<compile_context>
chip_gen: v6e
topology: v6e:2x2x1
jax: 0.10.0
libtpu: 0.0.40
codegen_flags: <defaults>
</compile_context>

<pallas_src>
import math
from functools import partial

import jax
import jax.numpy as jnp
from jax.experimental import pallas as pl
from jax.experimental.pallas import tpu as pltpu

LANES = 128      # padded output-channel width (lane-dense stores / MXU N fill)
TK_MAX = 1152    # max K tile (multiple of 128); K = kH*kW*Cin <= 1152 here
TM_MAX = 256     # max output-row tile (pooled rows) per grid step


def _round_up(x, m):
    return (x + m - 1) // m * m


# ---------------------------------------------------------------------------
# Pallas kernels
# ---------------------------------------------------------------------------
def _conv_pool_kernel(p_ref, w_ref, b_ref, o_ref, acc_ref, *, pool_k):
    """Fused Conv(+BN scale in weights) [+MaxPool(1,pool_k)] + bias + ReLU.

    p_ref  : (pool_k, tm, tk)   bf16 im2col patches (pool members on axis 0)
    w_ref  : (tk, 128)          bf16 weights (BN scale folded in)
    b_ref  : (1, 128)           f32 folded bias/shift
    o_ref  : (tm, 128)          f32 output tile (pooled rows)
    acc_ref: (pool_k, tm, 128)  f32 accumulator scratch
    """
    kk = pl.program_id(1)

    @pl.when(kk == 0)
    def _init():
        acc_ref[...] = jnp.zeros_like(acc_ref)

    # Static unroll over the (small) pool window: plain 2-D MXU dots.
    for j in range(pool_k):
        acc_ref[j] += jnp.dot(p_ref[j], w_ref[...],
                              preferred_element_type=jnp.float32)

    @pl.when(kk == pl.num_programs(1) - 1)
    def _finalize():
        res = acc_ref[0]
        for j in range(1, pool_k):           # max-pool over the W window
            res = jnp.maximum(res, acc_ref[j])
        o_ref[...] = jnp.maximum(res + b_ref[...], 0.0)


def _avgpool_fc_kernel(x_ref, w_ref, b_ref, o_ref, *, inv_hw):
    # x: (N, H*W, 128) -> global average pool -> (N, 128) -> Linear (padded).
    pooled = jnp.sum(x_ref[...], axis=1) * inv_hw
    o_ref[...] = jnp.dot(pooled, w_ref[...],
                         preferred_element_type=jnp.float32) + b_ref[...]


# ---------------------------------------------------------------------------
# Layer wrappers (im2col glue in plain JAX, compute in Pallas)
# ---------------------------------------------------------------------------
def conv_bn_relu_pool(x, w, conv_bias, bn, *, kH, kW, padH, padW,
                      pool_k, c_in, c_out, eps=1e-5):
    """Conv2d(stride=1) + BN(eval) + ReLU [+ MaxPool2d((1,pool_k))] fused.

    x : (N, H, W, C_pad) NHWC f32; only the first `c_in` channels are real.
    Returns (N, Hout, Wout//pool_k, 128) f32; first `c_out` channels real,
    padded channels are exactly zero.
    """
    gamma, beta, run_mean, run_var = bn
    N, H, W, _ = x.shape
    Hout = H + 2 * padH - kH + 1
    Wout = W + 2 * padW - kW + 1
    Wpool = Wout // pool_k            # MaxPool2d floor mode, stride == kernel
    Wkeep = Wpool * pool_k

    # ---- im2col on real channels only: (pool_k, M, K) --------------------
    xr = x[..., :c_in]
    xp = jnp.pad(xr, ((0, 0), (padH, padH), (padW, padW), (0, 0)))
    taps = [xp[:, dh:dh + Hout, dw:dw + Wkeep, :]
            for dh in range(kH) for dw in range(kW)]
    K = kH * kW * c_in
    p = jnp.stack(taps, axis=3)                          # (N,Hout,Wkeep,T,Cin)
    p = p.reshape(N, Hout, Wpool, pool_k, kH * kW, c_in)
    p = p.transpose(3, 0, 1, 2, 4, 5).reshape(pool_k, N * Hout * Wpool, K)
    M = N * Hout * Wpool

    # ---- pad K / M and pick tiles (fit v7x 32 MiB scoped VMEM) ------------
    K_pad = _round_up(K, LANES)
    if K_pad > TK_MAX:
        K_pad = _round_up(K_pad, TK_MAX)
        tk = TK_MAX
    else:
        tk = K_pad
    nk = K_pad // tk

    tm = min(TM_MAX, _round_up(M, 8))
    gm = pl.cdiv(M, tm)
    M_pad = gm * tm

    p = jnp.pad(p, ((0, 0), (0, M_pad - M), (0, K_pad - K)))
    p = p.astype(jnp.bfloat16)

    # ---- fold conv bias + eval BN into weights / bias, pad Cout -> 128 ----
    scale = gamma / jnp.sqrt(run_var + eps)                       # (c_out,)
    shift = beta + (conv_bias - run_mean) * scale                 # (c_out,)
    wmat = w.transpose(2, 3, 1, 0).reshape(K, c_out) * scale[None, :]
    wmat = jnp.pad(wmat, ((0, K_pad - K), (0, LANES - c_out))).astype(jnp.bfloat16)
    bvec = jnp.pad(shift, (0, LANES - c_out)).reshape(1, LANES).astype(jnp.float32)

    out = pl.pallas_call(
        partial(_conv_pool_kernel, pool_k=pool_k),
        out_shape=jax.ShapeDtypeStruct((M_pad, LANES), jnp.float32),
        grid=(gm, nk),
        in_specs=[
            pl.BlockSpec((pool_k, tm, tk), lambda i, kk: (0, i, kk)),
            pl.BlockSpec((tk, LANES), lambda i, kk: (kk, 0)),
            pl.BlockSpec((1, LANES), lambda i, kk: (0, 0)),
        ],
        out_specs=pl.BlockSpec((tm, LANES), lambda i, kk: (i, 0)),
        scratch_shapes=[pltpu.VMEM((pool_k, tm, LANES), jnp.float32)],
        compiler_params=pltpu.CompilerParams(
            dimension_semantics=("parallel", "arbitrary")),
    )(p, wmat, bvec)

    return out[:M].reshape(N, Hout, Wpool, LANES)


def avgpool_fc(x, fc_w, fc_b, num_classes):
    """AdaptiveAvgPool2d(1) + flatten + Linear fused into one Pallas kernel."""
    N, H, W, C = x.shape                 # C == LANES (padded channels are 0)
    x3 = x.reshape(N, H * W, C)
    w_pad = jnp.zeros((C, C), jnp.float32).at[:num_classes, :num_classes].set(fc_w.T)
    b_pad = jnp.pad(fc_b, (0, C - num_classes)).reshape(1, C).astype(jnp.float32)

    out = pl.pallas_call(
        partial(_avgpool_fc_kernel, inv_hw=1.0 / float(H * W)),
        out_shape=jax.ShapeDtypeStruct((N, C), jnp.float32),
        grid=(1,),
        in_specs=[
            pl.BlockSpec((N, H * W, C), lambda i: (0, 0, 0)),
            pl.BlockSpec((C, C), lambda i: (0, 0)),
            pl.BlockSpec((1, C), lambda i: (0, 0)),
        ],
        out_specs=pl.BlockSpec((N, C), lambda i: (0, 0)),
    )(x3, w_pad, b_pad)
    return out[:, :num_classes]


# ---------------------------------------------------------------------------
# Deterministic parameter initialization (mirrors _initialize_weights)
# ---------------------------------------------------------------------------
def init_conv(key, cout, cin, kH, kW):
    n = kH * kW * cout
    w = jax.random.normal(key, (cout, cin, kH, kW), jnp.float32) * math.sqrt(2.0 / n)
    b = jnp.zeros((cout,), jnp.float32)
    return w, b


def init_bn(c):
    return (jnp.ones((c,), jnp.float32), jnp.zeros((c,), jnp.float32),
            jnp.zeros((c,), jnp.float32), jnp.ones((c,), jnp.float32))


# ---------------------------------------------------------------------------
# Full RF_CAM forward (eval mode)
# ---------------------------------------------------------------------------
def rf_cam_forward(x_nchw, params, num_classes):
    x = x_nchw.transpose(0, 2, 3, 1)      # single NCHW -> NHWC entry transpose
    # --- first_layer ---
    x = conv_bn_relu_pool(x, *params['c1'], params['bn1'], kH=3, kW=6,
                          padH=1, padW=1, pool_k=1, c_in=1, c_out=32)
    x = conv_bn_relu_pool(x, *params['c2'], params['bn2'], kH=3, kW=6,
                          padH=1, padW=1, pool_k=3, c_in=32, c_out=32)
    # Dropout(0.1): identity in eval mode
    x = conv_bn_relu_pool(x, *params['c3'], params['bn3'], kH=3, kW=6,
                          padH=1, padW=1, pool_k=1, c_in=32, c_out=64)
    x = conv_bn_relu_pool(x, *params['c4'], params['bn4'], kH=3, kW=6,
                          padH=1, padW=1, pool_k=2, c_in=64, c_out=64)
    # Dropout(0.1): identity in eval mode
    # --- features (synthetic stand-in, see header comment) ---
    x = conv_bn_relu_pool(x, *params['cf'], params['bnf'], kH=3, kW=6,
                          padH=1, padW=1, pool_k=1, c_in=64, c_out=num_classes)
    # --- classifier: AdaptiveAvgPool2d(1) -> flatten -> fc ---
    return avgpool_fc(x, params['fc_w'], params['fc_b'], num_classes)


if __name__ == "__main__":
    num_classes = 95
    key = jax.random.PRNGKey(0)
    keys = jax.random.split(key, 7)

    params = {
        'c1': init_conv(keys[0], 32, 1, 3, 6), 'bn1': init_bn(32),
        'c2': init_conv(keys[1], 32, 32, 3, 6), 'bn2': init_bn(32),
        'c3': init_conv(keys[2], 64, 32, 3, 6), 'bn3': init_bn(64),
        'c4': init_conv(keys[3], 64, 64, 3, 6), 'bn4': init_bn(64),
        'cf': init_conv(keys[4], num_classes, 64, 3, 6), 'bnf': init_bn(num_classes),
        'fc_w': jax.random.normal(keys[5], (num_classes, num_classes),
                                  jnp.float32) * 0.01,
        'fc_b': jnp.zeros((num_classes,), jnp.float32),
    }

    # Small input consistent with the module: NCHW, in_channels=1.
    x = jax.random.normal(keys[6], (2, 1, 8, 64), jnp.float32)

    fwd = jax.jit(lambda xx, pp: rf_cam_forward(xx, pp, num_classes))
    out = jax.block_until_ready(fwd(x, params))

    assert out.shape == (2, num_classes), out.shape
    assert bool(jnp.all(jnp.isfinite(out)))
    print("KERNEL_OK")
</pallas_src>

<mosaic_0001>
module attributes {stable_mosaic.version = 11 : i64} {
  func.func @_conv_pool_kernel(%arg0: i32, %arg1: i32, %arg2: memref<1x256x128xbf16, #tpu.memory_space<vmem>>, %arg3: memref<128x128xbf16, #tpu.memory_space<vmem>>, %arg4: memref<1x128xf32, #tpu.memory_space<vmem>>, %arg5: memref<256x128xf32, #tpu.memory_space<vmem>>, %arg6: memref<1x256x128xf32, #tpu.memory_space<vmem>>) attributes {dimension_semantics = [#tpu.dimension_semantics<parallel>, #tpu.dimension_semantics<arbitrary>], iteration_bounds = array<i64: 4, 1>, scalar_prefetch = 0 : i64, scratch_operands = 1 : i64, tpu.core_type = #tpu.core_type<tc>, window_params = [{transform_indices = @transform_0, window_bounds = array<i64: 1, 256, 128>}, {transform_indices = @transform_1, window_bounds = array<i64: 128, 128>}, {pipeline_mode = #tpu.pipeline_mode<synchronous>, transform_indices = @transform_2, window_bounds = array<i64: 1, 128>}, {transform_indices = @transform_3, window_bounds = array<i64: 256, 128>}]} {
    %c0_i32 = arith.constant 0 : i32
    %0 = arith.cmpi eq, %arg1, %c0_i32 : i32
    %1 = arith.extui %0 : i1 to i32
    %c0_i32_0 = arith.constant 0 : i32
    %2 = arith.cmpi ne, %1, %c0_i32_0 : i32
    scf.if %2 {
      %cst_13 = arith.constant 0.000000e+00 : f32
      %16 = vector.broadcast %cst_13 : f32 to vector<1x256x128xf32>
      %c0_14 = arith.constant 0 : index
      %c0_15 = arith.constant 0 : index
      %c0_16 = arith.constant 0 : index
      %17 = vector.load %arg6[%c0_14, %c0_15, %c0_16] : memref<1x256x128xf32, #tpu.memory_space<vmem>>, vector<1x256x128xf32>
      tpu.vector_store %arg6[%c0_14, %c0_15, %c0_16], %16 {strides = array<i32>} : memref<1x256x128xf32, #tpu.memory_space<vmem>>, vector<1x256x128xf32>,
    } else {
    }
    %c0 = arith.constant 0 : index
    %c0_1 = arith.constant 0 : index
    %c0_2 = arith.constant 0 : index
    %3 = vector.load %arg6[%c0, %c0_1, %c0_2] : memref<1x256x128xf32, #tpu.memory_space<vmem>>, vector<1x256x128xf32>
    %4 = vector.shape_cast %3 : vector<1x256x128xf32> to vector<256x128xf32>
    %c0_3 = arith.constant 0 : index
    %c0_4 = arith.constant 0 : index
    %c0_5 = arith.constant 0 : index
    %5 = vector.load %arg2[%c0_3, %c0_4, %c0_5] : memref<1x256x128xbf16, #tpu.memory_space<vmem>>, vector<1x256x128xbf16>
    %6 = vector.shape_cast %5 : vector<1x256x128xbf16> to vector<256x128xbf16>
    %c0_6 = arith.constant 0 : index
    %c0_7 = arith.constant 0 : index
    %7 = vector.load %arg3[%c0_6, %c0_7] : memref<128x128xbf16, #tpu.memory_space<vmem>>, vector<128x128xbf16>
    %cst = arith.constant dense<0.000000e+00> : vector<256x128xf32>
    %8 = tpu.matmul %6, %7, %cst {dimension_numbers = #tpu.dot_dimension_numbers<[1], [0], [0], [1], [0, 0, 1, 1], [], []>} : vector<256x128xbf16>, vector<128x128xbf16>, vector<256x128xf32> -> vector<256x128xf32>
    %9 = arith.addf %4, %8 : vector<256x128xf32>
    %c0_8 = arith.constant 0 : index
    %c0_9 = arith.constant 0 : index
    %c0_10 = arith.constant 0 : index
    %10 = vector.load %arg6[%c0_8, %c0_9, %c0_10] : memref<1x256x128xf32, #tpu.memory_space<vmem>>, vector<1x256x128xf32>
    %11 = vector.shape_cast %10 : vector<1x256x128xf32> to vector<256x128xf32>
    %12 = vector.shape_cast %9 : vector<256x128xf32> to vector<1x256x128xf32>
    tpu.vector_store %arg6[%c0_8, %c0_9, %c0_10], %12 {strides = array<i32>} : memref<1x256x128xf32, #tpu.memory_space<vmem>>, vector<1x256x128xf32>,
    %c0_i32_11 = arith.constant 0 : i32
    %13 = arith.cmpi eq, %arg1, %c0_i32_11 : i32
    %14 = arith.extui %13 : i1 to i32
    %c0_i32_12 = arith.constant 0 : i32
    %15 = arith.cmpi ne, %14, %c0_i32_12 : i32
    scf.if %15 {
      %c0_13 = arith.constant 0 : index
      %c0_14 = arith.constant 0 : index
      %c0_15 = arith.constant 0 : index
      %16 = vector.load %arg6[%c0_13, %c0_14, %c0_15] : memref<1x256x128xf32, #tpu.memory_space<vmem>>, vector<1x256x128xf32>
      %17 = vector.shape_cast %16 : vector<1x256x128xf32> to vector<256x128xf32>
      %c0_16 = arith.constant 0 : index
      %c0_17 = arith.constant 0 : index
      %18 = vector.load %arg4[%c0_16, %c0_17] : memref<1x128xf32, #tpu.memory_space<vmem>>, vector<1x128xf32>
      %19 = vector.broadcast %18 : vector<1x128xf32> to vector<256x128xf32>
      %20 = arith.addf %17, %19 : vector<256x128xf32>
      %cst_18 = arith.constant 0.000000e+00 : f32
      %21 = vector.broadcast %cst_18 : f32 to vector<256x128xf32>
      %22 = arith.maximumf %20, %21 : vector<256x128xf32>
      %c0_19 = arith.constant 0 : index
      %c0_20 = arith.constant 0 : index
      %23 = vector.load %arg5[%c0_19, %c0_20] : memref<256x128xf32, #tpu.memory_space<vmem>>, vector<256x128xf32>
      tpu.vector_store %arg5[%c0_19, %c0_20], %22 {strides = array<i32>} : memref<256x128xf32, #tpu.memory_space<vmem>>, vector<256x128xf32>,
    } else {
    }
    return
  }
  func.func @transform_0(%arg0: i32, %arg1: i32) -> (i32, i32, i32) {
    %c0_i32 = arith.constant 0 : i32
    %c0_i32_0 = arith.constant 0 : i32
    return %c0_i32, %arg0, %arg1 : i32, i32, i32
  }
  func.func @transform_1(%arg0: i32, %arg1: i32) -> (i32, i32) {
    %c0_i32 = arith.constant 0 : i32
    %c0_i32_0 = arith.constant 0 : i32
    return %arg1, %c0_i32 : i32, i32
  }
  func.func @transform_2(%arg0: i32, %arg1: i32) -> (i32, i32) {
    %c0_i32 = arith.constant 0 : i32
    %c0_i32_0 = arith.constant 0 : i32
    %c0_i32_1 = arith.constant 0 : i32
    return %c0_i32, %c0_i32_0 : i32, i32
  }
  func.func @transform_3(%arg0: i32, %arg1: i32) -> (i32, i32) {
    %c0_i32 = arith.constant 0 : i32
    %c0_i32_0 = arith.constant 0 : i32
    return %arg0, %c0_i32 : i32, i32
  }
}

module attributes {stable_mosaic.version = 11 : i64} {
  func.func @_conv_pool_kernel(%arg0: i32, %arg1: i32, %arg2: memref<3x256x640xbf16, #tpu.memory_space<vmem>>, %arg3: memref<640x128xbf16, #tpu.memory_space<vmem>>, %arg4: memref<1x128xf32, #tpu.memory_space<vmem>>, %arg5: memref<256x128xf32, #tpu.memory_space<vmem>>, %arg6: memref<3x256x128xf32, #tpu.memory_space<vmem>>) attributes {dimension_semantics = [#tpu.dimension_semantics<parallel>, #tpu.dimension_semantics<arbitrary>], iteration_bounds = array<i64: 2, 1>, scalar_prefetch = 0 : i64, scratch_operands = 1 : i64, tpu.core_type = #tpu.core_type<tc>, window_params = [{transform_indices = @transform_0, window_bounds = array<i64: 3, 256, 640>}, {transform_indices = @transform_1, window_bounds = array<i64: 640, 128>}, {pipeline_mode = #tpu.pipeline_mode<synchronous>, transform_indices = @transform_2, window_bounds = array<i64: 1, 128>}, {transform_indices = @transform_3, window_bounds = array<i64: 256, 128>}]} {
    %c0_i32 = arith.constant 0 : i32
    %0 = arith.cmpi eq, %arg1, %c0_i32 : i32
    %1 = arith.extui %0 : i1 to i32
    %c0_i32_0 = arith.constant 0 : i32
    %2 = arith.cmpi ne, %1, %c0_i32_0 : i32
    scf.if %2 {
      %cst_35 = arith.constant 0.000000e+00 : f32
      %36 = vector.broadcast %cst_35 : f32 to vector<3x256x128xf32>
      %c0_36 = arith.constant 0 : index
      %c0_37 = arith.constant 0 : index
      %c0_38 = arith.constant 0 : index
      %37 = vector.load %arg6[%c0_36, %c0_37, %c0_38] : memref<3x256x128xf32, #tpu.memory_space<vmem>>, vector<3x256x128xf32>
      tpu.vector_store %arg6[%c0_36, %c0_37, %c0_38], %36 {strides = array<i32>} : memref<3x256x128xf32, #tpu.memory_space<vmem>>, vector<3x256x128xf32>,
    } else {
    }
    %c0 = arith.constant 0 : index
    %c0_1 = arith.constant 0 : index
    %c0_2 = arith.constant 0 : index
    %3 = vector.load %arg6[%c0, %c0_1, %c0_2] : memref<3x256x128xf32, #tpu.memory_space<vmem>>, vector<1x256x128xf32>
    %4 = vector.shape_cast %3 : vector<1x256x128xf32> to vector<256x128xf32>
    %c0_3 = arith.constant 0 : index
    %c0_4 = arith.constant 0 : index
    %c0_5 = arith.constant 0 : index
    %5 = vector.load %arg2[%c0_3, %c0_4, %c0_5] : memref<3x256x640xbf16, #tpu.memory_space<vmem>>, vector<1x256x640xbf16>
    %6 = vector.shape_cast %5 : vector<1x256x640xbf16> to vector<256x640xbf16>
    %c0_6 = arith.constant 0 : index
    %c0_7 = arith.constant 0 : index
    %7 = vector.load %arg3[%c0_6, %c0_7] : memref<640x128xbf16, #tpu.memory_space<vmem>>, vector<640x128xbf16>
    %cst = arith.constant dense<0.000000e+00> : vector<256x128xf32>
    %8 = tpu.matmul %6, %7, %cst {dimension_numbers = #tpu.dot_dimension_numbers<[1], [0], [0], [1], [0, 0, 1, 1], [], []>} : vector<256x640xbf16>, vector<640x128xbf16>, vector<256x128xf32> -> vector<256x128xf32>
    %9 = arith.addf %4, %8 : vector<256x128xf32>
    %c0_8 = arith.constant 0 : index
    %c0_9 = arith.constant 0 : index
    %c0_10 = arith.constant 0 : index
    %10 = vector.load %arg6[%c0_8, %c0_9, %c0_10] : memref<3x256x128xf32, #tpu.memory_space<vmem>>, vector<1x256x128xf32>
    %11 = vector.shape_cast %10 : vector<1x256x128xf32> to vector<256x128xf32>
    %12 = vector.shape_cast %9 : vector<256x128xf32> to vector<1x256x128xf32>
    tpu.vector_store %arg6[%c0_8, %c0_9, %c0_10], %12 {strides = array<i32>} : memref<3x256x128xf32, #tpu.memory_space<vmem>>, vector<1x256x128xf32>,
    %c1 = arith.constant 1 : index
    %c0_11 = arith.constant 0 : index
    %c0_12 = arith.constant 0 : index
    %13 = vector.load %arg6[%c1, %c0_11, %c0_12] : memref<3x256x128xf32, #tpu.memory_space<vmem>>, vector<1x256x128xf32>
    %14 = vector.shape_cast %13 : vector<1x256x128xf32> to vector<256x128xf32>
    %c1_13 = arith.constant 1 : index
    %c0_14 = arith.constant 0 : index
    %c0_15 = arith.constant 0 : index
    %15 = vector.load %arg2[%c1_13, %c0_14, %c0_15] : memref<3x256x640xbf16, #tpu.memory_space<vmem>>, vector<1x256x640xbf16>
    %16 = vector.shape_cast %15 : vector<1x256x640xbf16> to vector<256x640xbf16>
    %c0_16 = arith.constant 0 : index
    %c0_17 = arith.constant 0 : index
    %17 = vector.load %arg3[%c0_16, %c0_17] : memref<640x128xbf16, #tpu.memory_space<vmem>>, vector<640x128xbf16>
    %cst_18 = arith.constant dense<0.000000e+00> : vector<256x128xf32>
    %18 = tpu.matmul %16, %17, %cst_18 {dimension_numbers = #tpu.dot_dimension_numbers<[1], [0], [0], [1], [0, 0, 1, 1], [], []>} : vector<256x640xbf16>, vector<640x128xbf16>, vector<256x128xf32> -> vector<256x128xf32>
    %19 = arith.addf %14, %18 : vector<256x128xf32>
    %c1_19 = arith.constant 1 : index
    %c0_20 = arith.constant 0 : index
    %c0_21 = arith.constant 0 : index
    %20 = vector.load %arg6[%c1_19, %c0_20, %c0_21] : memref<3x256x128xf32, #tpu.memory_space<vmem>>, vector<1x256x128xf32>
    %21 = vector.shape_cast %20 : vector<1x256x128xf32> to vector<256x128xf32>
    %22 = vector.shape_cast %19 : vector<256x128xf32> to vector<1x256x128xf32>
    tpu.vector_store %arg6[%c1_19, %c0_20, %c0_21], %22 {strides = array<i32>} : memref<3x256x128xf32, #tpu.memory_space<vmem>>, vector<1x256x128xf32>,
    %c2 = arith.constant 2 : index
    %c0_22 = arith.constant 0 : index
    %c0_23 = arith.constant 0 : index
    %23 = vector.load %arg6[%c2, %c0_22, %c0_23] : memref<3x256x128xf32, #tpu.memory_space<vmem>>, vector<1x256x128xf32>
    %24 = vector.shape_cast %23 : vector<1x256x128xf32> to vector<256x128xf32>
    %c2_24 = arith.constant 2 : index
    %c0_25 = arith.constant 0 : index
    %c0_26 = arith.constant 0 : index
    %25 = vector.load %arg2[%c2_24, %c0_25, %c0_26] : memref<3x256x640xbf16, #tpu.memory_space<vmem>>, vector<1x256x640xbf16>
    %26 = vector.shape_cast %25 : vector<1x256x640xbf16> to vector<256x640xbf16>
    %c0_27 = arith.constant 0 : index
    %c0_28 = arith.constant 0 : index
    %27 = vector.load %arg3[%c0_27, %c0_28] : memref<640x128xbf16, #tpu.memory_space<vmem>>, vector<640x128xbf16>
    %cst_29 = arith.constant dense<0.000000e+00> : vector<256x128xf32>
    %28 = tpu.matmul %26, %27, %cst_29 {dimension_numbers = #tpu.dot_dimension_numbers<[1], [0], [0], [1], [0, 0, 1, 1], [], []>} : vector<256x640xbf16>, vector<640x128xbf16>, vector<256x128xf32> -> vector<256x128xf32>
    %29 = arith.addf %24, %28 : vector<256x128xf32>
    %c2_30 = arith.constant 2 : index
    %c0_31 = arith.constant 0 : index
    %c0_32 = arith.constant 0 : index
    %30 = vector.load %arg6[%c2_30, %c0_31, %c0_32] : memref<3x256x128xf32, #tpu.memory_space<vmem>>, vector<1x256x128xf32>
    %31 = vector.shape_cast %30 : vector<1x256x128xf32> to vector<256x128xf32>
    %32 = vector.shape_cast %29 : vector<256x128xf32> to vector<1x256x128xf32>
    tpu.vector_store %arg6[%c2_30, %c0_31, %c0_32], %32 {strides = array<i32>} : memref<3x256x128xf32, #tpu.memory_space<vmem>>, vector<1x256x128xf32>,
    %c0_i32_33 = arith.constant 0 : i32
    %33 = arith.cmpi eq, %arg1, %c0_i32_33 : i32
    %34 = arith.extui %33 : i1 to i32
    %c0_i32_34 = arith.constant 0 : i32
    %35 = arith.cmpi ne, %34, %c0_i32_34 : i32
    scf.if %35 {
      %c0_35 = arith.constant 0 : index
      %c0_36 = arith.constant 0 : index
      %c0_37 = arith.constant 0 : index
      %36 = vector.load %arg6[%c0_35, %c0_36, %c0_37] : memref<3x256x128xf32, #tpu.memory_space<vmem>>, vector<1x256x128xf32>
      %37 = vector.shape_cast %36 : vector<1x256x128xf32> to vector<256x128xf32>
      %c1_38 = arith.constant 1 : index
      %c0_39 = arith.constant 0 : index
      %c0_40 = arith.constant 0 : index
      %38 = vector.load %arg6[%c1_38, %c0_39, %c0_40] : memref<3x256x128xf32, #tpu.memory_space<vmem>>, vector<1x256x128xf32>
      %39 = vector.shape_cast %38 : vector<1x256x128xf32> to vector<256x128xf32>
      %40 = arith.maximumf %37, %39 : vector<256x128xf32>
      %c2_41 = arith.constant 2 : index
      %c0_42 = arith.constant 0 : index
      %c0_43 = arith.constant 0 : index
      %41 = vector.load %arg6[%c2_41, %c0_42, %c0_43] : memref<3x256x128xf32, #tpu.memory_space<vmem>>, vector<1x256x128xf32>
      %42 = vector.shape_cast %41 : vector<1x256x128xf32> to vector<256x128xf32>
      %43 = arith.maximumf %40, %42 : vector<256x128xf32>
      %c0_44 = arith.constant 0 : index
      %c0_45 = arith.constant 0 : index
      %44 = vector.load %arg4[%c0_44, %c0_45] : memref<1x128xf32, #tpu.memory_space<vmem>>, vector<1x128xf32>
      %45 = vector.broadcast %44 : vector<1x128xf32> to vector<256x128xf32>
      %46 = arith.addf %43, %45 : vector<256x128xf32>
      %cst_46 = arith.constant 0.000000e+00 : f32
      %47 = vector.broadcast %cst_46 : f32 to vector<256x128xf32>
      %48 = arith.maximumf %46, %47 : vector<256x128xf32>
      %c0_47 = arith.constant 0 : index
      %c0_48 = arith.constant 0 : index
      %49 = vector.load %arg5[%c0_47, %c0_48] : memref<256x128xf32, #tpu.memory_space<vmem>>, vector<256x128xf32>
      tpu.vector_store %arg5[%c0_47, %c0_48], %48 {strides = array<i32>} : memref<256x128xf32, #tpu.memory_space<vmem>>, vector<256x128xf32>,
    } else {
    }
    return
  }
  func.func @transform_0(%arg0: i32, %arg1: i32) -> (i32, i32, i32) {
    %c0_i32 = arith.constant 0 : i32
    %c0_i32_0 = arith.constant 0 : i32
    return %c0_i32, %arg0, %arg1 : i32, i32, i32
  }
  func.func @transform_1(%arg0: i32, %arg1: i32) -> (i32, i32) {
    %c0_i32 = arith.constant 0 : i32
    %c0_i32_0 = arith.constant 0 : i32
    return %arg1, %c0_i32 : i32, i32
  }
  func.func @transform_2(%arg0: i32, %arg1: i32) -> (i32, i32) {
    %c0_i32 = arith.constant 0 : i32
    %c0_i32_0 = arith.constant 0 : i32
    %c0_i32_1 = arith.constant 0 : i32
    return %c0_i32, %c0_i32_0 : i32, i32
  }
  func.func @transform_3(%arg0: i32, %arg1: i32) -> (i32, i32) {
    %c0_i32 = arith.constant 0 : i32
    %c0_i32_0 = arith.constant 0 : i32
    return %arg0, %c0_i32 : i32, i32
  }
}

module attributes {stable_mosaic.version = 11 : i64} {
  func.func @_conv_pool_kernel(%arg0: i32, %arg1: i32, %arg2: memref<1x256x640xbf16, #tpu.memory_space<vmem>>, %arg3: memref<640x128xbf16, #tpu.memory_space<vmem>>, %arg4: memref<1x128xf32, #tpu.memory_space<vmem>>, %arg5: memref<256x128xf32, #tpu.memory_space<vmem>>, %arg6: memref<1x256x128xf32, #tpu.memory_space<vmem>>) attributes {dimension_semantics = [#tpu.dimension_semantics<parallel>, #tpu.dimension_semantics<arbitrary>], iteration_bounds = array<i64: 1, 1>, scalar_prefetch = 0 : i64, scratch_operands = 1 : i64, tpu.core_type = #tpu.core_type<tc>, window_params = [{transform_indices = @transform_0, window_bounds = array<i64: 1, 256, 640>}, {transform_indices = @transform_1, window_bounds = array<i64: 640, 128>}, {pipeline_mode = #tpu.pipeline_mode<synchronous>, transform_indices = @transform_2, window_bounds = array<i64: 1, 128>}, {transform_indices = @transform_3, window_bounds = array<i64: 256, 128>}]} {
    %c0_i32 = arith.constant 0 : i32
    %0 = arith.cmpi eq, %arg1, %c0_i32 : i32
    %1 = arith.extui %0 : i1 to i32
    %c0_i32_0 = arith.constant 0 : i32
    %2 = arith.cmpi ne, %1, %c0_i32_0 : i32
    scf.if %2 {
      %cst_13 = arith.constant 0.000000e+00 : f32
      %16 = vector.broadcast %cst_13 : f32 to vector<1x256x128xf32>
      %c0_14 = arith.constant 0 : index
      %c0_15 = arith.constant 0 : index
      %c0_16 = arith.constant 0 : index
      %17 = vector.load %arg6[%c0_14, %c0_15, %c0_16] : memref<1x256x128xf32, #tpu.memory_space<vmem>>, vector<1x256x128xf32>
      tpu.vector_store %arg6[%c0_14, %c0_15, %c0_16], %16 {strides = array<i32>} : memref<1x256x128xf32, #tpu.memory_space<vmem>>, vector<1x256x128xf32>,
    } else {
    }
    %c0 = arith.constant 0 : index
    %c0_1 = arith.constant 0 : index
    %c0_2 = arith.constant 0 : index
    %3 = vector.load %arg6[%c0, %c0_1, %c0_2] : memref<1x256x128xf32, #tpu.memory_space<vmem>>, vector<1x256x128xf32>
    %4 = vector.shape_cast %3 : vector<1x256x128xf32> to vector<256x128xf32>
    %c0_3 = arith.constant 0 : index
    %c0_4 = arith.constant 0 : index
    %c0_5 = arith.constant 0 : index
    %5 = vector.load %arg2[%c0_3, %c0_4, %c0_5] : memref<1x256x640xbf16, #tpu.memory_space<vmem>>, vector<1x256x640xbf16>
    %6 = vector.shape_cast %5 : vector<1x256x640xbf16> to vector<256x640xbf16>
    %c0_6 = arith.constant 0 : index
    %c0_7 = arith.constant 0 : index
    %7 = vector.load %arg3[%c0_6, %c0_7] : memref<640x128xbf16, #tpu.memory_space<vmem>>, vector<640x128xbf16>
    %cst = arith.constant dense<0.000000e+00> : vector<256x128xf32>
    %8 = tpu.matmul %6, %7, %cst {dimension_numbers = #tpu.dot_dimension_numbers<[1], [0], [0], [1], [0, 0, 1, 1], [], []>} : vector<256x640xbf16>, vector<640x128xbf16>, vector<256x128xf32> -> vector<256x128xf32>
    %9 = arith.addf %4, %8 : vector<256x128xf32>
    %c0_8 = arith.constant 0 : index
    %c0_9 = arith.constant 0 : index
    %c0_10 = arith.constant 0 : index
    %10 = vector.load %arg6[%c0_8, %c0_9, %c0_10] : memref<1x256x128xf32, #tpu.memory_space<vmem>>, vector<1x256x128xf32>
    %11 = vector.shape_cast %10 : vector<1x256x128xf32> to vector<256x128xf32>
    %12 = vector.shape_cast %9 : vector<256x128xf32> to vector<1x256x128xf32>
    tpu.vector_store %arg6[%c0_8, %c0_9, %c0_10], %12 {strides = array<i32>} : memref<1x256x128xf32, #tpu.memory_space<vmem>>, vector<1x256x128xf32>,
    %c0_i32_11 = arith.constant 0 : i32
    %13 = arith.cmpi eq, %arg1, %c0_i32_11 : i32
    %14 = arith.extui %13 : i1 to i32
    %c0_i32_12 = arith.constant 0 : i32
    %15 = arith.cmpi ne, %14, %c0_i32_12 : i32
    scf.if %15 {
      %c0_13 = arith.constant 0 : index
      %c0_14 = arith.constant 0 : index
      %c0_15 = arith.constant 0 : index
      %16 = vector.load %arg6[%c0_13, %c0_14, %c0_15] : memref<1x256x128xf32, #tpu.memory_space<vmem>>, vector<1x256x128xf32>
      %17 = vector.shape_cast %16 : vector<1x256x128xf32> to vector<256x128xf32>
      %c0_16 = arith.constant 0 : index
      %c0_17 = arith.constant 0 : index
      %18 = vector.load %arg4[%c0_16, %c0_17] : memref<1x128xf32, #tpu.memory_space<vmem>>, vector<1x128xf32>
      %19 = vector.broadcast %18 : vector<1x128xf32> to vector<256x128xf32>
      %20 = arith.addf %17, %19 : vector<256x128xf32>
      %cst_18 = arith.constant 0.000000e+00 : f32
      %21 = vector.broadcast %cst_18 : f32 to vector<256x128xf32>
      %22 = arith.maximumf %20, %21 : vector<256x128xf32>
      %c0_19 = arith.constant 0 : index
      %c0_20 = arith.constant 0 : index
      %23 = vector.load %arg5[%c0_19, %c0_20] : memref<256x128xf32, #tpu.memory_space<vmem>>, vector<256x128xf32>
      tpu.vector_store %arg5[%c0_19, %c0_20], %22 {strides = array<i32>} : memref<256x128xf32, #tpu.memory_space<vmem>>, vector<256x128xf32>,
    } else {
    }
    return
  }
  func.func @transform_0(%arg0: i32, %arg1: i32) -> (i32, i32, i32) {
    %c0_i32 = arith.constant 0 : i32
    %c0_i32_0 = arith.constant 0 : i32
    return %c0_i32, %arg0, %arg1 : i32, i32, i32
  }
  func.func @transform_1(%arg0: i32, %arg1: i32) -> (i32, i32) {
    %c0_i32 = arith.constant 0 : i32
    %c0_i32_0 = arith.constant 0 : i32
    return %arg1, %c0_i32 : i32, i32
  }
  func.func @transform_2(%arg0: i32, %arg1: i32) -> (i32, i32) {
    %c0_i32 = arith.constant 0 : i32
    %c0_i32_0 = arith.constant 0 : i32
    %c0_i32_1 = arith.constant 0 : i32
    return %c0_i32, %c0_i32_0 : i32, i32
  }
  func.func @transform_3(%arg0: i32, %arg1: i32) -> (i32, i32) {
    %c0_i32 = arith.constant 0 : i32
    %c0_i32_0 = arith.constant 0 : i32
    return %arg0, %c0_i32 : i32, i32
  }
}

module attributes {stable_mosaic.version = 11 : i64} {
  func.func @_conv_pool_kernel(%arg0: i32, %arg1: i32, %arg2: memref<2x96x1152xbf16, #tpu.memory_space<vmem>>, %arg3: memref<1152x128xbf16, #tpu.memory_space<vmem>>, %arg4: memref<1x128xf32, #tpu.memory_space<vmem>>, %arg5: memref<96x128xf32, #tpu.memory_space<vmem>>, %arg6: memref<2x96x128xf32, #tpu.memory_space<vmem>>) attributes {dimension_semantics = [#tpu.dimension_semantics<parallel>, #tpu.dimension_semantics<arbitrary>], iteration_bounds = array<i64: 1, 1>, scalar_prefetch = 0 : i64, scratch_operands = 1 : i64, tpu.core_type = #tpu.core_type<tc>, window_params = [{transform_indices = @transform_0, window_bounds = array<i64: 2, 96, 1152>}, {transform_indices = @transform_1, window_bounds = array<i64: 1152, 128>}, {pipeline_mode = #tpu.pipeline_mode<synchronous>, transform_indices = @transform_2, window_bounds = array<i64: 1, 128>}, {transform_indices = @transform_3, window_bounds = array<i64: 96, 128>}]} {
    %c0_i32 = arith.constant 0 : i32
    %0 = arith.cmpi eq, %arg1, %c0_i32 : i32
    %1 = arith.extui %0 : i1 to i32
    %c0_i32_0 = arith.constant 0 : i32
    %2 = arith.cmpi ne, %1, %c0_i32_0 : i32
    scf.if %2 {
      %cst_24 = arith.constant 0.000000e+00 : f32
      %26 = vector.broadcast %cst_24 : f32 to vector<2x96x128xf32>
      %c0_25 = arith.constant 0 : index
      %c0_26 = arith.constant 0 : index
      %c0_27 = arith.constant 0 : index
      %27 = vector.load %arg6[%c0_25, %c0_26, %c0_27] : memref<2x96x128xf32, #tpu.memory_space<vmem>>, vector<2x96x128xf32>
      tpu.vector_store %arg6[%c0_25, %c0_26, %c0_27], %26 {strides = array<i32>} : memref<2x96x128xf32, #tpu.memory_space<vmem>>, vector<2x96x128xf32>,
    } else {
    }
    %c0 = arith.constant 0 : index
    %c0_1 = arith.constant 0 : index
    %c0_2 = arith.constant 0 : index
    %3 = vector.load %arg6[%c0, %c0_1, %c0_2] : memref<2x96x128xf32, #tpu.memory_space<vmem>>, vector<1x96x128xf32>
    %4 = vector.shape_cast %3 : vector<1x96x128xf32> to vector<96x128xf32>
    %c0_3 = arith.constant 0 : index
    %c0_4 = arith.constant 0 : index
    %c0_5 = arith.constant 0 : index
    %5 = vector.load %arg2[%c0_3, %c0_4, %c0_5] : memref<2x96x1152xbf16, #tpu.memory_space<vmem>>, vector<1x96x1152xbf16>
    %6 = vector.shape_cast %5 : vector<1x96x1152xbf16> to vector<96x1152xbf16>
    %c0_6 = arith.constant 0 : index
    %c0_7 = arith.constant 0 : index
    %7 = vector.load %arg3[%c0_6, %c0_7] : memref<1152x128xbf16, #tpu.memory_space<vmem>>, vector<1152x128xbf16>
    %cst = arith.constant dense<0.000000e+00> : vector<96x128xf32>
    %8 = tpu.matmul %6, %7, %cst {dimension_numbers = #tpu.dot_dimension_numbers<[1], [0], [0], [1], [0, 0, 1, 1], [], []>} : vector<96x1152xbf16>, vector<1152x128xbf16>, vector<96x128xf32> -> vector<96x128xf32>
    %9 = arith.addf %4, %8 : vector<96x128xf32>
    %c0_8 = arith.constant 0 : index
    %c0_9 = arith.constant 0 : index
    %c0_10 = arith.constant 0 : index
    %10 = vector.load %arg6[%c0_8, %c0_9, %c0_10] : memref<2x96x128xf32, #tpu.memory_space<vmem>>, vector<1x96x128xf32>
    %11 = vector.shape_cast %10 : vector<1x96x128xf32> to vector<96x128xf32>
    %12 = vector.shape_cast %9 : vector<96x128xf32> to vector<1x96x128xf32>
    tpu.vector_store %arg6[%c0_8, %c0_9, %c0_10], %12 {strides = array<i32>} : memref<2x96x128xf32, #tpu.memory_space<vmem>>, vector<1x96x128xf32>,
    %c1 = arith.constant 1 : index
    %c0_11 = arith.constant 0 : index
    %c0_12 = arith.constant 0 : index
    %13 = vector.load %arg6[%c1, %c0_11, %c0_12] : memref<2x96x128xf32, #tpu.memory_space<vmem>>, vector<1x96x128xf32>
    %14 = vector.shape_cast %13 : vector<1x96x128xf32> to vector<96x128xf32>
    %c1_13 = arith.constant 1 : index
    %c0_14 = arith.constant 0 : index
    %c0_15 = arith.constant 0 : index
    %15 = vector.load %arg2[%c1_13, %c0_14, %c0_15] : memref<2x96x1152xbf16, #tpu.memory_space<vmem>>, vector<1x96x1152xbf16>
    %16 = vector.shape_cast %15 : vector<1x96x1152xbf16> to vector<96x1152xbf16>
    %c0_16 = arith.constant 0 : index
    %c0_17 = arith.constant 0 : index
    %17 = vector.load %arg3[%c0_16, %c0_17] : memref<1152x128xbf16, #tpu.memory_space<vmem>>, vector<1152x128xbf16>
    %cst_18 = arith.constant dense<0.000000e+00> : vector<96x128xf32>
    %18 = tpu.matmul %16, %17, %cst_18 {dimension_numbers = #tpu.dot_dimension_numbers<[1], [0], [0], [1], [0, 0, 1, 1], [], []>} : vector<96x1152xbf16>, vector<1152x128xbf16>, vector<96x128xf32> -> vector<96x128xf32>
    %19 = arith.addf %14, %18 : vector<96x128xf32>
    %c1_19 = arith.constant 1 : index
    %c0_20 = arith.constant 0 : index
    %c0_21 = arith.constant 0 : index
    %20 = vector.load %arg6[%c1_19, %c0_20, %c0_21] : memref<2x96x128xf32, #tpu.memory_space<vmem>>, vector<1x96x128xf32>
    %21 = vector.shape_cast %20 : vector<1x96x128xf32> to vector<96x128xf32>
    %22 = vector.shape_cast %19 : vector<96x128xf32> to vector<1x96x128xf32>
    tpu.vector_store %arg6[%c1_19, %c0_20, %c0_21], %22 {strides = array<i32>} : memref<2x96x128xf32, #tpu.memory_space<vmem>>, vector<1x96x128xf32>,
    %c0_i32_22 = arith.constant 0 : i32
    %23 = arith.cmpi eq, %arg1, %c0_i32_22 : i32
    %24 = arith.extui %23 : i1 to i32
    %c0_i32_23 = arith.constant 0 : i32
    %25 = arith.cmpi ne, %24, %c0_i32_23 : i32
    scf.if %25 {
      %c0_24 = arith.constant 0 : index
      %c0_25 = arith.constant 0 : index
      %c0_26 = arith.constant 0 : index
      %26 = vector.load %arg6[%c0_24, %c0_25, %c0_26] : memref<2x96x128xf32, #tpu.memory_space<vmem>>, vector<1x96x128xf32>
      %27 = vector.shape_cast %26 : vector<1x96x128xf32> to vector<96x128xf32>
      %c1_27 = arith.constant 1 : index
      %c0_28 = arith.constant 0 : index
      %c0_29 = arith.constant 0 : index
      %28 = vector.load %arg6[%c1_27, %c0_28, %c0_29] : memref<2x96x128xf32, #tpu.memory_space<vmem>>, vector<1x96x128xf32>
      %29 = vector.shape_cast %28 : vector<1x96x128xf32> to vector<96x128xf32>
      %30 = arith.maximumf %27, %29 : vector<96x128xf32>
      %c0_30 = arith.constant 0 : index
      %c0_31 = arith.constant 0 : index
      %31 = vector.load %arg4[%c0_30, %c0_31] : memref<1x128xf32, #tpu.memory_space<vmem>>, vector<1x128xf32>
      %32 = vector.broadcast %31 : vector<1x128xf32> to vector<96x128xf32>
      %33 = arith.addf %30, %32 : vector<96x128xf32>
      %cst_32 = arith.constant 0.000000e+00 : f32
      %34 = vector.broadcast %cst_32 : f32 to vector<96x128xf32>
      %35 = arith.maximumf %33, %34 : vector<96x128xf32>
      %c0_33 = arith.constant 0 : index
      %c0_34 = arith.constant 0 : index
      %36 = vector.load %arg5[%c0_33, %c0_34] : memref<96x128xf32, #tpu.memory_space<vmem>>, vector<96x128xf32>
      tpu.vector_store %arg5[%c0_33, %c0_34], %35 {strides = array<i32>} : memref<96x128xf32, #tpu.memory_space<vmem>>, vector<96x128xf32>,
    } else {
    }
    return
  }
  func.func @transform_0(%arg0: i32, %arg1: i32) -> (i32, i32, i32) {
    %c0_i32 = arith.constant 0 : i32
    %c0_i32_0 = arith.constant 0 : i32
    return %c0_i32, %arg0, %arg1 : i32, i32, i32
  }
  func.func @transform_1(%arg0: i32, %arg1: i32) -> (i32, i32) {
    %c0_i32 = arith.constant 0 : i32
    %c0_i32_0 = arith.constant 0 : i32
    return %arg1, %c0_i32 : i32, i32
  }
  func.func @transform_2(%arg0: i32, %arg1: i32) -> (i32, i32) {
    %c0_i32 = arith.constant 0 : i32
    %c0_i32_0 = arith.constant 0 : i32
    %c0_i32_1 = arith.constant 0 : i32
    return %c0_i32, %c0_i32_0 : i32, i32
  }
  func.func @transform_3(%arg0: i32, %arg1: i32) -> (i32, i32) {
    %c0_i32 = arith.constant 0 : i32
    %c0_i32_0 = arith.constant 0 : i32
    return %arg0, %c0_i32 : i32, i32
  }
}

module attributes {stable_mosaic.version = 11 : i64} {
  func.func @_conv_pool_kernel(%arg0: i32, %arg1: i32, %arg2: memref<1x48x1152xbf16, #tpu.memory_space<vmem>>, %arg3: memref<1152x128xbf16, #tpu.memory_space<vmem>>, %arg4: memref<1x128xf32, #tpu.memory_space<vmem>>, %arg5: memref<48x128xf32, #tpu.memory_space<vmem>>, %arg6: memref<1x48x128xf32, #tpu.memory_space<vmem>>) attributes {dimension_semantics = [#tpu.dimension_semantics<parallel>, #tpu.dimension_semantics<arbitrary>], iteration_bounds = array<i64: 1, 1>, scalar_prefetch = 0 : i64, scratch_operands = 1 : i64, tpu.core_type = #tpu.core_type<tc>, window_params = [{transform_indices = @transform_0, window_bounds = array<i64: 1, 48, 1152>}, {transform_indices = @transform_1, window_bounds = array<i64: 1152, 128>}, {pipeline_mode = #tpu.pipeline_mode<synchronous>, transform_indices = @transform_2, window_bounds = array<i64: 1, 128>}, {transform_indices = @transform_3, window_bounds = array<i64: 48, 128>}]} {
    %c0_i32 = arith.constant 0 : i32
    %0 = arith.cmpi eq, %arg1, %c0_i32 : i32
    %1 = arith.extui %0 : i1 to i32
    %c0_i32_0 = arith.constant 0 : i32
    %2 = arith.cmpi ne, %1, %c0_i32_0 : i32
    scf.if %2 {
      %cst_13 = arith.constant 0.000000e+00 : f32
      %16 = vector.broadcast %cst_13 : f32 to vector<1x48x128xf32>
      %c0_14 = arith.constant 0 : index
      %c0_15 = arith.constant 0 : index
      %c0_16 = arith.constant 0 : index
      %17 = vector.load %arg6[%c0_14, %c0_15, %c0_16] : memref<1x48x128xf32, #tpu.memory_space<vmem>>, vector<1x48x128xf32>
      tpu.vector_store %arg6[%c0_14, %c0_15, %c0_16], %16 {strides = array<i32>} : memref<1x48x128xf32, #tpu.memory_space<vmem>>, vector<1x48x128xf32>,
    } else {
    }
    %c0 = arith.constant 0 : index
    %c0_1 = arith.constant 0 : index
    %c0_2 = arith.constant 0 : index
    %3 = vector.load %arg6[%c0, %c0_1, %c0_2] : memref<1x48x128xf32, #tpu.memory_space<vmem>>, vector<1x48x128xf32>
    %4 = vector.shape_cast %3 : vector<1x48x128xf32> to vector<48x128xf32>
    %c0_3 = arith.constant 0 : index
    %c0_4 = arith.constant 0 : index
    %c0_5 = arith.constant 0 : index
    %5 = vector.load %arg2[%c0_3, %c0_4, %c0_5] : memref<1x48x1152xbf16, #tpu.memory_space<vmem>>, vector<1x48x1152xbf16>
    %6 = vector.shape_cast %5 : vector<1x48x1152xbf16> to vector<48x1152xbf16>
    %c0_6 = arith.constant 0 : index
    %c0_7 = arith.constant 0 : index
    %7 = vector.load %arg3[%c0_6, %c0_7] : memref<1152x128xbf16, #tpu.memory_space<vmem>>, vector<1152x128xbf16>
    %cst = arith.constant dense<0.000000e+00> : vector<48x128xf32>
    %8 = tpu.matmul %6, %7, %cst {dimension_numbers = #tpu.dot_dimension_numbers<[1], [0], [0], [1], [0, 0, 1, 1], [], []>} : vector<48x1152xbf16>, vector<1152x128xbf16>, vector<48x128xf32> -> vector<48x128xf32>
    %9 = arith.addf %4, %8 : vector<48x128xf32>
    %c0_8 = arith.constant 0 : index
    %c0_9 = arith.constant 0 : index
    %c0_10 = arith.constant 0 : index
    %10 = vector.load %arg6[%c0_8, %c0_9, %c0_10] : memref<1x48x128xf32, #tpu.memory_space<vmem>>, vector<1x48x128xf32>
    %11 = vector.shape_cast %10 : vector<1x48x128xf32> to vector<48x128xf32>
    %12 = vector.shape_cast %9 : vector<48x128xf32> to vector<1x48x128xf32>
    tpu.vector_store %arg6[%c0_8, %c0_9, %c0_10], %12 {strides = array<i32>} : memref<1x48x128xf32, #tpu.memory_space<vmem>>, vector<1x48x128xf32>,
    %c0_i32_11 = arith.constant 0 : i32
    %13 = arith.cmpi eq, %arg1, %c0_i32_11 : i32
    %14 = arith.extui %13 : i1 to i32
    %c0_i32_12 = arith.constant 0 : i32
    %15 = arith.cmpi ne, %14, %c0_i32_12 : i32
    scf.if %15 {
      %c0_13 = arith.constant 0 : index
      %c0_14 = arith.constant 0 : index
      %c0_15 = arith.constant 0 : index
      %16 = vector.load %arg6[%c0_13, %c0_14, %c0_15] : memref<1x48x128xf32, #tpu.memory_space<vmem>>, vector<1x48x128xf32>
      %17 = vector.shape_cast %16 : vector<1x48x128xf32> to vector<48x128xf32>
      %c0_16 = arith.constant 0 : index
      %c0_17 = arith.constant 0 : index
      %18 = vector.load %arg4[%c0_16, %c0_17] : memref<1x128xf32, #tpu.memory_space<vmem>>, vector<1x128xf32>
      %19 = vector.broadcast %18 : vector<1x128xf32> to vector<48x128xf32>
      %20 = arith.addf %17, %19 : vector<48x128xf32>
      %cst_18 = arith.constant 0.000000e+00 : f32
      %21 = vector.broadcast %cst_18 : f32 to vector<48x128xf32>
      %22 = arith.maximumf %20, %21 : vector<48x128xf32>
      %c0_19 = arith.constant 0 : index
      %c0_20 = arith.constant 0 : index
      %23 = vector.load %arg5[%c0_19, %c0_20] : memref<48x128xf32, #tpu.memory_space<vmem>>, vector<48x128xf32>
      tpu.vector_store %arg5[%c0_19, %c0_20], %22 {strides = array<i32>} : memref<48x128xf32, #tpu.memory_space<vmem>>, vector<48x128xf32>,
    } else {
    }
    return
  }
  func.func @transform_0(%arg0: i32, %arg1: i32) -> (i32, i32, i32) {
    %c0_i32 = arith.constant 0 : i32
    %c0_i32_0 = arith.constant 0 : i32
    return %c0_i32, %arg0, %arg1 : i32, i32, i32
  }
  func.func @transform_1(%arg0: i32, %arg1: i32) -> (i32, i32) {
    %c0_i32 = arith.constant 0 : i32
    %c0_i32_0 = arith.constant 0 : i32
    return %arg1, %c0_i32 : i32, i32
  }
  func.func @transform_2(%arg0: i32, %arg1: i32) -> (i32, i32) {
    %c0_i32 = arith.constant 0 : i32
    %c0_i32_0 = arith.constant 0 : i32
    %c0_i32_1 = arith.constant 0 : i32
    return %c0_i32, %c0_i32_0 : i32, i32
  }
  func.func @transform_3(%arg0: i32, %arg1: i32) -> (i32, i32) {
    %c0_i32 = arith.constant 0 : i32
    %c0_i32_0 = arith.constant 0 : i32
    return %arg0, %c0_i32 : i32, i32
  }
}

module attributes {stable_mosaic.version = 11 : i64} {
  func.func @_avgpool_fc_kernel(%arg0: i32, %arg1: memref<2x24x128xf32, #tpu.memory_space<vmem>>, %arg2: memref<128x128xf32, #tpu.memory_space<vmem>>, %arg3: memref<1x128xf32, #tpu.memory_space<vmem>>, %arg4: memref<2x128xf32, #tpu.memory_space<vmem>>) attributes {dimension_semantics = [#tpu.dimension_semantics<arbitrary>], iteration_bounds = array<i64: 1>, scalar_prefetch = 0 : i64, scratch_operands = 0 : i64, tpu.core_type = #tpu.core_type<tc>, window_params = [{pipeline_mode = #tpu.pipeline_mode<synchronous>, transform_indices = @transform_0, window_bounds = array<i64: 2, 24, 128>}, {pipeline_mode = #tpu.pipeline_mode<synchronous>, transform_indices = @transform_1, window_bounds = array<i64: 128, 128>}, {pipeline_mode = #tpu.pipeline_mode<synchronous>, transform_indices = @transform_2, window_bounds = array<i64: 1, 128>}, {pipeline_mode = #tpu.pipeline_mode<synchronous>, transform_indices = @transform_3, window_bounds = array<i64: 2, 128>}]} {
    %c0 = arith.constant 0 : index
    %c0_0 = arith.constant 0 : index
    %c0_1 = arith.constant 0 : index
    %0 = vector.load %arg1[%c0, %c0_0, %c0_1] : memref<2x24x128xf32, #tpu.memory_space<vmem>>, vector<2x24x128xf32>
    %cst = arith.constant dense<0.000000e+00> : vector<2x128xf32>
    %1 = vector.multi_reduction <add>, %0, %cst [1] : vector<2x24x128xf32> to vector<2x128xf32>
    %cst_2 = arith.constant 0.0416666679 : f32
    %2 = vector.broadcast %cst_2 : f32 to vector<2x128xf32>
    %3 = arith.mulf %1, %2 : vector<2x128xf32>
    %c0_3 = arith.constant 0 : index
    %c0_4 = arith.constant 0 : index
    %4 = vector.load %arg2[%c0_3, %c0_4] : memref<128x128xf32, #tpu.memory_space<vmem>>, vector<128x128xf32>
    %cst_5 = arith.constant dense<0.000000e+00> : vector<2x128xf32>
    %5 = tpu.matmul %3, %4, %cst_5 {dimension_numbers = #tpu.dot_dimension_numbers<[1], [0], [0], [1], [0, 0, 1, 1], [], []>} : vector<2x128xf32>, vector<128x128xf32>, vector<2x128xf32> -> vector<2x128xf32>
    %c0_6 = arith.constant 0 : index
    %c0_7 = arith.constant 0 : index
    %6 = vector.load %arg3[%c0_6, %c0_7] : memref<1x128xf32, #tpu.memory_space<vmem>>, vector<1x128xf32>
    %7 = vector.broadcast %6 : vector<1x128xf32> to vector<2x128xf32>
    %8 = arith.addf %5, %7 : vector<2x128xf32>
    %c0_8 = arith.constant 0 : index
    %c0_9 = arith.constant 0 : index
    %9 = vector.load %arg4[%c0_8, %c0_9] : memref<2x128xf32, #tpu.memory_space<vmem>>, vector<2x128xf32>
    tpu.vector_store %arg4[%c0_8, %c0_9], %8 {strides = array<i32>} : memref<2x128xf32, #tpu.memory_space<vmem>>, vector<2x128xf32>,
    return
  }
  func.func @transform_0(%arg0: i32) -> (i32, i32, i32) {
    %c0_i32 = arith.constant 0 : i32
    %c0_i32_0 = arith.constant 0 : i32
    %c0_i32_1 = arith.constant 0 : i32
    %c0_i32_2 = arith.constant 0 : i32
    return %c0_i32, %c0_i32_0, %c0_i32_1 : i32, i32, i32
  }
  func.func @transform_1(%arg0: i32) -> (i32, i32) {
    %c0_i32 = arith.constant 0 : i32
    %c0_i32_0 = arith.constant 0 : i32
    %c0_i32_1 = arith.constant 0 : i32
    return %c0_i32, %c0_i32_0 : i32, i32
  }
  func.func @transform_2(%arg0: i32) -> (i32, i32) {
    %c0_i32 = arith.constant 0 : i32
    %c0_i32_0 = arith.constant 0 : i32
    %c0_i32_1 = arith.constant 0 : i32
    return %c0_i32, %c0_i32_0 : i32, i32
  }
  func.func @transform_3(%arg0: i32) -> (i32, i32) {
    %c0_i32 = arith.constant 0 : i32
    %c0_i32_0 = arith.constant 0 : i32
    %c0_i32_1 = arith.constant 0 : i32
    return %c0_i32, %c0_i32_0 : i32, i32
  }
}

</mosaic_0001>

<llo_original>
// kernel: _lambda_.6
$region0: #{_lambda_.6}
  #allocation0 [shape = 'u32[]', space=smem, size = 0x4, offset = 0x4, fixed_abs, tag = 'smem constant byte address 0x4 - core index']
  #allocation1 [shape = 'u32[144,128]{1,0:T(1,128)}', space=vmem, size = 0x12000, scoped, tag = 'internal scratch']
  #allocation2 [shape = 'f32[1,256,128]{2,1,0:T(8,128)}', space=vmem, size = 0x20000, scoped, tag = 'scratch operand']
  %s0 = inlined_call_operand.vmem [shape: bf16[1,1024,128], index: 0, kind: input, shape index: {}]
  %s1 = inlined_call_operand.vmem [shape: bf16[128,128], index: 1, kind: input, shape index: {}]
  %s2 = inlined_call_operand.vmem [shape: f32[1,128], index: 2, kind: input, shape index: {}]
  %s3 = inlined_call_operand.vmem [shape: f32[1024,128], index: 3, kind: output, shape index: {}]
  %s4 = sld [smem:[#allocation0]]
  $region53: #{_lambda_.6} parent=0
    _
  %s6 = ssub.s32 1, %s4
  %s7 = scalar_select 0, %s6, %s4
  loop: start=0, step=1, limit=6
  $region2: #{_lambda_.6} parent=0 // loop_pre_header
    _
  $region3: #{_lambda_.6} parent=0 // loop_header
    %s9 = sphi 0, %s13
    %p10 = scmp.ge.s32.totalorder %s9, 6
    %s16 = sphi 0, %s28
    %s17 = sphi 0, %s24
    %s18 = sphi 0, %s16
    %s19 = sphi 0, %s17
    %s20 = sphi 0, %s18
    %s21 = sphi 0, %s19
    %s33 = sphi 0, %s35
    %s36 = sphi 0, %s33
    %s37 = sphi 0, %s36
    %s53 = sphi 0, %s37
    %s59 = sphi 0, %s61
    %s62 = sphi 0, %s59
    %s63 = sphi 0, %s62
    %s79 = sphi 0, %s63
    %s83 = sphi 0, %s83
    %s85 = sphi 0, %s83
    %s86 = sphi 0, %s85
    %s100 = sphi 0, %s86
    %s106 = sphi 0, %s108
    %s109 = sphi 0, %s106
    %s110 = sphi 0, %s109
    %s126 = sphi 0, %s110
  $region4: #{_lambda_.6} parent=0 // loop_header_branch
    %12 = sbr.rel (%p10) target = $region8
  $region5: #{_lambda_.6} parent=0 // loop_body
    %s14 = ssub.s32 %s9, 1
    %s15 = ssub.s32 %s9, 2
    %s22 = sadd.s32 1, %s17
    %p23 = scmp.ge.s32.totalorder %s22, 1
    %s24 = scalar_select %p23, 0, %s22
    %s25 = sadd.s32 1, %s16
    %s26 = scalar_select %p23, %s25, %s16
    %p27 = scmp.ge.s32.totalorder %s26, 4
    %s28 = scalar_select %p27, 0, %s26
    %s29 = ssub.s32 %s16, %s28
    %s30 = ssub.s32 %s17, %s24
    %s31 = sor.u32 %s29, %s30
    %p32 = scmp.eq.s32.totalorder %s31, 0
    %s34 = sadd.s32 %s33, 1
    %s35 = scalar_select %p32, %s33, %s34
    %p38 = pneg %p32
    %p39 = scmp.eq.s32.totalorder %s9, 3
    %p40 = por %p38, %p39
    %p41 = scmp.ne.s32.totalorder %s33, %s36
    %p42 = scmp.eq.s32.totalorder %s9, 0
    %p43 = por %p41, %p42
    %p44 = scmp.ne.s32.totalorder %s33, %s36
    %p45 = scmp.eq.s32.totalorder %s14, 3
    %p46 = por %p44, %p45
    %p47 = scmp.ne.s32.totalorder %s36, %s37
    %p48 = scmp.eq.s32.totalorder %s14, 0
    %p49 = por %p47, %p48
    %p50 = scmp.ne.s32.totalorder %s36, %s37
    %p51 = scmp.eq.s32.totalorder %s15, 3
    %p52 = por %p50, %p51
    %p54 = scmp.ne.s32.totalorder %s37, %s53
    %p55 = scmp.eq.s32.totalorder %s15, 0
    %p56 = por %p54, %p55
    %s57 = ssub.s32 %s17, %s24
    %p58 = scmp.eq.s32.totalorder %s57, 0
    %s60 = sadd.s32 %s59, 1
    %s61 = scalar_select %p58, %s59, %s60
    %p64 = pneg %p58
    %p65 = scmp.eq.s32.totalorder %s9, 3
    %p66 = por %p64, %p65
    %p67 = scmp.ne.s32.totalorder %s59, %s62
    %p68 = scmp.eq.s32.totalorder %s9, 0
    %p69 = por %p67, %p68
    %p70 = scmp.ne.s32.totalorder %s59, %s62
    %p71 = scmp.eq.s32.totalorder %s14, 3
    %p72 = por %p70, %p71
    %p73 = scmp.ne.s32.totalorder %s62, %s63
    %p74 = scmp.eq.s32.totalorder %s14, 0
    %p75 = por %p73, %p74
    %p76 = scmp.ne.s32.totalorder %s62, %s63
    %p77 = scmp.eq.s32.totalorder %s15, 3
    %p78 = por %p76, %p77
    %p80 = scmp.ne.s32.totalorder %s63, %s79
    %p81 = scmp.eq.s32.totalorder %s15, 0
    %p82 = por %p80, %p81
    %s84 = sadd.s32 %s83, 1
    %p87 = scmp.eq.s32.totalorder %s9, 3
    %p88 = scmp.ne.s32.totalorder %s83, %s85
    %p89 = scmp.eq.s32.totalorder %s9, 0
    %p90 = por %p88, %p89
    %p91 = scmp.ne.s32.totalorder %s83, %s85
    %p92 = scmp.eq.s32.totalorder %s14, 3
    %p93 = por %p91, %p92
    %p94 = scmp.ne.s32.totalorder %s85, %s86
    %p95 = scmp.eq.s32.totalorder %s14, 0
    %p96 = por %p94, %p95
    %p97 = scmp.ne.s32.totalorder %s85, %s86
    %p98 = scmp.eq.s32.totalorder %s15, 3
    %p99 = por %p97, %p98
    %p101 = scmp.ne.s32.totalorder %s86, %s100
    %p102 = scmp.eq.s32.totalorder %s15, 0
    %p103 = por %p101, %p102
    %s104 = ssub.s32 %s16, %s28
    %p105 = scmp.eq.s32.totalorder %s104, 0
    %s107 = sadd.s32 %s106, 1
    %s108 = scalar_select %p105, %s106, %s107
    %p111 = pneg %p105
    %p112 = scmp.eq.s32.totalorder %s9, 3
    %p113 = por %p111, %p112
    %p114 = scmp.ne.s32.totalorder %s106, %s109
    %p115 = scmp.eq.s32.totalorder %s9, 0
    %p116 = por %p114, %p115
    %p117 = scmp.ne.s32.totalorder %s106, %s109
    %p118 = scmp.eq.s32.totalorder %s14, 3
    %p119 = por %p117, %p118
    %p120 = scmp.ne.s32.totalorder %s109, %s110
    %p121 = scmp.eq.s32.totalorder %s14, 0
    %p122 = por %p120, %p121
    %p123 = scmp.ne.s32.totalorder %s109, %s110
    %p124 = scmp.eq.s32.totalorder %s15, 3
    %p125 = por %p123, %p124
    %p127 = scmp.ne.s32.totalorder %s110, %s126
    %p128 = scmp.eq.s32.totalorder %s15, 0
    %p129 = por %p127, %p128
    %p130 = scmp.le.s32.totalorder 1, %s9
    %p131 = scmp.lt.s32.totalorder %s9, 5
    %p132 = pnand %p130, %p131
    %p133 = pneg %p132
    // Predicated region
    $region9: #{_lambda_.6} parent=5 // pred_check
      _
    $region10: #{_lambda_.6} parent=5 // pred_check_branch
      %135 = sbr.rel (%p132) target = $region12
    $region11: #{_lambda_.6} parent=5 // pred_region
      %s136 = ssub.s32 %s9, 1
      // Predicated region
      $region13: #{_lambda_.6} parent=11 // pred_check
        %p137 = pneg %p75
      $region14: #{_lambda_.6} parent=11 // pred_check_branch
        %139 = sbr.rel (%p137) target = $region16
      $region15: #{_lambda_.6} parent=11 // pred_region
        %s140 = smul.u32 16, %s19
        %p141 = scmp.lt.s32.totalorder %s140, 15
        %s142 = scalar_select %p141, %s140, 15
        %s143 = smul.addr %s142, 4
        %s144 = scalar_lea.vmem %s1, %s143
        %s145 = smul.u32 16, %s19
      $region16: #{_lambda_.6} parent=11 // pred_fallthru
        _
      // Predicated region
      $region17: #{_lambda_.6} parent=11 // pred_check
        %p146 = pneg %p96
      $region18: #{_lambda_.6} parent=11 // pred_check_branch
        %148 = sbr.rel (%p146) target = $region20
      $region19: #{_lambda_.6} parent=11 // pred_region
        _
      $region20: #{_lambda_.6} parent=11 // pred_fallthru
        _
    $region12: #{_lambda_.6} parent=5 // pred_fallthru
      _
    %p149 = scmp.lt.s32.totalorder %s9, 4
    // Predicated region
    $region21: #{_lambda_.6} parent=5 // pred_check
      %p150 = pneg %p149
    $region22: #{_lambda_.6} parent=5 // pred_check_branch
      %152 = sbr.rel (%p150) target = $region24
    $region23: #{_lambda_.6} parent=5 // pred_region
      // Predicated region
      $region25: #{_lambda_.6} parent=23 // pred_check
        %p153 = pneg %p43
      $region26: #{_lambda_.6} parent=23 // pred_check_branch
        %155 = sbr.rel (%p153) target = $region28
      $region27: #{_lambda_.6} parent=23 // pred_region
        %s156 = smul.u32 32, %s16
        %p157 = scmp.lt.s32.totalorder %s156, 127
        %s158 = scalar_select %p157, %s156, 127
        %p159 = scmp.lt.s32.totalorder %s17, 0
        %s160 = scalar_select %p159, %s17, 0
        %s161 = sadd.s32 %s160, %s158
        %s162 = smul.addr %s161, 4
        %s163 = scalar_lea.vmem %s0, %s162
        %s164 = smul.u32 32, %s16
      $region28: #{_lambda_.6} parent=23 // pred_fallthru
        _
    $region24: #{_lambda_.6} parent=5 // pred_fallthru
      _
    %p165 = scmp.le.s32.totalorder 1, %s9
    %p166 = scmp.lt.s32.totalorder %s9, 5
    %p167 = pnand %p165, %p166
    %p168 = pneg %p167
    // Predicated region
    $region29: #{_lambda_.6} parent=5 // pred_check
      _
    $region30: #{_lambda_.6} parent=5 // pred_check_branch
      %170 = sbr.rel (%p167) target = $region32
    $region31: #{_lambda_.6} parent=5 // pred_region
      %s171 = ssub.s32 %s9, 1
      %s172 = smul.u32 32, %s18
      %p173 = scmp.lt.s32.totalorder %s172, 127
      %s174 = scalar_select %p173, %s172, 127
      %p175 = scmp.lt.s32.totalorder %s19, 0
      %s176 = scalar_select %p175, %s19, 0
      %s177 = sadd.s32 %s176, %s174
      %s178 = smul.addr %s177, 4
      %s179 = scalar_lea.vmem %s0, %s178
      %p180 = pneg %p49
      %p181 = pneg %p46
      %s182 = smul.u32 16, %s19
      %p183 = scmp.lt.s32.totalorder %s182, 15
      %s184 = scalar_select %p183, %s182, 15
      %s185 = smul.addr %s184, 4
      %s186 = scalar_lea.vmem %s1, %s185
      %p187 = pneg %p75
      %p188 = pneg %p72
      %p189 = pneg %p96
      %p190 = pneg %p93
      %p191 = pneg %p122
      %p192 = pneg %p119
      %s193 = smul.u32 32, %s18
      %p194 = scmp.lt.s32.totalorder %s193, 127
      %s195 = scalar_select %p194, %s193, 127
      %s196 = smul.addr %s195, 8
      %s197 = scalar_lea.vmem %s3, %s196
      %s198 = smul.u32 32, %s18
      %p199 = scmp.lt.s32.totalorder %s198, 127
      %s200 = scalar_select %p199, %s198, 127
      %p201 = scmp.lt.s32.totalorder %s19, 0
      %s202 = scalar_select %p201, %s19, 0
      %s203 = sadd.s32 %s202, %s200
      %s204 = smul.addr %s203, 4
      %s205 = scalar_lea.vmem %s0, %s204
      %s206 = smul.u32 32, %s18
      %s207 = smul.u32 16, %s19
      %p208 = scmp.lt.s32.totalorder %s207, 15
      %s209 = scalar_select %p208, %s207, 15
      %s210 = smul.addr %s209, 4
      %s211 = scalar_lea.vmem %s1, %s210
      %s212 = smul.u32 16, %s19
      %s213 = smul.u32 32, %s18
      %p214 = scmp.lt.s32.totalorder %s213, 127
      %s215 = scalar_select %p214, %s213, 127
      %s216 = smul.addr %s215, 8
      %s217 = scalar_lea.vmem %s3, %s216
      %s218 = smul.u32 32, %s18
      %p220 = scmp.eq.s32.totalorder %s19, 0
      // Predicated region
      $region33: #{_lambda_.6} parent=31 // pred_check
        %p221 = pneg %p220
      $region34: #{_lambda_.6} parent=31 // pred_check_branch
        %223 = sbr.rel (%p221) target = $region36
      $region35: #{_lambda_.6} parent=31 // pred_region
        %224 = vst [vmem:[#allocation2] sm:$0xff] 0.0
        %225 = vst [vmem:[#allocation2 + $0x8] sm:$0xff] 0.0
        %226 = vst [vmem:[#allocation2 + $0x10] sm:$0xff] 0.0
        %227 = vst [vmem:[#allocation2 + $0x18] sm:$0xff] 0.0
        %228 = vst [vmem:[#allocation2 + $0x20] sm:$0xff] 0.0
        %229 = vst [vmem:[#allocation2 + $0x28] sm:$0xff] 0.0
        %230 = vst [vmem:[#allocation2 + $0x30] sm:$0xff] 0.0
        %231 = vst [vmem:[#allocation2 + $0x38] sm:$0xff] 0.0
        %232 = vst [vmem:[#allocation2 + $0x40] sm:$0xff] 0.0
        %233 = vst [vmem:[#allocation2 + $0x48] sm:$0xff] 0.0
        %234 = vst [vmem:[#allocation2 + $0x50] sm:$0xff] 0.0
        %235 = vst [vmem:[#allocation2 + $0x58] sm:$0xff] 0.0
        %236 = vst [vmem:[#allocation2 + $0x60] sm:$0xff] 0.0
        %237 = vst [vmem:[#allocation2 + $0x68] sm:$0xff] 0.0
        %238 = vst [vmem:[#allocation2 + $0x70] sm:$0xff] 0.0
        %239 = vst [vmem:[#allocation2 + $0x78] sm:$0xff] 0.0
        %240 = vst [vmem:[#allocation2 + $0x80] sm:$0xff] 0.0
        %241 = vst [vmem:[#allocation2 + $0x88] sm:$0xff] 0.0
        %242 = vst [vmem:[#allocation2 + $0x90] sm:$0xff] 0.0
        %243 = vst [vmem:[#allocation2 + $0x98] sm:$0xff] 0.0
        %244 = vst [vmem:[#allocation2 + $0xa0] sm:$0xff] 0.0
        %245 = vst [vmem:[#allocation2 + $0xa8] sm:$0xff] 0.0
        %246 = vst [vmem:[#allocation2 + $0xb0] sm:$0xff] 0.0
        %247 = vst [vmem:[#allocation2 + $0xb8] sm:$0xff] 0.0
        %248 = vst [vmem:[#allocation2 + $0xc0] sm:$0xff] 0.0
        %249 = vst [vmem:[#allocation2 + $0xc8] sm:$0xff] 0.0
        %250 = vst [vmem:[#allocation2 + $0xd0] sm:$0xff] 0.0
        %251 = vst [vmem:[#allocation2 + $0xd8] sm:$0xff] 0.0
        %252 = vst [vmem:[#allocation2 + $0xe0] sm:$0xff] 0.0
        %253 = vst [vmem:[#allocation2 + $0xe8] sm:$0xff] 0.0
        %254 = vst [vmem:[#allocation2 + $0xf0] sm:$0xff] 0.0
        %255 = vst [vmem:[#allocation2 + $0xf8] sm:$0xff] 0.0
      $region36: #{_lambda_.6} parent=31 // pred_fallthru
        _
      %v256 = vld [vmem:[#allocation2] sm:$0xff]
      %v257 = vld [vmem:[#allocation2 + $0x8] sm:$0xff]
      %v258 = vld [vmem:[#allocation2 + $0x10] sm:$0xff]
      %v259 = vld [vmem:[#allocation2 + $0x18] sm:$0xff]
      %v260 = vld [vmem:[#allocation2 + $0x20] sm:$0xff]
      %v261 = vld [vmem:[#allocation2 + $0x28] sm:$0xff]
      %v262 = vld [vmem:[#allocation2 + $0x30] sm:$0xff]
      %v263 = vld [vmem:[#allocation2 + $0x38] sm:$0xff]
      %v264 = vld [vmem:[#allocation2 + $0x40] sm:$0xff]
      %v265 = vld [vmem:[#allocation2 + $0x48] sm:$0xff]
      %v266 = vld [vmem:[#allocation2 + $0x50] sm:$0xff]
      %v267 = vld [vmem:[#allocation2 + $0x58] sm:$0xff]
      %v268 = vld [vmem:[#allocation2 + $0x60] sm:$0xff]
      %v269 = vld [vmem:[#allocation2 + $0x68] sm:$0xff]
      %v270 = vld [vmem:[#allocation2 + $0x70] sm:$0xff]
      %v271 = vld [vmem:[#allocation2 + $0x78] sm:$0xff]
      %v272 = vld [vmem:[#allocation2 + $0x80] sm:$0xff]
      %v273 = vld [vmem:[#allocation2 + $0x88] sm:$0xff]
      %v274 = vld [vmem:[#allocation2 + $0x90] sm:$0xff]
      %v275 = vld [vmem:[#allocation2 + $0x98] sm:$0xff]
      %v276 = vld [vmem:[#allocation2 + $0xa0] sm:$0xff]
      %v277 = vld [vmem:[#allocation2 + $0xa8] sm:$0xff]
      %v278 = vld [vmem:[#allocation2 + $0xb0] sm:$0xff]
      %v279 = vld [vmem:[#allocation2 + $0xb8] sm:$0xff]
      %v280 = vld [vmem:[#allocation2 + $0xc0] sm:$0xff]
      %v281 = vld [vmem:[#allocation2 + $0xc8] sm:$0xff]
      %v282 = vld [vmem:[#allocation2 + $0xd0] sm:$0xff]
      %v283 = vld [vmem:[#allocation2 + $0xd8] sm:$0xff]
      %v284 = vld [vmem:[#allocation2 + $0xe0] sm:$0xff]
      %v285 = vld [vmem:[#allocation2 + $0xe8] sm:$0xff]
      %v286 = vld [vmem:[#allocation2 + $0xf0] sm:$0xff]
      %v287 = vld [vmem:[#allocation2 + $0xf8] sm:$0xff]
      %v288 = vld [vmem:[%s205] sm:$0xf]
      %v289 = vld [vmem:[%s205 + $0x4] sm:$0xf]
      %v290 = vld [vmem:[%s205 + $0x8] sm:$0xf]
      %v291 = vld [vmem:[%s205 + $0xc] sm:$0xf]
      %v292 = vld [vmem:[%s205 + $0x10] sm:$0xf]
      %v293 = vld [vmem:[%s205 + $0x14] sm:$0xf]
      %v294 = vld [vmem:[%s205 + $0x18] sm:$0xf]
      %v295 = vld [vmem:[%s205 + $0x1c] sm:$0xf]
      %v296 = vld [vmem:[%s205 + $0x20] sm:$0xf]
      %v297 = vld [vmem:[%s205 + $0x24] sm:$0xf]
      %v298 = vld [vmem:[%s205 + $0x28] sm:$0xf]
      %v299 = vld [vmem:[%s205 + $0x2c] sm:$0xf]
      %v300 = vld [vmem:[%s205 + $0x30] sm:$0xf]
      %v301 = vld [vmem:[%s205 + $0x34] sm:$0xf]
      %v302 = vld [vmem:[%s205 + $0x38] sm:$0xf]
      %v303 = vld [vmem:[%s205 + $0x3c] sm:$0xf]
      %v304 = vld [vmem:[%s205 + $0x40] sm:$0xf]
      %v305 = vld [vmem:[%s205 + $0x44] sm:$0xf]
      %v306 = vld [vmem:[%s205 + $0x48] sm:$0xf]
      %v307 = vld [vmem:[%s205 + $0x4c] sm:$0xf]
      %v308 = vld [vmem:[%s205 + $0x50] sm:$0xf]
      %v309 = vld [vmem:[%s205 + $0x54] sm:$0xf]
      %v310 = vld [vmem:[%s205 + $0x58] sm:$0xf]
      %v311 = vld [vmem:[%s205 + $0x5c] sm:$0xf]
      %v312 = vld [vmem:[%s205 + $0x60] sm:$0xf]
      %v313 = vld [vmem:[%s205 + $0x64] sm:$0xf]
      %v314 = vld [vmem:[%s205 + $0x68] sm:$0xf]
      %v315 = vld [vmem:[%s205 + $0x6c] sm:$0xf]
      %v316 = vld [vmem:[%s205 + $0x70] sm:$0xf]
      %v317 = vld [vmem:[%s205 + $0x74] sm:$0xf]
      %v318 = vld [vmem:[%s205 + $0x78] sm:$0xf]
      %v319 = vld [vmem:[%s205 + $0x7c] sm:$0xf]
      %v320 = vld [vmem:[%s211] sm:$0xf]
      %v321 = vld [vmem:[%s211 + $0x4] sm:$0xf]
      %v322 = vld [vmem:[%s211 + $0x8] sm:$0xf]
      %v323 = vld [vmem:[%s211 + $0xc] sm:$0xf]
      %v324 = vld [vmem:[%s211 + $0x10] sm:$0xf]
      %v325 = vld [vmem:[%s211 + $0x14] sm:$0xf]
      %v326 = vld [vmem:[%s211 + $0x18] sm:$0xf]
      %v327 = vld [vmem:[%s211 + $0x1c] sm:$0xf]
      %v328 = vld [vmem:[%s211 + $0x20] sm:$0xf]
      %v329 = vld [vmem:[%s211 + $0x24] sm:$0xf]
      %v330 = vld [vmem:[%s211 + $0x28] sm:$0xf]
      %v331 = vld [vmem:[%s211 + $0x2c] sm:$0xf]
      %v332 = vld [vmem:[%s211 + $0x30] sm:$0xf]
      %v333 = vld [vmem:[%s211 + $0x34] sm:$0xf]
      %v334 = vld [vmem:[%s211 + $0x38] sm:$0xf]
      %v335 = vld [vmem:[%s211 + $0x3c] sm:$0xf]
      %v368 = vunpack.c.l.b16 %v288
      %v369 = vunpack.c.l.b16 %v289
      %v370 = vunpack.c.l.b16 %v290
      %v371 = vunpack.c.l.b16 %v291
      %v372 = vunpack.c.l.b16 %v292
      %v373 = vunpack.c.l.b16 %v293
      %v374 = vunpack.c.l.b16 %v294
      %v375 = vunpack.c.l.b16 %v295
      %v376 = vunpack.c.l.b16 %v296
      %v377 = vunpack.c.l.b16 %v297
      %v378 = vunpack.c.l.b16 %v298
      %v379 = vunpack.c.l.b16 %v299
      %v380 = vunpack.c.l.b16 %v300
      %v381 = vunpack.c.l.b16 %v301
      %v382 = vunpack.c.l.b16 %v302
      %v383 = vunpack.c.l.b16 %v303
      %v384 = vunpack.c.l.b16 %v304
      %v385 = vunpack.c.l.b16 %v305
      %v386 = vunpack.c.l.b16 %v306
      %v387 = vunpack.c.l.b16 %v307
      %v388 = vunpack.c.l.b16 %v308
      %v389 = vunpack.c.l.b16 %v309
      %v390 = vunpack.c.l.b16 %v310
      %v391 = vunpack.c.l.b16 %v311
      %v392 = vunpack.c.l.b16 %v312
      %v393 = vunpack.c.l.b16 %v313
      %v394 = vunpack.c.l.b16 %v314
      %v395 = vunpack.c.l.b16 %v315
      %v396 = vunpack.c.l.b16 %v316
      %v397 = vunpack.c.l.b16 %v317
      %v398 = vunpack.c.l.b16 %v318
      %v399 = vunpack.c.l.b16 %v319
      %v400 = vpack.c.b16 %v369, %v368
      %v401 = vpack.c.b16 %v371, %v370
      %v402 = vpack.c.b16 %v373, %v372
      %v403 = vpack.c.b16 %v375, %v374
      %v404 = vpack.c.b16 %v377, %v376
      %v405 = vpack.c.b16 %v379, %v378
      %v406 = vpack.c.b16 %v381, %v380
      %v407 = vpack.c.b16 %v383, %v382
      %v408 = vpack.c.b16 %v385, %v384
      %v409 = vpack.c.b16 %v387, %v386
      %v410 = vpack.c.b16 %v389, %v388
      %v411 = vpack.c.b16 %v391, %v390
      %v412 = vpack.c.b16 %v393, %v392
      %v413 = vpack.c.b16 %v395, %v394
      %v414 = vpack.c.b16 %v397, %v396
      %v415 = vpack.c.b16 %v399, %v398
      %v448 = vunpack.c.l.b16 %v320
      %v449 = vunpack.c.l.b16 %v321
      %v450 = vunpack.c.l.b16 %v322
      %v451 = vunpack.c.l.b16 %v323
      %v452 = vunpack.c.l.b16 %v324
      %v453 = vunpack.c.l.b16 %v325
      %v454 = vunpack.c.l.b16 %v326
      %v455 = vunpack.c.l.b16 %v327
      %v456 = vunpack.c.l.b16 %v328
      %v457 = vunpack.c.l.b16 %v329
      %v458 = vunpack.c.l.b16 %v330
      %v459 = vunpack.c.l.b16 %v331
      %v460 = vunpack.c.l.b16 %v332
      %v461 = vunpack.c.l.b16 %v333
      %v462 = vunpack.c.l.b16 %v334
      %v463 = vunpack.c.l.b16 %v335
      %v464 = vpack.c.b16 %v449, %v448
      %v465 = vpack.c.b16 %v451, %v450
      %v466 = vpack.c.b16 %v453, %v452
      %v467 = vpack.c.b16 %v455, %v454
      %v468 = vpack.c.b16 %v457, %v456
      %v469 = vpack.c.b16 %v459, %v458
      %v470 = vpack.c.b16 %v461, %v460
      %v471 = vpack.c.b16 %v463, %v462
      %480 = vmatprep.subr.bf16.mxu0 0
      %481 = vmatpush1.bf16.msra.mxu0 %v471
      %482 = vmatprep.subr.bf16.mxu0 0
      %483 = vmatpush1.bf16.msra.mxu0 %v470
      %484 = vmatprep.subr.bf16.mxu0 0
      %485 = vmatpush1.bf16.msra.mxu0 %v469
      %486 = vmatprep.subr.bf16.mxu0 0
      %487 = vmatpush1.bf16.msra.mxu0 %v468
      %488 = vmatprep.subr.bf16.mxu0 0
      %489 = vmatpush1.bf16.msra.mxu0 %v467
      %490 = vmatprep.subr.bf16.mxu0 0
      %491 = vmatpush1.bf16.msra.mxu0 %v466
      %492 = vmatprep.subr.bf16.mxu0 0
      %493 = vmatpush1.bf16.msra.mxu0 %v465
      %494 = vmatprep.subr.bf16.mxu0 0
      %495 = vmatpush1.bf16.msra.mxu0 %v464
      %496 = vmatprep.subr.bf16.mxu0 0
      %497 = vmatpush2.bf16.msra.mxu0 0
      %498 = vmatprep.subr.bf16.mxu0 0
      %499 = vmatpush2.bf16.msra.mxu0 0
      %500 = vmatprep.subr.bf16.mxu0 0
      %501 = vmatpush2.bf16.msra.mxu0 0
      %502 = vmatprep.subr.bf16.mxu0 0
      %503 = vmatpush2.bf16.msra.mxu0 0
      %504 = vmatprep.subr.bf16.mxu0 0
      %505 = vmatpush2.bf16.msra.mxu0 0
      %506 = vmatprep.subr.bf16.mxu0 0
      %507 = vmatpush2.bf16.msra.mxu0 0
      %508 = vmatprep.subr.bf16.mxu0 0
      %509 = vmatpush2.bf16.msra.mxu0 0
      %510 = vmatprep.subr.bf16.mxu0 0
      %511 = vmatpush2.bf16.msra.mxu0 0
      %512 = vmatprep.mubr.bf16.mxu0 0
      %513 = vmatmul.mubr.bf16.gmra.mxu0 %v400
      %v514 = vpop.f32.mrf.mxu0
      %v515 = vadd.f32 0.0, %v514
      %v516 = vpop.f32.mrf.mxu0
      %v517 = vpop.f32.mrf.mxu0
      %v518 = vadd.f32 0.0, %v517
      %v519 = vpop.f32.mrf.mxu0
      %520 = vmatprep.mubr.bf16.mxu0 0
      %521 = vmatmul.mubr.bf16.gmra.mxu0 %v401
      %v522 = vpop.f32.mrf.mxu0
      %v523 = vadd.f32 0.0, %v522
      %v524 = vpop.f32.mrf.mxu0
      %v525 = vpop.f32.mrf.mxu0
      %v526 = vadd.f32 0.0, %v525
      %v527 = vpop.f32.mrf.mxu0
      %528 = vmatprep.mubr.bf16.mxu0 0
      %529 = vmatmul.mubr.bf16.gmra.mxu0 %v402
      %v530 = vpop.f32.mrf.mxu0
      %v531 = vadd.f32 0.0, %v530
      %v532 = vpop.f32.mrf.mxu0
      %v533 = vpop.f32.mrf.mxu0
      %v534 = vadd.f32 0.0, %v533
      %v535 = vpop.f32.mrf.mxu0
      %536 = vmatprep.mubr.bf16.mxu0 0
      %537 = vmatmul.mubr.bf16.gmra.mxu0 %v403
      %v538 = vpop.f32.mrf.mxu0
      %v539 = vadd.f32 0.0, %v538
      %v540 = vpop.f32.mrf.mxu0
      %v541 = vpop.f32.mrf.mxu0
      %v542 = vadd.f32 0.0, %v541
      %v543 = vpop.f32.mrf.mxu0
      %544 = vmatprep.mubr.bf16.mxu0 0
      %545 = vmatmul.mubr.bf16.gmra.mxu0 %v404
      %v546 = vpop.f32.mrf.mxu0
      %v547 = vadd.f32 0.0, %v546
      %v548 = vpop.f32.mrf.mxu0
      %v549 = vpop.f32.mrf.mxu0
      %v550 = vadd.f32 0.0, %v549
      %v551 = vpop.f32.mrf.mxu0
      %552 = vmatprep.mubr.bf16.mxu0 0
      %553 = vmatmul.mubr.bf16.gmra.mxu0 %v405
      %v554 = vpop.f32.mrf.mxu0
      %v555 = vadd.f32 0.0, %v554
      %v556 = vpop.f32.mrf.mxu0
      %v557 = vpop.f32.mrf.mxu0
      %v558 = vadd.f32 0.0, %v557
      %v559 = vpop.f32.mrf.mxu0
      %560 = vmatprep.mubr.bf16.mxu0 0
      %561 = vmatmul.mubr.bf16.gmra.mxu0 %v406
      %v562 = vpop.f32.mrf.mxu0
      %v563 = vadd.f32 0.0, %v562
      %v564 = vpop.f32.mrf.mxu0
      %v565 = vpop.f32.mrf.mxu0
      %v566 = vadd.f32 0.0, %v565
      %v567 = vpop.f32.mrf.mxu0
      %568 = vmatprep.mubr.bf16.mxu0 0
      %569 = vmatmul.mubr.bf16.gmra.mxu0 %v407
      %v570 = vpop.f32.mrf.mxu0
      %v571 = vadd.f32 0.0, %v570
      %v572 = vpop.f32.mrf.mxu0
      %v573 = vpop.f32.mrf.mxu0
      %v574 = vadd.f32 0.0, %v573
      %v575 = vpop.f32.mrf.mxu0
      %576 = vmatprep.mubr.bf16.mxu0 0
      %577 = vmatmul.mubr.bf16.gmra.mxu0 %v408
      %v578 = vpop.f32.mrf.mxu0
      %v579 = vadd.f32 0.0, %v578
      %v580 = vpop.f32.mrf.mxu0
      %v581 = vpop.f32.mrf.mxu0
      %v582 = vadd.f32 0.0, %v581
      %v583 = vpop.f32.mrf.mxu0
      %584 = vmatprep.mubr.bf16.mxu0 0
      %585 = vmatmul.mubr.bf16.gmra.mxu0 %v409
      %v586 = vpop.f32.mrf.mxu0
      %v587 = vadd.f32 0.0, %v586
      %v588 = vpop.f32.mrf.mxu0
      %v589 = vpop.f32.mrf.mxu0
      %v590 = vadd.f32 0.0, %v589
      %v591 = vpop.f32.mrf.mxu0
      %592 = vmatprep.mubr.bf16.mxu0 0
      %593 = vmatmul.mubr.bf16.gmra.mxu0 %v410
      %v594 = vpop.f32.mrf.mxu0
      %v595 = vadd.f32 0.0, %v594
      %v596 = vpop.f32.mrf.mxu0
      %v597 = vpop.f32.mrf.mxu0
      %v598 = vadd.f32 0.0, %v597
      %v599 = vpop.f32.mrf.mxu0
      %600 = vmatprep.mubr.bf16.mxu0 0
      %601 = vmatmul.mubr.bf16.gmra.mxu0 %v411
      %v602 = vpop.f32.mrf.mxu0
      %v603 = vadd.f32 0.0, %v602
      %v604 = vpop.f32.mrf.mxu0
      %v605 = vpop.f32.mrf.mxu0
      %v606 = vadd.f32 0.0, %v605
      %v607 = vpop.f32.mrf.mxu0
      %608 = vmatprep.mubr.bf16.mxu0 0
      %609 = vmatmul.mubr.bf16.gmra.mxu0 %v412
      %v610 = vpop.f32.mrf.mxu0
      %v611 = vadd.f32 0.0, %v610
      %v612 = vpop.f32.mrf.mxu0
      %v613 = vpop.f32.mrf.mxu0
      %v614 = vadd.f32 0.0, %v613
      %v615 = vpop.f32.mrf.mxu0
      %616 = vmatprep.mubr.bf16.mxu0 0
      %617 = vmatmul.mubr.bf16.gmra.mxu0 %v413
      %v618 = vpop.f32.mrf.mxu0
      %v619 = vadd.f32 0.0, %v618
      %v620 = vpop.f32.mrf.mxu0
      %v621 = vpop.f32.mrf.mxu0
      %v622 = vadd.f32 0.0, %v621
      %v623 = vpop.f32.mrf.mxu0
      %624 = vmatprep.mubr.bf16.mxu0 0
      %625 = vmatmul.mubr.bf16.gmra.mxu0 %v414
      %v626 = vpop.f32.mrf.mxu0
      %v627 = vadd.f32 0.0, %v626
      %v628 = vpop.f32.mrf.mxu0
      %v629 = vpop.f32.mrf.mxu0
      %v630 = vadd.f32 0.0, %v629
      %v631 = vpop.f32.mrf.mxu0
      %632 = vmatprep.mubr.bf16.mxu0 0
      %633 = vmatmul.mubr.bf16.gmra.mxu0 %v415
      %v634 = vpop.f32.mrf.mxu0
      %v635 = vadd.f32 0.0, %v634
      %v636 = vpop.f32.mrf.mxu0
      %v637 = vpop.f32.mrf.mxu0
      %v638 = vadd.f32 0.0, %v637
      %v639 = vpop.f32.mrf.mxu0
      %640 = vdwg.mxu0
      %v641 = vadd.f32 %v256, %v515
      %v642 = vadd.f32 %v257, %v518
      %v643 = vadd.f32 %v258, %v523
      %v644 = vadd.f32 %v259, %v526
      %v645 = vadd.f32 %v260, %v531
      %v646 = vadd.f32 %v261, %v534
      %v647 = vadd.f32 %v262, %v539
      %v648 = vadd.f32 %v263, %v542
      %v649 = vadd.f32 %v264, %v547
      %v650 = vadd.f32 %v265, %v550
      %v651 = vadd.f32 %v266, %v555
      %v652 = vadd.f32 %v267, %v558
      %v653 = vadd.f32 %v268, %v563
      %v654 = vadd.f32 %v269, %v566
      %v655 = vadd.f32 %v270, %v571
      %v656 = vadd.f32 %v271, %v574
      %v657 = vadd.f32 %v272, %v579
      %v658 = vadd.f32 %v273, %v582
      %v659 = vadd.f32 %v274, %v587
      %v660 = vadd.f32 %v275, %v590
      %v661 = vadd.f32 %v276, %v595
      %v662 = vadd.f32 %v277, %v598
      %v663 = vadd.f32 %v278, %v603
      %v664 = vadd.f32 %v279, %v606
      %v665 = vadd.f32 %v280, %v611
      %v666 = vadd.f32 %v281, %v614
      %v667 = vadd.f32 %v282, %v619
      %v668 = vadd.f32 %v283, %v622
      %v669 = vadd.f32 %v284, %v627
      %v670 = vadd.f32 %v285, %v630
      %v671 = vadd.f32 %v286, %v635
      %v672 = vadd.f32 %v287, %v638
      %673 = vst [vmem:[#allocation2] sm:$0xff] %v641
      %674 = vst [vmem:[#allocation2 + $0x8] sm:$0xff] %v642
      %675 = vst [vmem:[#allocation2 + $0x10] sm:$0xff] %v643
      %676 = vst [vmem:[#allocation2 + $0x18] sm:$0xff] %v644
      %677 = vst [vmem:[#allocation2 + $0x20] sm:$0xff] %v645
      %678 = vst [vmem:[#allocation2 + $0x28] sm:$0xff] %v646
      %679 = vst [vmem:[#allocation2 + $0x30] sm:$0xff] %v647
      %680 = vst [vmem:[#allocation2 + $0x38] sm:$0xff] %v648
      %681 = vst [vmem:[#allocation2 + $0x40] sm:$0xff] %v649
      %682 = vst [vmem:[#allocation2 + $0x48] sm:$0xff] %v650
      %683 = vst [vmem:[#allocation2 + $0x50] sm:$0xff] %v651
      %684 = vst [vmem:[#allocation2 + $0x58] sm:$0xff] %v652
      %685 = vst [vmem:[#allocation2 + $0x60] sm:$0xff] %v653
      %686 = vst [vmem:[#allocation2 + $0x68] sm:$0xff] %v654
      %687 = vst [vmem:[#allocation2 + $0x70] sm:$0xff] %v655
      %688 = vst [vmem:[#allocation2 + $0x78] sm:$0xff] %v656
      %689 = vst [vmem:[#allocation2 + $0x80] sm:$0xff] %v657
      %690 = vst [vmem:[#allocation2 + $0x88] sm:$0xff] %v658
      %691 = vst [vmem:[#allocation2 + $0x90] sm:$0xff] %v659
      %692 = vst [vmem:[#allocation2 + $0x98] sm:$0xff] %v660
      %693 = vst [vmem:[#allocation2 + $0xa0] sm:$0xff] %v661
      %694 = vst [vmem:[#allocation2 + $0xa8] sm:$0xff] %v662
      %695 = vst [vmem:[#allocation2 + $0xb0] sm:$0xff] %v663
      %696 = vst [vmem:[#allocation2 + $0xb8] sm:$0xff] %v664
      %697 = vst [vmem:[#allocation2 + $0xc0] sm:$0xff] %v665
      %698 = vst [vmem:[#allocation2 + $0xc8] sm:$0xff] %v666
      %699 = vst [vmem:[#allocation2 + $0xd0] sm:$0xff] %v667
      %700 = vst [vmem:[#allocation2 + $0xd8] sm:$0xff] %v668
      %701 = vst [vmem:[#allocation2 + $0xe0] sm:$0xff] %v669
      %702 = vst [vmem:[#allocation2 + $0xe8] sm:$0xff] %v670
      %703 = vst [vmem:[#allocation2 + $0xf0] sm:$0xff] %v671
      %704 = vst [vmem:[#allocation2 + $0xf8] sm:$0xff] %v672
      // Predicated region
      $region37: #{_lambda_.6} parent=31 // pred_check
        %p705 = pneg %p220
      $region38: #{_lambda_.6} parent=31 // pred_check_branch
        %707 = sbr.rel (%p705) target = $region40
      $region39: #{_lambda_.6} parent=31 // pred_region
        %v708 = vld [vmem:[#allocation2] sm:$0xff]
        %v709 = vld [vmem:[#allocation2 + $0x8] sm:$0xff]
        %v710 = vld [vmem:[#allocation2 + $0x10] sm:$0xff]
        %v711 = vld [vmem:[#allocation2 + $0x18] sm:$0xff]
        %v712 = vld [vmem:[#allocation2 + $0x20] sm:$0xff]
        %v713 = vld [vmem:[#allocation2 + $0x28] sm:$0xff]
        %v714 = vld [vmem:[#allocation2 + $0x30] sm:$0xff]
        %v715 = vld [vmem:[#allocation2 + $0x38] sm:$0xff]
        %v716 = vld [vmem:[#allocation2 + $0x40] sm:$0xff]
        %v717 = vld [vmem:[#allocation2 + $0x48] sm:$0xff]
        %v718 = vld [vmem:[#allocation2 + $0x50] sm:$0xff]
        %v719 = vld [vmem:[#allocation2 + $0x58] sm:$0xff]
        %v720 = vld [vmem:[#allocation2 + $0x60] sm:$0xff]
        %v721 = vld [vmem:[#allocation2 + $0x68] sm:$0xff]
        %v722 = vld [vmem:[#allocation2 + $0x70] sm:$0xff]
        %v723 = vld [vmem:[#allocation2 + $0x78] sm:$0xff]
        %v724 = vld [vmem:[#allocation2 + $0x80] sm:$0xff]
        %v725 = vld [vmem:[#allocation2 + $0x88] sm:$0xff]
        %v726 = vld [vmem:[#allocation2 + $0x90] sm:$0xff]
        %v727 = vld [vmem:[#allocation2 + $0x98] sm:$0xff]
        %v728 = vld [vmem:[#allocation2 + $0xa0] sm:$0xff]
        %v729 = vld [vmem:[#allocation2 + $0xa8] sm:$0xff]
        %v730 = vld [vmem:[#allocation2 + $0xb0] sm:$0xff]
        %v731 = vld [vmem:[#allocation2 + $0xb8] sm:$0xff]
        %v732 = vld [vmem:[#allocation2 + $0xc0] sm:$0xff]
        %v733 = vld [vmem:[#allocation2 + $0xc8] sm:$0xff]
        %v734 = vld [vmem:[#allocation2 + $0xd0] sm:$0xff]
        %v735 = vld [vmem:[#allocation2 + $0xd8] sm:$0xff]
        %v736 = vld [vmem:[#allocation2 + $0xe0] sm:$0xff]
        %v737 = vld [vmem:[#allocation2 + $0xe8] sm:$0xff]
        %v738 = vld [vmem:[#allocation2 + $0xf0] sm:$0xff]
        %v739 = vld [vmem:[#allocation2 + $0xf8] sm:$0xff]
        %v740 = vld [vmem:[%s2] sm:$0x1]
        %v742 = vlaneseq
        %v743 = vshrl.u32 %v742, 7
        %v744 = vsub.s32 0, %v743
        %v745 = vrot.slane %v740, %v744
        %v747 = vadd.f32 %v708, %v745
        %v748 = vadd.f32 %v709, %v745
        %v749 = vadd.f32 %v710, %v745
        %v750 = vadd.f32 %v711, %v745
        %v751 = vadd.f32 %v712, %v745
        %v752 = vadd.f32 %v713, %v745
        %v753 = vadd.f32 %v714, %v745
        %v754 = vadd.f32 %v715, %v745
        %v755 = vadd.f32 %v716, %v745
        %v756 = vadd.f32 %v717, %v745
        %v757 = vadd.f32 %v718, %v745
        %v758 = vadd.f32 %v719, %v745
        %v759 = vadd.f32 %v720, %v745
        %v760 = vadd.f32 %v721, %v745
        %v761 = vadd.f32 %v722, %v745
        %v762 = vadd.f32 %v723, %v745
        %v763 = vadd.f32 %v724, %v745
        %v764 = vadd.f32 %v725, %v745
        %v765 = vadd.f32 %v726, %v745
        %v766 = vadd.f32 %v727, %v745
        %v767 = vadd.f32 %v728, %v745
        %v768 = vadd.f32 %v729, %v745
        %v769 = vadd.f32 %v730, %v745
        %v770 = vadd.f32 %v731, %v745
        %v771 = vadd.f32 %v732, %v745
        %v772 = vadd.f32 %v733, %v745
        %v773 = vadd.f32 %v734, %v745
        %v774 = vadd.f32 %v735, %v745
        %v775 = vadd.f32 %v736, %v745
        %v776 = vadd.f32 %v737, %v745
        %v777 = vadd.f32 %v738, %v745
        %v778 = vadd.f32 %v739, %v745
        %v779 = vmax.f32 %v747, 0.0
        %v780 = vmax.f32 %v748, 0.0
        %v781 = vmax.f32 %v749, 0.0
        %v782 = vmax.f32 %v750, 0.0
        %v783 = vmax.f32 %v751, 0.0
        %v784 = vmax.f32 %v752, 0.0
        %v785 = vmax.f32 %v753, 0.0
        %v786 = vmax.f32 %v754, 0.0
        %v787 = vmax.f32 %v755, 0.0
        %v788 = vmax.f32 %v756, 0.0
        %v789 = vmax.f32 %v757, 0.0
        %v790 = vmax.f32 %v758, 0.0
        %v791 = vmax.f32 %v759, 0.0
        %v792 = vmax.f32 %v760, 0.0
        %v793 = vmax.f32 %v761, 0.0
        %v794 = vmax.f32 %v762, 0.0
        %v795 = vmax.f32 %v763, 0.0
        %v796 = vmax.f32 %v764, 0.0
        %v797 = vmax.f32 %v765, 0.0
        %v798 = vmax.f32 %v766, 0.0
        %v799 = vmax.f32 %v767, 0.0
        %v800 = vmax.f32 %v768, 0.0
        %v801 = vmax.f32 %v769, 0.0
        %v802 = vmax.f32 %v770, 0.0
        %v803 = vmax.f32 %v771, 0.0
        %v804 = vmax.f32 %v772, 0.0
        %v805 = vmax.f32 %v773, 0.0
        %v806 = vmax.f32 %v774, 0.0
        %v807 = vmax.f32 %v775, 0.0
        %v808 = vmax.f32 %v776, 0.0
        %v809 = vmax.f32 %v777, 0.0
        %v810 = vmax.f32 %v778, 0.0
        %811 = vst [vmem:[%s217] sm:$0xff] %v779
        %812 = vst [vmem:[%s217 + $0x8] sm:$0xff] %v780
        %813 = vst [vmem:[%s217 + $0x10] sm:$0xff] %v781
        %814 = vst [vmem:[%s217 + $0x18] sm:$0xff] %v782
        %815 = vst [vmem:[%s217 + $0x20] sm:$0xff] %v783
        %816 = vst [vmem:[%s217 + $0x28] sm:$0xff] %v784
        %817 = vst [vmem:[%s217 + $0x30] sm:$0xff] %v785
        %818 = vst [vmem:[%s217 + $0x38] sm:$0xff] %v786
        %819 = vst [vmem:[%s217 + $0x40] sm:$0xff] %v787
        %820 = vst [vmem:[%s217 + $0x48] sm:$0xff] %v788
        %821 = vst [vmem:[%s217 + $0x50] sm:$0xff] %v789
        %822 = vst [vmem:[%s217 + $0x58] sm:$0xff] %v790
        %823 = vst [vmem:[%s217 + $0x60] sm:$0xff] %v791
        %824 = vst [vmem:[%s217 + $0x68] sm:$0xff] %v792
        %825 = vst [vmem:[%s217 + $0x70] sm:$0xff] %v793
        %826 = vst [vmem:[%s217 + $0x78] sm:$0xff] %v794
        %827 = vst [vmem:[%s217 + $0x80] sm:$0xff] %v795
        %828 = vst [vmem:[%s217 + $0x88] sm:$0xff] %v796
        %829 = vst [vmem:[%s217 + $0x90] sm:$0xff] %v797
        %830 = vst [vmem:[%s217 + $0x98] sm:$0xff] %v798
        %831 = vst [vmem:[%s217 + $0xa0] sm:$0xff] %v799
        %832 = vst [vmem:[%s217 + $0xa8] sm:$0xff] %v800
        %833 = vst [vmem:[%s217 + $0xb0] sm:$0xff] %v801
        %834 = vst [vmem:[%s217 + $0xb8] sm:$0xff] %v802
        %835 = vst [vmem:[%s217 + $0xc0] sm:$0xff] %v803
        %836 = vst [vmem:[%s217 + $0xc8] sm:$0xff] %v804
        %837 = vst [vmem:[%s217 + $0xd0] sm:$0xff] %v805
        %838 = vst [vmem:[%s217 + $0xd8] sm:$0xff] %v806
        %839 = vst [vmem:[%s217 + $0xe0] sm:$0xff] %v807
        %840 = vst [vmem:[%s217 + $0xe8] sm:$0xff] %v808
        %841 = vst [vmem:[%s217 + $0xf0] sm:$0xff] %v809
        %842 = vst [vmem:[%s217 + $0xf8] sm:$0xff] %v810
      $region40: #{_lambda_.6} parent=31 // pred_fallthru
        _
      %s843 = smul.u32 32, %s18
      %p844 = scmp.lt.s32.totalorder %s843, 127
      %s845 = scalar_select %p844, %s843, 127
      %s846 = smul.addr %s845, 8
      %s847 = scalar_lea.vmem %s3, %s846
      // Predicated region
      $region41: #{_lambda_.6} parent=31 // pred_check
        %p848 = pneg %p119
      $region42: #{_lambda_.6} parent=31 // pred_check_branch
        %850 = sbr.rel (%p848) target = $region44
      $region43: #{_lambda_.6} parent=31 // pred_region
        %s851 = smul.u32 32, %s18
      $region44: #{_lambda_.6} parent=31 // pred_fallthru
        _
    $region32: #{_lambda_.6} parent=5 // pred_fallthru
      _
    %p852 = scmp.le.s32.totalorder 2, %s9
    // Predicated region
    $region45: #{_lambda_.6} parent=5 // pred_check
      %p853 = pneg %p852
    $region46: #{_lambda_.6} parent=5 // pred_check_branch
      %855 = sbr.rel (%p853) target = $region48
    $region47: #{_lambda_.6} parent=5 // pred_region
      %s856 = ssub.s32 %s9, 2
      // Predicated region
      $region49: #{_lambda_.6} parent=47 // pred_check
        %p857 = pneg %p125
      $region50: #{_lambda_.6} parent=47 // pred_check_branch
        %859 = sbr.rel (%p857) target = $region52
      $region51: #{_lambda_.6} parent=47 // pred_region
        %s860 = smul.u32 32, %s20
        %p861 = scmp.lt.s32.totalorder %s860, 127
        %s862 = scalar_select %p861, %s860, 127
        %s863 = smul.addr %s862, 8
        %s864 = scalar_lea.vmem %s3, %s863
      $region52: #{_lambda_.6} parent=47 // pred_fallthru
        _
    $region48: #{_lambda_.6} parent=5 // pred_fallthru
      _
  $region6: #{_lambda_.6} parent=0 // loop_footer
    %s13 = sadd.s32 1, %s9
  $region7: #{_lambda_.6} parent=0 // loop_footer_branch
    %8 = sbr.rel target = $region3
  $region8: #{_lambda_.6} parent=0 // loop_exit
    _

// kernel: _lambda_.7
$region0: #{_lambda_.7}
  #allocation0 [shape = 'u32[]', space=smem, size = 0x4, offset = 0x4, fixed_abs, tag = 'smem constant byte address 0x4 - core index']
  #allocation1 [shape = 'u32[144,128]{1,0:T(1,128)}', space=vmem, size = 0x12000, scoped, tag = 'internal scratch']
  #allocation2 [shape = 'f32[3,256,128]{2,1,0:T(8,128)}', space=vmem, size = 0x60000, scoped, tag = 'scratch operand']
  %s0 = inlined_call_operand.vmem [shape: bf16[3,512,640], index: 0, kind: input, shape index: {}]
  %s1 = inlined_call_operand.vmem [shape: bf16[640,128], index: 1, kind: input, shape index: {}]
  %s2 = inlined_call_operand.vmem [shape: f32[1,128], index: 2, kind: input, shape index: {}]
  %s3 = inlined_call_operand.vmem [shape: f32[512,128], index: 3, kind: output, shape index: {}]
  %s4 = sld [smem:[#allocation0]]
  $region79: #{_lambda_.7} parent=0
    _
  %s6 = ssub.s32 1, %s4
  %s7 = scalar_select 0, %s6, %s4
  $region1: #{_lambda_.7} parent=0
    #allocation3 [shape = 'u8[1966080]{0}', space=vmem, size = 0x1e0000, scoped, tag = 'input window, operand 0']
    loop: start=0, step=1, limit=4
    $region2: #{_lambda_.7} parent=1 // loop_pre_header
      _
    $region3: #{_lambda_.7} parent=1 // loop_header
      %s9 = sphi 0, %s13
      %p10 = scmp.ge.s32.totalorder %s9, 4
      %s16 = sphi 0, %s28
      %s17 = sphi 0, %s24
      %s18 = sphi 0, %s16
      %s19 = sphi 0, %s17
      %s20 = sphi 0, %s18
      %s21 = sphi 0, %s19
      %s33 = sphi 0, %s35
      %s36 = sphi 0, %s33
      %s37 = sphi 0, %s36
      %s53 = sphi 0, %s37
      %s59 = sphi 0, %s61
      %s62 = sphi 0, %s59
      %s63 = sphi 0, %s62
      %s79 = sphi 0, %s63
      %s83 = sphi 0, %s83
      %s85 = sphi 0, %s83
      %s86 = sphi 0, %s85
      %s100 = sphi 0, %s86
      %s106 = sphi 0, %s108
      %s109 = sphi 0, %s106
      %s110 = sphi 0, %s109
      %s126 = sphi 0, %s110
    $region4: #{_lambda_.7} parent=1 // loop_header_branch
      %12 = sbr.rel (%p10) target = $region8
    $region5: #{_lambda_.7} parent=1 // loop_body
      %s14 = ssub.s32 %s9, 1
      %s15 = ssub.s32 %s9, 2
      %s22 = sadd.s32 1, %s17
      %p23 = scmp.ge.s32.totalorder %s22, 1
      %s24 = scalar_select %p23, 0, %s22
      %s25 = sadd.s32 1, %s16
      %s26 = scalar_select %p23, %s25, %s16
      %p27 = scmp.ge.s32.totalorder %s26, 2
      %s28 = scalar_select %p27, 0, %s26
      %s29 = ssub.s32 %s16, %s28
      %s30 = ssub.s32 %s17, %s24
      %s31 = sor.u32 %s29, %s30
      %p32 = scmp.eq.s32.totalorder %s31, 0
      %s34 = sadd.s32 %s33, 1
      %s35 = scalar_select %p32, %s33, %s34
      %p38 = pneg %p32
      %p39 = scmp.eq.s32.totalorder %s9, 1
      %p40 = por %p38, %p39
      %p41 = scmp.ne.s32.totalorder %s33, %s36
      %p42 = scmp.eq.s32.totalorder %s9, 0
      %p43 = por %p41, %p42
      %p44 = scmp.ne.s32.totalorder %s33, %s36
      %p45 = scmp.eq.s32.totalorder %s14, 1
      %p46 = por %p44, %p45
      %p47 = scmp.ne.s32.totalorder %s36, %s37
      %p48 = scmp.eq.s32.totalorder %s14, 0
      %p49 = por %p47, %p48
      %p50 = scmp.ne.s32.totalorder %s36, %s37
      %p51 = scmp.eq.s32.totalorder %s15, 1
      %p52 = por %p50, %p51
      %p54 = scmp.ne.s32.totalorder %s37, %s53
      %p55 = scmp.eq.s32.totalorder %s15, 0
      %p56 = por %p54, %p55
      %s57 = ssub.s32 %s17, %s24
      %p58 = scmp.eq.s32.totalorder %s57, 0
      %s60 = sadd.s32 %s59, 1
      %s61 = scalar_select %p58, %s59, %s60
      %p64 = pneg %p58
      %p65 = scmp.eq.s32.totalorder %s9, 1
      %p66 = por %p64, %p65
      %p67 = scmp.ne.s32.totalorder %s59, %s62
      %p68 = scmp.eq.s32.totalorder %s9, 0
      %p69 = por %p67, %p68
      %p70 = scmp.ne.s32.totalorder %s59, %s62
      %p71 = scmp.eq.s32.totalorder %s14, 1
      %p72 = por %p70, %p71
      %p73 = scmp.ne.s32.totalorder %s62, %s63
      %p74 = scmp.eq.s32.totalorder %s14, 0
      %p75 = por %p73, %p74
      %p76 = scmp.ne.s32.totalorder %s62, %s63
      %p77 = scmp.eq.s32.totalorder %s15, 1
      %p78 = por %p76, %p77
      %p80 = scmp.ne.s32.totalorder %s63, %s79
      %p81 = scmp.eq.s32.totalorder %s15, 0
      %p82 = por %p80, %p81
      %s84 = sadd.s32 %s83, 1
      %p87 = scmp.eq.s32.totalorder %s9, 1
      %p88 = scmp.ne.s32.totalorder %s83, %s85
      %p89 = scmp.eq.s32.totalorder %s9, 0
      %p90 = por %p88, %p89
      %p91 = scmp.ne.s32.totalorder %s83, %s85
      %p92 = scmp.eq.s32.totalorder %s14, 1
      %p93 = por %p91, %p92
      %p94 = scmp.ne.s32.totalorder %s85, %s86
      %p95 = scmp.eq.s32.totalorder %s14, 0
      %p96 = por %p94, %p95
      %p97 = scmp.ne.s32.totalorder %s85, %s86
      %p98 = scmp.eq.s32.totalorder %s15, 1
      %p99 = por %p97, %p98
      %p101 = scmp.ne.s32.totalorder %s86, %s100
      %p102 = scmp.eq.s32.totalorder %s15, 0
      %p103 = por %p101, %p102
      %s104 = ssub.s32 %s16, %s28
      %p105 = scmp.eq.s32.totalorder %s104, 0
      %s107 = sadd.s32 %s106, 1
      %s108 = scalar_select %p105, %s106, %s107
      %p111 = pneg %p105
      %p112 = scmp.eq.s32.totalorder %s9, 1
      %p113 = por %p111, %p112
      %p114 = scmp.ne.s32.totalorder %s106, %s109
      %p115 = scmp.eq.s32.totalorder %s9, 0
      %p116 = por %p114, %p115
      %p117 = scmp.ne.s32.totalorder %s106, %s109
      %p118 = scmp.eq.s32.totalorder %s14, 1
      %p119 = por %p117, %p118
      %p120 = scmp.ne.s32.totalorder %s109, %s110
      %p121 = scmp.eq.s32.totalorder %s14, 0
      %p122 = por %p120, %p121
      %p123 = scmp.ne.s32.totalorder %s109, %s110
      %p124 = scmp.eq.s32.totalorder %s15, 1
      %p125 = por %p123, %p124
      %p127 = scmp.ne.s32.totalorder %s110, %s126
      %p128 = scmp.eq.s32.totalorder %s15, 0
      %p129 = por %p127, %p128
      %p130 = scmp.le.s32.totalorder 1, %s9
      %p131 = scmp.lt.s32.totalorder %s9, 3
      %p132 = pnand %p130, %p131
      %p133 = pneg %p132
      // Predicated region
      $region9: #{_lambda_.7} parent=5 // pred_check
        _
      $region10: #{_lambda_.7} parent=5 // pred_check_branch
        %135 = sbr.rel (%p132) target = $region12
      $region11: #{_lambda_.7} parent=5 // pred_region
        %s136 = ssub.s32 %s9, 1
        // Predicated region
        $region13: #{_lambda_.7} parent=11 // pred_check
          %p137 = pneg %p75
        $region14: #{_lambda_.7} parent=11 // pred_check_branch
          %139 = sbr.rel (%p137) target = $region16
        $region15: #{_lambda_.7} parent=11 // pred_region
          %s140 = smul.u32 80, %s19
          %p141 = scmp.lt.s32.totalorder %s140, 79
          %s142 = scalar_select %p141, %s140, 79
          %s143 = smul.addr %s142, 4
          %s144 = scalar_lea.vmem %s1, %s143
          %s145 = smul.u32 80, %s19
        $region16: #{_lambda_.7} parent=11 // pred_fallthru
          _
        // Predicated region
        $region17: #{_lambda_.7} parent=11 // pred_check
          %p146 = pneg %p96
        $region18: #{_lambda_.7} parent=11 // pred_check_branch
          %148 = sbr.rel (%p146) target = $region20
        $region19: #{_lambda_.7} parent=11 // pred_region
          _
        $region20: #{_lambda_.7} parent=11 // pred_fallthru
          _
      $region12: #{_lambda_.7} parent=5 // pred_fallthru
        _
      %p149 = scmp.lt.s32.totalorder %s9, 2
      // Predicated region
      $region21: #{_lambda_.7} parent=5 // pred_check
        %p150 = pneg %p149
      $region22: #{_lambda_.7} parent=5 // pred_check_branch
        %152 = sbr.rel (%p150) target = $region24
      $region23: #{_lambda_.7} parent=5 // pred_region
        // Predicated region
        $region25: #{_lambda_.7} parent=23 // pred_check
          %p153 = pneg %p43
        $region26: #{_lambda_.7} parent=23 // pred_check_branch
          %155 = sbr.rel (%p153) target = $region28
        $region27: #{_lambda_.7} parent=23 // pred_region
          %s156 = sand.u32 %s33, 1
          %s157 = sand.u32 %s33, 1
          %s158 = smul.addr %s157, 1920
          %s159 = scalar_lea.vmem [#allocation3], %s158
          %s160 = smul.u32 32, %s16
          %s161 = smul.u32 5, %s17
          %s162 = smul.addr %s160, 5
          %s163 = sadd.s32 %s161, %s162
          %s164 = smul.addr %s163, 4
          %s165 = scalar_lea.vmem %s0, %s164
          // Predicated region
          $region29: #{_lambda_.7} parent=27 // pred_check
            _
          $region30: #{_lambda_.7} parent=27 // pred_check_branch
            %167 = sbr.rel (0) target = $region32
          $region31: #{_lambda_.7} parent=27 // pred_region
            // Predicated region
            $region33: #{_lambda_.7} parent=31 // pred_check
              _
            $region34: #{_lambda_.7} parent=31 // pred_check_branch
              %169 = sbr.rel (0) target = $region36
            $region35: #{_lambda_.7} parent=31 // pred_region
              %s170 = scalar_lea.vmem %s165, 16
              %s171 = scalar_lea.vmem %s159, 16 [#allocation3]
              loop: start=0, step=1, limit=1
              $region37: #{_lambda_.7} parent=35 // loop_pre_header
                _
              $region38: #{_lambda_.7} parent=35 // loop_header
                %s173 = sphi 0, %s177
                %p174 = scmp.ge.s32.totalorder %s173, 1
                %s178 = sphi %s165, %s165
                %s179 = sphi %s159, %s159
              $region39: #{_lambda_.7} parent=35 // loop_header_branch
                %176 = sbr.rel (%p174) target = $region43
              $region40: #{_lambda_.7} parent=35 // loop_body
                %v180 = vld [vmem:[%s178] sm:$0xff]
                %181 = vst [vmem:[%s179] sm:$0xff] %v180
                %v182 = vld [vmem:[%s178 + $0x8] sm:$0xff]
                %183 = vst [vmem:[%s179 + $0x8] sm:$0xff] %v182
                %v184 = vld [vmem:[%s178 + $0x14] sm:$0xff]
                %185 = vst [vmem:[%s179 + $0x14] sm:$0xff] %v184
                %v186 = vld [vmem:[%s178 + $0x1c] sm:$0xff]
                %187 = vst [vmem:[%s179 + $0x1c] sm:$0xff] %v186
                %v188 = vld [vmem:[%s178 + $0x28] sm:$0xff]
                %189 = vst [vmem:[%s179 + $0x28] sm:$0xff] %v188
                %v190 = vld [vmem:[%s178 + $0x30] sm:$0xff]
                %191 = vst [vmem:[%s179 + $0x30] sm:$0xff] %v190
                %v192 = vld [vmem:[%s178 + $0x3c] sm:$0xff]
                %193 = vst [vmem:[%s179 + $0x3c] sm:$0xff] %v192
                %v194 = vld [vmem:[%s178 + $0x44] sm:$0xff]
                %195 = vst [vmem:[%s179 + $0x44] sm:$0xff] %v194
                %v196 = vld [vmem:[%s178 + $0x50] sm:$0xff]
                %197 = vst [vmem:[%s179 + $0x50] sm:$0xff] %v196
                %v198 = vld [vmem:[%s178 + $0x58] sm:$0xff]
                %199 = vst [vmem:[%s179 + $0x58] sm:$0xff] %v198
                %v200 = vld [vmem:[%s178 + $0x64] sm:$0xff]
                %201 = vst [vmem:[%s179 + $0x64] sm:$0xff] %v200
                %v202 = vld [vmem:[%s178 + $0x6c] sm:$0xff]
                %203 = vst [vmem:[%s179 + $0x6c] sm:$0xff] %v202
                %v204 = vld [vmem:[%s178 + $0x78] sm:$0xff]
                %205 = vst [vmem:[%s179 + $0x78] sm:$0xff] %v204
                %v206 = vld [vmem:[%s178 + $0x80] sm:$0xff]
                %207 = vst [vmem:[%s179 + $0x80] sm:$0xff] %v206
                %v208 = vld [vmem:[%s178 + $0x8c] sm:$0xff]
                %209 = vst [vmem:[%s179 + $0x8c] sm:$0xff] %v208
                %v210 = vld [vmem:[%s178 + $0x94] sm:$0xff]
                %211 = vst [vmem:[%s179 + $0x94] sm:$0xff] %v210
                %v212 = vld [vmem:[%s178 + $0xa0] sm:$0xff]
                %213 = vst [vmem:[%s179 + $0xa0] sm:$0xff] %v212
                %v214 = vld [vmem:[%s178 + $0xa8] sm:$0xff]
                %215 = vst [vmem:[%s179 + $0xa8] sm:$0xff] %v214
                %v216 = vld [vmem:[%s178 + $0xb4] sm:$0xff]
                %217 = vst [vmem:[%s179 + $0xb4] sm:$0xff] %v216
                %v218 = vld [vmem:[%s178 + $0xbc] sm:$0xff]
                %219 = vst [vmem:[%s179 + $0xbc] sm:$0xff] %v218
                %v220 = vld [vmem:[%s178 + $0xc8] sm:$0xff]
                %221 = vst [vmem:[%s179 + $0xc8] sm:$0xff] %v220
                %v222 = vld [vmem:[%s178 + $0xd0] sm:$0xff]
                %223 = vst [vmem:[%s179 + $0xd0] sm:$0xff] %v222
                %v224 = vld [vmem:[%s178 + $0xdc] sm:$0xff]
                %225 = vst [vmem:[%s179 + $0xdc] sm:$0xff] %v224
                %v226 = vld [vmem:[%s178 + $0xe4] sm:$0xff]
                %227 = vst [vmem:[%s179 + $0xe4] sm:$0xff] %v226
                %v228 = vld [vmem:[%s178 + $0xf0] sm:$0xff]
                %229 = vst [vmem:[%s179 + $0xf0] sm:$0xff] %v228
                %v230 = vld [vmem:[%s178 + $0xf8] sm:$0xff]
                %231 = vst [vmem:[%s179 + $0xf8] sm:$0xff] %v230
                %v232 = vld [vmem:[%s178 + $0x104] sm:$0xff]
                %233 = vst [vmem:[%s179 + $0x104] sm:$0xff] %v232
                %v234 = vld [vmem:[%s178 + $0x10c] sm:$0xff]
                %235 = vst [vmem:[%s179 + $0x10c] sm:$0xff] %v234
                %v236 = vld [vmem:[%s178 + $0x118] sm:$0xff]
                %237 = vst [vmem:[%s179 + $0x118] sm:$0xff] %v236
                %v238 = vld [vmem:[%s178 + $0x120] sm:$0xff]
                %239 = vst [vmem:[%s179 + $0x120] sm:$0xff] %v238
                %v240 = vld [vmem:[%s178 + $0x12c] sm:$0xff]
                %241 = vst [vmem:[%s179 + $0x12c] sm:$0xff] %v240
                %v242 = vld [vmem:[%s178 + $0x134] sm:$0xff]
                %243 = vst [vmem:[%s179 + $0x134] sm:$0xff] %v242
                %v244 = vld [vmem:[%s178 + $0x140] sm:$0xff]
                %245 = vst [vmem:[%s179 + $0x140] sm:$0xff] %v244
                %v246 = vld [vmem:[%s178 + $0x148] sm:$0xff]
                %247 = vst [vmem:[%s179 + $0x148] sm:$0xff] %v246
                %v248 = vld [vmem:[%s178 + $0x154] sm:$0xff]
                %249 = vst [vmem:[%s179 + $0x154] sm:$0xff] %v248
                %v250 = vld [vmem:[%s178 + $0x15c] sm:$0xff]
                %251 = vst [vmem:[%s179 + $0x15c] sm:$0xff] %v250
                %v252 = vld [vmem:[%s178 + $0x168] sm:$0xff]
                %253 = vst [vmem:[%s179 + $0x168] sm:$0xff] %v252
                %v254 = vld [vmem:[%s178 + $0x170] sm:$0xff]
                %255 = vst [vmem:[%s179 + $0x170] sm:$0xff] %v254
                %v256 = vld [vmem:[%s178 + $0x17c] sm:$0xff]
                %257 = vst [vmem:[%s179 + $0x17c] sm:$0xff] %v256
                %v258 = vld [vmem:[%s178 + $0x184] sm:$0xff]
                %259 = vst [vmem:[%s179 + $0x184] sm:$0xff] %v258
                %v260 = vld [vmem:[%s178 + $0x190] sm:$0xff]
                %261 = vst [vmem:[%s179 + $0x190] sm:$0xff] %v260
                %v262 = vld [vmem:[%s178 + $0x198] sm:$0xff]
                %263 = vst [vmem:[%s179 + $0x198] sm:$0xff] %v262
                %v264 = vld [vmem:[%s178 + $0x1a4] sm:$0xff]
                %265 = vst [vmem:[%s179 + $0x1a4] sm:$0xff] %v264
                %v266 = vld [vmem:[%s178 + $0x1ac] sm:$0xff]
                %267 = vst [vmem:[%s179 + $0x1ac] sm:$0xff] %v266
                %v268 = vld [vmem:[%s178 + $0x1b8] sm:$0xff]
                %269 = vst [vmem:[%s179 + $0x1b8] sm:$0xff] %v268
                %v270 = vld [vmem:[%s178 + $0x1c0] sm:$0xff]
                %271 = vst [vmem:[%s179 + $0x1c0] sm:$0xff] %v270
                %v272 = vld [vmem:[%s178 + $0x1cc] sm:$0xff]
                %273 = vst [vmem:[%s179 + $0x1cc] sm:$0xff] %v272
                %v274 = vld [vmem:[%s178 + $0x1d4] sm:$0xff]
                %275 = vst [vmem:[%s179 + $0x1d4] sm:$0xff] %v274
                %v276 = vld [vmem:[%s178 + $0x1e0] sm:$0xff]
                %277 = vst [vmem:[%s179 + $0x1e0] sm:$0xff] %v276
                %v278 = vld [vmem:[%s178 + $0x1e8] sm:$0xff]
                %279 = vst [vmem:[%s179 + $0x1e8] sm:$0xff] %v278
                %v280 = vld [vmem:[%s178 + $0x1f4] sm:$0xff]
                %281 = vst [vmem:[%s179 + $0x1f4] sm:$0xff] %v280
                %v282 = vld [vmem:[%s178 + $0x1fc] sm:$0xff]
                %283 = vst [vmem:[%s179 + $0x1fc] sm:$0xff] %v282
                %v284 = vld [vmem:[%s178 + $0x208] sm:$0xff]
                %285 = vst [vmem:[%s179 + $0x208] sm:$0xff] %v284
                %v286 = vld [vmem:[%s178 + $0x210] sm:$0xff]
                %287 = vst [vmem:[%s179 + $0x210] sm:$0xff] %v286
                %v288 = vld [vmem:[%s178 + $0x21c] sm:$0xff]
                %289 = vst [vmem:[%s179 + $0x21c] sm:$0xff] %v288
                %v290 = vld [vmem:[%s178 + $0x224] sm:$0xff]
                %291 = vst [vmem:[%s179 + $0x224] sm:$0xff] %v290
                %v292 = vld [vmem:[%s178 + $0x230] sm:$0xff]
                %293 = vst [vmem:[%s179 + $0x230] sm:$0xff] %v292
                %v294 = vld [vmem:[%s178 + $0x238] sm:$0xff]
                %295 = vst [vmem:[%s179 + $0x238] sm:$0xff] %v294
                %v296 = vld [vmem:[%s178 + $0x244] sm:$0xff]
                %297 = vst [vmem:[%s179 + $0x244] sm:$0xff] %v296
                %v298 = vld [vmem:[%s178 + $0x24c] sm:$0xff]
                %299 = vst [vmem:[%s179 + $0x24c] sm:$0xff] %v298
                %v300 = vld [vmem:[%s178 + $0x258] sm:$0xff]
                %301 = vst [vmem:[%s179 + $0x258] sm:$0xff] %v300
                %v302 = vld [vmem:[%s178 + $0x260] sm:$0xff]
                %303 = vst [vmem:[%s179 + $0x260] sm:$0xff] %v302
                %v304 = vld [vmem:[%s178 + $0x26c] sm:$0xff]
                %305 = vst [vmem:[%s179 + $0x26c] sm:$0xff] %v304
                %v306 = vld [vmem:[%s178 + $0x274] sm:$0xff]
                %307 = vst [vmem:[%s179 + $0x274] sm:$0xff] %v306
                %v308 = vld [vmem:[%s178 + $0x500] sm:$0xff]
                %309 = vst [vmem:[%s179 + $0x280] sm:$0xff] %v308
                %v310 = vld [vmem:[%s178 + $0x508] sm:$0xff]
                %311 = vst [vmem:[%s179 + $0x288] sm:$0xff] %v310
                %v312 = vld [vmem:[%s178 + $0x514] sm:$0xff]
                %313 = vst [vmem:[%s179 + $0x294] sm:$0xff] %v312
                %v314 = vld [vmem:[%s178 + $0x51c] sm:$0xff]
                %315 = vst [vmem:[%s179 + $0x29c] sm:$0xff] %v314
                %v316 = vld [vmem:[%s178 + $0x528] sm:$0xff]
                %317 = vst [vmem:[%s179 + $0x2a8] sm:$0xff] %v316
                %v318 = vld [vmem:[%s178 + $0x530] sm:$0xff]
                %319 = vst [vmem:[%s179 + $0x2b0] sm:$0xff] %v318
                %v320 = vld [vmem:[%s178 + $0x53c] sm:$0xff]
                %321 = vst [vmem:[%s179 + $0x2bc] sm:$0xff] %v320
                %v322 = vld [vmem:[%s178 + $0x544] sm:$0xff]
                %323 = vst [vmem:[%s179 + $0x2c4] sm:$0xff] %v322
                %v324 = vld [vmem:[%s178 + $0x550] sm:$0xff]
                %325 = vst [vmem:[%s179 + $0x2d0] sm:$0xff] %v324
                %v326 = vld [vmem:[%s178 + $0x558] sm:$0xff]
                %327 = vst [vmem:[%s179 + $0x2d8] sm:$0xff] %v326
                %v328 = vld [vmem:[%s178 + $0x564] sm:$0xff]
                %329 = vst [vmem:[%s179 + $0x2e4] sm:$0xff] %v328
                %v330 = vld [vmem:[%s178 + $0x56c] sm:$0xff]
                %331 = vst [vmem:[%s179 + $0x2ec] sm:$0xff] %v330
                %v332 = vld [vmem:[%s178 + $0x578] sm:$0xff]
                %333 = vst [vmem:[%s179 + $0x2f8] sm:$0xff] %v332
                %v334 = vld [vmem:[%s178 + $0x580] sm:$0xff]
                %335 = vst [vmem:[%s179 + $0x300] sm:$0xff] %v334
                %v336 = vld [vmem:[%s178 + $0x58c] sm:$0xff]
                %337 = vst [vmem:[%s179 + $0x30c] sm:$0xff] %v336
                %v338 = vld [vmem:[%s178 + $0x594] sm:$0xff]
                %339 = vst [vmem:[%s179 + $0x314] sm:$0xff] %v338
                %v340 = vld [vmem:[%s178 + $0x5a0] sm:$0xff]
                %341 = vst [vmem:[%s179 + $0x320] sm:$0xff] %v340
                %v342 = vld [vmem:[%s178 + $0x5a8] sm:$0xff]
                %343 = vst [vmem:[%s179 + $0x328] sm:$0xff] %v342
                %v344 = vld [vmem:[%s178 + $0x5b4] sm:$0xff]
                %345 = vst [vmem:[%s179 + $0x334] sm:$0xff] %v344
                %v346 = vld [vmem:[%s178 + $0x5bc] sm:$0xff]
                %347 = vst [vmem:[%s179 + $0x33c] sm:$0xff] %v346
                %v348 = vld [vmem:[%s178 + $0x5c8] sm:$0xff]
                %349 = vst [vmem:[%s179 + $0x348] sm:$0xff] %v348
                %v350 = vld [vmem:[%s178 + $0x5d0] sm:$0xff]
                %351 = vst [vmem:[%s179 + $0x350] sm:$0xff] %v350
                %v352 = vld [vmem:[%s178 + $0x5dc] sm:$0xff]
                %353 = vst [vmem:[%s179 + $0x35c] sm:$0xff] %v352
                %v354 = vld [vmem:[%s178 + $0x5e4] sm:$0xff]
                %355 = vst [vmem:[%s179 + $0x364] sm:$0xff] %v354
                %v356 = vld [vmem:[%s178 + $0x5f0] sm:$0xff]
                %357 = vst [vmem:[%s179 + $0x370] sm:$0xff] %v356
                %v358 = vld [vmem:[%s178 + $0x5f8] sm:$0xff]
                %359 = vst [vmem:[%s179 + $0x378] sm:$0xff] %v358
                %v360 = vld [vmem:[%s178 + $0x604] sm:$0xff]
                %361 = vst [vmem:[%s179 + $0x384] sm:$0xff] %v360
                %v362 = vld [vmem:[%s178 + $0x60c] sm:$0xff]
                %363 = vst [vmem:[%s179 + $0x38c] sm:$0xff] %v362
                %v364 = vld [vmem:[%s178 + $0x618] sm:$0xff]
                %365 = vst [vmem:[%s179 + $0x398] sm:$0xff] %v364
                %v366 = vld [vmem:[%s178 + $0x620] sm:$0xff]
                %367 = vst [vmem:[%s179 + $0x3a0] sm:$0xff] %v366
                %v368 = vld [vmem:[%s178 + $0x62c] sm:$0xff]
                %369 = vst [vmem:[%s179 + $0x3ac] sm:$0xff] %v368
                %v370 = vld [vmem:[%s178 + $0x634] sm:$0xff]
                %371 = vst [vmem:[%s179 + $0x3b4] sm:$0xff] %v370
                %v372 = vld [vmem:[%s178 + $0x640] sm:$0xff]
                %373 = vst [vmem:[%s179 + $0x3c0] sm:$0xff] %v372
                %v374 = vld [vmem:[%s178 + $0x648] sm:$0xff]
                %375 = vst [vmem:[%s179 + $0x3c8] sm:$0xff] %v374
                %v376 = vld [vmem:[%s178 + $0x654] sm:$0xff]
                %377 = vst [vmem:[%s179 + $0x3d4] sm:$0xff] %v376
                %v378 = vld [vmem:[%s178 + $0x65c] sm:$0xff]
                %379 = vst [vmem:[%s179 + $0x3dc] sm:$0xff] %v378
                %v380 = vld [vmem:[%s178 + $0x668] sm:$0xff]
                %381 = vst [vmem:[%s179 + $0x3e8] sm:$0xff] %v380
                %v382 = vld [vmem:[%s178 + $0x670] sm:$0xff]
                %383 = vst [vmem:[%s179 + $0x3f0] sm:$0xff] %v382
                %v384 = vld [vmem:[%s178 + $0x67c] sm:$0xff]
                %385 = vst [vmem:[%s179 + $0x3fc] sm:$0xff] %v384
                %v386 = vld [vmem:[%s178 + $0x684] sm:$0xff]
                %387 = vst [vmem:[%s179 + $0x404] sm:$0xff] %v386
                %v388 = vld [vmem:[%s178 + $0x690] sm:$0xff]
                %389 = vst [vmem:[%s179 + $0x410] sm:$0xff] %v388
                %v390 = vld [vmem:[%s178 + $0x698] sm:$0xff]
                %391 = vst [vmem:[%s179 + $0x418] sm:$0xff] %v390
                %v392 = vld [vmem:[%s178 + $0x6a4] sm:$0xff]
                %393 = vst [vmem:[%s179 + $0x424] sm:$0xff] %v392
                %v394 = vld [vmem:[%s178 + $0x6ac] sm:$0xff]
                %395 = vst [vmem:[%s179 + $0x42c] sm:$0xff] %v394
                %v396 = vld [vmem:[%s178 + $0x6b8] sm:$0xff]
                %397 = vst [vmem:[%s179 + $0x438] sm:$0xff] %v396
                %v398 = vld [vmem:[%s178 + $0x6c0] sm:$0xff]
                %399 = vst [vmem:[%s179 + $0x440] sm:$0xff] %v398
                %v400 = vld [vmem:[%s178 + $0x6cc] sm:$0xff]
                %401 = vst [vmem:[%s179 + $0x44c] sm:$0xff] %v400
                %v402 = vld [vmem:[%s178 + $0x6d4] sm:$0xff]
                %403 = vst [vmem:[%s179 + $0x454] sm:$0xff] %v402
                %v404 = vld [vmem:[%s178 + $0x6e0] sm:$0xff]
                %405 = vst [vmem:[%s179 + $0x460] sm:$0xff] %v404
                %v406 = vld [vmem:[%s178 + $0x6e8] sm:$0xff]
                %407 = vst [vmem:[%s179 + $0x468] sm:$0xff] %v406
                %v408 = vld [vmem:[%s178 + $0x6f4] sm:$0xff]
                %409 = vst [vmem:[%s179 + $0x474] sm:$0xff] %v408
                %v410 = vld [vmem:[%s178 + $0x6fc] sm:$0xff]
                %411 = vst [vmem:[%s179 + $0x47c] sm:$0xff] %v410
                %v412 = vld [vmem:[%s178 + $0x708] sm:$0xff]
                %413 = vst [vmem:[%s179 + $0x488] sm:$0xff] %v412
                %v414 = vld [vmem:[%s178 + $0x710] sm:$0xff]
                %415 = vst [vmem:[%s179 + $0x490] sm:$0xff] %v414
                %v416 = vld [vmem:[%s178 + $0x71c] sm:$0xff]
                %417 = vst [vmem:[%s179 + $0x49c] sm:$0xff] %v416
                %v418 = vld [vmem:[%s178 + $0x724] sm:$0xff]
                %419 = vst [vmem:[%s179 + $0x4a4] sm:$0xff] %v418
                %v420 = vld [vmem:[%s178 + $0x730] sm:$0xff]
                %421 = vst [vmem:[%s179 + $0x4b0] sm:$0xff] %v420
                %v422 = vld [vmem:[%s178 + $0x738] sm:$0xff]
                %423 = vst [vmem:[%s179 + $0x4b8] sm:$0xff] %v422
                %v424 = vld [vmem:[%s178 + $0x744] sm:$0xff]
                %425 = vst [vmem:[%s179 + $0x4c4] sm:$0xff] %v424
                %v426 = vld [vmem:[%s178 + $0x74c] sm:$0xff]
                %427 = vst [vmem:[%s179 + $0x4cc] sm:$0xff] %v426
                %v428 = vld [vmem:[%s178 + $0x758] sm:$0xff]
                %429 = vst [vmem:[%s179 + $0x4d8] sm:$0xff] %v428
                %v430 = vld [vmem:[%s178 + $0x760] sm:$0xff]
                %431 = vst [vmem:[%s179 + $0x4e0] sm:$0xff] %v430
                %v432 = vld [vmem:[%s178 + $0x76c] sm:$0xff]
                %433 = vst [vmem:[%s179 + $0x4ec] sm:$0xff] %v432
                %v434 = vld [vmem:[%s178 + $0x774] sm:$0xff]
                %435 = vst [vmem:[%s179 + $0x4f4] sm:$0xff] %v434
                %v436 = vld [vmem:[%s178 + $0xa00] sm:$0xff]
                %437 = vst [vmem:[%s179 + $0x500] sm:$0xff] %v436
                %v438 = vld [vmem:[%s178 + $0xa08] sm:$0xff]
                %439 = vst [vmem:[%s179 + $0x508] sm:$0xff] %v438
                %v440 = vld [vmem:[%s178 + $0xa14] sm:$0xff]
                %441 = vst [vmem:[%s179 + $0x514] sm:$0xff] %v440
                %v442 = vld [vmem:[%s178 + $0xa1c] sm:$0xff]
                %443 = vst [vmem:[%s179 + $0x51c] sm:$0xff] %v442
                %v444 = vld [vmem:[%s178 + $0xa28] sm:$0xff]
                %445 = vst [vmem:[%s179 + $0x528] sm:$0xff] %v444
                %v446 = vld [vmem:[%s178 + $0xa30] sm:$0xff]
                %447 = vst [vmem:[%s179 + $0x530] sm:$0xff] %v446
                %v448 = vld [vmem:[%s178 + $0xa3c] sm:$0xff]
                %449 = vst [vmem:[%s179 + $0x53c] sm:$0xff] %v448
                %v450 = vld [vmem:[%s178 + $0xa44] sm:$0xff]
                %451 = vst [vmem:[%s179 + $0x544] sm:$0xff] %v450
                %v452 = vld [vmem:[%s178 + $0xa50] sm:$0xff]
                %453 = vst [vmem:[%s179 + $0x550] sm:$0xff] %v452
                %v454 = vld [vmem:[%s178 + $0xa58] sm:$0xff]
                %455 = vst [vmem:[%s179 + $0x558] sm:$0xff] %v454
                %v456 = vld [vmem:[%s178 + $0xa64] sm:$0xff]
                %457 = vst [vmem:[%s179 + $0x564] sm:$0xff] %v456
                %v458 = vld [vmem:[%s178 + $0xa6c] sm:$0xff]
                %459 = vst [vmem:[%s179 + $0x56c] sm:$0xff] %v458
                %v460 = vld [vmem:[%s178 + $0xa78] sm:$0xff]
                %461 = vst [vmem:[%s179 + $0x578] sm:$0xff] %v460
                %v462 = vld [vmem:[%s178 + $0xa80] sm:$0xff]
                %463 = vst [vmem:[%s179 + $0x580] sm:$0xff] %v462
                %v464 = vld [vmem:[%s178 + $0xa8c] sm:$0xff]
                %465 = vst [vmem:[%s179 + $0x58c] sm:$0xff] %v464
                %v466 = vld [vmem:[%s178 + $0xa94] sm:$0xff]
                %467 = vst [vmem:[%s179 + $0x594] sm:$0xff] %v466
                %v468 = vld [vmem:[%s178 + $0xaa0] sm:$0xff]
                %469 = vst [vmem:[%s179 + $0x5a0] sm:$0xff] %v468
                %v470 = vld [vmem:[%s178 + $0xaa8] sm:$0xff]
                %471 = vst [vmem:[%s179 + $0x5a8] sm:$0xff] %v470
                %v472 = vld [vmem:[%s178 + $0xab4] sm:$0xff]
                %473 = vst [vmem:[%s179 + $0x5b4] sm:$0xff] %v472
                %v474 = vld [vmem:[%s178 + $0xabc] sm:$0xff]
                %475 = vst [vmem:[%s179 + $0x5bc] sm:$0xff] %v474
                %v476 = vld [vmem:[%s178 + $0xac8] sm:$0xff]
                %477 = vst [vmem:[%s179 + $0x5c8] sm:$0xff] %v476
                %v478 = vld [vmem:[%s178 + $0xad0] sm:$0xff]
                %479 = vst [vmem:[%s179 + $0x5d0] sm:$0xff] %v478
                %v480 = vld [vmem:[%s178 + $0xadc] sm:$0xff]
                %481 = vst [vmem:[%s179 + $0x5dc] sm:$0xff] %v480
                %v482 = vld [vmem:[%s178 + $0xae4] sm:$0xff]
                %483 = vst [vmem:[%s179 + $0x5e4] sm:$0xff] %v482
                %v484 = vld [vmem:[%s178 + $0xaf0] sm:$0xff]
                %485 = vst [vmem:[%s179 + $0x5f0] sm:$0xff] %v484
                %v486 = vld [vmem:[%s178 + $0xaf8] sm:$0xff]
                %487 = vst [vmem:[%s179 + $0x5f8] sm:$0xff] %v486
                %v488 = vld [vmem:[%s178 + $0xb04] sm:$0xff]
                %489 = vst [vmem:[%s179 + $0x604] sm:$0xff] %v488
                %v490 = vld [vmem:[%s178 + $0xb0c] sm:$0xff]
                %491 = vst [vmem:[%s179 + $0x60c] sm:$0xff] %v490
                %v492 = vld [vmem:[%s178 + $0xb18] sm:$0xff]
                %493 = vst [vmem:[%s179 + $0x618] sm:$0xff] %v492
                %v494 = vld [vmem:[%s178 + $0xb20] sm:$0xff]
                %495 = vst [vmem:[%s179 + $0x620] sm:$0xff] %v494
                %v496 = vld [vmem:[%s178 + $0xb2c] sm:$0xff]
                %497 = vst [vmem:[%s179 + $0x62c] sm:$0xff] %v496
                %v498 = vld [vmem:[%s178 + $0xb34] sm:$0xff]
                %499 = vst [vmem:[%s179 + $0x634] sm:$0xff] %v498
                %v500 = vld [vmem:[%s178 + $0xb40] sm:$0xff]
                %501 = vst [vmem:[%s179 + $0x640] sm:$0xff] %v500
                %v502 = vld [vmem:[%s178 + $0xb48] sm:$0xff]
                %503 = vst [vmem:[%s179 + $0x648] sm:$0xff] %v502
                %v504 = vld [vmem:[%s178 + $0xb54] sm:$0xff]
                %505 = vst [vmem:[%s179 + $0x654] sm:$0xff] %v504
                %v506 = vld [vmem:[%s178 + $0xb5c] sm:$0xff]
                %507 = vst [vmem:[%s179 + $0x65c] sm:$0xff] %v506
                %v508 = vld [vmem:[%s178 + $0xb68] sm:$0xff]
                %509 = vst [vmem:[%s179 + $0x668] sm:$0xff] %v508
                %v510 = vld [vmem:[%s178 + $0xb70] sm:$0xff]
                %511 = vst [vmem:[%s179 + $0x670] sm:$0xff] %v510
                %v512 = vld [vmem:[%s178 + $0xb7c] sm:$0xff]
                %513 = vst [vmem:[%s179 + $0x67c] sm:$0xff] %v512
                %v514 = vld [vmem:[%s178 + $0xb84] sm:$0xff]
                %515 = vst [vmem:[%s179 + $0x684] sm:$0xff] %v514
                %v516 = vld [vmem:[%s178 + $0xb90] sm:$0xff]
                %517 = vst [vmem:[%s179 + $0x690] sm:$0xff] %v516
                %v518 = vld [vmem:[%s178 + $0xb98] sm:$0xff]
                %519 = vst [vmem:[%s179 + $0x698] sm:$0xff] %v518
                %v520 = vld [vmem:[%s178 + $0xba4] sm:$0xff]
                %521 = vst [vmem:[%s179 + $0x6a4] sm:$0xff] %v520
                %v522 = vld [vmem:[%s178 + $0xbac] sm:$0xff]
                %523 = vst [vmem:[%s179 + $0x6ac] sm:$0xff] %v522
                %v524 = vld [vmem:[%s178 + $0xbb8] sm:$0xff]
                %525 = vst [vmem:[%s179 + $0x6b8] sm:$0xff] %v524
                %v526 = vld [vmem:[%s178 + $0xbc0] sm:$0xff]
                %527 = vst [vmem:[%s179 + $0x6c0] sm:$0xff] %v526
                %v528 = vld [vmem:[%s178 + $0xbcc] sm:$0xff]
                %529 = vst [vmem:[%s179 + $0x6cc] sm:$0xff] %v528
                %v530 = vld [vmem:[%s178 + $0xbd4] sm:$0xff]
                %531 = vst [vmem:[%s179 + $0x6d4] sm:$0xff] %v530
                %v532 = vld [vmem:[%s178 + $0xbe0] sm:$0xff]
                %533 = vst [vmem:[%s179 + $0x6e0] sm:$0xff] %v532
                %v534 = vld [vmem:[%s178 + $0xbe8] sm:$0xff]
                %535 = vst [vmem:[%s179 + $0x6e8] sm:$0xff] %v534
                %v536 = vld [vmem:[%s178 + $0xbf4] sm:$0xff]
                %537 = vst [vmem:[%s179 + $0x6f4] sm:$0xff] %v536
                %v538 = vld [vmem:[%s178 + $0xbfc] sm:$0xff]
                %539 = vst [vmem:[%s179 + $0x6fc] sm:$0xff] %v538
                %v540 = vld [vmem:[%s178 + $0xc08] sm:$0xff]
                %541 = vst [vmem:[%s179 + $0x708] sm:$0xff] %v540
                %v542 = vld [vmem:[%s178 + $0xc10] sm:$0xff]
                %543 = vst [vmem:[%s179 + $0x710] sm:$0xff] %v542
                %v544 = vld [vmem:[%s178 + $0xc1c] sm:$0xff]
                %545 = vst [vmem:[%s179 + $0x71c] sm:$0xff] %v544
                %v546 = vld [vmem:[%s178 + $0xc24] sm:$0xff]
                %547 = vst [vmem:[%s179 + $0x724] sm:$0xff] %v546
                %v548 = vld [vmem:[%s178 + $0xc30] sm:$0xff]
                %549 = vst [vmem:[%s179 + $0x730] sm:$0xff] %v548
                %v550 = vld [vmem:[%s178 + $0xc38] sm:$0xff]
                %551 = vst [vmem:[%s179 + $0x738] sm:$0xff] %v550
                %v552 = vld [vmem:[%s178 + $0xc44] sm:$0xff]
                %553 = vst [vmem:[%s179 + $0x744] sm:$0xff] %v552
                %v554 = vld [vmem:[%s178 + $0xc4c] sm:$0xff]
                %555 = vst [vmem:[%s179 + $0x74c] sm:$0xff] %v554
                %v556 = vld [vmem:[%s178 + $0xc58] sm:$0xff]
                %557 = vst [vmem:[%s179 + $0x758] sm:$0xff] %v556
                %v558 = vld [vmem:[%s178 + $0xc60] sm:$0xff]
                %559 = vst [vmem:[%s179 + $0x760] sm:$0xff] %v558
                %v560 = vld [vmem:[%s178 + $0xc6c] sm:$0xff]
                %561 = vst [vmem:[%s179 + $0x76c] sm:$0xff] %v560
                %v562 = vld [vmem:[%s178 + $0xc74] sm:$0xff]
                %563 = vst [vmem:[%s179 + $0x774] sm:$0xff] %v562
              $region41: #{_lambda_.7} parent=35 // loop_footer
                %s177 = sadd.s32 1, %s173
              $region42: #{_lambda_.7} parent=35 // loop_footer_branch
                %172 = sbr.rel target = $region38
              $region43: #{_lambda_.7} parent=35 // loop_exit
                _
              %s565 = ssub.s32 16, 1
              loop: start=0, step=1, limit=1
              $region44: #{_lambda_.7} parent=35 // loop_pre_header
                _
              $region45: #{_lambda_.7} parent=35 // loop_header
                %s567 = sphi 0, %s571
                %p568 = scmp.ge.s32.totalorder %s567, 1
                %s572 = sphi %s170, %s170
                %s573 = sphi %s171, %s171
              $region46: #{_lambda_.7} parent=35 // loop_header_branch
                %570 = sbr.rel (%p568) target = $region50
              $region47: #{_lambda_.7} parent=35 // loop_body
                %v574 = vld [vmem:[%s572] sm:%s565]
                %575 = vst [vmem:[%s573] sm:%s565] %v574
                %v576 = vld [vmem:[%s572 + $0x14] sm:%s565]
                %577 = vst [vmem:[%s573 + $0x14] sm:%s565] %v576
                %v578 = vld [vmem:[%s572 + $0x28] sm:%s565]
                %579 = vst [vmem:[%s573 + $0x28] sm:%s565] %v578
                %v580 = vld [vmem:[%s572 + $0x3c] sm:%s565]
                %581 = vst [vmem:[%s573 + $0x3c] sm:%s565] %v580
                %v582 = vld [vmem:[%s572 + $0x50] sm:%s565]
                %583 = vst [vmem:[%s573 + $0x50] sm:%s565] %v582
                %v584 = vld [vmem:[%s572 + $0x64] sm:%s565]
                %585 = vst [vmem:[%s573 + $0x64] sm:%s565] %v584
                %v586 = vld [vmem:[%s572 + $0x78] sm:%s565]
                %587 = vst [vmem:[%s573 + $0x78] sm:%s565] %v586
                %v588 = vld [vmem:[%s572 + $0x8c] sm:%s565]
                %589 = vst [vmem:[%s573 + $0x8c] sm:%s565] %v588
                %v590 = vld [vmem:[%s572 + $0xa0] sm:%s565]
                %591 = vst [vmem:[%s573 + $0xa0] sm:%s565] %v590
                %v592 = vld [vmem:[%s572 + $0xb4] sm:%s565]
                %593 = vst [vmem:[%s573 + $0xb4] sm:%s565] %v592
                %v594 = vld [vmem:[%s572 + $0xc8] sm:%s565]
                %595 = vst [vmem:[%s573 + $0xc8] sm:%s565] %v594
                %v596 = vld [vmem:[%s572 + $0xdc] sm:%s565]
                %597 = vst [vmem:[%s573 + $0xdc] sm:%s565] %v596
                %v598 = vld [vmem:[%s572 + $0xf0] sm:%s565]
                %599 = vst [vmem:[%s573 + $0xf0] sm:%s565] %v598
                %v600 = vld [vmem:[%s572 + $0x104] sm:%s565]
                %601 = vst [vmem:[%s573 + $0x104] sm:%s565] %v600
                %v602 = vld [vmem:[%s572 + $0x118] sm:%s565]
                %603 = vst [vmem:[%s573 + $0x118] sm:%s565] %v602
                %v604 = vld [vmem:[%s572 + $0x12c] sm:%s565]
                %605 = vst [vmem:[%s573 + $0x12c] sm:%s565] %v604
                %v606 = vld [vmem:[%s572 + $0x140] sm:%s565]
                %607 = vst [vmem:[%s573 + $0x140] sm:%s565] %v606
                %v608 = vld [vmem:[%s572 + $0x154] sm:%s565]
                %609 = vst [vmem:[%s573 + $0x154] sm:%s565] %v608
                %v610 = vld [vmem:[%s572 + $0x168] sm:%s565]
                %611 = vst [vmem:[%s573 + $0x168] sm:%s565] %v610
                %v612 = vld [vmem:[%s572 + $0x17c] sm:%s565]
                %613 = vst [vmem:[%s573 + $0x17c] sm:%s565] %v612
                %v614 = vld [vmem:[%s572 + $0x190] sm:%s565]
                %615 = vst [vmem:[%s573 + $0x190] sm:%s565] %v614
                %v616 = vld [vmem:[%s572 + $0x1a4] sm:%s565]
                %617 = vst [vmem:[%s573 + $0x1a4] sm:%s565] %v616
                %v618 = vld [vmem:[%s572 + $0x1b8] sm:%s565]
                %619 = vst [vmem:[%s573 + $0x1b8] sm:%s565] %v618
                %v620 = vld [vmem:[%s572 + $0x1cc] sm:%s565]
                %621 = vst [vmem:[%s573 + $0x1cc] sm:%s565] %v620
                %v622 = vld [vmem:[%s572 + $0x1e0] sm:%s565]
                %623 = vst [vmem:[%s573 + $0x1e0] sm:%s565] %v622
                %v624 = vld [vmem:[%s572 + $0x1f4] sm:%s565]
                %625 = vst [vmem:[%s573 + $0x1f4] sm:%s565] %v624
                %v626 = vld [vmem:[%s572 + $0x208] sm:%s565]
                %627 = vst [vmem:[%s573 + $0x208] sm:%s565] %v626
                %v628 = vld [vmem:[%s572 + $0x21c] sm:%s565]
                %629 = vst [vmem:[%s573 + $0x21c] sm:%s565] %v628
                %v630 = vld [vmem:[%s572 + $0x230] sm:%s565]
                %631 = vst [vmem:[%s573 + $0x230] sm:%s565] %v630
                %v632 = vld [vmem:[%s572 + $0x244] sm:%s565]
                %633 = vst [vmem:[%s573 + $0x244] sm:%s565] %v632
                %v634 = vld [vmem:[%s572 + $0x258] sm:%s565]
                %635 = vst [vmem:[%s573 + $0x258] sm:%s565] %v634
                %v636 = vld [vmem:[%s572 + $0x26c] sm:%s565]
                %637 = vst [vmem:[%s573 + $0x26c] sm:%s565] %v636
                %v638 = vld [vmem:[%s572 + $0x500] sm:%s565]
                %639 = vst [vmem:[%s573 + $0x280] sm:%s565] %v638
                %v640 = vld [vmem:[%s572 + $0x514] sm:%s565]
                %641 = vst [vmem:[%s573 + $0x294] sm:%s565] %v640
                %v642 = vld [vmem:[%s572 + $0x528] sm:%s565]
                %643 = vst [vmem:[%s573 + $0x2a8] sm:%s565] %v642
                %v644 = vld [vmem:[%s572 + $0x53c] sm:%s565]
                %645 = vst [vmem:[%s573 + $0x2bc] sm:%s565] %v644
                %v646 = vld [vmem:[%s572 + $0x550] sm:%s565]
                %647 = vst [vmem:[%s573 + $0x2d0] sm:%s565] %v646
                %v648 = vld [vmem:[%s572 + $0x564] sm:%s565]
                %649 = vst [vmem:[%s573 + $0x2e4] sm:%s565] %v648
                %v650 = vld [vmem:[%s572 + $0x578] sm:%s565]
                %651 = vst [vmem:[%s573 + $0x2f8] sm:%s565] %v650
                %v652 = vld [vmem:[%s572 + $0x58c] sm:%s565]
                %653 = vst [vmem:[%s573 + $0x30c] sm:%s565] %v652
                %v654 = vld [vmem:[%s572 + $0x5a0] sm:%s565]
                %655 = vst [vmem:[%s573 + $0x320] sm:%s565] %v654
                %v656 = vld [vmem:[%s572 + $0x5b4] sm:%s565]
                %657 = vst [vmem:[%s573 + $0x334] sm:%s565] %v656
                %v658 = vld [vmem:[%s572 + $0x5c8] sm:%s565]
                %659 = vst [vmem:[%s573 + $0x348] sm:%s565] %v658
                %v660 = vld [vmem:[%s572 + $0x5dc] sm:%s565]
                %661 = vst [vmem:[%s573 + $0x35c] sm:%s565] %v660
                %v662 = vld [vmem:[%s572 + $0x5f0] sm:%s565]
                %663 = vst [vmem:[%s573 + $0x370] sm:%s565] %v662
                %v664 = vld [vmem:[%s572 + $0x604] sm:%s565]
                %665 = vst [vmem:[%s573 + $0x384] sm:%s565] %v664
                %v666 = vld [vmem:[%s572 + $0x618] sm:%s565]
                %667 = vst [vmem:[%s573 + $0x398] sm:%s565] %v666
                %v668 = vld [vmem:[%s572 + $0x62c] sm:%s565]
                %669 = vst [vmem:[%s573 + $0x3ac] sm:%s565] %v668
                %v670 = vld [vmem:[%s572 + $0x640] sm:%s565]
                %671 = vst [vmem:[%s573 + $0x3c0] sm:%s565] %v670
                %v672 = vld [vmem:[%s572 + $0x654] sm:%s565]
                %673 = vst [vmem:[%s573 + $0x3d4] sm:%s565] %v672
                %v674 = vld [vmem:[%s572 + $0x668] sm:%s565]
                %675 = vst [vmem:[%s573 + $0x3e8] sm:%s565] %v674
                %v676 = vld [vmem:[%s572 + $0x67c] sm:%s565]
                %677 = vst [vmem:[%s573 + $0x3fc] sm:%s565] %v676
                %v678 = vld [vmem:[%s572 + $0x690] sm:%s565]
                %679 = vst [vmem:[%s573 + $0x410] sm:%s565] %v678
                %v680 = vld [vmem:[%s572 + $0x6a4] sm:%s565]
                %681 = vst [vmem:[%s573 + $0x424] sm:%s565] %v680
                %v682 = vld [vmem:[%s572 + $0x6b8] sm:%s565]
                %683 = vst [vmem:[%s573 + $0x438] sm:%s565] %v682
                %v684 = vld [vmem:[%s572 + $0x6cc] sm:%s565]
                %685 = vst [vmem:[%s573 + $0x44c] sm:%s565] %v684
                %v686 = vld [vmem:[%s572 + $0x6e0] sm:%s565]
                %687 = vst [vmem:[%s573 + $0x460] sm:%s565] %v686
                %v688 = vld [vmem:[%s572 + $0x6f4] sm:%s565]
                %689 = vst [vmem:[%s573 + $0x474] sm:%s565] %v688
                %v690 = vld [vmem:[%s572 + $0x708] sm:%s565]
                %691 = vst [vmem:[%s573 + $0x488] sm:%s565] %v690
                %v692 = vld [vmem:[%s572 + $0x71c] sm:%s565]
                %693 = vst [vmem:[%s573 + $0x49c] sm:%s565] %v692
                %v694 = vld [vmem:[%s572 + $0x730] sm:%s565]
                %695 = vst [vmem:[%s573 + $0x4b0] sm:%s565] %v694
                %v696 = vld [vmem:[%s572 + $0x744] sm:%s565]
                %697 = vst [vmem:[%s573 + $0x4c4] sm:%s565] %v696
                %v698 = vld [vmem:[%s572 + $0x758] sm:%s565]
                %699 = vst [vmem:[%s573 + $0x4d8] sm:%s565] %v698
                %v700 = vld [vmem:[%s572 + $0x76c] sm:%s565]
                %701 = vst [vmem:[%s573 + $0x4ec] sm:%s565] %v700
                %v702 = vld [vmem:[%s572 + $0xa00] sm:%s565]
                %703 = vst [vmem:[%s573 + $0x500] sm:%s565] %v702
                %v704 = vld [vmem:[%s572 + $0xa14] sm:%s565]
                %705 = vst [vmem:[%s573 + $0x514] sm:%s565] %v704
                %v706 = vld [vmem:[%s572 + $0xa28] sm:%s565]
                %707 = vst [vmem:[%s573 + $0x528] sm:%s565] %v706
                %v708 = vld [vmem:[%s572 + $0xa3c] sm:%s565]
                %709 = vst [vmem:[%s573 + $0x53c] sm:%s565] %v708
                %v710 = vld [vmem:[%s572 + $0xa50] sm:%s565]
                %711 = vst [vmem:[%s573 + $0x550] sm:%s565] %v710
                %v712 = vld [vmem:[%s572 + $0xa64] sm:%s565]
                %713 = vst [vmem:[%s573 + $0x564] sm:%s565] %v712
                %v714 = vld [vmem:[%s572 + $0xa78] sm:%s565]
                %715 = vst [vmem:[%s573 + $0x578] sm:%s565] %v714
                %v716 = vld [vmem:[%s572 + $0xa8c] sm:%s565]
                %717 = vst [vmem:[%s573 + $0x58c] sm:%s565] %v716
                %v718 = vld [vmem:[%s572 + $0xaa0] sm:%s565]
                %719 = vst [vmem:[%s573 + $0x5a0] sm:%s565] %v718
                %v720 = vld [vmem:[%s572 + $0xab4] sm:%s565]
                %721 = vst [vmem:[%s573 + $0x5b4] sm:%s565] %v720
                %v722 = vld [vmem:[%s572 + $0xac8] sm:%s565]
                %723 = vst [vmem:[%s573 + $0x5c8] sm:%s565] %v722
                %v724 = vld [vmem:[%s572 + $0xadc] sm:%s565]
                %725 = vst [vmem:[%s573 + $0x5dc] sm:%s565] %v724
                %v726 = vld [vmem:[%s572 + $0xaf0] sm:%s565]
                %727 = vst [vmem:[%s573 + $0x5f0] sm:%s565] %v726
                %v728 = vld [vmem:[%s572 + $0xb04] sm:%s565]
                %729 = vst [vmem:[%s573 + $0x604] sm:%s565] %v728
                %v730 = vld [vmem:[%s572 + $0xb18] sm:%s565]
                %731 = vst [vmem:[%s573 + $0x618] sm:%s565] %v730
                %v732 = vld [vmem:[%s572 + $0xb2c] sm:%s565]
                %733 = vst [vmem:[%s573 + $0x62c] sm:%s565] %v732
                %v734 = vld [vmem:[%s572 + $0xb40] sm:%s565]
                %735 = vst [vmem:[%s573 + $0x640] sm:%s565] %v734
                %v736 = vld [vmem:[%s572 + $0xb54] sm:%s565]
                %737 = vst [vmem:[%s573 + $0x654] sm:%s565] %v736
                %v738 = vld [vmem:[%s572 + $0xb68] sm:%s565]
                %739 = vst [vmem:[%s573 + $0x668] sm:%s565] %v738
                %v740 = vld [vmem:[%s572 + $0xb7c] sm:%s565]
                %741 = vst [vmem:[%s573 + $0x67c] sm:%s565] %v740
                %v742 = vld [vmem:[%s572 + $0xb90] sm:%s565]
                %743 = vst [vmem:[%s573 + $0x690] sm:%s565] %v742
                %v744 = vld [vmem:[%s572 + $0xba4] sm:%s565]
                %745 = vst [vmem:[%s573 + $0x6a4] sm:%s565] %v744
                %v746 = vld [vmem:[%s572 + $0xbb8] sm:%s565]
                %747 = vst [vmem:[%s573 + $0x6b8] sm:%s565] %v746
                %v748 = vld [vmem:[%s572 + $0xbcc] sm:%s565]
                %749 = vst [vmem:[%s573 + $0x6cc] sm:%s565] %v748
                %v750 = vld [vmem:[%s572 + $0xbe0] sm:%s565]
                %751 = vst [vmem:[%s573 + $0x6e0] sm:%s565] %v750
                %v752 = vld [vmem:[%s572 + $0xbf4] sm:%s565]
                %753 = vst [vmem:[%s573 + $0x6f4] sm:%s565] %v752
                %v754 = vld [vmem:[%s572 + $0xc08] sm:%s565]
                %755 = vst [vmem:[%s573 + $0x708] sm:%s565] %v754
                %v756 = vld [vmem:[%s572 + $0xc1c] sm:%s565]
                %757 = vst [vmem:[%s573 + $0x71c] sm:%s565] %v756
                %v758 = vld [vmem:[%s572 + $0xc30] sm:%s565]
                %759 = vst [vmem:[%s573 + $0x730] sm:%s565] %v758
                %v760 = vld [vmem:[%s572 + $0xc44] sm:%s565]
                %761 = vst [vmem:[%s573 + $0x744] sm:%s565] %v760
                %v762 = vld [vmem:[%s572 + $0xc58] sm:%s565]
                %763 = vst [vmem:[%s573 + $0x758] sm:%s565] %v762
                %v764 = vld [vmem:[%s572 + $0xc6c] sm:%s565]
                %765 = vst [vmem:[%s573 + $0x76c] sm:%s565] %v764
              $region48: #{_lambda_.7} parent=35 // loop_footer
                %s571 = sadd.s32 1, %s567
              $region49: #{_lambda_.7} parent=35 // loop_footer_branch
                %566 = sbr.rel target = $region45
              $region50: #{_lambda_.7} parent=35 // loop_exit
                _
            $region36: #{_lambda_.7} parent=31 // pred_fallthru
              _
          $region32: #{_lambda_.7} parent=27 // pred_fallthru
            _
          %766 = vnop
        $region28: #{_lambda_.7} parent=23 // pred_fallthru
          _
      $region24: #{_lambda_.7} parent=5 // pred_fallthru
        _
      %p767 = scmp.le.s32.totalorder 1, %s9
      %p768 = scmp.lt.s32.totalorder %s9, 3
      %p769 = pnand %p767, %p768
      %p770 = pneg %p769
      // Predicated region
      $region51: #{_lambda_.7} parent=5 // pred_check
        _
      $region52: #{_lambda_.7} parent=5 // pred_check_branch
        %772 = sbr.rel (%p769) target = $region54
      $region53: #{_lambda_.7} parent=5 // pred_region
        %s773 = ssub.s32 %s9, 1
        %s774 = sand.u32 %s36, 1
        %s775 = sand.u32 %s36, 1
        %s776 = smul.addr %s775, 1920
        %s777 = scalar_lea.vmem [#allocation3], %s776
        // Predicated region
        $region55: #{_lambda_.7} parent=53 // pred_check
          %p778 = pneg %p49
        $region56: #{_lambda_.7} parent=53 // pred_check_branch
          %780 = sbr.rel (%p778) target = $region58
        $region57: #{_lambda_.7} parent=53 // pred_region
          _
        $region58: #{_lambda_.7} parent=53 // pred_fallthru
          _
        %s781 = sand.u32 %s36, 1
        %s782 = sand.u32 %s36, 1
        %s783 = smul.addr %s782, 1920
        %s784 = scalar_lea.vmem [#allocation3], %s783
        %p785 = pneg %p49
        %p786 = pneg %p46
        %s787 = smul.u32 80, %s19
        %p788 = scmp.lt.s32.totalorder %s787, 79
        %s789 = scalar_select %p788, %s787, 79
        %s790 = smul.addr %s789, 4
        %s791 = scalar_lea.vmem %s1, %s790
        %p792 = pneg %p75
        %p793 = pneg %p72
        %p794 = pneg %p96
        %p795 = pneg %p93
        %p796 = pneg %p122
        %p797 = pneg %p119
        %s798 = smul.u32 32, %s18
        %p799 = scmp.lt.s32.totalorder %s798, 63
        %s800 = scalar_select %p799, %s798, 63
        %s801 = smul.addr %s800, 8
        %s802 = scalar_lea.vmem %s3, %s801
        %s803 = smul.u32 32, %s18
        %s804 = smul.u32 5, %s19
        %s805 = smul.u32 80, %s19
        %p806 = scmp.lt.s32.totalorder %s805, 79
        %s807 = scalar_select %p806, %s805, 79
        %s808 = smul.addr %s807, 4
        %s809 = scalar_lea.vmem %s1, %s808
        %s810 = smul.u32 80, %s19
        %s811 = smul.u32 32, %s18
        %p812 = scmp.lt.s32.totalorder %s811, 63
        %s813 = scalar_select %p812, %s811, 63
        %s814 = smul.addr %s813, 8
        %s815 = scalar_lea.vmem %s3, %s814
        %s816 = smul.u32 32, %s18
        %p818 = scmp.eq.s32.totalorder %s19, 0
        // Predicated region
        $region59: #{_lambda_.7} parent=53 // pred_check
          %p819 = pneg %p818
        $region60: #{_lambda_.7} parent=53 // pred_check_branch
          %821 = sbr.rel (%p819) target = $region62
        $region61: #{_lambda_.7} parent=53 // pred_region
          %822 = vst [vmem:[#allocation2] sm:$0xff] 0.0
          %823 = vst [vmem:[#allocation2 + $0x8] sm:$0xff] 0.0
          %824 = vst [vmem:[#allocation2 + $0x10] sm:$0xff] 0.0
          %825 = vst [vmem:[#allocation2 + $0x18] sm:$0xff] 0.0
          %826 = vst [vmem:[#allocation2 + $0x20] sm:$0xff] 0.0
          %827 = vst [vmem:[#allocation2 + $0x28] sm:$0xff] 0.0
          %828 = vst [vmem:[#allocation2 + $0x30] sm:$0xff] 0.0
          %829 = vst [vmem:[#allocation2 + $0x38] sm:$0xff] 0.0
          %830 = vst [vmem:[#allocation2 + $0x40] sm:$0xff] 0.0
          %831 = vst [vmem:[#allocation2 + $0x48] sm:$0xff] 0.0
          %832 = vst [vmem:[#allocation2 + $0x50] sm:$0xff] 0.0
          %833 = vst [vmem:[#allocation2 + $0x58] sm:$0xff] 0.0
          %834 = vst [vmem:[#allocation2 + $0x60] sm:$0xff] 0.0
          %835 = vst [vmem:[#allocation2 + $0x68] sm:$0xff] 0.0
          %836 = vst [vmem:[#allocation2 + $0x70] sm:$0xff] 0.0
          %837 = vst [vmem:[#allocation2 + $0x78] sm:$0xff] 0.0
          %838 = vst [vmem:[#allocation2 + $0x80] sm:$0xff] 0.0
          %839 = vst [vmem:[#allocation2 + $0x88] sm:$0xff] 0.0
          %840 = vst [vmem:[#allocation2 + $0x90] sm:$0xff] 0.0
          %841 = vst [vmem:[#allocation2 + $0x98] sm:$0xff] 0.0
          %842 = vst [vmem:[#allocation2 + $0xa0] sm:$0xff] 0.0
          %843 = vst [vmem:[#allocation2 + $0xa8] sm:$0xff] 0.0
          %844 = vst [vmem:[#allocation2 + $0xb0] sm:$0xff] 0.0
          %845 = vst [vmem:[#allocation2 + $0xb8] sm:$0xff] 0.0
          %846 = vst [vmem:[#allocation2 + $0xc0] sm:$0xff] 0.0
          %847 = vst [vmem:[#allocation2 + $0xc8] sm:$0xff] 0.0
          %848 = vst [vmem:[#allocation2 + $0xd0] sm:$0xff] 0.0
          %849 = vst [vmem:[#allocation2 + $0xd8] sm:$0xff] 0.0
          %850 = vst [vmem:[#allocation2 + $0xe0] sm:$0xff] 0.0
          %851 = vst [vmem:[#allocation2 + $0xe8] sm:$0xff] 0.0
          %852 = vst [vmem:[#allocation2 + $0xf0] sm:$0xff] 0.0
          %853 = vst [vmem:[#allocation2 + $0xf8] sm:$0xff] 0.0
          %854 = vst [vmem:[#allocation2 + $0x100] sm:$0xff] 0.0
          %855 = vst [vmem:[#allocation2 + $0x108] sm:$0xff] 0.0
          %856 = vst [vmem:[#allocation2 + $0x110] sm:$0xff] 0.0
          %857 = vst [vmem:[#allocation2 + $0x118] sm:$0xff] 0.0
          %858 = vst [vmem:[#allocation2 + $0x120] sm:$0xff] 0.0
          %859 = vst [vmem:[#allocation2 + $0x128] sm:$0xff] 0.0
          %860 = vst [vmem:[#allocation2 + $0x130] sm:$0xff] 0.0
          %861 = vst [vmem:[#allocation2 + $0x138] sm:$0xff] 0.0
          %862 = vst [vmem:[#allocation2 + $0x140] sm:$0xff] 0.0
          %863 = vst [vmem:[#allocation2 + $0x148] sm:$0xff] 0.0
          %864 = vst [vmem:[#allocation2 + $0x150] sm:$0xff] 0.0
          %865 = vst [vmem:[#allocation2 + $0x158] sm:$0xff] 0.0
          %866 = vst [vmem:[#allocation2 + $0x160] sm:$0xff] 0.0
          %867 = vst [vmem:[#allocation2 + $0x168] sm:$0xff] 0.0
          %868 = vst [vmem:[#allocation2 + $0x170] sm:$0xff] 0.0
          %869 = vst [vmem:[#allocation2 + $0x178] sm:$0xff] 0.0
          %870 = vst [vmem:[#allocation2 + $0x180] sm:$0xff] 0.0
          %871 = vst [vmem:[#allocation2 + $0x188] sm:$0xff] 0.0
          %872 = vst [vmem:[#allocation2 + $0x190] sm:$0xff] 0.0
          %873 = vst [vmem:[#allocation2 + $0x198] sm:$0xff] 0.0
          %874 = vst [vmem:[#allocation2 + $0x1a0] sm:$0xff] 0.0
          %875 = vst [vmem:[#allocation2 + $0x1a8] sm:$0xff] 0.0
          %876 = vst [vmem:[#allocation2 + $0x1b0] sm:$0xff] 0.0
          %877 = vst [vmem:[#allocation2 + $0x1b8] sm:$0xff] 0.0
          %878 = vst [vmem:[#allocation2 + $0x1c0] sm:$0xff] 0.0
          %879 = vst [vmem:[#allocation2 + $0x1c8] sm:$0xff] 0.0
          %880 = vst [vmem:[#allocation2 + $0x1d0] sm:$0xff] 0.0
          %881 = vst [vmem:[#allocation2 + $0x1d8] sm:$0xff] 0.0
          %882 = vst [vmem:[#allocation2 + $0x1e0] sm:$0xff] 0.0
          %883 = vst [vmem:[#allocation2 + $0x1e8] sm:$0xff] 0.0
          %884 = vst [vmem:[#allocation2 + $0x1f0] sm:$0xff] 0.0
          %885 = vst [vmem:[#allocation2 + $0x1f8] sm:$0xff] 0.0
          %886 = vst [vmem:[#allocation2 + $0x200] sm:$0xff] 0.0
          %887 = vst [vmem:[#allocation2 + $0x208] sm:$0xff] 0.0
          %888 = vst [vmem:[#allocation2 + $0x210] sm:$0xff] 0.0
          %889 = vst [vmem:[#allocation2 + $0x218] sm:$0xff] 0.0
          %890 = vst [vmem:[#allocation2 + $0x220] sm:$0xff] 0.0
          %891 = vst [vmem:[#allocation2 + $0x228] sm:$0xff] 0.0
          %892 = vst [vmem:[#allocation2 + $0x230] sm:$0xff] 0.0
          %893 = vst [vmem:[#allocation2 + $0x238] sm:$0xff] 0.0
          %894 = vst [vmem:[#allocation2 + $0x240] sm:$0xff] 0.0
          %895 = vst [vmem:[#allocation2 + $0x248] sm:$0xff] 0.0
          %896 = vst [vmem:[#allocation2 + $0x250] sm:$0xff] 0.0
          %897 = vst [vmem:[#allocation2 + $0x258] sm:$0xff] 0.0
          %898 = vst [vmem:[#allocation2 + $0x260] sm:$0xff] 0.0
          %899 = vst [vmem:[#allocation2 + $0x268] sm:$0xff] 0.0
          %900 = vst [vmem:[#allocation2 + $0x270] sm:$0xff] 0.0
          %901 = vst [vmem:[#allocation2 + $0x278] sm:$0xff] 0.0
          %902 = vst [vmem:[#allocation2 + $0x280] sm:$0xff] 0.0
          %903 = vst [vmem:[#allocation2 + $0x288] sm:$0xff] 0.0
          %904 = vst [vmem:[#allocation2 + $0x290] sm:$0xff] 0.0
          %905 = vst [vmem:[#allocation2 + $0x298] sm:$0xff] 0.0
          %906 = vst [vmem:[#allocation2 + $0x2a0] sm:$0xff] 0.0
          %907 = vst [vmem:[#allocation2 + $0x2a8] sm:$0xff] 0.0
          %908 = vst [vmem:[#allocation2 + $0x2b0] sm:$0xff] 0.0
          %909 = vst [vmem:[#allocation2 + $0x2b8] sm:$0xff] 0.0
          %910 = vst [vmem:[#allocation2 + $0x2c0] sm:$0xff] 0.0
          %911 = vst [vmem:[#allocation2 + $0x2c8] sm:$0xff] 0.0
          %912 = vst [vmem:[#allocation2 + $0x2d0] sm:$0xff] 0.0
          %913 = vst [vmem:[#allocation2 + $0x2d8] sm:$0xff] 0.0
          %914 = vst [vmem:[#allocation2 + $0x2e0] sm:$0xff] 0.0
          %915 = vst [vmem:[#allocation2 + $0x2e8] sm:$0xff] 0.0
          %916 = vst [vmem:[#allocation2 + $0x2f0] sm:$0xff] 0.0
          %917 = vst [vmem:[#allocation2 + $0x2f8] sm:$0xff] 0.0
        $region62: #{_lambda_.7} parent=53 // pred_fallthru
          _
        %v918 = vld [vmem:[#allocation2] sm:$0xff]
        %v919 = vld [vmem:[#allocation2 + $0x8] sm:$0xff]
        %v920 = vld [vmem:[#allocation2 + $0x10] sm:$0xff]
        %v921 = vld [vmem:[#allocation2 + $0x18] sm:$0xff]
        %v922 = vld [vmem:[#allocation2 + $0x20] sm:$0xff]
        %v923 = vld [vmem:[#allocation2 + $0x28] sm:$0xff]
        %v924 = vld [vmem:[#allocation2 + $0x30] sm:$0xff]
        %v925 = vld [vmem:[#allocation2 + $0x38] sm:$0xff]
        %v926 = vld [vmem:[#allocation2 + $0x40] sm:$0xff]
        %v927 = vld [vmem:[#allocation2 + $0x48] sm:$0xff]
        %v928 = vld [vmem:[#allocation2 + $0x50] sm:$0xff]
        %v929 = vld [vmem:[#allocation2 + $0x58] sm:$0xff]
        %v930 = vld [vmem:[#allocation2 + $0x60] sm:$0xff]
        %v931 = vld [vmem:[#allocation2 + $0x68] sm:$0xff]
        %v932 = vld [vmem:[#allocation2 + $0x70] sm:$0xff]
        %v933 = vld [vmem:[#allocation2 + $0x78] sm:$0xff]
        %v934 = vld [vmem:[#allocation2 + $0x80] sm:$0xff]
        %v935 = vld [vmem:[#allocation2 + $0x88] sm:$0xff]
        %v936 = vld [vmem:[#allocation2 + $0x90] sm:$0xff]
        %v937 = vld [vmem:[#allocation2 + $0x98] sm:$0xff]
        %v938 = vld [vmem:[#allocation2 + $0xa0] sm:$0xff]
        %v939 = vld [vmem:[#allocation2 + $0xa8] sm:$0xff]
        %v940 = vld [vmem:[#allocation2 + $0xb0] sm:$0xff]
        %v941 = vld [vmem:[#allocation2 + $0xb8] sm:$0xff]
        %v942 = vld [vmem:[#allocation2 + $0xc0] sm:$0xff]
        %v943 = vld [vmem:[#allocation2 + $0xc8] sm:$0xff]
        %v944 = vld [vmem:[#allocation2 + $0xd0] sm:$0xff]
        %v945 = vld [vmem:[#allocation2 + $0xd8] sm:$0xff]
        %v946 = vld [vmem:[#allocation2 + $0xe0] sm:$0xff]
        %v947 = vld [vmem:[#allocation2 + $0xe8] sm:$0xff]
        %v948 = vld [vmem:[#allocation2 + $0xf0] sm:$0xff]
        %v949 = vld [vmem:[#allocation2 + $0xf8] sm:$0xff]
        %v950 = vld [vmem:[%s777] sm:$0xff]
        %v951 = vld [vmem:[%s777 + $0x8] sm:$0xff]
        %v952 = vld [vmem:[%s777 + $0x10] sm:$0xf]
        %v953 = vld [vmem:[%s777 + $0x14] sm:$0xff]
        %v954 = vld [vmem:[%s777 + $0x1c] sm:$0xff]
        %v955 = vld [vmem:[%s777 + $0x24] sm:$0xf]
        %v956 = vld [vmem:[%s777 + $0x28] sm:$0xff]
        %v957 = vld [vmem:[%s777 + $0x30] sm:$0xff]
        %v958 = vld [vmem:[%s777 + $0x38] sm:$0xf]
        %v959 = vld [vmem:[%s777 + $0x3c] sm:$0xff]
        %v960 = vld [vmem:[%s777 + $0x44] sm:$0xff]
        %v961 = vld [vmem:[%s777 + $0x4c] sm:$0xf]
        %v962 = vld [vmem:[%s777 + $0x50] sm:$0xff]
        %v963 = vld [vmem:[%s777 + $0x58] sm:$0xff]
        %v964 = vld [vmem:[%s777 + $0x60] sm:$0xf]
        %v965 = vld [vmem:[%s777 + $0x64] sm:$0xff]
        %v966 = vld [vmem:[%s777 + $0x6c] sm:$0xff]
        %v967 = vld [vmem:[%s777 + $0x74] sm:$0xf]
        %v968 = vld [vmem:[%s777 + $0x78] sm:$0xff]
        %v969 = vld [vmem:[%s777 + $0x80] sm:$0xff]
        %v970 = vld [vmem:[%s777 + $0x88] sm:$0xf]
        %v971 = vld [vmem:[%s777 + $0x8c] sm:$0xff]
        %v972 = vld [vmem:[%s777 + $0x94] sm:$0xff]
        %v973 = vld [vmem:[%s777 + $0x9c] sm:$0xf]
        %v974 = vld [vmem:[%s777 + $0xa0] sm:$0xff]
        %v975 = vld [vmem:[%s777 + $0xa8] sm:$0xff]
        %v976 = vld [vmem:[%s777 + $0xb0] sm:$0xf]
        %v977 = vld [vmem:[%s777 + $0xb4] sm:$0xff]
        %v978 = vld [vmem:[%s777 + $0xbc] sm:$0xff]
        %v979 = vld [vmem:[%s777 + $0xc4] sm:$0xf]
        %v980 = vld [vmem:[%s777 + $0xc8] sm:$0xff]
        %v981 = vld [vmem:[%s777 + $0xd0] sm:$0xff]
        %v982 = vld [vmem:[%s777 + $0xd8] sm:$0xf]
        %v983 = vld [vmem:[%s777 + $0xdc] sm:$0xff]
        %v984 = vld [vmem:[%s777 + $0xe4] sm:$0xff]
        %v985 = vld [vmem:[%s777 + $0xec] sm:$0xf]
        %v986 = vld [vmem:[%s777 + $0xf0] sm:$0xff]
        %v987 = vld [vmem:[%s777 + $0xf8] sm:$0xff]
        %v988 = vld [vmem:[%s777 + $0x100] sm:$0xf]
        %v989 = vld [vmem:[%s777 + $0x104] sm:$0xff]
        %v990 = vld [vmem:[%s777 + $0x10c] sm:$0xff]
        %v991 = vld [vmem:[%s777 + $0x114] sm:$0xf]
        %v992 = vld [vmem:[%s777 + $0x118] sm:$0xff]
        %v993 = vld [vmem:[%s777 + $0x120] sm:$0xff]
        %v994 = vld [vmem:[%s777 + $0x128] sm:$0xf]
        %v995 = vld [vmem:[%s777 + $0x12c] sm:$0xff]
        %v996 = vld [vmem:[%s777 + $0x134] sm:$0xff]
        %v997 = vld [vmem:[%s777 + $0x13c] sm:$0xf]
        %v998 = vld [vmem:[%s777 + $0x140] sm:$0xff]
        %v999 = vld [vmem:[%s777 + $0x148] sm:$0xff]
        %v1000 = vld [vmem:[%s777 + $0x150] sm:$0xf]
        %v1001 = vld [vmem:[%s777 + $0x154] sm:$0xff]
        %v1002 = vld [vmem:[%s777 + $0x15c] sm:$0xff]
        %v1003 = vld [vmem:[%s777 + $0x164] sm:$0xf]
        %v1004 = vld [vmem:[%s777 + $0x168] sm:$0xff]
        %v1005 = vld [vmem:[%s777 + $0x170] sm:$0xff]
        %v1006 = vld [vmem:[%s777 + $0x178] sm:$0xf]
        %v1007 = vld [vmem:[%s777 + $0x17c] sm:$0xff]
        %v1008 = vld [vmem:[%s777 + $0x184] sm:$0xff]
        %v1009 = vld [vmem:[%s777 + $0x18c] sm:$0xf]
        %v1010 = vld [vmem:[%s777 + $0x190] sm:$0xff]
        %v1011 = vld [vmem:[%s777 + $0x198] sm:$0xff]
        %v1012 = vld [vmem:[%s777 + $0x1a0] sm:$0xf]
        %v1013 = vld [vmem:[%s777 + $0x1a4] sm:$0xff]
        %v1014 = vld [vmem:[%s777 + $0x1ac] sm:$0xff]
        %v1015 = vld [vmem:[%s777 + $0x1b4] sm:$0xf]
        %v1016 = vld [vmem:[%s777 + $0x1b8] sm:$0xff]
        %v1017 = vld [vmem:[%s777 + $0x1c0] sm:$0xff]
        %v1018 = vld [vmem:[%s777 + $0x1c8] sm:$0xf]
        %v1019 = vld [vmem:[%s777 + $0x1cc] sm:$0xff]
        %v1020 = vld [vmem:[%s777 + $0x1d4] sm:$0xff]
        %v1021 = vld [vmem:[%s777 + $0x1dc] sm:$0xf]
        %v1022 = vld [vmem:[%s777 + $0x1e0] sm:$0xff]
        %v1023 = vld [vmem:[%s777 + $0x1e8] sm:$0xff]
        %v1024 = vld [vmem:[%s777 + $0x1f0] sm:$0xf]
        %v1025 = vld [vmem:[%s777 + $0x1f4] sm:$0xff]
        %v1026 = vld [vmem:[%s777 + $0x1fc] sm:$0xff]
        %v1027 = vld [vmem:[%s777 + $0x204] sm:$0xf]
        %v1028 = vld [vmem:[%s777 + $0x208] sm:$0xff]
        %v1029 = vld [vmem:[%s777 + $0x210] sm:$0xff]
        %v1030 = vld [vmem:[%s777 + $0x218] sm:$0xf]
        %v1031 = vld [vmem:[%s777 + $0x21c] sm:$0xff]
        %v1032 = vld [vmem:[%s777 + $0x224] sm:$0xff]
        %v1033 = vld [vmem:[%s777 + $0x22c] sm:$0xf]
        %v1034 = vld [vmem:[%s777 + $0x230] sm:$0xff]
        %v1035 = vld [vmem:[%s777 + $0x238] sm:$0xff]
        %v1036 = vld [vmem:[%s777 + $0x240] sm:$0xf]
        %v1037 = vld [vmem:[%s777 + $0x244] sm:$0xff]
        %v1038 = vld [vmem:[%s777 + $0x24c] sm:$0xff]
        %v1039 = vld [vmem:[%s777 + $0x254] sm:$0xf]
        %v1040 = vld [vmem:[%s777 + $0x258] sm:$0xff]
        %v1041 = vld [vmem:[%s777 + $0x260] sm:$0xff]
        %v1042 = vld [vmem:[%s777 + $0x268] sm:$0xf]
        %v1043 = vld [vmem:[%s777 + $0x26c] sm:$0xff]
        %v1044 = vld [vmem:[%s777 + $0x274] sm:$0xff]
        %v1045 = vld [vmem:[%s777 + $0x27c] sm:$0xf]
        %v1046 = vld [vmem:[%s809] sm:$0xf]
        %v1047 = vld [vmem:[%s809 + $0x4] sm:$0xf]
        %v1048 = vld [vmem:[%s809 + $0x8] sm:$0xf]
        %v1049 = vld [vmem:[%s809 + $0xc] sm:$0xf]
        %v1050 = vld [vmem:[%s809 + $0x10] sm:$0xf]
        %v1051 = vld [vmem:[%s809 + $0x14] sm:$0xf]
        %v1052 = vld [vmem:[%s809 + $0x18] sm:$0xf]
        %v1053 = vld [vmem:[%s809 + $0x1c] sm:$0xf]
        %v1054 = vld [vmem:[%s809 + $0x20] sm:$0xf]
        %v1055 = vld [vmem:[%s809 + $0x24] sm:$0xf]
        %v1056 = vld [vmem:[%s809 + $0x28] sm:$0xf]
        %v1057 = vld [vmem:[%s809 + $0x2c] sm:$0xf]
        %v1058 = vld [vmem:[%s809 + $0x30] sm:$0xf]
        %v1059 = vld [vmem:[%s809 + $0x34] sm:$0xf]
        %v1060 = vld [vmem:[%s809 + $0x38] sm:$0xf]
        %v1061 = vld [vmem:[%s809 + $0x3c] sm:$0xf]
        %v1062 = vld [vmem:[%s809 + $0x40] sm:$0xf]
        %v1063 = vld [vmem:[%s809 + $0x44] sm:$0xf]
        %v1064 = vld [vmem:[%s809 + $0x48] sm:$0xf]
        %v1065 = vld [vmem:[%s809 + $0x4c] sm:$0xf]
        %v1066 = vld [vmem:[%s809 + $0x50] sm:$0xf]
        %v1067 = vld [vmem:[%s809 + $0x54] sm:$0xf]
        %v1068 = vld [vmem:[%s809 + $0x58] sm:$0xf]
        %v1069 = vld [vmem:[%s809 + $0x5c] sm:$0xf]
        %v1070 = vld [vmem:[%s809 + $0x60] sm:$0xf]
        %v1071 = vld [vmem:[%s809 + $0x64] sm:$0xf]
        %v1072 = vld [vmem:[%s809 + $0x68] sm:$0xf]
        %v1073 = vld [vmem:[%s809 + $0x6c] sm:$0xf]
        %v1074 = vld [vmem:[%s809 + $0x70] sm:$0xf]
        %v1075 = vld [vmem:[%s809 + $0x74] sm:$0xf]
        %v1076 = vld [vmem:[%s809 + $0x78] sm:$0xf]
        %v1077 = vld [vmem:[%s809 + $0x7c] sm:$0xf]
        %v1078 = vld [vmem:[%s809 + $0x80] sm:$0xf]
        %v1079 = vld [vmem:[%s809 + $0x84] sm:$0xf]
        %v1080 = vld [vmem:[%s809 + $0x88] sm:$0xf]
        %v1081 = vld [vmem:[%s809 + $0x8c] sm:$0xf]
        %v1082 = vld [vmem:[%s809 + $0x90] sm:$0xf]
        %v1083 = vld [vmem:[%s809 + $0x94] sm:$0xf]
        %v1084 = vld [vmem:[%s809 + $0x98] sm:$0xf]
        %v1085 = vld [vmem:[%s809 + $0x9c] sm:$0xf]
        %v1086 = vld [vmem:[%s809 + $0xa0] sm:$0xf]
        %v1087 = vld [vmem:[%s809 + $0xa4] sm:$0xf]
        %v1088 = vld [vmem:[%s809 + $0xa8] sm:$0xf]
        %v1089 = vld [vmem:[%s809 + $0xac] sm:$0xf]
        %v1090 = vld [vmem:[%s809 + $0xb0] sm:$0xf]
        %v1091 = vld [vmem:[%s809 + $0xb4] sm:$0xf]
        %v1092 = vld [vmem:[%s809 + $0xb8] sm:$0xf]
        %v1093 = vld [vmem:[%s809 + $0xbc] sm:$0xf]
        %v1094 = vld [vmem:[%s809 + $0xc0] sm:$0xf]
        %v1095 = vld [vmem:[%s809 + $0xc4] sm:$0xf]
        %v1096 = vld [vmem:[%s809 + $0xc8] sm:$0xf]
        %v1097 = vld [vmem:[%s809 + $0xcc] sm:$0xf]
        %v1098 = vld [vmem:[%s809 + $0xd0] sm:$0xf]
        %v1099 = vld [vmem:[%s809 + $0xd4] sm:$0xf]
        %v1100 = vld [vmem:[%s809 + $0xd8] sm:$0xf]
        %v1101 = vld [vmem:[%s809 + $0xdc] sm:$0xf]
        %v1102 = vld [vmem:[%s809 + $0xe0] sm:$0xf]
        %v1103 = vld [vmem:[%s809 + $0xe4] sm:$0xf]
        %v1104 = vld [vmem:[%s809 + $0xe8] sm:$0xf]
        %v1105 = vld [vmem:[%s809 + $0xec] sm:$0xf]
        %v1106 = vld [vmem:[%s809 + $0xf0] sm:$0xf]
        %v1107 = vld [vmem:[%s809 + $0xf4] sm:$0xf]
        %v1108 = vld [vmem:[%s809 + $0xf8] sm:$0xf]
        %v1109 = vld [vmem:[%s809 + $0xfc] sm:$0xf]
        %v1110 = vld [vmem:[%s809 + $0x100] sm:$0xf]
        %v1111 = vld [vmem:[%s809 + $0x104] sm:$0xf]
        %v1112 = vld [vmem:[%s809 + $0x108] sm:$0xf]
        %v1113 = vld [vmem:[%s809 + $0x10c] sm:$0xf]
        %v1114 = vld [vmem:[%s809 + $0x110] sm:$0xf]
        %v1115 = vld [vmem:[%s809 + $0x114] sm:$0xf]
        %v1116 = vld [vmem:[%s809 + $0x118] sm:$0xf]
        %v1117 = vld [vmem:[%s809 + $0x11c] sm:$0xf]
        %v1118 = vld [vmem:[%s809 + $0x120] sm:$0xf]
        %v1119 = vld [vmem:[%s809 + $0x124] sm:$0xf]
        %v1120 = vld [vmem:[%s809 + $0x128] sm:$0xf]
        %v1121 = vld [vmem:[%s809 + $0x12c] sm:$0xf]
        %v1122 = vld [vmem:[%s809 + $0x130] sm:$0xf]
        %v1123 = vld [vmem:[%s809 + $0x134] sm:$0xf]
        %v1124 = vld [vmem:[%s809 + $0x138] sm:$0xf]
        %v1125 = vld [vmem:[%s809 + $0x13c] sm:$0xf]
        %v1222 = vunpack.c.l.b16 %v950
        %v1223 = vunpack.c.h.b16 %v950
        %v1224 = vunpack.c.l.b16 %v951
        %v1225 = vunpack.c.h.b16 %v951
        %v1226 = vunpack.c.l.b16 %v952
        %v1227 = vunpack.c.l.b16 %v953
        %v1228 = vunpack.c.h.b16 %v953
        %v1229 = vunpack.c.l.b16 %v954
        %v1230 = vunpack.c.h.b16 %v954
        %v1231 = vunpack.c.l.b16 %v955
        %v1232 = vunpack.c.l.b16 %v956
        %v1233 = vunpack.c.h.b16 %v956
        %v1234 = vunpack.c.l.b16 %v957
        %v1235 = vunpack.c.h.b16 %v957
        %v1236 = vunpack.c.l.b16 %v958
        %v1237 = vunpack.c.l.b16 %v959
        %v1238 = vunpack.c.h.b16 %v959
        %v1239 = vunpack.c.l.b16 %v960
        %v1240 = vunpack.c.h.b16 %v960
        %v1241 = vunpack.c.l.b16 %v961
        %v1242 = vunpack.c.l.b16 %v962
        %v1243 = vunpack.c.h.b16 %v962
        %v1244 = vunpack.c.l.b16 %v963
        %v1245 = vunpack.c.h.b16 %v963
        %v1246 = vunpack.c.l.b16 %v964
        %v1247 = vunpack.c.l.b16 %v965
        %v1248 = vunpack.c.h.b16 %v965
        %v1249 = vunpack.c.l.b16 %v966
        %v1250 = vunpack.c.h.b16 %v966
        %v1251 = vunpack.c.l.b16 %v967
        %v1252 = vunpack.c.l.b16 %v968
        %v1253 = vunpack.c.h.b16 %v968
        %v1254 = vunpack.c.l.b16 %v969
        %v1255 = vunpack.c.h.b16 %v969
        %v1256 = vunpack.c.l.b16 %v970
        %v1257 = vunpack.c.l.b16 %v971
        %v1258 = vunpack.c.h.b16 %v971
        %v1259 = vunpack.c.l.b16 %v972
        %v1260 = vunpack.c.h.b16 %v972
        %v1261 = vunpack.c.l.b16 %v973
        %v1262 = vunpack.c.l.b16 %v974
        %v1263 = vunpack.c.h.b16 %v974
        %v1264 = vunpack.c.l.b16 %v975
        %v1265 = vunpack.c.h.b16 %v975
        %v1266 = vunpack.c.l.b16 %v976
        %v1267 = vunpack.c.l.b16 %v977
        %v1268 = vunpack.c.h.b16 %v977
        %v1269 = vunpack.c.l.b16 %v978
        %v1270 = vunpack.c.h.b16 %v978
        %v1271 = vunpack.c.l.b16 %v979
        %v1272 = vunpack.c.l.b16 %v980
        %v1273 = vunpack.c.h.b16 %v980
        %v1274 = vunpack.c.l.b16 %v981
        %v1275 = vunpack.c.h.b16 %v981
        %v1276 = vunpack.c.l.b16 %v982
        %v1277 = vunpack.c.l.b16 %v983
        %v1278 = vunpack.c.h.b16 %v983
        %v1279 = vunpack.c.l.b16 %v984
        %v1280 = vunpack.c.h.b16 %v984
        %v1281 = vunpack.c.l.b16 %v985
        %v1282 = vunpack.c.l.b16 %v986
        %v1283 = vunpack.c.h.b16 %v986
        %v1284 = vunpack.c.l.b16 %v987
        %v1285 = vunpack.c.h.b16 %v987
        %v1286 = vunpack.c.l.b16 %v988
        %v1287 = vunpack.c.l.b16 %v989
        %v1288 = vunpack.c.h.b16 %v989
        %v1289 = vunpack.c.l.b16 %v990
        %v1290 = vunpack.c.h.b16 %v990
        %v1291 = vunpack.c.l.b16 %v991
        %v1292 = vunpack.c.l.b16 %v992
        %v1293 = vunpack.c.h.b16 %v992
        %v1294 = vunpack.c.l.b16 %v993
        %v1295 = vunpack.c.h.b16 %v993
        %v1296 = vunpack.c.l.b16 %v994
        %v1297 = vunpack.c.l.b16 %v995
        %v1298 = vunpack.c.h.b16 %v995
        %v1299 = vunpack.c.l.b16 %v996
        %v1300 = vunpack.c.h.b16 %v996
        %v1301 = vunpack.c.l.b16 %v997
        %v1302 = vunpack.c.l.b16 %v998
        %v1303 = vunpack.c.h.b16 %v998
        %v1304 = vunpack.c.l.b16 %v999
        %v1305 = vunpack.c.h.b16 %v999
        %v1306 = vunpack.c.l.b16 %v1000
        %v1307 = vunpack.c.l.b16 %v1001
        %v1308 = vunpack.c.h.b16 %v1001
        %v1309 = vunpack.c.l.b16 %v1002
        %v1310 = vunpack.c.h.b16 %v1002
        %v1311 = vunpack.c.l.b16 %v1003
        %v1312 = vunpack.c.l.b16 %v1004
        %v1313 = vunpack.c.h.b16 %v1004
        %v1314 = vunpack.c.l.b16 %v1005
        %v1315 = vunpack.c.h.b16 %v1005
        %v1316 = vunpack.c.l.b16 %v1006
        %v1317 = vunpack.c.l.b16 %v1007
        %v1318 = vunpack.c.h.b16 %v1007
        %v1319 = vunpack.c.l.b16 %v1008
        %v1320 = vunpack.c.h.b16 %v1008
        %v1321 = vunpack.c.l.b16 %v1009
        %v1322 = vunpack.c.l.b16 %v1010
        %v1323 = vunpack.c.h.b16 %v1010
        %v1324 = vunpack.c.l.b16 %v1011
        %v1325 = vunpack.c.h.b16 %v1011
        %v1326 = vunpack.c.l.b16 %v1012
        %v1327 = vunpack.c.l.b16 %v1013
        %v1328 = vunpack.c.h.b16 %v1013
        %v1329 = vunpack.c.l.b16 %v1014
        %v1330 = vunpack.c.h.b16 %v1014
        %v1331 = vunpack.c.l.b16 %v1015
        %v1332 = vunpack.c.l.b16 %v1016
        %v1333 = vunpack.c.h.b16 %v1016
        %v1334 = vunpack.c.l.b16 %v1017
        %v1335 = vunpack.c.h.b16 %v1017
        %v1336 = vunpack.c.l.b16 %v1018
        %v1337 = vunpack.c.l.b16 %v1019
        %v1338 = vunpack.c.h.b16 %v1019
        %v1339 = vunpack.c.l.b16 %v1020
        %v1340 = vunpack.c.h.b16 %v1020
        %v1341 = vunpack.c.l.b16 %v1021
        %v1342 = vunpack.c.l.b16 %v1022
        %v1343 = vunpack.c.h.b16 %v1022
        %v1344 = vunpack.c.l.b16 %v1023
        %v1345 = vunpack.c.h.b16 %v1023
        %v1346 = vunpack.c.l.b16 %v1024
        %v1347 = vunpack.c.l.b16 %v1025
        %v1348 = vunpack.c.h.b16 %v1025
        %v1349 = vunpack.c.l.b16 %v1026
        %v1350 = vunpack.c.h.b16 %v1026
        %v1351 = vunpack.c.l.b16 %v1027
        %v1352 = vunpack.c.l.b16 %v1028
        %v1353 = vunpack.c.h.b16 %v1028
        %v1354 = vunpack.c.l.b16 %v1029
        %v1355 = vunpack.c.h.b16 %v1029
        %v1356 = vunpack.c.l.b16 %v1030
        %v1357 = vunpack.c.l.b16 %v1031
        %v1358 = vunpack.c.h.b16 %v1031
        %v1359 = vunpack.c.l.b16 %v1032
        %v1360 = vunpack.c.h.b16 %v1032
        %v1361 = vunpack.c.l.b16 %v1033
        %v1362 = vunpack.c.l.b16 %v1034
        %v1363 = vunpack.c.h.b16 %v1034
        %v1364 = vunpack.c.l.b16 %v1035
        %v1365 = vunpack.c.h.b16 %v1035
        %v1366 = vunpack.c.l.b16 %v1036
        %v1367 = vunpack.c.l.b16 %v1037
        %v1368 = vunpack.c.h.b16 %v1037
        %v1369 = vunpack.c.l.b16 %v1038
        %v1370 = vunpack.c.h.b16 %v1038
        %v1371 = vunpack.c.l.b16 %v1039
        %v1372 = vunpack.c.l.b16 %v1040
        %v1373 = vunpack.c.h.b16 %v1040
        %v1374 = vunpack.c.l.b16 %v1041
        %v1375 = vunpack.c.h.b16 %v1041
        %v1376 = vunpack.c.l.b16 %v1042
        %v1377 = vunpack.c.l.b16 %v1043
        %v1378 = vunpack.c.h.b16 %v1043
        %v1379 = vunpack.c.l.b16 %v1044
        %v1380 = vunpack.c.h.b16 %v1044
        %v1381 = vunpack.c.l.b16 %v1045
        %v1382 = vpack.c.b16 %v1227, %v1222
        %v1383 = vpack.c.b16 %v1228, %v1223
        %v1384 = vpack.c.b16 %v1229, %v1224
        %v1385 = vpack.c.b16 %v1230, %v1225
        %v1386 = vpack.c.b16 %v1231, %v1226
        %v1387 = vpack.c.b16 %v1237, %v1232
        %v1388 = vpack.c.b16 %v1238, %v1233
        %v1389 = vpack.c.b16 %v1239, %v1234
        %v1390 = vpack.c.b16 %v1240, %v1235
        %v1391 = vpack.c.b16 %v1241, %v1236
        %v1392 = vpack.c.b16 %v1247, %v1242
        %v1393 = vpack.c.b16 %v1248, %v1243
        %v1394 = vpack.c.b16 %v1249, %v1244
        %v1395 = vpack.c.b16 %v1250, %v1245
        %v1396 = vpack.c.b16 %v1251, %v1246
        %v1397 = vpack.c.b16 %v1257, %v1252
        %v1398 = vpack.c.b16 %v1258, %v1253
        %v1399 = vpack.c.b16 %v1259, %v1254
        %v1400 = vpack.c.b16 %v1260, %v1255
        %v1401 = vpack.c.b16 %v1261, %v1256
        %v1402 = vpack.c.b16 %v1267, %v1262
        %v1403 = vpack.c.b16 %v1268, %v1263
        %v1404 = vpack.c.b16 %v1269, %v1264
        %v1405 = vpack.c.b16 %v1270, %v1265
        %v1406 = vpack.c.b16 %v1271, %v1266
        %v1407 = vpack.c.b16 %v1277, %v1272
        %v1408 = vpack.c.b16 %v1278, %v1273
        %v1409 = vpack.c.b16 %v1279, %v1274
        %v1410 = vpack.c.b16 %v1280, %v1275
        %v1411 = vpack.c.b16 %v1281, %v1276
        %v1412 = vpack.c.b16 %v1287, %v1282
        %v1413 = vpack.c.b16 %v1288, %v1283
        %v1414 = vpack.c.b16 %v1289, %v1284
        %v1415 = vpack.c.b16 %v1290, %v1285
        %v1416 = vpack.c.b16 %v1291, %v1286
        %v1417 = vpack.c.b16 %v1297, %v1292
        %v1418 = vpack.c.b16 %v1298, %v1293
        %v1419 = vpack.c.b16 %v1299, %v1294
        %v1420 = vpack.c.b16 %v1300, %v1295
        %v1421 = vpack.c.b16 %v1301, %v1296
        %v1422 = vpack.c.b16 %v1307, %v1302
        %v1423 = vpack.c.b16 %v1308, %v1303
        %v1424 = vpack.c.b16 %v1309, %v1304
        %v1425 = vpack.c.b16 %v1310, %v1305
        %v1426 = vpack.c.b16 %v1311, %v1306
        %v1427 = vpack.c.b16 %v1317, %v1312
        %v1428 = vpack.c.b16 %v1318, %v1313
        %v1429 = vpack.c.b16 %v1319, %v1314
        %v1430 = vpack.c.b16 %v1320, %v1315
        %v1431 = vpack.c.b16 %v1321, %v1316
        %v1432 = vpack.c.b16 %v1327, %v1322
        %v1433 = vpack.c.b16 %v1328, %v1323
        %v1434 = vpack.c.b16 %v1329, %v1324
        %v1435 = vpack.c.b16 %v1330, %v1325
        %v1436 = vpack.c.b16 %v1331, %v1326
        %v1437 = vpack.c.b16 %v1337, %v1332
        %v1438 = vpack.c.b16 %v1338, %v1333
        %v1439 = vpack.c.b16 %v1339, %v1334
        %v1440 = vpack.c.b16 %v1340, %v1335
        %v1441 = vpack.c.b16 %v1341, %v1336
        %v1442 = vpack.c.b16 %v1347, %v1342
        %v1443 = vpack.c.b16 %v1348, %v1343
        %v1444 = vpack.c.b16 %v1349, %v1344
        %v1445 = vpack.c.b16 %v1350, %v1345
        %v1446 = vpack.c.b16 %v1351, %v1346
        %v1447 = vpack.c.b16 %v1357, %v1352
        %v1448 = vpack.c.b16 %v1358, %v1353
        %v1449 = vpack.c.b16 %v1359, %v1354
        %v1450 = vpack.c.b16 %v1360, %v1355
        %v1451 = vpack.c.b16 %v1361, %v1356
        %v1452 = vpack.c.b16 %v1367, %v1362
        %v1453 = vpack.c.b16 %v1368, %v1363
        %v1454 = vpack.c.b16 %v1369, %v1364
        %v1455 = vpack.c.b16 %v1370, %v1365
        %v1456 = vpack.c.b16 %v1371, %v1366
        %v1457 = vpack.c.b16 %v1377, %v1372
        %v1458 = vpack.c.b16 %v1378, %v1373
        %v1459 = vpack.c.b16 %v1379, %v1374
        %v1460 = vpack.c.b16 %v1380, %v1375
        %v1461 = vpack.c.b16 %v1381, %v1376
        %v1622 = vunpack.c.l.b16 %v1046
        %v1623 = vunpack.c.l.b16 %v1047
        %v1624 = vunpack.c.l.b16 %v1048
        %v1625 = vunpack.c.l.b16 %v1049
        %v1626 = vunpack.c.l.b16 %v1050
        %v1627 = vunpack.c.l.b16 %v1051
        %v1628 = vunpack.c.l.b16 %v1052
        %v1629 = vunpack.c.l.b16 %v1053
        %v1630 = vunpack.c.l.b16 %v1054
        %v1631 = vunpack.c.l.b16 %v1055
        %v1632 = vunpack.c.l.b16 %v1056
        %v1633 = vunpack.c.l.b16 %v1057
        %v1634 = vunpack.c.l.b16 %v1058
        %v1635 = vunpack.c.l.b16 %v1059
        %v1636 = vunpack.c.l.b16 %v1060
        %v1637 = vunpack.c.l.b16 %v1061
        %v1638 = vunpack.c.l.b16 %v1062
        %v1639 = vunpack.c.l.b16 %v1063
        %v1640 = vunpack.c.l.b16 %v1064
        %v1641 = vunpack.c.l.b16 %v1065
        %v1642 = vunpack.c.l.b16 %v1066
        %v1643 = vunpack.c.l.b16 %v1067
        %v1644 = vunpack.c.l.b16 %v1068
        %v1645 = vunpack.c.l.b16 %v1069
        %v1646 = vunpack.c.l.b16 %v1070
        %v1647 = vunpack.c.l.b16 %v1071
        %v1648 = vunpack.c.l.b16 %v1072
        %v1649 = vunpack.c.l.b16 %v1073
        %v1650 = vunpack.c.l.b16 %v1074
        %v1651 = vunpack.c.l.b16 %v1075
        %v1652 = vunpack.c.l.b16 %v1076
        %v1653 = vunpack.c.l.b16 %v1077
        %v1654 = vunpack.c.l.b16 %v1078
        %v1655 = vunpack.c.l.b16 %v1079
        %v1656 = vunpack.c.l.b16 %v1080
        %v1657 = vunpack.c.l.b16 %v1081
        %v1658 = vunpack.c.l.b16 %v1082
        %v1659 = vunpack.c.l.b16 %v1083
        %v1660 = vunpack.c.l.b16 %v1084
        %v1661 = vunpack.c.l.b16 %v1085
        %v1662 = vunpack.c.l.b16 %v1086
        %v1663 = vunpack.c.l.b16 %v1087
        %v1664 = vunpack.c.l.b16 %v1088
        %v1665 = vunpack.c.l.b16 %v1089
        %v1666 = vunpack.c.l.b16 %v1090
        %v1667 = vunpack.c.l.b16 %v1091
        %v1668 = vunpack.c.l.b16 %v1092
        %v1669 = vunpack.c.l.b16 %v1093
        %v1670 = vunpack.c.l.b16 %v1094
        %v1671 = vunpack.c.l.b16 %v1095
        %v1672 = vunpack.c.l.b16 %v1096
        %v1673 = vunpack.c.l.b16 %v1097
        %v1674 = vunpack.c.l.b16 %v1098
        %v1675 = vunpack.c.l.b16 %v1099
        %v1676 = vunpack.c.l.b16 %v1100
        %v1677 = vunpack.c.l.b16 %v1101
        %v1678 = vunpack.c.l.b16 %v1102
        %v1679 = vunpack.c.l.b16 %v1103
        %v1680 = vunpack.c.l.b16 %v1104
        %v1681 = vunpack.c.l.b16 %v1105
        %v1682 = vunpack.c.l.b16 %v1106
        %v1683 = vunpack.c.l.b16 %v1107
        %v1684 = vunpack.c.l.b16 %v1108
        %v1685 = vunpack.c.l.b16 %v1109
        %v1686 = vunpack.c.l.b16 %v1110
        %v1687 = vunpack.c.l.b16 %v1111
        %v1688 = vunpack.c.l.b16 %v1112
        %v1689 = vunpack.c.l.b16 %v1113
        %v1690 = vunpack.c.l.b16 %v1114
        %v1691 = vunpack.c.l.b16 %v1115
        %v1692 = vunpack.c.l.b16 %v1116
        %v1693 = vunpack.c.l.b16 %v1117
        %v1694 = vunpack.c.l.b16 %v1118
        %v1695 = vunpack.c.l.b16 %v1119
        %v1696 = vunpack.c.l.b16 %v1120
        %v1697 = vunpack.c.l.b16 %v1121
        %v1698 = vunpack.c.l.b16 %v1122
        %v1699 = vunpack.c.l.b16 %v1123
        %v1700 = vunpack.c.l.b16 %v1124
        %v1701 = vunpack.c.l.b16 %v1125
        %v1702 = vpack.c.b16 %v1623, %v1622
        %v1703 = vpack.c.b16 %v1625, %v1624
        %v1704 = vpack.c.b16 %v1627, %v1626
        %v1705 = vpack.c.b16 %v1629, %v1628
        %v1706 = vpack.c.b16 %v1631, %v1630
        %v1707 = vpack.c.b16 %v1633, %v1632
        %v1708 = vpack.c.b16 %v1635, %v1634
        %v1709 = vpack.c.b16 %v1637, %v1636
        %v1710 = vpack.c.b16 %v1639, %v1638
        %v1711 = vpack.c.b16 %v1641, %v1640
        %v1712 = vpack.c.b16 %v1643, %v1642
        %v1713 = vpack.c.b16 %v1645, %v1644
        %v1714 = vpack.c.b16 %v1647, %v1646
        %v1715 = vpack.c.b16 %v1649, %v1648
        %v1716 = vpack.c.b16 %v1651, %v1650
        %v1717 = vpack.c.b16 %v1653, %v1652
        %v1718 = vpack.c.b16 %v1655, %v1654
        %v1719 = vpack.c.b16 %v1657, %v1656
        %v1720 = vpack.c.b16 %v1659, %v1658
        %v1721 = vpack.c.b16 %v1661, %v1660
        %v1722 = vpack.c.b16 %v1663, %v1662
        %v1723 = vpack.c.b16 %v1665, %v1664
        %v1724 = vpack.c.b16 %v1667, %v1666
        %v1725 = vpack.c.b16 %v1669, %v1668
        %v1726 = vpack.c.b16 %v1671, %v1670
        %v1727 = vpack.c.b16 %v1673, %v1672
        %v1728 = vpack.c.b16 %v1675, %v1674
        %v1729 = vpack.c.b16 %v1677, %v1676
        %v1730 = vpack.c.b16 %v1679, %v1678
        %v1731 = vpack.c.b16 %v1681, %v1680
        %v1732 = vpack.c.b16 %v1683, %v1682
        %v1733 = vpack.c.b16 %v1685, %v1684
        %v1734 = vpack.c.b16 %v1687, %v1686
        %v1735 = vpack.c.b16 %v1689, %v1688
        %v1736 = vpack.c.b16 %v1691, %v1690
        %v1737 = vpack.c.b16 %v1693, %v1692
        %v1738 = vpack.c.b16 %v1695, %v1694
        %v1739 = vpack.c.b16 %v1697, %v1696
        %v1740 = vpack.c.b16 %v1699, %v1698
        %v1741 = vpack.c.b16 %v1701, %v1700
        %1782 = vmatprep.subr.bf16.mxu0 0
        %1783 = vmatpush1.bf16.msra.mxu0 %v1709
        %1784 = vmatprep.subr.bf16.mxu0 0
        %1785 = vmatpush1.bf16.msra.mxu0 %v1708
        %1786 = vmatprep.subr.bf16.mxu0 0
        %1787 = vmatpush1.bf16.msra.mxu0 %v1707
        %1788 = vmatprep.subr.bf16.mxu0 0
        %1789 = vmatpush1.bf16.msra.mxu0 %v1706
        %1790 = vmatprep.subr.bf16.mxu0 0
        %1791 = vmatpush1.bf16.msra.mxu0 %v1705
        %1792 = vmatprep.subr.bf16.mxu0 0
        %1793 = vmatpush1.bf16.msra.mxu0 %v1704
        %1794 = vmatprep.subr.bf16.mxu0 0
        %1795 = vmatpush1.bf16.msra.mxu0 %v1703
        %1796 = vmatprep.subr.bf16.mxu0 0
        %1797 = vmatpush1.bf16.msra.mxu0 %v1702
        %1798 = vmatprep.subr.bf16.mxu0 0
        %1799 = vmatpush2.bf16.msra.mxu0 %v1717
        %1800 = vmatprep.subr.bf16.mxu0 0
        %1801 = vmatpush2.bf16.msra.mxu0 %v1716
        %1802 = vmatprep.subr.bf16.mxu0 0
        %1803 = vmatpush2.bf16.msra.mxu0 %v1715
        %1804 = vmatprep.subr.bf16.mxu0 0
        %1805 = vmatpush2.bf16.msra.mxu0 %v1714
        %1806 = vmatprep.subr.bf16.mxu0 0
        %1807 = vmatpush2.bf16.msra.mxu0 %v1713
        %1808 = vmatprep.subr.bf16.mxu0 0
        %1809 = vmatpush2.bf16.msra.mxu0 %v1712
        %1810 = vmatprep.subr.bf16.mxu0 0
        %1811 = vmatpush2.bf16.msra.mxu0 %v1711
        %1812 = vmatprep.subr.bf16.mxu0 0
        %1813 = vmatpush2.bf16.msra.mxu0 %v1710
        %1814 = vmatprep.mubr.bf16.mxu0 %v1383
        %1815 = vmatmul.mubr.bf16.gmra.mxu0 %v1382
        %v1816 = vpop.f32.mrf.mxu0
        %v1817 = vadd.f32 0.0, %v1816
        %v1818 = vpop.f32.mrf.mxu0
        %v1819 = vpop.f32.mrf.mxu0
        %v1820 = vadd.f32 0.0, %v1819
        %v1821 = vpop.f32.mrf.mxu0
        %1822 = vmatprep.mubr.bf16.mxu0 %v1388
        %1823 = vmatmul.mubr.bf16.gmra.mxu0 %v1387
        %v1824 = vpop.f32.mrf.mxu0
        %v1825 = vadd.f32 0.0, %v1824
        %v1826 = vpop.f32.mrf.mxu0
        %v1827 = vpop.f32.mrf.mxu0
        %v1828 = vadd.f32 0.0, %v1827
        %v1829 = vpop.f32.mrf.mxu0
        %1830 = vmatprep.mubr.bf16.mxu0 %v1393
        %1831 = vmatmul.mubr.bf16.gmra.mxu0 %v1392
        %v1832 = vpop.f32.mrf.mxu0
        %v1833 = vadd.f32 0.0, %v1832
        %v1834 = vpop.f32.mrf.mxu0
        %v1835 = vpop.f32.mrf.mxu0
        %v1836 = vadd.f32 0.0, %v1835
        %v1837 = vpop.f32.mrf.mxu0
        %1838 = vmatprep.mubr.bf16.mxu0 %v1398
        %1839 = vmatmul.mubr.bf16.gmra.mxu0 %v1397
        %v1840 = vpop.f32.mrf.mxu0
        %v1841 = vadd.f32 0.0, %v1840
        %v1842 = vpop.f32.mrf.mxu0
        %v1843 = vpop.f32.mrf.mxu0
        %v1844 = vadd.f32 0.0, %v1843
        %v1845 = vpop.f32.mrf.mxu0
        %1846 = vmatprep.mubr.bf16.mxu0 %v1403
        %1847 = vmatmul.mubr.bf16.gmra.mxu0 %v1402
        %v1848 = vpop.f32.mrf.mxu0
        %v1849 = vadd.f32 0.0, %v1848
        %v1850 = vpop.f32.mrf.mxu0
        %v1851 = vpop.f32.mrf.mxu0
        %v1852 = vadd.f32 0.0, %v1851
        %v1853 = vpop.f32.mrf.mxu0
        %1854 = vmatprep.mubr.bf16.mxu0 %v1408
        %1855 = vmatmul.mubr.bf16.gmra.mxu0 %v1407
        %v1856 = vpop.f32.mrf.mxu0
        %v1857 = vadd.f32 0.0, %v1856
        %v1858 = vpop.f32.mrf.mxu0
        %v1859 = vpop.f32.mrf.mxu0
        %v1860 = vadd.f32 0.0, %v1859
        %v1861 = vpop.f32.mrf.mxu0
        %1862 = vmatprep.mubr.bf16.mxu0 %v1413
        %1863 = vmatmul.mubr.bf16.gmra.mxu0 %v1412
        %v1864 = vpop.f32.mrf.mxu0
        %v1865 = vadd.f32 0.0, %v1864
        %v1866 = vpop.f32.mrf.mxu0
        %v1867 = vpop.f32.mrf.mxu0
        %v1868 = vadd.f32 0.0, %v1867
        %v1869 = vpop.f32.mrf.mxu0
        %1870 = vmatprep.mubr.bf16.mxu0 %v1418
        %1871 = vmatmul.mubr.bf16.gmra.mxu0 %v1417
        %v1872 = vpop.f32.mrf.mxu0
        %v1873 = vadd.f32 0.0, %v1872
        %v1874 = vpop.f32.mrf.mxu0
        %v1875 = vpop.f32.mrf.mxu0
        %v1876 = vadd.f32 0.0, %v1875
        %v1877 = vpop.f32.mrf.mxu0
        %1878 = vmatprep.mubr.bf16.mxu0 %v1423
        %1879 = vmatmul.mubr.bf16.gmra.mxu0 %v1422
        %v1880 = vpop.f32.mrf.mxu0
        %v1881 = vadd.f32 0.0, %v1880
        %v1882 = vpop.f32.mrf.mxu0
        %v1883 = vpop.f32.mrf.mxu0
        %v1884 = vadd.f32 0.0, %v1883
        %v1885 = vpop.f32.mrf.mxu0
        %1886 = vmatprep.mubr.bf16.mxu0 %v1428
        %1887 = vmatmul.mubr.bf16.gmra.mxu0 %v1427
        %v1888 = vpop.f32.mrf.mxu0
        %v1889 = vadd.f32 0.0, %v1888
        %v1890 = vpop.f32.mrf.mxu0
        %v1891 = vpop.f32.mrf.mxu0
        %v1892 = vadd.f32 0.0, %v1891
        %v1893 = vpop.f32.mrf.mxu0
        %1894 = vmatprep.mubr.bf16.mxu0 %v1433
        %1895 = vmatmul.mubr.bf16.gmra.mxu0 %v1432
        %v1896 = vpop.f32.mrf.mxu0
        %v1897 = vadd.f32 0.0, %v1896
        %v1898 = vpop.f32.mrf.mxu0
        %v1899 = vpop.f32.mrf.mxu0
        %v1900 = vadd.f32 0.0, %v1899
        %v1901 = vpop.f32.mrf.mxu0
        %1902 = vmatprep.mubr.bf16.mxu0 %v1438
        %1903 = vmatmul.mubr.bf16.gmra.mxu0 %v1437
        %v1904 = vpop.f32.mrf.mxu0
        %v1905 = vadd.f32 0.0, %v1904
        %v1906 = vpop.f32.mrf.mxu0
        %v1907 = vpop.f32.mrf.mxu0
        %v1908 = vadd.f32 0.0, %v1907
        %v1909 = vpop.f32.mrf.mxu0
        %1910 = vmatprep.mubr.bf16.mxu0 %v1443
        %1911 = vmatmul.mubr.bf16.gmra.mxu0 %v1442
        %v1912 = vpop.f32.mrf.mxu0
        %v1913 = vadd.f32 0.0, %v1912
        %v1914 = vpop.f32.mrf.mxu0
        %v1915 = vpop.f32.mrf.mxu0
        %v1916 = vadd.f32 0.0, %v1915
        %v1917 = vpop.f32.mrf.mxu0
        %1918 = vmatprep.mubr.bf16.mxu0 %v1448
        %1919 = vmatmul.mubr.bf16.gmra.mxu0 %v1447
        %v1920 = vpop.f32.mrf.mxu0
        %v1921 = vadd.f32 0.0, %v1920
        %v1922 = vpop.f32.mrf.mxu0
        %v1923 = vpop.f32.mrf.mxu0
        %v1924 = vadd.f32 0.0, %v1923
        %v1925 = vpop.f32.mrf.mxu0
        %1926 = vmatprep.mubr.bf16.mxu0 %v1453
        %1927 = vmatmul.mubr.bf16.gmra.mxu0 %v1452
        %v1928 = vpop.f32.mrf.mxu0
        %v1929 = vadd.f32 0.0, %v1928
        %v1930 = vpop.f32.mrf.mxu0
        %v1931 = vpop.f32.mrf.mxu0
        %v1932 = vadd.f32 0.0, %v1931
        %v1933 = vpop.f32.mrf.mxu0
        %1934 = vmatprep.mubr.bf16.mxu0 %v1458
        %1935 = vmatmul.mubr.bf16.gmra.mxu0 %v1457
        %v1936 = vpop.f32.mrf.mxu0
        %v1937 = vadd.f32 0.0, %v1936
        %v1938 = vpop.f32.mrf.mxu0
        %v1939 = vpop.f32.mrf.mxu0
        %v1940 = vadd.f32 0.0, %v1939
        %v1941 = vpop.f32.mrf.mxu0
        %1942 = vdwg.mxu0
        %1943 = vmatprep.subr.bf16.mxu0 0
        %1944 = vmatpush1.bf16.msra.mxu0 %v1725
        %1945 = vmatprep.subr.bf16.mxu0 0
        %1946 = vmatpush1.bf16.msra.mxu0 %v1724
        %1947 = vmatprep.subr.bf16.mxu0 0
        %1948 = vmatpush1.bf16.msra.mxu0 %v1723
        %1949 = vmatprep.subr.bf16.mxu0 0
        %1950 = vmatpush1.bf16.msra.mxu0 %v1722
        %1951 = vmatprep.subr.bf16.mxu0 0
        %1952 = vmatpush1.bf16.msra.mxu0 %v1721
        %1953 = vmatprep.subr.bf16.mxu0 0
        %1954 = vmatpush1.bf16.msra.mxu0 %v1720
        %1955 = vmatprep.subr.bf16.mxu0 0
        %1956 = vmatpush1.bf16.msra.mxu0 %v1719
        %1957 = vmatprep.subr.bf16.mxu0 0
        %1958 = vmatpush1.bf16.msra.mxu0 %v1718
        %1959 = vmatprep.subr.bf16.mxu0 0
        %1960 = vmatpush2.bf16.msra.mxu0 %v1733
        %1961 = vmatprep.subr.bf16.mxu0 0
        %1962 = vmatpush2.bf16.msra.mxu0 %v1732
        %1963 = vmatprep.subr.bf16.mxu0 0
        %1964 = vmatpush2.bf16.msra.mxu0 %v1731
        %1965 = vmatprep.subr.bf16.mxu0 0
        %1966 = vmatpush2.bf16.msra.mxu0 %v1730
        %1967 = vmatprep.subr.bf16.mxu0 0
        %1968 = vmatpush2.bf16.msra.mxu0 %v1729
        %1969 = vmatprep.subr.bf16.mxu0 0
        %1970 = vmatpush2.bf16.msra.mxu0 %v1728
        %1971 = vmatprep.subr.bf16.mxu0 0
        %1972 = vmatpush2.bf16.msra.mxu0 %v1727
        %1973 = vmatprep.subr.bf16.mxu0 0
        %1974 = vmatpush2.bf16.msra.mxu0 %v1726
        %1975 = vmatprep.mubr.bf16.mxu0 %v1385
        %1976 = vmatmul.mubr.bf16.gmra.mxu0 %v1384
        %v1977 = vpop.f32.mrf.mxu0
        %v1978 = vadd.f32 %v1817, %v1977
        %v1979 = vpop.f32.mrf.mxu0
        %v1980 = vpop.f32.mrf.mxu0
        %v1981 = vadd.f32 %v1820, %v1980
        %v1982 = vpop.f32.mrf.mxu0
        %1983 = vmatprep.mubr.bf16.mxu0 %v1390
        %1984 = vmatmul.mubr.bf16.gmra.mxu0 %v1389
        %v1985 = vpop.f32.mrf.mxu0
        %v1986 = vadd.f32 %v1825, %v1985
        %v1987 = vpop.f32.mrf.mxu0
        %v1988 = vpop.f32.mrf.mxu0
        %v1989 = vadd.f32 %v1828, %v1988
        %v1990 = vpop.f32.mrf.mxu0
        %1991 = vmatprep.mubr.bf16.mxu0 %v1395
        %1992 = vmatmul.mubr.bf16.gmra.mxu0 %v1394
        %v1993 = vpop.f32.mrf.mxu0
        %v1994 = vadd.f32 %v1833, %v1993
        %v1995 = vpop.f32.mrf.mxu0
        %v1996 = vpop.f32.mrf.mxu0
        %v1997 = vadd.f32 %v1836, %v1996
        %v1998 = vpop.f32.mrf.mxu0
        %1999 = vmatprep.mubr.bf16.mxu0 %v1400
        %2000 = vmatmul.mubr.bf16.gmra.mxu0 %v1399
        %v2001 = vpop.f32.mrf.mxu0
        %v2002 = vadd.f32 %v1841, %v2001
        %v2003 = vpop.f32.mrf.mxu0
        %v2004 = vpop.f32.mrf.mxu0
        %v2005 = vadd.f32 %v1844, %v2004
        %v2006 = vpop.f32.mrf.mxu0
        %2007 = vmatprep.mubr.bf16.mxu0 %v1405
        %2008 = vmatmul.mubr.bf16.gmra.mxu0 %v1404
        %v2009 = vpop.f32.mrf.mxu0
        %v2010 = vadd.f32 %v1849, %v2009
        %v2011 = vpop.f32.mrf.mxu0
        %v2012 = vpop.f32.mrf.mxu0
        %v2013 = vadd.f32 %v1852, %v2012
        %v2014 = vpop.f32.mrf.mxu0
        %2015 = vmatprep.mubr.bf16.mxu0 %v1410
        %2016 = vmatmul.mubr.bf16.gmra.mxu0 %v1409
        %v2017 = vpop.f32.mrf.mxu0
        %v2018 = vadd.f32 %v1857, %v2017
        %v2019 = vpop.f32.mrf.mxu0
        %v2020 = vpop.f32.mrf.mxu0
        %v2021 = vadd.f32 %v1860, %v2020
        %v2022 = vpop.f32.mrf.mxu0
        %2023 = vmatprep.mubr.bf16.mxu0 %v1415
        %2024 = vmatmul.mubr.bf16.gmra.mxu0 %v1414
        %v2025 = vpop.f32.mrf.mxu0
        %v2026 = vadd.f32 %v1865, %v2025
        %v2027 = vpop.f32.mrf.mxu0
        %v2028 = vpop.f32.mrf.mxu0
        %v2029 = vadd.f32 %v1868, %v2028
        %v2030 = vpop.f32.mrf.mxu0
        %2031 = vmatprep.mubr.bf16.mxu0 %v1420
        %2032 = vmatmul.mubr.bf16.gmra.mxu0 %v1419
        %v2033 = vpop.f32.mrf.mxu0
        %v2034 = vadd.f32 %v1873, %v2033
        %v2035 = vpop.f32.mrf.mxu0
        %v2036 = vpop.f32.mrf.mxu0
        %v2037 = vadd.f32 %v1876, %v2036
        %v2038 = vpop.f32.mrf.mxu0
        %2039 = vmatprep.mubr.bf16.mxu0 %v1425
        %2040 = vmatmul.mubr.bf16.gmra.mxu0 %v1424
        %v2041 = vpop.f32.mrf.mxu0
        %v2042 = vadd.f32 %v1881, %v2041
        %v2043 = vpop.f32.mrf.mxu0
        %v2044 = vpop.f32.mrf.mxu0
        %v2045 = vadd.f32 %v1884, %v2044
        %v2046 = vpop.f32.mrf.mxu0
        %2047 = vmatprep.mubr.bf16.mxu0 %v1430
        %2048 = vmatmul.mubr.bf16.gmra.mxu0 %v1429
        %v2049 = vpop.f32.mrf.mxu0
        %v2050 = vadd.f32 %v1889, %v2049
        %v2051 = vpop.f32.mrf.mxu0
        %v2052 = vpop.f32.mrf.mxu0
        %v2053 = vadd.f32 %v1892, %v2052
        %v2054 = vpop.f32.mrf.mxu0
        %2055 = vmatprep.mubr.bf16.mxu0 %v1435
        %2056 = vmatmul.mubr.bf16.gmra.mxu0 %v1434
        %v2057 = vpop.f32.mrf.mxu0
        %v2058 = vadd.f32 %v1897, %v2057
        %v2059 = vpop.f32.mrf.mxu0
        %v2060 = vpop.f32.mrf.mxu0
        %v2061 = vadd.f32 %v1900, %v2060
        %v2062 = vpop.f32.mrf.mxu0
        %2063 = vmatprep.mubr.bf16.mxu0 %v1440
        %2064 = vmatmul.mubr.bf16.gmra.mxu0 %v1439
        %v2065 = vpop.f32.mrf.mxu0
        %v2066 = vadd.f32 %v1905, %v2065
        %v2067 = vpop.f32.mrf.mxu0
        %v2068 = vpop.f32.mrf.mxu0
        %v2069 = vadd.f32 %v1908, %v2068
        %v2070 = vpop.f32.mrf.mxu0
        %2071 = vmatprep.mubr.bf16.mxu0 %v1445
        %2072 = vmatmul.mubr.bf16.gmra.mxu0 %v1444
        %v2073 = vpop.f32.mrf.mxu0
        %v2074 = vadd.f32 %v1913, %v2073
        %v2075 = vpop.f32.mrf.mxu0
        %v2076 = vpop.f32.mrf.mxu0
        %v2077 = vadd.f32 %v1916, %v2076
        %v2078 = vpop.f32.mrf.mxu0
        %2079 = vmatprep.mubr.bf16.mxu0 %v1450
        %2080 = vmatmul.mubr.bf16.gmra.mxu0 %v1449
        %v2081 = vpop.f32.mrf.mxu0
        %v2082 = vadd.f32 %v1921, %v2081
        %v2083 = vpop.f32.mrf.mxu0
        %v2084 = vpop.f32.mrf.mxu0
        %v2085 = vadd.f32 %v1924, %v2084
        %v2086 = vpop.f32.mrf.mxu0
        %2087 = vmatprep.mubr.bf16.mxu0 %v1455
        %2088 = vmatmul.mubr.bf16.gmra.mxu0 %v1454
        %v2089 = vpop.f32.mrf.mxu0
        %v2090 = vadd.f32 %v1929, %v2089
        %v2091 = vpop.f32.mrf.mxu0
        %v2092 = vpop.f32.mrf.mxu0
        %v2093 = vadd.f32 %v1932, %v2092
        %v2094 = vpop.f32.mrf.mxu0
        %2095 = vmatprep.mubr.bf16.mxu0 %v1460
        %2096 = vmatmul.mubr.bf16.gmra.mxu0 %v1459
        %v2097 = vpop.f32.mrf.mxu0
        %v2098 = vadd.f32 %v1937, %v2097
        %v2099 = vpop.f32.mrf.mxu0
        %v2100 = vpop.f32.mrf.mxu0
        %v2101 = vadd.f32 %v1940, %v2100
        %v2102 = vpop.f32.mrf.mxu0
        %2103 = vdwg.mxu0
        %2104 = vmatprep.subr.bf16.mxu0 0
        %2105 = vmatpush1.bf16.msra.mxu0 %v1741
        %2106 = vmatprep.subr.bf16.mxu0 0
        %2107 = vmatpush1.bf16.msra.mxu0 %v1740
        %2108 = vmatprep.subr.bf16.mxu0 0
        %2109 = vmatpush1.bf16.msra.mxu0 %v1739
        %2110 = vmatprep.subr.bf16.mxu0 0
        %2111 = vmatpush1.bf16.msra.mxu0 %v1738
        %2112 = vmatprep.subr.bf16.mxu0 0
        %2113 = vmatpush1.bf16.msra.mxu0 %v1737
        %2114 = vmatprep.subr.bf16.mxu0 0
        %2115 = vmatpush1.bf16.msra.mxu0 %v1736
        %2116 = vmatprep.subr.bf16.mxu0 0
        %2117 = vmatpush1.bf16.msra.mxu0 %v1735
        %2118 = vmatprep.subr.bf16.mxu0 0
        %2119 = vmatpush1.bf16.msra.mxu0 %v1734
        %2120 = vmatprep.subr.bf16.mxu0 0
        %2121 = vmatpush2.bf16.msra.mxu0 0
        %2122 = vmatprep.subr.bf16.mxu0 0
        %2123 = vmatpush2.bf16.msra.mxu0 0
        %2124 = vmatprep.subr.bf16.mxu0 0
        %2125 = vmatpush2.bf16.msra.mxu0 0
        %2126 = vmatprep.subr.bf16.mxu0 0
        %2127 = vmatpush2.bf16.msra.mxu0 0
        %2128 = vmatprep.subr.bf16.mxu0 0
        %2129 = vmatpush2.bf16.msra.mxu0 0
        %2130 = vmatprep.subr.bf16.mxu0 0
        %2131 = vmatpush2.bf16.msra.mxu0 0
        %2132 = vmatprep.subr.bf16.mxu0 0
        %2133 = vmatpush2.bf16.msra.mxu0 0
        %2134 = vmatprep.subr.bf16.mxu0 0
        %2135 = vmatpush2.bf16.msra.mxu0 0
        %2136 = vmatprep.mubr.bf16.mxu0 0
        %2137 = vmatmul.mubr.bf16.gmra.mxu0 %v1386
        %v2138 = vpop.f32.mrf.mxu0
        %v2139 = vadd.f32 %v1978, %v2138
        %v2140 = vpop.f32.mrf.mxu0
        %v2141 = vpop.f32.mrf.mxu0
        %v2142 = vadd.f32 %v1981, %v2141
        %v2143 = vpop.f32.mrf.mxu0
        %2144 = vmatprep.mubr.bf16.mxu0 0
        %2145 = vmatmul.mubr.bf16.gmra.mxu0 %v1391
        %v2146 = vpop.f32.mrf.mxu0
        %v2147 = vadd.f32 %v1986, %v2146
        %v2148 = vpop.f32.mrf.mxu0
        %v2149 = vpop.f32.mrf.mxu0
        %v2150 = vadd.f32 %v1989, %v2149
        %v2151 = vpop.f32.mrf.mxu0
        %2152 = vmatprep.mubr.bf16.mxu0 0
        %2153 = vmatmul.mubr.bf16.gmra.mxu0 %v1396
        %v2154 = vpop.f32.mrf.mxu0
        %v2155 = vadd.f32 %v1994, %v2154
        %v2156 = vpop.f32.mrf.mxu0
        %v2157 = vpop.f32.mrf.mxu0
        %v2158 = vadd.f32 %v1997, %v2157
        %v2159 = vpop.f32.mrf.mxu0
        %2160 = vmatprep.mubr.bf16.mxu0 0
        %2161 = vmatmul.mubr.bf16.gmra.mxu0 %v1401
        %v2162 = vpop.f32.mrf.mxu0
        %v2163 = vadd.f32 %v2002, %v2162
        %v2164 = vpop.f32.mrf.mxu0
        %v2165 = vpop.f32.mrf.mxu0
        %v2166 = vadd.f32 %v2005, %v2165
        %v2167 = vpop.f32.mrf.mxu0
        %2168 = vmatprep.mubr.bf16.mxu0 0
        %2169 = vmatmul.mubr.bf16.gmra.mxu0 %v1406
        %v2170 = vpop.f32.mrf.mxu0
        %v2171 = vadd.f32 %v2010, %v2170
        %v2172 = vpop.f32.mrf.mxu0
        %v2173 = vpop.f32.mrf.mxu0
        %v2174 = vadd.f32 %v2013, %v2173
        %v2175 = vpop.f32.mrf.mxu0
        %2176 = vmatprep.mubr.bf16.mxu0 0
        %2177 = vmatmul.mubr.bf16.gmra.mxu0 %v1411
        %v2178 = vpop.f32.mrf.mxu0
        %v2179 = vadd.f32 %v2018, %v2178
        %v2180 = vpop.f32.mrf.mxu0
        %v2181 = vpop.f32.mrf.mxu0
        %v2182 = vadd.f32 %v2021, %v2181
        %v2183 = vpop.f32.mrf.mxu0
        %2184 = vmatprep.mubr.bf16.mxu0 0
        %2185 = vmatmul.mubr.bf16.gmra.mxu0 %v1416
        %v2186 = vpop.f32.mrf.mxu0
        %v2187 = vadd.f32 %v2026, %v2186
        %v2188 = vpop.f32.mrf.mxu0
        %v2189 = vpop.f32.mrf.mxu0
        %v2190 = vadd.f32 %v2029, %v2189
        %v2191 = vpop.f32.mrf.mxu0
        %2192 = vmatprep.mubr.bf16.mxu0 0
        %2193 = vmatmul.mubr.bf16.gmra.mxu0 %v1421
        %v2194 = vpop.f32.mrf.mxu0
        %v2195 = vadd.f32 %v2034, %v2194
        %v2196 = vpop.f32.mrf.mxu0
        %v2197 = vpop.f32.mrf.mxu0
        %v2198 = vadd.f32 %v2037, %v2197
        %v2199 = vpop.f32.mrf.mxu0
        %2200 = vmatprep.mubr.bf16.mxu0 0
        %2201 = vmatmul.mubr.bf16.gmra.mxu0 %v1426
        %v2202 = vpop.f32.mrf.mxu0
        %v2203 = vadd.f32 %v2042, %v2202
        %v2204 = vpop.f32.mrf.mxu0
        %v2205 = vpop.f32.mrf.mxu0
        %v2206 = vadd.f32 %v2045, %v2205
        %v2207 = vpop.f32.mrf.mxu0
        %2208 = vmatprep.mubr.bf16.mxu0 0
        %2209 = vmatmul.mubr.bf16.gmra.mxu0 %v1431
        %v2210 = vpop.f32.mrf.mxu0
        %v2211 = vadd.f32 %v2050, %v2210
        %v2212 = vpop.f32.mrf.mxu0
        %v2213 = vpop.f32.mrf.mxu0
        %v2214 = vadd.f32 %v2053, %v2213
        %v2215 = vpop.f32.mrf.mxu0
        %2216 = vmatprep.mubr.bf16.mxu0 0
        %2217 = vmatmul.mubr.bf16.gmra.mxu0 %v1436
        %v2218 = vpop.f32.mrf.mxu0
        %v2219 = vadd.f32 %v2058, %v2218
        %v2220 = vpop.f32.mrf.mxu0
        %v2221 = vpop.f32.mrf.mxu0
        %v2222 = vadd.f32 %v2061, %v2221
        %v2223 = vpop.f32.mrf.mxu0
        %2224 = vmatprep.mubr.bf16.mxu0 0
        %2225 = vmatmul.mubr.bf16.gmra.mxu0 %v1441
        %v2226 = vpop.f32.mrf.mxu0
        %v2227 = vadd.f32 %v2066, %v2226
        %v2228 = vpop.f32.mrf.mxu0
        %v2229 = vpop.f32.mrf.mxu0
        %v2230 = vadd.f32 %v2069, %v2229
        %v2231 = vpop.f32.mrf.mxu0
        %2232 = vmatprep.mubr.bf16.mxu0 0
        %2233 = vmatmul.mubr.bf16.gmra.mxu0 %v1446
        %v2234 = vpop.f32.mrf.mxu0
        %v2235 = vadd.f32 %v2074, %v2234
        %v2236 = vpop.f32.mrf.mxu0
        %v2237 = vpop.f32.mrf.mxu0
        %v2238 = vadd.f32 %v2077, %v2237
        %v2239 = vpop.f32.mrf.mxu0
        %2240 = vmatprep.mubr.bf16.mxu0 0
        %2241 = vmatmul.mubr.bf16.gmra.mxu0 %v1451
        %v2242 = vpop.f32.mrf.mxu0
        %v2243 = vadd.f32 %v2082, %v2242
        %v2244 = vpop.f32.mrf.mxu0
        %v2245 = vpop.f32.mrf.mxu0
        %v2246 = vadd.f32 %v2085, %v2245
        %v2247 = vpop.f32.mrf.mxu0
        %2248 = vmatprep.mubr.bf16.mxu0 0
        %2249 = vmatmul.mubr.bf16.gmra.mxu0 %v1456
        %v2250 = vpop.f32.mrf.mxu0
        %v2251 = vadd.f32 %v2090, %v2250
        %v2252 = vpop.f32.mrf.mxu0
        %v2253 = vpop.f32.mrf.mxu0
        %v2254 = vadd.f32 %v2093, %v2253
        %v2255 = vpop.f32.mrf.mxu0
        %2256 = vmatprep.mubr.bf16.mxu0 0
        %2257 = vmatmul.mubr.bf16.gmra.mxu0 %v1461
        %v2258 = vpop.f32.mrf.mxu0
        %v2259 = vadd.f32 %v2098, %v2258
        %v2260 = vpop.f32.mrf.mxu0
        %v2261 = vpop.f32.mrf.mxu0
        %v2262 = vadd.f32 %v2101, %v2261
        %v2263 = vpop.f32.mrf.mxu0
        %2264 = vdwg.mxu0
        %v2265 = vadd.f32 %v918, %v2139
        %v2266 = vadd.f32 %v919, %v2142
        %v2267 = vadd.f32 %v920, %v2147
        %v2268 = vadd.f32 %v921, %v2150
        %v2269 = vadd.f32 %v922, %v2155
        %v2270 = vadd.f32 %v923, %v2158
        %v2271 = vadd.f32 %v924, %v2163
        %v2272 = vadd.f32 %v925, %v2166
        %v2273 = vadd.f32 %v926, %v2171
        %v2274 = vadd.f32 %v927, %v2174
        %v2275 = vadd.f32 %v928, %v2179
        %v2276 = vadd.f32 %v929, %v2182
        %v2277 = vadd.f32 %v930, %v2187
        %v2278 = vadd.f32 %v931, %v2190
        %v2279 = vadd.f32 %v932, %v2195
        %v2280 = vadd.f32 %v933, %v2198
        %v2281 = vadd.f32 %v934, %v2203
        %v2282 = vadd.f32 %v935, %v2206
        %v2283 = vadd.f32 %v936, %v2211
        %v2284 = vadd.f32 %v937, %v2214
        %v2285 = vadd.f32 %v938, %v2219
        %v2286 = vadd.f32 %v939, %v2222
        %v2287 = vadd.f32 %v940, %v2227
        %v2288 = vadd.f32 %v941, %v2230
        %v2289 = vadd.f32 %v942, %v2235
        %v2290 = vadd.f32 %v943, %v2238
        %v2291 = vadd.f32 %v944, %v2243
        %v2292 = vadd.f32 %v945, %v2246
        %v2293 = vadd.f32 %v946, %v2251
        %v2294 = vadd.f32 %v947, %v2254
        %v2295 = vadd.f32 %v948, %v2259
        %v2296 = vadd.f32 %v949, %v2262
        %2297 = vst [vmem:[#allocation2] sm:$0xff] %v2265
        %2298 = vst [vmem:[#allocation2 + $0x8] sm:$0xff] %v2266
        %2299 = vst [vmem:[#allocation2 + $0x10] sm:$0xff] %v2267
        %2300 = vst [vmem:[#allocation2 + $0x18] sm:$0xff] %v2268
        %2301 = vst [vmem:[#allocation2 + $0x20] sm:$0xff] %v2269
        %2302 = vst [vmem:[#allocation2 + $0x28] sm:$0xff] %v2270
        %2303 = vst [vmem:[#allocation2 + $0x30] sm:$0xff] %v2271
        %2304 = vst [vmem:[#allocation2 + $0x38] sm:$0xff] %v2272
        %2305 = vst [vmem:[#allocation2 + $0x40] sm:$0xff] %v2273
        %2306 = vst [vmem:[#allocation2 + $0x48] sm:$0xff] %v2274
        %2307 = vst [vmem:[#allocation2 + $0x50] sm:$0xff] %v2275
        %2308 = vst [vmem:[#allocation2 + $0x58] sm:$0xff] %v2276
        %2309 = vst [vmem:[#allocation2 + $0x60] sm:$0xff] %v2277
        %2310 = vst [vmem:[#allocation2 + $0x68] sm:$0xff] %v2278
        %2311 = vst [vmem:[#allocation2 + $0x70] sm:$0xff] %v2279
        %2312 = vst [vmem:[#allocation2 + $0x78] sm:$0xff] %v2280
        %2313 = vst [vmem:[#allocation2 + $0x80] sm:$0xff] %v2281
        %2314 = vst [vmem:[#allocation2 + $0x88] sm:$0xff] %v2282
        %2315 = vst [vmem:[#allocation2 + $0x90] sm:$0xff] %v2283
        %2316 = vst [vmem:[#allocation2 + $0x98] sm:$0xff] %v2284
        %2317 = vst [vmem:[#allocation2 + $0xa0] sm:$0xff] %v2285
        %2318 = vst [vmem:[#allocation2 + $0xa8] sm:$0xff] %v2286
        %2319 = vst [vmem:[#allocation2 + $0xb0] sm:$0xff] %v2287
        %2320 = vst [vmem:[#allocation2 + $0xb8] sm:$0xff] %v2288
        %2321 = vst [vmem:[#allocation2 + $0xc0] sm:$0xff] %v2289
        %2322 = vst [vmem:[#allocation2 + $0xc8] sm:$0xff] %v2290
        %2323 = vst [vmem:[#allocation2 + $0xd0] sm:$0xff] %v2291
        %2324 = vst [vmem:[#allocation2 + $0xd8] sm:$0xff] %v2292
        %2325 = vst [vmem:[#allocation2 + $0xe0] sm:$0xff] %v2293
        %2326 = vst [vmem:[#allocation2 + $0xe8] sm:$0xff] %v2294
        %2327 = vst [vmem:[#allocation2 + $0xf0] sm:$0xff] %v2295
        %2328 = vst [vmem:[#allocation2 + $0xf8] sm:$0xff] %v2296
        %s2329 = scalar_lea.vmem [#allocation2], 256
        %v2330 = vld [vmem:[%s2329] sm:$0xff]
        %v2331 = vld [vmem:[%s2329 + $0x8] sm:$0xff]
        %v2332 = vld [vmem:[%s2329 + $0x10] sm:$0xff]
        %v2333 = vld [vmem:[%s2329 + $0x18] sm:$0xff]
        %v2334 = vld [vmem:[%s2329 + $0x20] sm:$0xff]
        %v2335 = vld [vmem:[%s2329 + $0x28] sm:$0xff]
        %v2336 = vld [vmem:[%s2329 + $0x30] sm:$0xff]
        %v2337 = vld [vmem:[%s2329 + $0x38] sm:$0xff]
        %v2338 = vld [vmem:[%s2329 + $0x40] sm:$0xff]
        %v2339 = vld [vmem:[%s2329 + $0x48] sm:$0xff]
        %v2340 = vld [vmem:[%s2329 + $0x50] sm:$0xff]
        %v2341 = vld [vmem:[%s2329 + $0x58] sm:$0xff]
        %v2342 = vld [vmem:[%s2329 + $0x60] sm:$0xff]
        %v2343 = vld [vmem:[%s2329 + $0x68] sm:$0xff]
        %v2344 = vld [vmem:[%s2329 + $0x70] sm:$0xff]
        %v2345 = vld [vmem:[%s2329 + $0x78] sm:$0xff]
        %v2346 = vld [vmem:[%s2329 + $0x80] sm:$0xff]
        %v2347 = vld [vmem:[%s2329 + $0x88] sm:$0xff]
        %v2348 = vld [vmem:[%s2329 + $0x90] sm:$0xff]
        %v2349 = vld [vmem:[%s2329 + $0x98] sm:$0xff]
        %v2350 = vld [vmem:[%s2329 + $0xa0] sm:$0xff]
        %v2351 = vld [vmem:[%s2329 + $0xa8] sm:$0xff]
        %v2352 = vld [vmem:[%s2329 + $0xb0] sm:$0xff]
        %v2353 = vld [vmem:[%s2329 + $0xb8] sm:$0xff]
        %v2354 = vld [vmem:[%s2329 + $0xc0] sm:$0xff]
        %v2355 = vld [vmem:[%s2329 + $0xc8] sm:$0xff]
        %v2356 = vld [vmem:[%s2329 + $0xd0] sm:$0xff]
        %v2357 = vld [vmem:[%s2329 + $0xd8] sm:$0xff]
        %v2358 = vld [vmem:[%s2329 + $0xe0] sm:$0xff]
        %v2359 = vld [vmem:[%s2329 + $0xe8] sm:$0xff]
        %v2360 = vld [vmem:[%s2329 + $0xf0] sm:$0xff]
        %v2361 = vld [vmem:[%s2329 + $0xf8] sm:$0xff]
        %s2362 = scalar_lea.vmem %s777, 640 [#allocation3]
        %v2363 = vld [vmem:[%s2362] sm:$0xff]
        %v2364 = vld [vmem:[%s2362 + $0x8] sm:$0xff]
        %v2365 = vld [vmem:[%s2362 + $0x10] sm:$0xf]
        %v2366 = vld [vmem:[%s2362 + $0x14] sm:$0xff]
        %v2367 = vld [vmem:[%s2362 + $0x1c] sm:$0xff]
        %v2368 = vld [vmem:[%s2362 + $0x24] sm:$0xf]
        %v2369 = vld [vmem:[%s2362 + $0x28] sm:$0xff]
        %v2370 = vld [vmem:[%s2362 + $0x30] sm:$0xff]
        %v2371 = vld [vmem:[%s2362 + $0x38] sm:$0xf]
        %v2372 = vld [vmem:[%s2362 + $0x3c] sm:$0xff]
        %v2373 = vld [vmem:[%s2362 + $0x44] sm:$0xff]
        %v2374 = vld [vmem:[%s2362 + $0x4c] sm:$0xf]
        %v2375 = vld [vmem:[%s2362 + $0x50] sm:$0xff]
        %v2376 = vld [vmem:[%s2362 + $0x58] sm:$0xff]
        %v2377 = vld [vmem:[%s2362 + $0x60] sm:$0xf]
        %v2378 = vld [vmem:[%s2362 + $0x64] sm:$0xff]
        %v2379 = vld [vmem:[%s2362 + $0x6c] sm:$0xff]
        %v2380 = vld [vmem:[%s2362 + $0x74] sm:$0xf]
        %v2381 = vld [vmem:[%s2362 + $0x78] sm:$0xff]
        %v2382 = vld [vmem:[%s2362 + $0x80] sm:$0xff]
        %v2383 = vld [vmem:[%s2362 + $0x88] sm:$0xf]
        %v2384 = vld [vmem:[%s2362 + $0x8c] sm:$0xff]
        %v2385 = vld [vmem:[%s2362 + $0x94] sm:$0xff]
        %v2386 = vld [vmem:[%s2362 + $0x9c] sm:$0xf]
        %v2387 = vld [vmem:[%s2362 + $0xa0] sm:$0xff]
        %v2388 = vld [vmem:[%s2362 + $0xa8] sm:$0xff]
        %v2389 = vld [vmem:[%s2362 + $0xb0] sm:$0xf]
        %v2390 = vld [vmem:[%s2362 + $0xb4] sm:$0xff]
        %v2391 = vld [vmem:[%s2362 + $0xbc] sm:$0xff]
        %v2392 = vld [vmem:[%s2362 + $0xc4] sm:$0xf]
        %v2393 = vld [vmem:[%s2362 + $0xc8] sm:$0xff]
        %v2394 = vld [vmem:[%s2362 + $0xd0] sm:$0xff]
        %v2395 = vld [vmem:[%s2362 + $0xd8] sm:$0xf]
        %v2396 = vld [vmem:[%s2362 + $0xdc] sm:$0xff]
        %v2397 = vld [vmem:[%s2362 + $0xe4] sm:$0xff]
        %v2398 = vld [vmem:[%s2362 + $0xec] sm:$0xf]
        %v2399 = vld [vmem:[%s2362 + $0xf0] sm:$0xff]
        %v2400 = vld [vmem:[%s2362 + $0xf8] sm:$0xff]
        %v2401 = vld [vmem:[%s2362 + $0x100] sm:$0xf]
        %v2402 = vld [vmem:[%s2362 + $0x104] sm:$0xff]
        %v2403 = vld [vmem:[%s2362 + $0x10c] sm:$0xff]
        %v2404 = vld [vmem:[%s2362 + $0x114] sm:$0xf]
        %v2405 = vld [vmem:[%s2362 + $0x118] sm:$0xff]
        %v2406 = vld [vmem:[%s2362 + $0x120] sm:$0xff]
        %v2407 = vld [vmem:[%s2362 + $0x128] sm:$0xf]
        %v2408 = vld [vmem:[%s2362 + $0x12c] sm:$0xff]
        %v2409 = vld [vmem:[%s2362 + $0x134] sm:$0xff]
        %v2410 = vld [vmem:[%s2362 + $0x13c] sm:$0xf]
        %v2411 = vld [vmem:[%s2362 + $0x140] sm:$0xff]
        %v2412 = vld [vmem:[%s2362 + $0x148] sm:$0xff]
        %v2413 = vld [vmem:[%s2362 + $0x150] sm:$0xf]
        %v2414 = vld [vmem:[%s2362 + $0x154] sm:$0xff]
        %v2415 = vld [vmem:[%s2362 + $0x15c] sm:$0xff]
        %v2416 = vld [vmem:[%s2362 + $0x164] sm:$0xf]
        %v2417 = vld [vmem:[%s2362 + $0x168] sm:$0xff]
        %v2418 = vld [vmem:[%s2362 + $0x170] sm:$0xff]
        %v2419 = vld [vmem:[%s2362 + $0x178] sm:$0xf]
        %v2420 = vld [vmem:[%s2362 + $0x17c] sm:$0xff]
        %v2421 = vld [vmem:[%s2362 + $0x184] sm:$0xff]
        %v2422 = vld [vmem:[%s2362 + $0x18c] sm:$0xf]
        %v2423 = vld [vmem:[%s2362 + $0x190] sm:$0xff]
        %v2424 = vld [vmem:[%s2362 + $0x198] sm:$0xff]
        %v2425 = vld [vmem:[%s2362 + $0x1a0] sm:$0xf]
        %v2426 = vld [vmem:[%s2362 + $0x1a4] sm:$0xff]
        %v2427 = vld [vmem:[%s2362 + $0x1ac] sm:$0xff]
        %v2428 = vld [vmem:[%s2362 + $0x1b4] sm:$0xf]
        %v2429 = vld [vmem:[%s2362 + $0x1b8] sm:$0xff]
        %v2430 = vld [vmem:[%s2362 + $0x1c0] sm:$0xff]
        %v2431 = vld [vmem:[%s2362 + $0x1c8] sm:$0xf]
        %v2432 = vld [vmem:[%s2362 + $0x1cc] sm:$0xff]
        %v2433 = vld [vmem:[%s2362 + $0x1d4] sm:$0xff]
        %v2434 = vld [vmem:[%s2362 + $0x1dc] sm:$0xf]
        %v2435 = vld [vmem:[%s2362 + $0x1e0] sm:$0xff]
        %v2436 = vld [vmem:[%s2362 + $0x1e8] sm:$0xff]
        %v2437 = vld [vmem:[%s2362 + $0x1f0] sm:$0xf]
        %v2438 = vld [vmem:[%s2362 + $0x1f4] sm:$0xff]
        %v2439 = vld [vmem:[%s2362 + $0x1fc] sm:$0xff]
        %v2440 = vld [vmem:[%s2362 + $0x204] sm:$0xf]
        %v2441 = vld [vmem:[%s2362 + $0x208] sm:$0xff]
        %v2442 = vld [vmem:[%s2362 + $0x210] sm:$0xff]
        %v2443 = vld [vmem:[%s2362 + $0x218] sm:$0xf]
        %v2444 = vld [vmem:[%s2362 + $0x21c] sm:$0xff]
        %v2445 = vld [vmem:[%s2362 + $0x224] sm:$0xff]
        %v2446 = vld [vmem:[%s2362 + $0x22c] sm:$0xf]
        %v2447 = vld [vmem:[%s2362 + $0x230] sm:$0xff]
        %v2448 = vld [vmem:[%s2362 + $0x238] sm:$0xff]
        %v2449 = vld [vmem:[%s2362 + $0x240] sm:$0xf]
        %v2450 = vld [vmem:[%s2362 + $0x244] sm:$0xff]
        %v2451 = vld [vmem:[%s2362 + $0x24c] sm:$0xff]
        %v2452 = vld [vmem:[%s2362 + $0x254] sm:$0xf]
        %v2453 = vld [vmem:[%s2362 + $0x258] sm:$0xff]
        %v2454 = vld [vmem:[%s2362 + $0x260] sm:$0xff]
        %v2455 = vld [vmem:[%s2362 + $0x268] sm:$0xf]
        %v2456 = vld [vmem:[%s2362 + $0x26c] sm:$0xff]
        %v2457 = vld [vmem:[%s2362 + $0x274] sm:$0xff]
        %v2458 = vld [vmem:[%s2362 + $0x27c] sm:$0xf]
        %v2459 = vld [vmem:[%s809] sm:$0xf]
        %v2460 = vld [vmem:[%s809 + $0x4] sm:$0xf]
        %v2461 = vld [vmem:[%s809 + $0x8] sm:$0xf]
        %v2462 = vld [vmem:[%s809 + $0xc] sm:$0xf]
        %v2463 = vld [vmem:[%s809 + $0x10] sm:$0xf]
        %v2464 = vld [vmem:[%s809 + $0x14] sm:$0xf]
        %v2465 = vld [vmem:[%s809 + $0x18] sm:$0xf]
        %v2466 = vld [vmem:[%s809 + $0x1c] sm:$0xf]
        %v2467 = vld [vmem:[%s809 + $0x20] sm:$0xf]
        %v2468 = vld [vmem:[%s809 + $0x24] sm:$0xf]
        %v2469 = vld [vmem:[%s809 + $0x28] sm:$0xf]
        %v2470 = vld [vmem:[%s809 + $0x2c] sm:$0xf]
        %v2471 = vld [vmem:[%s809 + $0x30] sm:$0xf]
        %v2472 = vld [vmem:[%s809 + $0x34] sm:$0xf]
        %v2473 = vld [vmem:[%s809 + $0x38] sm:$0xf]
        %v2474 = vld [vmem:[%s809 + $0x3c] sm:$0xf]
        %v2475 = vld [vmem:[%s809 + $0x40] sm:$0xf]
        %v2476 = vld [vmem:[%s809 + $0x44] sm:$0xf]
        %v2477 = vld [vmem:[%s809 + $0x48] sm:$0xf]
        %v2478 = vld [vmem:[%s809 + $0x4c] sm:$0xf]
        %v2479 = vld [vmem:[%s809 + $0x50] sm:$0xf]
        %v2480 = vld [vmem:[%s809 + $0x54] sm:$0xf]
        %v2481 = vld [vmem:[%s809 + $0x58] sm:$0xf]
        %v2482 = vld [vmem:[%s809 + $0x5c] sm:$0xf]
        %v2483 = vld [vmem:[%s809 + $0x60] sm:$0xf]
        %v2484 = vld [vmem:[%s809 + $0x64] sm:$0xf]
        %v2485 = vld [vmem:[%s809 + $0x68] sm:$0xf]
        %v2486 = vld [vmem:[%s809 + $0x6c] sm:$0xf]
        %v2487 = vld [vmem:[%s809 + $0x70] sm:$0xf]
        %v2488 = vld [vmem:[%s809 + $0x74] sm:$0xf]
        %v2489 = vld [vmem:[%s809 + $0x78] sm:$0xf]
        %v2490 = vld [vmem:[%s809 + $0x7c] sm:$0xf]
        %v2491 = vld [vmem:[%s809 + $0x80] sm:$0xf]
        %v2492 = vld [vmem:[%s809 + $0x84] sm:$0xf]
        %v2493 = vld [vmem:[%s809 + $0x88] sm:$0xf]
        %v2494 = vld [vmem:[%s809 + $0x8c] sm:$0xf]
        %v2495 = vld [vmem:[%s809 + $0x90] sm:$0xf]
        %v2496 = vld [vmem:[%s809 + $0x94] sm:$0xf]
        %v2497 = vld [vmem:[%s809 + $0x98] sm:$0xf]
        %v2498 = vld [vmem:[%s809 + $0x9c] sm:$0xf]
        %v2499 = vld [vmem:[%s809 + $0xa0] sm:$0xf]
        %v2500 = vld [vmem:[%s809 + $0xa4] sm:$0xf]
        %v2501 = vld [vmem:[%s809 + $0xa8] sm:$0xf]
        %v2502 = vld [vmem:[%s809 + $0xac] sm:$0xf]
        %v2503 = vld [vmem:[%s809 + $0xb0] sm:$0xf]
        %v2504 = vld [vmem:[%s809 + $0xb4] sm:$0xf]
        %v2505 = vld [vmem:[%s809 + $0xb8] sm:$0xf]
        %v2506 = vld [vmem:[%s809 + $0xbc] sm:$0xf]
        %v2507 = vld [vmem:[%s809 + $0xc0] sm:$0xf]
        %v2508 = vld [vmem:[%s809 + $0xc4] sm:$0xf]
        %v2509 = vld [vmem:[%s809 + $0xc8] sm:$0xf]
        %v2510 = vld [vmem:[%s809 + $0xcc] sm:$0xf]
        %v2511 = vld [vmem:[%s809 + $0xd0] sm:$0xf]
        %v2512 = vld [vmem:[%s809 + $0xd4] sm:$0xf]
        %v2513 = vld [vmem:[%s809 + $0xd8] sm:$0xf]
        %v2514 = vld [vmem:[%s809 + $0xdc] sm:$0xf]
        %v2515 = vld [vmem:[%s809 + $0xe0] sm:$0xf]
        %v2516 = vld [vmem:[%s809 + $0xe4] sm:$0xf]
        %v2517 = vld [vmem:[%s809 + $0xe8] sm:$0xf]
        %v2518 = vld [vmem:[%s809 + $0xec] sm:$0xf]
        %v2519 = vld [vmem:[%s809 + $0xf0] sm:$0xf]
        %v2520 = vld [vmem:[%s809 + $0xf4] sm:$0xf]
        %v2521 = vld [vmem:[%s809 + $0xf8] sm:$0xf]
        %v2522 = vld [vmem:[%s809 + $0xfc] sm:$0xf]
        %v2523 = vld [vmem:[%s809 + $0x100] sm:$0xf]
        %v2524 = vld [vmem:[%s809 + $0x104] sm:$0xf]
        %v2525 = vld [vmem:[%s809 + $0x108] sm:$0xf]
        %v2526 = vld [vmem:[%s809 + $0x10c] sm:$0xf]
        %v2527 = vld [vmem:[%s809 + $0x110] sm:$0xf]
        %v2528 = vld [vmem:[%s809 + $0x114] sm:$0xf]
        %v2529 = vld [vmem:[%s809 + $0x118] sm:$0xf]
        %v2530 = vld [vmem:[%s809 + $0x11c] sm:$0xf]
        %v2531 = vld [vmem:[%s809 + $0x120] sm:$0xf]
        %v2532 = vld [vmem:[%s809 + $0x124] sm:$0xf]
        %v2533 = vld [vmem:[%s809 + $0x128] sm:$0xf]
        %v2534 = vld [vmem:[%s809 + $0x12c] sm:$0xf]
        %v2535 = vld [vmem:[%s809 + $0x130] sm:$0xf]
        %v2536 = vld [vmem:[%s809 + $0x134] sm:$0xf]
        %v2537 = vld [vmem:[%s809 + $0x138] sm:$0xf]
        %v2538 = vld [vmem:[%s809 + $0x13c] sm:$0xf]
        %v2635 = vunpack.c.l.b16 %v2363
        %v2636 = vunpack.c.h.b16 %v2363
        %v2637 = vunpack.c.l.b16 %v2364
        %v2638 = vunpack.c.h.b16 %v2364
        %v2639 = vunpack.c.l.b16 %v2365
        %v2640 = vunpack.c.l.b16 %v2366
        %v2641 = vunpack.c.h.b16 %v2366
        %v2642 = vunpack.c.l.b16 %v2367
        %v2643 = vunpack.c.h.b16 %v2367
        %v2644 = vunpack.c.l.b16 %v2368
        %v2645 = vunpack.c.l.b16 %v2369
        %v2646 = vunpack.c.h.b16 %v2369
        %v2647 = vunpack.c.l.b16 %v2370
        %v2648 = vunpack.c.h.b16 %v2370
        %v2649 = vunpack.c.l.b16 %v2371
        %v2650 = vunpack.c.l.b16 %v2372
        %v2651 = vunpack.c.h.b16 %v2372
        %v2652 = vunpack.c.l.b16 %v2373
        %v2653 = vunpack.c.h.b16 %v2373
        %v2654 = vunpack.c.l.b16 %v2374
        %v2655 = vunpack.c.l.b16 %v2375
        %v2656 = vunpack.c.h.b16 %v2375
        %v2657 = vunpack.c.l.b16 %v2376
        %v2658 = vunpack.c.h.b16 %v2376
        %v2659 = vunpack.c.l.b16 %v2377
        %v2660 = vunpack.c.l.b16 %v2378
        %v2661 = vunpack.c.h.b16 %v2378
        %v2662 = vunpack.c.l.b16 %v2379
        %v2663 = vunpack.c.h.b16 %v2379
        %v2664 = vunpack.c.l.b16 %v2380
        %v2665 = vunpack.c.l.b16 %v2381
        %v2666 = vunpack.c.h.b16 %v2381
        %v2667 = vunpack.c.l.b16 %v2382
        %v2668 = vunpack.c.h.b16 %v2382
        %v2669 = vunpack.c.l.b16 %v2383
        %v2670 = vunpack.c.l.b16 %v2384
        %v2671 = vunpack.c.h.b16 %v2384
        %v2672 = vunpack.c.l.b16 %v2385
        %v2673 = vunpack.c.h.b16 %v2385
        %v2674 = vunpack.c.l.b16 %v2386
        %v2675 = vunpack.c.l.b16 %v2387
        %v2676 = vunpack.c.h.b16 %v2387
        %v2677 = vunpack.c.l.b16 %v2388
        %v2678 = vunpack.c.h.b16 %v2388
        %v2679 = vunpack.c.l.b16 %v2389
        %v2680 = vunpack.c.l.b16 %v2390
        %v2681 = vunpack.c.h.b16 %v2390
        %v2682 = vunpack.c.l.b16 %v2391
        %v2683 = vunpack.c.h.b16 %v2391
        %v2684 = vunpack.c.l.b16 %v2392
        %v2685 = vunpack.c.l.b16 %v2393
        %v2686 = vunpack.c.h.b16 %v2393
        %v2687 = vunpack.c.l.b16 %v2394
        %v2688 = vunpack.c.h.b16 %v2394
        %v2689 = vunpack.c.l.b16 %v2395
        %v2690 = vunpack.c.l.b16 %v2396
        %v2691 = vunpack.c.h.b16 %v2396
        %v2692 = vunpack.c.l.b16 %v2397
        %v2693 = vunpack.c.h.b16 %v2397
        %v2694 = vunpack.c.l.b16 %v2398
        %v2695 = vunpack.c.l.b16 %v2399
        %v2696 = vunpack.c.h.b16 %v2399
        %v2697 = vunpack.c.l.b16 %v2400
        %v2698 = vunpack.c.h.b16 %v2400
        %v2699 = vunpack.c.l.b16 %v2401
        %v2700 = vunpack.c.l.b16 %v2402
        %v2701 = vunpack.c.h.b16 %v2402
        %v2702 = vunpack.c.l.b16 %v2403
        %v2703 = vunpack.c.h.b16 %v2403
        %v2704 = vunpack.c.l.b16 %v2404
        %v2705 = vunpack.c.l.b16 %v2405
        %v2706 = vunpack.c.h.b16 %v2405
        %v2707 = vunpack.c.l.b16 %v2406
        %v2708 = vunpack.c.h.b16 %v2406
        %v2709 = vunpack.c.l.b16 %v2407
        %v2710 = vunpack.c.l.b16 %v2408
        %v2711 = vunpack.c.h.b16 %v2408
        %v2712 = vunpack.c.l.b16 %v2409
        %v2713 = vunpack.c.h.b16 %v2409
        %v2714 = vunpack.c.l.b16 %v2410
        %v2715 = vunpack.c.l.b16 %v2411
        %v2716 = vunpack.c.h.b16 %v2411
        %v2717 = vunpack.c.l.b16 %v2412
        %v2718 = vunpack.c.h.b16 %v2412
        %v2719 = vunpack.c.l.b16 %v2413
        %v2720 = vunpack.c.l.b16 %v2414
        %v2721 = vunpack.c.h.b16 %v2414
        %v2722 = vunpack.c.l.b16 %v2415
        %v2723 = vunpack.c.h.b16 %v2415
        %v2724 = vunpack.c.l.b16 %v2416
        %v2725 = vunpack.c.l.b16 %v2417
        %v2726 = vunpack.c.h.b16 %v2417
        %v2727 = vunpack.c.l.b16 %v2418
        %v2728 = vunpack.c.h.b16 %v2418
        %v2729 = vunpack.c.l.b16 %v2419
        %v2730 = vunpack.c.l.b16 %v2420
        %v2731 = vunpack.c.h.b16 %v2420
        %v2732 = vunpack.c.l.b16 %v2421
        %v2733 = vunpack.c.h.b16 %v2421
        %v2734 = vunpack.c.l.b16 %v2422
        %v2735 = vunpack.c.l.b16 %v2423
        %v2736 = vunpack.c.h.b16 %v2423
        %v2737 = vunpack.c.l.b16 %v2424
        %v2738 = vunpack.c.h.b16 %v2424
        %v2739 = vunpack.c.l.b16 %v2425
        %v2740 = vunpack.c.l.b16 %v2426
        %v2741 = vunpack.c.h.b16 %v2426
        %v2742 = vunpack.c.l.b16 %v2427
        %v2743 = vunpack.c.h.b16 %v2427
        %v2744 = vunpack.c.l.b16 %v2428
        %v2745 = vunpack.c.l.b16 %v2429
        %v2746 = vunpack.c.h.b16 %v2429
        %v2747 = vunpack.c.l.b16 %v2430
        %v2748 = vunpack.c.h.b16 %v2430
        %v2749 = vunpack.c.l.b16 %v2431
        %v2750 = vunpack.c.l.b16 %v2432
        %v2751 = vunpack.c.h.b16 %v2432
        %v2752 = vunpack.c.l.b16 %v2433
        %v2753 = vunpack.c.h.b16 %v2433
        %v2754 = vunpack.c.l.b16 %v2434
        %v2755 = vunpack.c.l.b16 %v2435
        %v2756 = vunpack.c.h.b16 %v2435
        %v2757 = vunpack.c.l.b16 %v2436
        %v2758 = vunpack.c.h.b16 %v2436
        %v2759 = vunpack.c.l.b16 %v2437
        %v2760 = vunpack.c.l.b16 %v2438
        %v2761 = vunpack.c.h.b16 %v2438
        %v2762 = vunpack.c.l.b16 %v2439
        %v2763 = vunpack.c.h.b16 %v2439
        %v2764 = vunpack.c.l.b16 %v2440
        %v2765 = vunpack.c.l.b16 %v2441
        %v2766 = vunpack.c.h.b16 %v2441
        %v2767 = vunpack.c.l.b16 %v2442
        %v2768 = vunpack.c.h.b16 %v2442
        %v2769 = vunpack.c.l.b16 %v2443
        %v2770 = vunpack.c.l.b16 %v2444
        %v2771 = vunpack.c.h.b16 %v2444
        %v2772 = vunpack.c.l.b16 %v2445
        %v2773 = vunpack.c.h.b16 %v2445
        %v2774 = vunpack.c.l.b16 %v2446
        %v2775 = vunpack.c.l.b16 %v2447
        %v2776 = vunpack.c.h.b16 %v2447
        %v2777 = vunpack.c.l.b16 %v2448
        %v2778 = vunpack.c.h.b16 %v2448
        %v2779 = vunpack.c.l.b16 %v2449
        %v2780 = vunpack.c.l.b16 %v2450
        %v2781 = vunpack.c.h.b16 %v2450
        %v2782 = vunpack.c.l.b16 %v2451
        %v2783 = vunpack.c.h.b16 %v2451
        %v2784 = vunpack.c.l.b16 %v2452
        %v2785 = vunpack.c.l.b16 %v2453
        %v2786 = vunpack.c.h.b16 %v2453
        %v2787 = vunpack.c.l.b16 %v2454
        %v2788 = vunpack.c.h.b16 %v2454
        %v2789 = vunpack.c.l.b16 %v2455
        %v2790 = vunpack.c.l.b16 %v2456
        %v2791 = vunpack.c.h.b16 %v2456
        %v2792 = vunpack.c.l.b16 %v2457
        %v2793 = vunpack.c.h.b16 %v2457
        %v2794 = vunpack.c.l.b16 %v2458
        %v2795 = vpack.c.b16 %v2640, %v2635
        %v2796 = vpack.c.b16 %v2641, %v2636
        %v2797 = vpack.c.b16 %v2642, %v2637
        %v2798 = vpack.c.b16 %v2643, %v2638
        %v2799 = vpack.c.b16 %v2644, %v2639
        %v2800 = vpack.c.b16 %v2650, %v2645
        %v2801 = vpack.c.b16 %v2651, %v2646
        %v2802 = vpack.c.b16 %v2652, %v2647
        %v2803 = vpack.c.b16 %v2653, %v2648
        %v2804 = vpack.c.b16 %v2654, %v2649
        %v2805 = vpack.c.b16 %v2660, %v2655
        %v2806 = vpack.c.b16 %v2661, %v2656
        %v2807 = vpack.c.b16 %v2662, %v2657
        %v2808 = vpack.c.b16 %v2663, %v2658
        %v2809 = vpack.c.b16 %v2664, %v2659
        %v2810 = vpack.c.b16 %v2670, %v2665
        %v2811 = vpack.c.b16 %v2671, %v2666
        %v2812 = vpack.c.b16 %v2672, %v2667
        %v2813 = vpack.c.b16 %v2673, %v2668
        %v2814 = vpack.c.b16 %v2674, %v2669
        %v2815 = vpack.c.b16 %v2680, %v2675
        %v2816 = vpack.c.b16 %v2681, %v2676
        %v2817 = vpack.c.b16 %v2682, %v2677
        %v2818 = vpack.c.b16 %v2683, %v2678
        %v2819 = vpack.c.b16 %v2684, %v2679
        %v2820 = vpack.c.b16 %v2690, %v2685
        %v2821 = vpack.c.b16 %v2691, %v2686
        %v2822 = vpack.c.b16 %v2692, %v2687
        %v2823 = vpack.c.b16 %v2693, %v2688
        %v2824 = vpack.c.b16 %v2694, %v2689
        %v2825 = vpack.c.b16 %v2700, %v2695
        %v2826 = vpack.c.b16 %v2701, %v2696
        %v2827 = vpack.c.b16 %v2702, %v2697
        %v2828 = vpack.c.b16 %v2703, %v2698
        %v2829 = vpack.c.b16 %v2704, %v2699
        %v2830 = vpack.c.b16 %v2710, %v2705
        %v2831 = vpack.c.b16 %v2711, %v2706
        %v2832 = vpack.c.b16 %v2712, %v2707
        %v2833 = vpack.c.b16 %v2713, %v2708
        %v2834 = vpack.c.b16 %v2714, %v2709
        %v2835 = vpack.c.b16 %v2720, %v2715
        %v2836 = vpack.c.b16 %v2721, %v2716
        %v2837 = vpack.c.b16 %v2722, %v2717
        %v2838 = vpack.c.b16 %v2723, %v2718
        %v2839 = vpack.c.b16 %v2724, %v2719
        %v2840 = vpack.c.b16 %v2730, %v2725
        %v2841 = vpack.c.b16 %v2731, %v2726
        %v2842 = vpack.c.b16 %v2732, %v2727
        %v2843 = vpack.c.b16 %v2733, %v2728
        %v2844 = vpack.c.b16 %v2734, %v2729
        %v2845 = vpack.c.b16 %v2740, %v2735
        %v2846 = vpack.c.b16 %v2741, %v2736
        %v2847 = vpack.c.b16 %v2742, %v2737
        %v2848 = vpack.c.b16 %v2743, %v2738
        %v2849 = vpack.c.b16 %v2744, %v2739
        %v2850 = vpack.c.b16 %v2750, %v2745
        %v2851 = vpack.c.b16 %v2751, %v2746
        %v2852 = vpack.c.b16 %v2752, %v2747
        %v2853 = vpack.c.b16 %v2753, %v2748
        %v2854 = vpack.c.b16 %v2754, %v2749
        %v2855 = vpack.c.b16 %v2760, %v2755
        %v2856 = vpack.c.b16 %v2761, %v2756
        %v2857 = vpack.c.b16 %v2762, %v2757
        %v2858 = vpack.c.b16 %v2763, %v2758
        %v2859 = vpack.c.b16 %v2764, %v2759
        %v2860 = vpack.c.b16 %v2770, %v2765
        %v2861 = vpack.c.b16 %v2771, %v2766
        %v2862 = vpack.c.b16 %v2772, %v2767
        %v2863 = vpack.c.b16 %v2773, %v2768
        %v2864 = vpack.c.b16 %v2774, %v2769
        %v2865 = vpack.c.b16 %v2780, %v2775
        %v2866 = vpack.c.b16 %v2781, %v2776
        %v2867 = vpack.c.b16 %v2782, %v2777
        %v2868 = vpack.c.b16 %v2783, %v2778
        %v2869 = vpack.c.b16 %v2784, %v2779
        %v2870 = vpack.c.b16 %v2790, %v2785
        %v2871 = vpack.c.b16 %v2791, %v2786
        %v2872 = vpack.c.b16 %v2792, %v2787
        %v2873 = vpack.c.b16 %v2793, %v2788
        %v2874 = vpack.c.b16 %v2794, %v2789
        %v3035 = vunpack.c.l.b16 %v2459
        %v3036 = vunpack.c.l.b16 %v2460
        %v3037 = vunpack.c.l.b16 %v2461
        %v3038 = vunpack.c.l.b16 %v2462
        %v3039 = vunpack.c.l.b16 %v2463
        %v3040 = vunpack.c.l.b16 %v2464
        %v3041 = vunpack.c.l.b16 %v2465
        %v3042 = vunpack.c.l.b16 %v2466
        %v3043 = vunpack.c.l.b16 %v2467
        %v3044 = vunpack.c.l.b16 %v2468
        %v3045 = vunpack.c.l.b16 %v2469
        %v3046 = vunpack.c.l.b16 %v2470
        %v3047 = vunpack.c.l.b16 %v2471
        %v3048 = vunpack.c.l.b16 %v2472
        %v3049 = vunpack.c.l.b16 %v2473
        %v3050 = vunpack.c.l.b16 %v2474
        %v3051 = vunpack.c.l.b16 %v2475
        %v3052 = vunpack.c.l.b16 %v2476
        %v3053 = vunpack.c.l.b16 %v2477
        %v3054 = vunpack.c.l.b16 %v2478
        %v3055 = vunpack.c.l.b16 %v2479
        %v3056 = vunpack.c.l.b16 %v2480
        %v3057 = vunpack.c.l.b16 %v2481
        %v3058 = vunpack.c.l.b16 %v2482
        %v3059 = vunpack.c.l.b16 %v2483
        %v3060 = vunpack.c.l.b16 %v2484
        %v3061 = vunpack.c.l.b16 %v2485
        %v3062 = vunpack.c.l.b16 %v2486
        %v3063 = vunpack.c.l.b16 %v2487
        %v3064 = vunpack.c.l.b16 %v2488
        %v3065 = vunpack.c.l.b16 %v2489
        %v3066 = vunpack.c.l.b16 %v2490
        %v3067 = vunpack.c.l.b16 %v2491
        %v3068 = vunpack.c.l.b16 %v2492
        %v3069 = vunpack.c.l.b16 %v2493
        %v3070 = vunpack.c.l.b16 %v2494
        %v3071 = vunpack.c.l.b16 %v2495
        %v3072 = vunpack.c.l.b16 %v2496
        %v3073 = vunpack.c.l.b16 %v2497
        %v3074 = vunpack.c.l.b16 %v2498
        %v3075 = vunpack.c.l.b16 %v2499
        %v3076 = vunpack.c.l.b16 %v2500
        %v3077 = vunpack.c.l.b16 %v2501
        %v3078 = vunpack.c.l.b16 %v2502
        %v3079 = vunpack.c.l.b16 %v2503
        %v3080 = vunpack.c.l.b16 %v2504
        %v3081 = vunpack.c.l.b16 %v2505
        %v3082 = vunpack.c.l.b16 %v2506
        %v3083 = vunpack.c.l.b16 %v2507
        %v3084 = vunpack.c.l.b16 %v2508
        %v3085 = vunpack.c.l.b16 %v2509
        %v3086 = vunpack.c.l.b16 %v2510
        %v3087 = vunpack.c.l.b16 %v2511
        %v3088 = vunpack.c.l.b16 %v2512
        %v3089 = vunpack.c.l.b16 %v2513
        %v3090 = vunpack.c.l.b16 %v2514
        %v3091 = vunpack.c.l.b16 %v2515
        %v3092 = vunpack.c.l.b16 %v2516
        %v3093 = vunpack.c.l.b16 %v2517
        %v3094 = vunpack.c.l.b16 %v2518
        %v3095 = vunpack.c.l.b16 %v2519
        %v3096 = vunpack.c.l.b16 %v2520
        %v3097 = vunpack.c.l.b16 %v2521
        %v3098 = vunpack.c.l.b16 %v2522
        %v3099 = vunpack.c.l.b16 %v2523
        %v3100 = vunpack.c.l.b16 %v2524
        %v3101 = vunpack.c.l.b16 %v2525
        %v3102 = vunpack.c.l.b16 %v2526
        %v3103 = vunpack.c.l.b16 %v2527
        %v3104 = vunpack.c.l.b16 %v2528
        %v3105 = vunpack.c.l.b16 %v2529
        %v3106 = vunpack.c.l.b16 %v2530
        %v3107 = vunpack.c.l.b16 %v2531
        %v3108 = vunpack.c.l.b16 %v2532
        %v3109 = vunpack.c.l.b16 %v2533
        %v3110 = vunpack.c.l.b16 %v2534
        %v3111 = vunpack.c.l.b16 %v2535
        %v3112 = vunpack.c.l.b16 %v2536
        %v3113 = vunpack.c.l.b16 %v2537
        %v3114 = vunpack.c.l.b16 %v2538
        %v3115 = vpack.c.b16 %v3036, %v3035
        %v3116 = vpack.c.b16 %v3038, %v3037
        %v3117 = vpack.c.b16 %v3040, %v3039
        %v3118 = vpack.c.b16 %v3042, %v3041
        %v3119 = vpack.c.b16 %v3044, %v3043
        %v3120 = vpack.c.b16 %v3046, %v3045
        %v3121 = vpack.c.b16 %v3048, %v3047
        %v3122 = vpack.c.b16 %v3050, %v3049
        %v3123 = vpack.c.b16 %v3052, %v3051
        %v3124 = vpack.c.b16 %v3054, %v3053
        %v3125 = vpack.c.b16 %v3056, %v3055
        %v3126 = vpack.c.b16 %v3058, %v3057
        %v3127 = vpack.c.b16 %v3060, %v3059
        %v3128 = vpack.c.b16 %v3062, %v3061
        %v3129 = vpack.c.b16 %v3064, %v3063
        %v3130 = vpack.c.b16 %v3066, %v3065
        %v3131 = vpack.c.b16 %v3068, %v3067
        %v3132 = vpack.c.b16 %v3070, %v3069
        %v3133 = vpack.c.b16 %v3072, %v3071
        %v3134 = vpack.c.b16 %v3074, %v3073
        %v3135 = vpack.c.b16 %v3076, %v3075
        %v3136 = vpack.c.b16 %v3078, %v3077
        %v3137 = vpack.c.b16 %v3080, %v3079
        %v3138 = vpack.c.b16 %v3082, %v3081
        %v3139 = vpack.c.b16 %v3084, %v3083
        %v3140 = vpack.c.b16 %v3086, %v3085
        %v3141 = vpack.c.b16 %v3088, %v3087
        %v3142 = vpack.c.b16 %v3090, %v3089
        %v3143 = vpack.c.b16 %v3092, %v3091
        %v3144 = vpack.c.b16 %v3094, %v3093
        %v3145 = vpack.c.b16 %v3096, %v3095
        %v3146 = vpack.c.b16 %v3098, %v3097
        %v3147 = vpack.c.b16 %v3100, %v3099
        %v3148 = vpack.c.b16 %v3102, %v3101
        %v3149 = vpack.c.b16 %v3104, %v3103
        %v3150 = vpack.c.b16 %v3106, %v3105
        %v3151 = vpack.c.b16 %v3108, %v3107
        %v3152 = vpack.c.b16 %v3110, %v3109
        %v3153 = vpack.c.b16 %v3112, %v3111
        %v3154 = vpack.c.b16 %v3114, %v3113
        %3195 = vmatprep.subr.bf16.mxu0 0
        %3196 = vmatpush1.bf16.msra.mxu0 %v3122
        %3197 = vmatprep.subr.bf16.mxu0 0
        %3198 = vmatpush1.bf16.msra.mxu0 %v3121
        %3199 = vmatprep.subr.bf16.mxu0 0
        %3200 = vmatpush1.bf16.msra.mxu0 %v3120
        %3201 = vmatprep.subr.bf16.mxu0 0
        %3202 = vmatpush1.bf16.msra.mxu0 %v3119
        %3203 = vmatprep.subr.bf16.mxu0 0
        %3204 = vmatpush1.bf16.msra.mxu0 %v3118
        %3205 = vmatprep.subr.bf16.mxu0 0
        %3206 = vmatpush1.bf16.msra.mxu0 %v3117
        %3207 = vmatprep.subr.bf16.mxu0 0
        %3208 = vmatpush1.bf16.msra.mxu0 %v3116
        %3209 = vmatprep.subr.bf16.mxu0 0
        %3210 = vmatpush1.bf16.msra.mxu0 %v3115
        %3211 = vmatprep.subr.bf16.mxu0 0
        %3212 = vmatpush2.bf16.msra.mxu0 %v3130
        %3213 = vmatprep.subr.bf16.mxu0 0
        %3214 = vmatpush2.bf16.msra.mxu0 %v3129
        %3215 = vmatprep.subr.bf16.mxu0 0
        %3216 = vmatpush2.bf16.msra.mxu0 %v3128
        %3217 = vmatprep.subr.bf16.mxu0 0
        %3218 = vmatpush2.bf16.msra.mxu0 %v3127
        %3219 = vmatprep.subr.bf16.mxu0 0
        %3220 = vmatpush2.bf16.msra.mxu0 %v3126
        %3221 = vmatprep.subr.bf16.mxu0 0
        %3222 = vmatpush2.bf16.msra.mxu0 %v3125
        %3223 = vmatprep.subr.bf16.mxu0 0
        %3224 = vmatpush2.bf16.msra.mxu0 %v3124
        %3225 = vmatprep.subr.bf16.mxu0 0
        %3226 = vmatpush2.bf16.msra.mxu0 %v3123
        %3227 = vmatprep.mubr.bf16.mxu0 %v2796
        %3228 = vmatmul.mubr.bf16.gmra.mxu0 %v2795
        %v3229 = vpop.f32.mrf.mxu0
        %v3230 = vadd.f32 0.0, %v3229
        %v3231 = vpop.f32.mrf.mxu0
        %v3232 = vpop.f32.mrf.mxu0
        %v3233 = vadd.f32 0.0, %v3232
        %v3234 = vpop.f32.mrf.mxu0
        %3235 = vmatprep.mubr.bf16.mxu0 %v2801
        %3236 = vmatmul.mubr.bf16.gmra.mxu0 %v2800
        %v3237 = vpop.f32.mrf.mxu0
        %v3238 = vadd.f32 0.0, %v3237
        %v3239 = vpop.f32.mrf.mxu0
        %v3240 = vpop.f32.mrf.mxu0
        %v3241 = vadd.f32 0.0, %v3240
        %v3242 = vpop.f32.mrf.mxu0
        %3243 = vmatprep.mubr.bf16.mxu0 %v2806
        %3244 = vmatmul.mubr.bf16.gmra.mxu0 %v2805
        %v3245 = vpop.f32.mrf.mxu0
        %v3246 = vadd.f32 0.0, %v3245
        %v3247 = vpop.f32.mrf.mxu0
        %v3248 = vpop.f32.mrf.mxu0
        %v3249 = vadd.f32 0.0, %v3248
        %v3250 = vpop.f32.mrf.mxu0
        %3251 = vmatprep.mubr.bf16.mxu0 %v2811
        %3252 = vmatmul.mubr.bf16.gmra.mxu0 %v2810
        %v3253 = vpop.f32.mrf.mxu0
        %v3254 = vadd.f32 0.0, %v3253
        %v3255 = vpop.f32.mrf.mxu0
        %v3256 = vpop.f32.mrf.mxu0
        %v3257 = vadd.f32 0.0, %v3256
        %v3258 = vpop.f32.mrf.mxu0
        %3259 = vmatprep.mubr.bf16.mxu0 %v2816
        %3260 = vmatmul.mubr.bf16.gmra.mxu0 %v2815
        %v3261 = vpop.f32.mrf.mxu0
        %v3262 = vadd.f32 0.0, %v3261
        %v3263 = vpop.f32.mrf.mxu0
        %v3264 = vpop.f32.mrf.mxu0
        %v3265 = vadd.f32 0.0, %v3264
        %v3266 = vpop.f32.mrf.mxu0
        %3267 = vmatprep.mubr.bf16.mxu0 %v2821
        %3268 = vmatmul.mubr.bf16.gmra.mxu0 %v2820
        %v3269 = vpop.f32.mrf.mxu0
        %v3270 = vadd.f32 0.0, %v3269
        %v3271 = vpop.f32.mrf.mxu0
        %v3272 = vpop.f32.mrf.mxu0
        %v3273 = vadd.f32 0.0, %v3272
        %v3274 = vpop.f32.mrf.mxu0
        %3275 = vmatprep.mubr.bf16.mxu0 %v2826
        %3276 = vmatmul.mubr.bf16.gmra.mxu0 %v2825
        %v3277 = vpop.f32.mrf.mxu0
        %v3278 = vadd.f32 0.0, %v3277
        %v3279 = vpop.f32.mrf.mxu0
        %v3280 = vpop.f32.mrf.mxu0
        %v3281 = vadd.f32 0.0, %v3280
        %v3282 = vpop.f32.mrf.mxu0
        %3283 = vmatprep.mubr.bf16.mxu0 %v2831
        %3284 = vmatmul.mubr.bf16.gmra.mxu0 %v2830
        %v3285 = vpop.f32.mrf.mxu0
        %v3286 = vadd.f32 0.0, %v3285
        %v3287 = vpop.f32.mrf.mxu0
        %v3288 = vpop.f32.mrf.mxu0
        %v3289 = vadd.f32 0.0, %v3288
        %v3290 = vpop.f32.mrf.mxu0
        %3291 = vmatprep.mubr.bf16.mxu0 %v2836
        %3292 = vmatmul.mubr.bf16.gmra.mxu0 %v2835
        %v3293 = vpop.f32.mrf.mxu0
        %v3294 = vadd.f32 0.0, %v3293
        %v3295 = vpop.f32.mrf.mxu0
        %v3296 = vpop.f32.mrf.mxu0
        %v3297 = vadd.f32 0.0, %v3296
        %v3298 = vpop.f32.mrf.mxu0
        %3299 = vmatprep.mubr.bf16.mxu0 %v2841
        %3300 = vmatmul.mubr.bf16.gmra.mxu0 %v2840
        %v3301 = vpop.f32.mrf.mxu0
        %v3302 = vadd.f32 0.0, %v3301
        %v3303 = vpop.f32.mrf.mxu0
        %v3304 = vpop.f32.mrf.mxu0
        %v3305 = vadd.f32 0.0, %v3304
        %v3306 = vpop.f32.mrf.mxu0
        %3307 = vmatprep.mubr.bf16.mxu0 %v2846
        %3308 = vmatmul.mubr.bf16.gmra.mxu0 %v2845
        %v3309 = vpop.f32.mrf.mxu0
        %v3310 = vadd.f32 0.0, %v3309
        %v3311 = vpop.f32.mrf.mxu0
        %v3312 = vpop.f32.mrf.mxu0
        %v3313 = vadd.f32 0.0, %v3312
        %v3314 = vpop.f32.mrf.mxu0
        %3315 = vmatprep.mubr.bf16.mxu0 %v2851
        %3316 = vmatmul.mubr.bf16.gmra.mxu0 %v2850
        %v3317 = vpop.f32.mrf.mxu0
        %v3318 = vadd.f32 0.0, %v3317
        %v3319 = vpop.f32.mrf.mxu0
        %v3320 = vpop.f32.mrf.mxu0
        %v3321 = vadd.f32 0.0, %v3320
        %v3322 = vpop.f32.mrf.mxu0
        %3323 = vmatprep.mubr.bf16.mxu0 %v2856
        %3324 = vmatmul.mubr.bf16.gmra.mxu0 %v2855
        %v3325 = vpop.f32.mrf.mxu0
        %v3326 = vadd.f32 0.0, %v3325
        %v3327 = vpop.f32.mrf.mxu0
        %v3328 = vpop.f32.mrf.mxu0
        %v3329 = vadd.f32 0.0, %v3328
        %v3330 = vpop.f32.mrf.mxu0
        %3331 = vmatprep.mubr.bf16.mxu0 %v2861
        %3332 = vmatmul.mubr.bf16.gmra.mxu0 %v2860
        %v3333 = vpop.f32.mrf.mxu0
        %v3334 = vadd.f32 0.0, %v3333
        %v3335 = vpop.f32.mrf.mxu0
        %v3336 = vpop.f32.mrf.mxu0
        %v3337 = vadd.f32 0.0, %v3336
        %v3338 = vpop.f32.mrf.mxu0
        %3339 = vmatprep.mubr.bf16.mxu0 %v2866
        %3340 = vmatmul.mubr.bf16.gmra.mxu0 %v2865
        %v3341 = vpop.f32.mrf.mxu0
        %v3342 = vadd.f32 0.0, %v3341
        %v3343 = vpop.f32.mrf.mxu0
        %v3344 = vpop.f32.mrf.mxu0
        %v3345 = vadd.f32 0.0, %v3344
        %v3346 = vpop.f32.mrf.mxu0
        %3347 = vmatprep.mubr.bf16.mxu0 %v2871
        %3348 = vmatmul.mubr.bf16.gmra.mxu0 %v2870
        %v3349 = vpop.f32.mrf.mxu0
        %v3350 = vadd.f32 0.0, %v3349
        %v3351 = vpop.f32.mrf.mxu0
        %v3352 = vpop.f32.mrf.mxu0
        %v3353 = vadd.f32 0.0, %v3352
        %v3354 = vpop.f32.mrf.mxu0
        %3355 = vdwg.mxu0
        %3356 = vmatprep.subr.bf16.mxu0 0
        %3357 = vmatpush1.bf16.msra.mxu0 %v3138
        %3358 = vmatprep.subr.bf16.mxu0 0
        %3359 = vmatpush1.bf16.msra.mxu0 %v3137
        %3360 = vmatprep.subr.bf16.mxu0 0
        %3361 = vmatpush1.bf16.msra.mxu0 %v3136
        %3362 = vmatprep.subr.bf16.mxu0 0
        %3363 = vmatpush1.bf16.msra.mxu0 %v3135
        %3364 = vmatprep.subr.bf16.mxu0 0
        %3365 = vmatpush1.bf16.msra.mxu0 %v3134
        %3366 = vmatprep.subr.bf16.mxu0 0
        %3367 = vmatpush1.bf16.msra.mxu0 %v3133
        %3368 = vmatprep.subr.bf16.mxu0 0
        %3369 = vmatpush1.bf16.msra.mxu0 %v3132
        %3370 = vmatprep.subr.bf16.mxu0 0
        %3371 = vmatpush1.bf16.msra.mxu0 %v3131
        %3372 = vmatprep.subr.bf16.mxu0 0
        %3373 = vmatpush2.bf16.msra.mxu0 %v3146
        %3374 = vmatprep.subr.bf16.mxu0 0
        %3375 = vmatpush2.bf16.msra.mxu0 %v3145
        %3376 = vmatprep.subr.bf16.mxu0 0
        %3377 = vmatpush2.bf16.msra.mxu0 %v3144
        %3378 = vmatprep.subr.bf16.mxu0 0
        %3379 = vmatpush2.bf16.msra.mxu0 %v3143
        %3380 = vmatprep.subr.bf16.mxu0 0
        %3381 = vmatpush2.bf16.msra.mxu0 %v3142
        %3382 = vmatprep.subr.bf16.mxu0 0
        %3383 = vmatpush2.bf16.msra.mxu0 %v3141
        %3384 = vmatprep.subr.bf16.mxu0 0
        %3385 = vmatpush2.bf16.msra.mxu0 %v3140
        %3386 = vmatprep.subr.bf16.mxu0 0
        %3387 = vmatpush2.bf16.msra.mxu0 %v3139
        %3388 = vmatprep.mubr.bf16.mxu0 %v2798
        %3389 = vmatmul.mubr.bf16.gmra.mxu0 %v2797
        %v3390 = vpop.f32.mrf.mxu0
        %v3391 = vadd.f32 %v3230, %v3390
        %v3392 = vpop.f32.mrf.mxu0
        %v3393 = vpop.f32.mrf.mxu0
        %v3394 = vadd.f32 %v3233, %v3393
        %v3395 = vpop.f32.mrf.mxu0
        %3396 = vmatprep.mubr.bf16.mxu0 %v2803
        %3397 = vmatmul.mubr.bf16.gmra.mxu0 %v2802
        %v3398 = vpop.f32.mrf.mxu0
        %v3399 = vadd.f32 %v3238, %v3398
        %v3400 = vpop.f32.mrf.mxu0
        %v3401 = vpop.f32.mrf.mxu0
        %v3402 = vadd.f32 %v3241, %v3401
        %v3403 = vpop.f32.mrf.mxu0
        %3404 = vmatprep.mubr.bf16.mxu0 %v2808
        %3405 = vmatmul.mubr.bf16.gmra.mxu0 %v2807
        %v3406 = vpop.f32.mrf.mxu0
        %v3407 = vadd.f32 %v3246, %v3406
        %v3408 = vpop.f32.mrf.mxu0
        %v3409 = vpop.f32.mrf.mxu0
        %v3410 = vadd.f32 %v3249, %v3409
        %v3411 = vpop.f32.mrf.mxu0
        %3412 = vmatprep.mubr.bf16.mxu0 %v2813
        %3413 = vmatmul.mubr.bf16.gmra.mxu0 %v2812
        %v3414 = vpop.f32.mrf.mxu0
        %v3415 = vadd.f32 %v3254, %v3414
        %v3416 = vpop.f32.mrf.mxu0
        %v3417 = vpop.f32.mrf.mxu0
        %v3418 = vadd.f32 %v3257, %v3417
        %v3419 = vpop.f32.mrf.mxu0
        %3420 = vmatprep.mubr.bf16.mxu0 %v2818
        %3421 = vmatmul.mubr.bf16.gmra.mxu0 %v2817
        %v3422 = vpop.f32.mrf.mxu0
        %v3423 = vadd.f32 %v3262, %v3422
        %v3424 = vpop.f32.mrf.mxu0
        %v3425 = vpop.f32.mrf.mxu0
        %v3426 = vadd.f32 %v3265, %v3425
        %v3427 = vpop.f32.mrf.mxu0
        %3428 = vmatprep.mubr.bf16.mxu0 %v2823
        %3429 = vmatmul.mubr.bf16.gmra.mxu0 %v2822
        %v3430 = vpop.f32.mrf.mxu0
        %v3431 = vadd.f32 %v3270, %v3430
        %v3432 = vpop.f32.mrf.mxu0
        %v3433 = vpop.f32.mrf.mxu0
        %v3434 = vadd.f32 %v3273, %v3433
        %v3435 = vpop.f32.mrf.mxu0
        %3436 = vmatprep.mubr.bf16.mxu0 %v2828
        %3437 = vmatmul.mubr.bf16.gmra.mxu0 %v2827
        %v3438 = vpop.f32.mrf.mxu0
        %v3439 = vadd.f32 %v3278, %v3438
        %v3440 = vpop.f32.mrf.mxu0
        %v3441 = vpop.f32.mrf.mxu0
        %v3442 = vadd.f32 %v3281, %v3441
        %v3443 = vpop.f32.mrf.mxu0
        %3444 = vmatprep.mubr.bf16.mxu0 %v2833
        %3445 = vmatmul.mubr.bf16.gmra.mxu0 %v2832
        %v3446 = vpop.f32.mrf.mxu0
        %v3447 = vadd.f32 %v3286, %v3446
        %v3448 = vpop.f32.mrf.mxu0
        %v3449 = vpop.f32.mrf.mxu0
        %v3450 = vadd.f32 %v3289, %v3449
        %v3451 = vpop.f32.mrf.mxu0
        %3452 = vmatprep.mubr.bf16.mxu0 %v2838
        %3453 = vmatmul.mubr.bf16.gmra.mxu0 %v2837
        %v3454 = vpop.f32.mrf.mxu0
        %v3455 = vadd.f32 %v3294, %v3454
        %v3456 = vpop.f32.mrf.mxu0
        %v3457 = vpop.f32.mrf.mxu0
        %v3458 = vadd.f32 %v3297, %v3457
        %v3459 = vpop.f32.mrf.mxu0
        %3460 = vmatprep.mubr.bf16.mxu0 %v2843
        %3461 = vmatmul.mubr.bf16.gmra.mxu0 %v2842
        %v3462 = vpop.f32.mrf.mxu0
        %v3463 = vadd.f32 %v3302, %v3462
        %v3464 = vpop.f32.mrf.mxu0
        %v3465 = vpop.f32.mrf.mxu0
        %v3466 = vadd.f32 %v3305, %v3465
        %v3467 = vpop.f32.mrf.mxu0
        %3468 = vmatprep.mubr.bf16.mxu0 %v2848
        %3469 = vmatmul.mubr.bf16.gmra.mxu0 %v2847
        %v3470 = vpop.f32.mrf.mxu0
        %v3471 = vadd.f32 %v3310, %v3470
        %v3472 = vpop.f32.mrf.mxu0
        %v3473 = vpop.f32.mrf.mxu0
        %v3474 = vadd.f32 %v3313, %v3473
        %v3475 = vpop.f32.mrf.mxu0
        %3476 = vmatprep.mubr.bf16.mxu0 %v2853
        %3477 = vmatmul.mubr.bf16.gmra.mxu0 %v2852
        %v3478 = vpop.f32.mrf.mxu0
        %v3479 = vadd.f32 %v3318, %v3478
        %v3480 = vpop.f32.mrf.mxu0
        %v3481 = vpop.f32.mrf.mxu0
        %v3482 = vadd.f32 %v3321, %v3481
        %v3483 = vpop.f32.mrf.mxu0
        %3484 = vmatprep.mubr.bf16.mxu0 %v2858
        %3485 = vmatmul.mubr.bf16.gmra.mxu0 %v2857
        %v3486 = vpop.f32.mrf.mxu0
        %v3487 = vadd.f32 %v3326, %v3486
        %v3488 = vpop.f32.mrf.mxu0
        %v3489 = vpop.f32.mrf.mxu0
        %v3490 = vadd.f32 %v3329, %v3489
        %v3491 = vpop.f32.mrf.mxu0
        %3492 = vmatprep.mubr.bf16.mxu0 %v2863
        %3493 = vmatmul.mubr.bf16.gmra.mxu0 %v2862
        %v3494 = vpop.f32.mrf.mxu0
        %v3495 = vadd.f32 %v3334, %v3494
        %v3496 = vpop.f32.mrf.mxu0
        %v3497 = vpop.f32.mrf.mxu0
        %v3498 = vadd.f32 %v3337, %v3497
        %v3499 = vpop.f32.mrf.mxu0
        %3500 = vmatprep.mubr.bf16.mxu0 %v2868
        %3501 = vmatmul.mubr.bf16.gmra.mxu0 %v2867
        %v3502 = vpop.f32.mrf.mxu0
        %v3503 = vadd.f32 %v3342, %v3502
        %v3504 = vpop.f32.mrf.mxu0
        %v3505 = vpop.f32.mrf.mxu0
        %v3506 = vadd.f32 %v3345, %v3505
        %v3507 = vpop.f32.mrf.mxu0
        %3508 = vmatprep.mubr.bf16.mxu0 %v2873
        %3509 = vmatmul.mubr.bf16.gmra.mxu0 %v2872
        %v3510 = vpop.f32.mrf.mxu0
        %v3511 = vadd.f32 %v3350, %v3510
        %v3512 = vpop.f32.mrf.mxu0
        %v3513 = vpop.f32.mrf.mxu0
        %v3514 = vadd.f32 %v3353, %v3513
        %v3515 = vpop.f32.mrf.mxu0
        %3516 = vdwg.mxu0
        %3517 = vmatprep.subr.bf16.mxu0 0
        %3518 = vmatpush1.bf16.msra.mxu0 %v3154
        %3519 = vmatprep.subr.bf16.mxu0 0
        %3520 = vmatpush1.bf16.msra.mxu0 %v3153
        %3521 = vmatprep.subr.bf16.mxu0 0
        %3522 = vmatpush1.bf16.msra.mxu0 %v3152
        %3523 = vmatprep.subr.bf16.mxu0 0
        %3524 = vmatpush1.bf16.msra.mxu0 %v3151
        %3525 = vmatprep.subr.bf16.mxu0 0
        %3526 = vmatpush1.bf16.msra.mxu0 %v3150
        %3527 = vmatprep.subr.bf16.mxu0 0
        %3528 = vmatpush1.bf16.msra.mxu0 %v3149
        %3529 = vmatprep.subr.bf16.mxu0 0
        %3530 = vmatpush1.bf16.msra.mxu0 %v3148
        %3531 = vmatprep.subr.bf16.mxu0 0
        %3532 = vmatpush1.bf16.msra.mxu0 %v3147
        %3533 = vmatprep.subr.bf16.mxu0 0
        %3534 = vmatpush2.bf16.msra.mxu0 0
        %3535 = vmatprep.subr.bf16.mxu0 0
        %3536 = vmatpush2.bf16.msra.mxu0 0
        %3537 = vmatprep.subr.bf16.mxu0 0
        %3538 = vmatpush2.bf16.msra.mxu0 0
        %3539 = vmatprep.subr.bf16.mxu0 0
        %3540 = vmatpush2.bf16.msra.mxu0 0
        %3541 = vmatprep.subr.bf16.mxu0 0
        %3542 = vmatpush2.bf16.msra.mxu0 0
        %3543 = vmatprep.subr.bf16.mxu0 0
        %3544 = vmatpush2.bf16.msra.mxu0 0
        %3545 = vmatprep.subr.bf16.mxu0 0
        %3546 = vmatpush2.bf16.msra.mxu0 0
        %3547 = vmatprep.subr.bf16.mxu0 0
        %3548 = vmatpush2.bf16.msra.mxu0 0
        %3549 = vmatprep.mubr.bf16.mxu0 0
        %3550 = vmatmul.mubr.bf16.gmra.mxu0 %v2799
        %v3551 = vpop.f32.mrf.mxu0
        %v3552 = vadd.f32 %v3391, %v3551
        %v3553 = vpop.f32.mrf.mxu0
        %v3554 = vpop.f32.mrf.mxu0
        %v3555 = vadd.f32 %v3394, %v3554
        %v3556 = vpop.f32.mrf.mxu0
        %3557 = vmatprep.mubr.bf16.mxu0 0
        %3558 = vmatmul.mubr.bf16.gmra.mxu0 %v2804
        %v3559 = vpop.f32.mrf.mxu0
        %v3560 = vadd.f32 %v3399, %v3559
        %v3561 = vpop.f32.mrf.mxu0
        %v3562 = vpop.f32.mrf.mxu0
        %v3563 = vadd.f32 %v3402, %v3562
        %v3564 = vpop.f32.mrf.mxu0
        %3565 = vmatprep.mubr.bf16.mxu0 0
        %3566 = vmatmul.mubr.bf16.gmra.mxu0 %v2809
        %v3567 = vpop.f32.mrf.mxu0
        %v3568 = vadd.f32 %v3407, %v3567
        %v3569 = vpop.f32.mrf.mxu0
        %v3570 = vpop.f32.mrf.mxu0
        %v3571 = vadd.f32 %v3410, %v3570
        %v3572 = vpop.f32.mrf.mxu0
        %3573 = vmatprep.mubr.bf16.mxu0 0
        %3574 = vmatmul.mubr.bf16.gmra.mxu0 %v2814
        %v3575 = vpop.f32.mrf.mxu0
        %v3576 = vadd.f32 %v3415, %v3575
        %v3577 = vpop.f32.mrf.mxu0
        %v3578 = vpop.f32.mrf.mxu0
        %v3579 = vadd.f32 %v3418, %v3578
        %v3580 = vpop.f32.mrf.mxu0
        %3581 = vmatprep.mubr.bf16.mxu0 0
        %3582 = vmatmul.mubr.bf16.gmra.mxu0 %v2819
        %v3583 = vpop.f32.mrf.mxu0
        %v3584 = vadd.f32 %v3423, %v3583
        %v3585 = vpop.f32.mrf.mxu0
        %v3586 = vpop.f32.mrf.mxu0
        %v3587 = vadd.f32 %v3426, %v3586
        %v3588 = vpop.f32.mrf.mxu0
        %3589 = vmatprep.mubr.bf16.mxu0 0
        %3590 = vmatmul.mubr.bf16.gmra.mxu0 %v2824
        %v3591 = vpop.f32.mrf.mxu0
        %v3592 = vadd.f32 %v3431, %v3591
        %v3593 = vpop.f32.mrf.mxu0
        %v3594 = vpop.f32.mrf.mxu0
        %v3595 = vadd.f32 %v3434, %v3594
        %v3596 = vpop.f32.mrf.mxu0
        %3597 = vmatprep.mubr.bf16.mxu0 0
        %3598 = vmatmul.mubr.bf16.gmra.mxu0 %v2829
        %v3599 = vpop.f32.mrf.mxu0
        %v3600 = vadd.f32 %v3439, %v3599
        %v3601 = vpop.f32.mrf.mxu0
        %v3602 = vpop.f32.mrf.mxu0
        %v3603 = vadd.f32 %v3442, %v3602
        %v3604 = vpop.f32.mrf.mxu0
        %3605 = vmatprep.mubr.bf16.mxu0 0
        %3606 = vmatmul.mubr.bf16.gmra.mxu0 %v2834
        %v3607 = vpop.f32.mrf.mxu0
        %v3608 = vadd.f32 %v3447, %v3607
        %v3609 = vpop.f32.mrf.mxu0
        %v3610 = vpop.f32.mrf.mxu0
        %v3611 = vadd.f32 %v3450, %v3610
        %v3612 = vpop.f32.mrf.mxu0
        %3613 = vmatprep.mubr.bf16.mxu0 0
        %3614 = vmatmul.mubr.bf16.gmra.mxu0 %v2839
        %v3615 = vpop.f32.mrf.mxu0
        %v3616 = vadd.f32 %v3455, %v3615
        %v3617 = vpop.f32.mrf.mxu0
        %v3618 = vpop.f32.mrf.mxu0
        %v3619 = vadd.f32 %v3458, %v3618
        %v3620 = vpop.f32.mrf.mxu0
        %3621 = vmatprep.mubr.bf16.mxu0 0
        %3622 = vmatmul.mubr.bf16.gmra.mxu0 %v2844
        %v3623 = vpop.f32.mrf.mxu0
        %v3624 = vadd.f32 %v3463, %v3623
        %v3625 = vpop.f32.mrf.mxu0
        %v3626 = vpop.f32.mrf.mxu0
        %v3627 = vadd.f32 %v3466, %v3626
        %v3628 = vpop.f32.mrf.mxu0
        %3629 = vmatprep.mubr.bf16.mxu0 0
        %3630 = vmatmul.mubr.bf16.gmra.mxu0 %v2849
        %v3631 = vpop.f32.mrf.mxu0
        %v3632 = vadd.f32 %v3471, %v3631
        %v3633 = vpop.f32.mrf.mxu0
        %v3634 = vpop.f32.mrf.mxu0
        %v3635 = vadd.f32 %v3474, %v3634
        %v3636 = vpop.f32.mrf.mxu0
        %3637 = vmatprep.mubr.bf16.mxu0 0
        %3638 = vmatmul.mubr.bf16.gmra.mxu0 %v2854
        %v3639 = vpop.f32.mrf.mxu0
        %v3640 = vadd.f32 %v3479, %v3639
        %v3641 = vpop.f32.mrf.mxu0
        %v3642 = vpop.f32.mrf.mxu0
        %v3643 = vadd.f32 %v3482, %v3642
        %v3644 = vpop.f32.mrf.mxu0
        %3645 = vmatprep.mubr.bf16.mxu0 0
        %3646 = vmatmul.mubr.bf16.gmra.mxu0 %v2859
        %v3647 = vpop.f32.mrf.mxu0
        %v3648 = vadd.f32 %v3487, %v3647
        %v3649 = vpop.f32.mrf.mxu0
        %v3650 = vpop.f32.mrf.mxu0
        %v3651 = vadd.f32 %v3490, %v3650
        %v3652 = vpop.f32.mrf.mxu0
        %3653 = vmatprep.mubr.bf16.mxu0 0
        %3654 = vmatmul.mubr.bf16.gmra.mxu0 %v2864
        %v3655 = vpop.f32.mrf.mxu0
        %v3656 = vadd.f32 %v3495, %v3655
        %v3657 = vpop.f32.mrf.mxu0
        %v3658 = vpop.f32.mrf.mxu0
        %v3659 = vadd.f32 %v3498, %v3658
        %v3660 = vpop.f32.mrf.mxu0
        %3661 = vmatprep.mubr.bf16.mxu0 0
        %3662 = vmatmul.mubr.bf16.gmra.mxu0 %v2869
        %v3663 = vpop.f32.mrf.mxu0
        %v3664 = vadd.f32 %v3503, %v3663
        %v3665 = vpop.f32.mrf.mxu0
        %v3666 = vpop.f32.mrf.mxu0
        %v3667 = vadd.f32 %v3506, %v3666
        %v3668 = vpop.f32.mrf.mxu0
        %3669 = vmatprep.mubr.bf16.mxu0 0
        %3670 = vmatmul.mubr.bf16.gmra.mxu0 %v2874
        %v3671 = vpop.f32.mrf.mxu0
        %v3672 = vadd.f32 %v3511, %v3671
        %v3673 = vpop.f32.mrf.mxu0
        %v3674 = vpop.f32.mrf.mxu0
        %v3675 = vadd.f32 %v3514, %v3674
        %v3676 = vpop.f32.mrf.mxu0
        %3677 = vdwg.mxu0
        %v3678 = vadd.f32 %v2330, %v3552
        %v3679 = vadd.f32 %v2331, %v3555
        %v3680 = vadd.f32 %v2332, %v3560
        %v3681 = vadd.f32 %v2333, %v3563
        %v3682 = vadd.f32 %v2334, %v3568
        %v3683 = vadd.f32 %v2335, %v3571
        %v3684 = vadd.f32 %v2336, %v3576
        %v3685 = vadd.f32 %v2337, %v3579
        %v3686 = vadd.f32 %v2338, %v3584
        %v3687 = vadd.f32 %v2339, %v3587
        %v3688 = vadd.f32 %v2340, %v3592
        %v3689 = vadd.f32 %v2341, %v3595
        %v3690 = vadd.f32 %v2342, %v3600
        %v3691 = vadd.f32 %v2343, %v3603
        %v3692 = vadd.f32 %v2344, %v3608
        %v3693 = vadd.f32 %v2345, %v3611
        %v3694 = vadd.f32 %v2346, %v3616
        %v3695 = vadd.f32 %v2347, %v3619
        %v3696 = vadd.f32 %v2348, %v3624
        %v3697 = vadd.f32 %v2349, %v3627
        %v3698 = vadd.f32 %v2350, %v3632
        %v3699 = vadd.f32 %v2351, %v3635
        %v3700 = vadd.f32 %v2352, %v3640
        %v3701 = vadd.f32 %v2353, %v3643
        %v3702 = vadd.f32 %v2354, %v3648
        %v3703 = vadd.f32 %v2355, %v3651
        %v3704 = vadd.f32 %v2356, %v3656
        %v3705 = vadd.f32 %v2357, %v3659
        %v3706 = vadd.f32 %v2358, %v3664
        %v3707 = vadd.f32 %v2359, %v3667
        %v3708 = vadd.f32 %v2360, %v3672
        %v3709 = vadd.f32 %v2361, %v3675
        %3710 = vst [vmem:[%s2329] sm:$0xff] %v3678
        %3711 = vst [vmem:[%s2329 + $0x8] sm:$0xff] %v3679
        %3712 = vst [vmem:[%s2329 + $0x10] sm:$0xff] %v3680
        %3713 = vst [vmem:[%s2329 + $0x18] sm:$0xff] %v3681
        %3714 = vst [vmem:[%s2329 + $0x20] sm:$0xff] %v3682
        %3715 = vst [vmem:[%s2329 + $0x28] sm:$0xff] %v3683
        %3716 = vst [vmem:[%s2329 + $0x30] sm:$0xff] %v3684
        %3717 = vst [vmem:[%s2329 + $0x38] sm:$0xff] %v3685
        %3718 = vst [vmem:[%s2329 + $0x40] sm:$0xff] %v3686
        %3719 = vst [vmem:[%s2329 + $0x48] sm:$0xff] %v3687
        %3720 = vst [vmem:[%s2329 + $0x50] sm:$0xff] %v3688
        %3721 = vst [vmem:[%s2329 + $0x58] sm:$0xff] %v3689
        %3722 = vst [vmem:[%s2329 + $0x60] sm:$0xff] %v3690
        %3723 = vst [vmem:[%s2329 + $0x68] sm:$0xff] %v3691
        %3724 = vst [vmem:[%s2329 + $0x70] sm:$0xff] %v3692
        %3725 = vst [vmem:[%s2329 + $0x78] sm:$0xff] %v3693
        %3726 = vst [vmem:[%s2329 + $0x80] sm:$0xff] %v3694
        %3727 = vst [vmem:[%s2329 + $0x88] sm:$0xff] %v3695
        %3728 = vst [vmem:[%s2329 + $0x90] sm:$0xff] %v3696
        %3729 = vst [vmem:[%s2329 + $0x98] sm:$0xff] %v3697
        %3730 = vst [vmem:[%s2329 + $0xa0] sm:$0xff] %v3698
        %3731 = vst [vmem:[%s2329 + $0xa8] sm:$0xff] %v3699
        %3732 = vst [vmem:[%s2329 + $0xb0] sm:$0xff] %v3700
        %3733 = vst [vmem:[%s2329 + $0xb8] sm:$0xff] %v3701
        %3734 = vst [vmem:[%s2329 + $0xc0] sm:$0xff] %v3702
        %3735 = vst [vmem:[%s2329 + $0xc8] sm:$0xff] %v3703
        %3736 = vst [vmem:[%s2329 + $0xd0] sm:$0xff] %v3704
        %3737 = vst [vmem:[%s2329 + $0xd8] sm:$0xff] %v3705
        %3738 = vst [vmem:[%s2329 + $0xe0] sm:$0xff] %v3706
        %3739 = vst [vmem:[%s2329 + $0xe8] sm:$0xff] %v3707
        %3740 = vst [vmem:[%s2329 + $0xf0] sm:$0xff] %v3708
        %3741 = vst [vmem:[%s2329 + $0xf8] sm:$0xff] %v3709
        %s3742 = scalar_lea.vmem [#allocation2], 512
        %v3743 = vld [vmem:[%s3742] sm:$0xff]
        %v3744 = vld [vmem:[%s3742 + $0x8] sm:$0xff]
        %v3745 = vld [vmem:[%s3742 + $0x10] sm:$0xff]
        %v3746 = vld [vmem:[%s3742 + $0x18] sm:$0xff]
        %v3747 = vld [vmem:[%s3742 + $0x20] sm:$0xff]
        %v3748 = vld [vmem:[%s3742 + $0x28] sm:$0xff]
        %v3749 = vld [vmem:[%s3742 + $0x30] sm:$0xff]
        %v3750 = vld [vmem:[%s3742 + $0x38] sm:$0xff]
        %v3751 = vld [vmem:[%s3742 + $0x40] sm:$0xff]
        %v3752 = vld [vmem:[%s3742 + $0x48] sm:$0xff]
        %v3753 = vld [vmem:[%s3742 + $0x50] sm:$0xff]
        %v3754 = vld [vmem:[%s3742 + $0x58] sm:$0xff]
        %v3755 = vld [vmem:[%s3742 + $0x60] sm:$0xff]
        %v3756 = vld [vmem:[%s3742 + $0x68] sm:$0xff]
        %v3757 = vld [vmem:[%s3742 + $0x70] sm:$0xff]
        %v3758 = vld [vmem:[%s3742 + $0x78] sm:$0xff]
        %v3759 = vld [vmem:[%s3742 + $0x80] sm:$0xff]
        %v3760 = vld [vmem:[%s3742 + $0x88] sm:$0xff]
        %v3761 = vld [vmem:[%s3742 + $0x90] sm:$0xff]
        %v3762 = vld [vmem:[%s3742 + $0x98] sm:$0xff]
        %v3763 = vld [vmem:[%s3742 + $0xa0] sm:$0xff]
        %v3764 = vld [vmem:[%s3742 + $0xa8] sm:$0xff]
        %v3765 = vld [vmem:[%s3742 + $0xb0] sm:$0xff]
        %v3766 = vld [vmem:[%s3742 + $0xb8] sm:$0xff]
        %v3767 = vld [vmem:[%s3742 + $0xc0] sm:$0xff]
        %v3768 = vld [vmem:[%s3742 + $0xc8] sm:$0xff]
        %v3769 = vld [vmem:[%s3742 + $0xd0] sm:$0xff]
        %v3770 = vld [vmem:[%s3742 + $0xd8] sm:$0xff]
        %v3771 = vld [vmem:[%s3742 + $0xe0] sm:$0xff]
        %v3772 = vld [vmem:[%s3742 + $0xe8] sm:$0xff]
        %v3773 = vld [vmem:[%s3742 + $0xf0] sm:$0xff]
        %v3774 = vld [vmem:[%s3742 + $0xf8] sm:$0xff]
        %s3775 = scalar_lea.vmem %s777, 1280 [#allocation3]
        %v3776 = vld [vmem:[%s3775] sm:$0xff]
        %v3777 = vld [vmem:[%s3775 + $0x8] sm:$0xff]
        %v3778 = vld [vmem:[%s3775 + $0x10] sm:$0xf]
        %v3779 = vld [vmem:[%s3775 + $0x14] sm:$0xff]
        %v3780 = vld [vmem:[%s3775 + $0x1c] sm:$0xff]
        %v3781 = vld [vmem:[%s3775 + $0x24] sm:$0xf]
        %v3782 = vld [vmem:[%s3775 + $0x28] sm:$0xff]
        %v3783 = vld [vmem:[%s3775 + $0x30] sm:$0xff]
        %v3784 = vld [vmem:[%s3775 + $0x38] sm:$0xf]
        %v3785 = vld [vmem:[%s3775 + $0x3c] sm:$0xff]
        %v3786 = vld [vmem:[%s3775 + $0x44] sm:$0xff]
        %v3787 = vld [vmem:[%s3775 + $0x4c] sm:$0xf]
        %v3788 = vld [vmem:[%s3775 + $0x50] sm:$0xff]
        %v3789 = vld [vmem:[%s3775 + $0x58] sm:$0xff]
        %v3790 = vld [vmem:[%s3775 + $0x60] sm:$0xf]
        %v3791 = vld [vmem:[%s3775 + $0x64] sm:$0xff]
        %v3792 = vld [vmem:[%s3775 + $0x6c] sm:$0xff]
        %v3793 = vld [vmem:[%s3775 + $0x74] sm:$0xf]
        %v3794 = vld [vmem:[%s3775 + $0x78] sm:$0xff]
        %v3795 = vld [vmem:[%s3775 + $0x80] sm:$0xff]
        %v3796 = vld [vmem:[%s3775 + $0x88] sm:$0xf]
        %v3797 = vld [vmem:[%s3775 + $0x8c] sm:$0xff]
        %v3798 = vld [vmem:[%s3775 + $0x94] sm:$0xff]
        %v3799 = vld [vmem:[%s3775 + $0x9c] sm:$0xf]
        %v3800 = vld [vmem:[%s3775 + $0xa0] sm:$0xff]
        %v3801 = vld [vmem:[%s3775 + $0xa8] sm:$0xff]
        %v3802 = vld [vmem:[%s3775 + $0xb0] sm:$0xf]
        %v3803 = vld [vmem:[%s3775 + $0xb4] sm:$0xff]
        %v3804 = vld [vmem:[%s3775 + $0xbc] sm:$0xff]
        %v3805 = vld [vmem:[%s3775 + $0xc4] sm:$0xf]
        %v3806 = vld [vmem:[%s3775 + $0xc8] sm:$0xff]
        %v3807 = vld [vmem:[%s3775 + $0xd0] sm:$0xff]
        %v3808 = vld [vmem:[%s3775 + $0xd8] sm:$0xf]
        %v3809 = vld [vmem:[%s3775 + $0xdc] sm:$0xff]
        %v3810 = vld [vmem:[%s3775 + $0xe4] sm:$0xff]
        %v3811 = vld [vmem:[%s3775 + $0xec] sm:$0xf]
        %v3812 = vld [vmem:[%s3775 + $0xf0] sm:$0xff]
        %v3813 = vld [vmem:[%s3775 + $0xf8] sm:$0xff]
        %v3814 = vld [vmem:[%s3775 + $0x100] sm:$0xf]
        %v3815 = vld [vmem:[%s3775 + $0x104] sm:$0xff]
        %v3816 = vld [vmem:[%s3775 + $0x10c] sm:$0xff]
        %v3817 = vld [vmem:[%s3775 + $0x114] sm:$0xf]
        %v3818 = vld [vmem:[%s3775 + $0x118] sm:$0xff]
        %v3819 = vld [vmem:[%s3775 + $0x120] sm:$0xff]
        %v3820 = vld [vmem:[%s3775 + $0x128] sm:$0xf]
        %v3821 = vld [vmem:[%s3775 + $0x12c] sm:$0xff]
        %v3822 = vld [vmem:[%s3775 + $0x134] sm:$0xff]
        %v3823 = vld [vmem:[%s3775 + $0x13c] sm:$0xf]
        %v3824 = vld [vmem:[%s3775 + $0x140] sm:$0xff]
        %v3825 = vld [vmem:[%s3775 + $0x148] sm:$0xff]
        %v3826 = vld [vmem:[%s3775 + $0x150] sm:$0xf]
        %v3827 = vld [vmem:[%s3775 + $0x154] sm:$0xff]
        %v3828 = vld [vmem:[%s3775 + $0x15c] sm:$0xff]
        %v3829 = vld [vmem:[%s3775 + $0x164] sm:$0xf]
        %v3830 = vld [vmem:[%s3775 + $0x168] sm:$0xff]
        %v3831 = vld [vmem:[%s3775 + $0x170] sm:$0xff]
        %v3832 = vld [vmem:[%s3775 + $0x178] sm:$0xf]
        %v3833 = vld [vmem:[%s3775 + $0x17c] sm:$0xff]
        %v3834 = vld [vmem:[%s3775 + $0x184] sm:$0xff]
        %v3835 = vld [vmem:[%s3775 + $0x18c] sm:$0xf]
        %v3836 = vld [vmem:[%s3775 + $0x190] sm:$0xff]
        %v3837 = vld [vmem:[%s3775 + $0x198] sm:$0xff]
        %v3838 = vld [vmem:[%s3775 + $0x1a0] sm:$0xf]
        %v3839 = vld [vmem:[%s3775 + $0x1a4] sm:$0xff]
        %v3840 = vld [vmem:[%s3775 + $0x1ac] sm:$0xff]
        %v3841 = vld [vmem:[%s3775 + $0x1b4] sm:$0xf]
        %v3842 = vld [vmem:[%s3775 + $0x1b8] sm:$0xff]
        %v3843 = vld [vmem:[%s3775 + $0x1c0] sm:$0xff]
        %v3844 = vld [vmem:[%s3775 + $0x1c8] sm:$0xf]
        %v3845 = vld [vmem:[%s3775 + $0x1cc] sm:$0xff]
        %v3846 = vld [vmem:[%s3775 + $0x1d4] sm:$0xff]
        %v3847 = vld [vmem:[%s3775 + $0x1dc] sm:$0xf]
        %v3848 = vld [vmem:[%s3775 + $0x1e0] sm:$0xff]
        %v3849 = vld [vmem:[%s3775 + $0x1e8] sm:$0xff]
        %v3850 = vld [vmem:[%s3775 + $0x1f0] sm:$0xf]
        %v3851 = vld [vmem:[%s3775 + $0x1f4] sm:$0xff]
        %v3852 = vld [vmem:[%s3775 + $0x1fc] sm:$0xff]
        %v3853 = vld [vmem:[%s3775 + $0x204] sm:$0xf]
        %v3854 = vld [vmem:[%s3775 + $0x208] sm:$0xff]
        %v3855 = vld [vmem:[%s3775 + $0x210] sm:$0xff]
        %v3856 = vld [vmem:[%s3775 + $0x218] sm:$0xf]
        %v3857 = vld [vmem:[%s3775 + $0x21c] sm:$0xff]
        %v3858 = vld [vmem:[%s3775 + $0x224] sm:$0xff]
        %v3859 = vld [vmem:[%s3775 + $0x22c] sm:$0xf]
        %v3860 = vld [vmem:[%s3775 + $0x230] sm:$0xff]
        %v3861 = vld [vmem:[%s3775 + $0x238] sm:$0xff]
        %v3862 = vld [vmem:[%s3775 + $0x240] sm:$0xf]
        %v3863 = vld [vmem:[%s3775 + $0x244] sm:$0xff]
        %v3864 = vld [vmem:[%s3775 + $0x24c] sm:$0xff]
        %v3865 = vld [vmem:[%s3775 + $0x254] sm:$0xf]
        %v3866 = vld [vmem:[%s3775 + $0x258] sm:$0xff]
        %v3867 = vld [vmem:[%s3775 + $0x260] sm:$0xff]
        %v3868 = vld [vmem:[%s3775 + $0x268] sm:$0xf]
        %v3869 = vld [vmem:[%s3775 + $0x26c] sm:$0xff]
        %v3870 = vld [vmem:[%s3775 + $0x274] sm:$0xff]
        %v3871 = vld [vmem:[%s3775 + $0x27c] sm:$0xf]
        %v3872 = vld [vmem:[%s809] sm:$0xf]
        %v3873 = vld [vmem:[%s809 + $0x4] sm:$0xf]
        %v3874 = vld [vmem:[%s809 + $0x8] sm:$0xf]
        %v3875 = vld [vmem:[%s809 + $0xc] sm:$0xf]
        %v3876 = vld [vmem:[%s809 + $0x10] sm:$0xf]
        %v3877 = vld [vmem:[%s809 + $0x14] sm:$0xf]
        %v3878 = vld [vmem:[%s809 + $0x18] sm:$0xf]
        %v3879 = vld [vmem:[%s809 + $0x1c] sm:$0xf]
        %v3880 = vld [vmem:[%s809 + $0x20] sm:$0xf]
        %v3881 = vld [vmem:[%s809 + $0x24] sm:$0xf]
        %v3882 = vld [vmem:[%s809 + $0x28] sm:$0xf]
        %v3883 = vld [vmem:[%s809 + $0x2c] sm:$0xf]
        %v3884 = vld [vmem:[%s809 + $0x30] sm:$0xf]
        %v3885 = vld [vmem:[%s809 + $0x34] sm:$0xf]
        %v3886 = vld [vmem:[%s809 + $0x38] sm:$0xf]
        %v3887 = vld [vmem:[%s809 + $0x3c] sm:$0xf]
        %v3888 = vld [vmem:[%s809 + $0x40] sm:$0xf]
        %v3889 = vld [vmem:[%s809 + $0x44] sm:$0xf]
        %v3890 = vld [vmem:[%s809 + $0x48] sm:$0xf]
        %v3891 = vld [vmem:[%s809 + $0x4c] sm:$0xf]
        %v3892 = vld [vmem:[%s809 + $0x50] sm:$0xf]
        %v3893 = vld [vmem:[%s809 + $0x54] sm:$0xf]
        %v3894 = vld [vmem:[%s809 + $0x58] sm:$0xf]
        %v3895 = vld [vmem:[%s809 + $0x5c] sm:$0xf]
        %v3896 = vld [vmem:[%s809 + $0x60] sm:$0xf]
        %v3897 = vld [vmem:[%s809 + $0x64] sm:$0xf]
        %v3898 = vld [vmem:[%s809 + $0x68] sm:$0xf]
        %v3899 = vld [vmem:[%s809 + $0x6c] sm:$0xf]
        %v3900 = vld [vmem:[%s809 + $0x70] sm:$0xf]
        %v3901 = vld [vmem:[%s809 + $0x74] sm:$0xf]
        %v3902 = vld [vmem:[%s809 + $0x78] sm:$0xf]
        %v3903 = vld [vmem:[%s809 + $0x7c] sm:$0xf]
        %v3904 = vld [vmem:[%s809 + $0x80] sm:$0xf]
        %v3905 = vld [vmem:[%s809 + $0x84] sm:$0xf]
        %v3906 = vld [vmem:[%s809 + $0x88] sm:$0xf]
        %v3907 = vld [vmem:[%s809 + $0x8c] sm:$0xf]
        %v3908 = vld [vmem:[%s809 + $0x90] sm:$0xf]
        %v3909 = vld [vmem:[%s809 + $0x94] sm:$0xf]
        %v3910 = vld [vmem:[%s809 + $0x98] sm:$0xf]
        %v3911 = vld [vmem:[%s809 + $0x9c] sm:$0xf]
        %v3912 = vld [vmem:[%s809 + $0xa0] sm:$0xf]
        %v3913 = vld [vmem:[%s809 + $0xa4] sm:$0xf]
        %v3914 = vld [vmem:[%s809 + $0xa8] sm:$0xf]
        %v3915 = vld [vmem:[%s809 + $0xac] sm:$0xf]
        %v3916 = vld [vmem:[%s809 + $0xb0] sm:$0xf]
        %v3917 = vld [vmem:[%s809 + $0xb4] sm:$0xf]
        %v3918 = vld [vmem:[%s809 + $0xb8] sm:$0xf]
        %v3919 = vld [vmem:[%s809 + $0xbc] sm:$0xf]
        %v3920 = vld [vmem:[%s809 + $0xc0] sm:$0xf]
        %v3921 = vld [vmem:[%s809 + $0xc4] sm:$0xf]
        %v3922 = vld [vmem:[%s809 + $0xc8] sm:$0xf]
        %v3923 = vld [vmem:[%s809 + $0xcc] sm:$0xf]
        %v3924 = vld [vmem:[%s809 + $0xd0] sm:$0xf]
        %v3925 = vld [vmem:[%s809 + $0xd4] sm:$0xf]
        %v3926 = vld [vmem:[%s809 + $0xd8] sm:$0xf]
        %v3927 = vld [vmem:[%s809 + $0xdc] sm:$0xf]
        %v3928 = vld [vmem:[%s809 + $0xe0] sm:$0xf]
        %v3929 = vld [vmem:[%s809 + $0xe4] sm:$0xf]
        %v3930 = vld [vmem:[%s809 + $0xe8] sm:$0xf]
        %v3931 = vld [vmem:[%s809 + $0xec] sm:$0xf]
        %v3932 = vld [vmem:[%s809 + $0xf0] sm:$0xf]
        %v3933 = vld [vmem:[%s809 + $0xf4] sm:$0xf]
        %v3934 = vld [vmem:[%s809 + $0xf8] sm:$0xf]
        %v3935 = vld [vmem:[%s809 + $0xfc] sm:$0xf]
        %v3936 = vld [vmem:[%s809 + $0x100] sm:$0xf]
        %v3937 = vld [vmem:[%s809 + $0x104] sm:$0xf]
        %v3938 = vld [vmem:[%s809 + $0x108] sm:$0xf]
        %v3939 = vld [vmem:[%s809 + $0x10c] sm:$0xf]
        %v3940 = vld [vmem:[%s809 + $0x110] sm:$0xf]
        %v3941 = vld [vmem:[%s809 + $0x114] sm:$0xf]
        %v3942 = vld [vmem:[%s809 + $0x118] sm:$0xf]
        %v3943 = vld [vmem:[%s809 + $0x11c] sm:$0xf]
        %v3944 = vld [vmem:[%s809 + $0x120] sm:$0xf]
        %v3945 = vld [vmem:[%s809 + $0x124] sm:$0xf]
        %v3946 = vld [vmem:[%s809 + $0x128] sm:$0xf]
        %v3947 = vld [vmem:[%s809 + $0x12c] sm:$0xf]
        %v3948 = vld [vmem:[%s809 + $0x130] sm:$0xf]
        %v3949 = vld [vmem:[%s809 + $0x134] sm:$0xf]
        %v3950 = vld [vmem:[%s809 + $0x138] sm:$0xf]
        %v3951 = vld [vmem:[%s809 + $0x13c] sm:$0xf]
        %v4048 = vunpack.c.l.b16 %v3776
        %v4049 = vunpack.c.h.b16 %v3776
        %v4050 = vunpack.c.l.b16 %v3777
        %v4051 = vunpack.c.h.b16 %v3777
        %v4052 = vunpack.c.l.b16 %v3778
        %v4053 = vunpack.c.l.b16 %v3779
        %v4054 = vunpack.c.h.b16 %v3779
        %v4055 = vunpack.c.l.b16 %v3780
        %v4056 = vunpack.c.h.b16 %v3780
        %v4057 = vunpack.c.l.b16 %v3781
        %v4058 = vunpack.c.l.b16 %v3782
        %v4059 = vunpack.c.h.b16 %v3782
        %v4060 = vunpack.c.l.b16 %v3783
        %v4061 = vunpack.c.h.b16 %v3783
        %v4062 = vunpack.c.l.b16 %v3784
        %v4063 = vunpack.c.l.b16 %v3785
        %v4064 = vunpack.c.h.b16 %v3785
        %v4065 = vunpack.c.l.b16 %v3786
        %v4066 = vunpack.c.h.b16 %v3786
        %v4067 = vunpack.c.l.b16 %v3787
        %v4068 = vunpack.c.l.b16 %v3788
        %v4069 = vunpack.c.h.b16 %v3788
        %v4070 = vunpack.c.l.b16 %v3789
        %v4071 = vunpack.c.h.b16 %v3789
        %v4072 = vunpack.c.l.b16 %v3790
        %v4073 = vunpack.c.l.b16 %v3791
        %v4074 = vunpack.c.h.b16 %v3791
        %v4075 = vunpack.c.l.b16 %v3792
        %v4076 = vunpack.c.h.b16 %v3792
        %v4077 = vunpack.c.l.b16 %v3793
        %v4078 = vunpack.c.l.b16 %v3794
        %v4079 = vunpack.c.h.b16 %v3794
        %v4080 = vunpack.c.l.b16 %v3795
        %v4081 = vunpack.c.h.b16 %v3795
        %v4082 = vunpack.c.l.b16 %v3796
        %v4083 = vunpack.c.l.b16 %v3797
        %v4084 = vunpack.c.h.b16 %v3797
        %v4085 = vunpack.c.l.b16 %v3798
        %v4086 = vunpack.c.h.b16 %v3798
        %v4087 = vunpack.c.l.b16 %v3799
        %v4088 = vunpack.c.l.b16 %v3800
        %v4089 = vunpack.c.h.b16 %v3800
        %v4090 = vunpack.c.l.b16 %v3801
        %v4091 = vunpack.c.h.b16 %v3801
        %v4092 = vunpack.c.l.b16 %v3802
        %v4093 = vunpack.c.l.b16 %v3803
        %v4094 = vunpack.c.h.b16 %v3803
        %v4095 = vunpack.c.l.b16 %v3804
        %v4096 = vunpack.c.h.b16 %v3804
        %v4097 = vunpack.c.l.b16 %v3805
        %v4098 = vunpack.c.l.b16 %v3806
        %v4099 = vunpack.c.h.b16 %v3806
        %v4100 = vunpack.c.l.b16 %v3807
        %v4101 = vunpack.c.h.b16 %v3807
        %v4102 = vunpack.c.l.b16 %v3808
        %v4103 = vunpack.c.l.b16 %v3809
        %v4104 = vunpack.c.h.b16 %v3809
        %v4105 = vunpack.c.l.b16 %v3810
        %v4106 = vunpack.c.h.b16 %v3810
        %v4107 = vunpack.c.l.b16 %v3811
        %v4108 = vunpack.c.l.b16 %v3812
        %v4109 = vunpack.c.h.b16 %v3812
        %v4110 = vunpack.c.l.b16 %v3813
        %v4111 = vunpack.c.h.b16 %v3813
        %v4112 = vunpack.c.l.b16 %v3814
        %v4113 = vunpack.c.l.b16 %v3815
        %v4114 = vunpack.c.h.b16 %v3815
        %v4115 = vunpack.c.l.b16 %v3816
        %v4116 = vunpack.c.h.b16 %v3816
        %v4117 = vunpack.c.l.b16 %v3817
        %v4118 = vunpack.c.l.b16 %v3818
        %v4119 = vunpack.c.h.b16 %v3818
        %v4120 = vunpack.c.l.b16 %v3819
        %v4121 = vunpack.c.h.b16 %v3819
        %v4122 = vunpack.c.l.b16 %v3820
        %v4123 = vunpack.c.l.b16 %v3821
        %v4124 = vunpack.c.h.b16 %v3821
        %v4125 = vunpack.c.l.b16 %v3822
        %v4126 = vunpack.c.h.b16 %v3822
        %v4127 = vunpack.c.l.b16 %v3823
        %v4128 = vunpack.c.l.b16 %v3824
        %v4129 = vunpack.c.h.b16 %v3824
        %v4130 = vunpack.c.l.b16 %v3825
        %v4131 = vunpack.c.h.b16 %v3825
        %v4132 = vunpack.c.l.b16 %v3826
        %v4133 = vunpack.c.l.b16 %v3827
        %v4134 = vunpack.c.h.b16 %v3827
        %v4135 = vunpack.c.l.b16 %v3828
        %v4136 = vunpack.c.h.b16 %v3828
        %v4137 = vunpack.c.l.b16 %v3829
        %v4138 = vunpack.c.l.b16 %v3830
        %v4139 = vunpack.c.h.b16 %v3830
        %v4140 = vunpack.c.l.b16 %v3831
        %v4141 = vunpack.c.h.b16 %v3831
        %v4142 = vunpack.c.l.b16 %v3832
        %v4143 = vunpack.c.l.b16 %v3833
        %v4144 = vunpack.c.h.b16 %v3833
        %v4145 = vunpack.c.l.b16 %v3834
        %v4146 = vunpack.c.h.b16 %v3834
        %v4147 = vunpack.c.l.b16 %v3835
        %v4148 = vunpack.c.l.b16 %v3836
        %v4149 = vunpack.c.h.b16 %v3836
        %v4150 = vunpack.c.l.b16 %v3837
        %v4151 = vunpack.c.h.b16 %v3837
        %v4152 = vunpack.c.l.b16 %v3838
        %v4153 = vunpack.c.l.b16 %v3839
        %v4154 = vunpack.c.h.b16 %v3839
        %v4155 = vunpack.c.l.b16 %v3840
        %v4156 = vunpack.c.h.b16 %v3840
        %v4157 = vunpack.c.l.b16 %v3841
        %v4158 = vunpack.c.l.b16 %v3842
        %v4159 = vunpack.c.h.b16 %v3842
        %v4160 = vunpack.c.l.b16 %v3843
        %v4161 = vunpack.c.h.b16 %v3843
        %v4162 = vunpack.c.l.b16 %v3844
        %v4163 = vunpack.c.l.b16 %v3845
        %v4164 = vunpack.c.h.b16 %v3845
        %v4165 = vunpack.c.l.b16 %v3846
        %v4166 = vunpack.c.h.b16 %v3846
        %v4167 = vunpack.c.l.b16 %v3847
        %v4168 = vunpack.c.l.b16 %v3848
        %v4169 = vunpack.c.h.b16 %v3848
        %v4170 = vunpack.c.l.b16 %v3849
        %v4171 = vunpack.c.h.b16 %v3849
        %v4172 = vunpack.c.l.b16 %v3850
        %v4173 = vunpack.c.l.b16 %v3851
        %v4174 = vunpack.c.h.b16 %v3851
        %v4175 = vunpack.c.l.b16 %v3852
        %v4176 = vunpack.c.h.b16 %v3852
        %v4177 = vunpack.c.l.b16 %v3853
        %v4178 = vunpack.c.l.b16 %v3854
        %v4179 = vunpack.c.h.b16 %v3854
        %v4180 = vunpack.c.l.b16 %v3855
        %v4181 = vunpack.c.h.b16 %v3855
        %v4182 = vunpack.c.l.b16 %v3856
        %v4183 = vunpack.c.l.b16 %v3857
        %v4184 = vunpack.c.h.b16 %v3857
        %v4185 = vunpack.c.l.b16 %v3858
        %v4186 = vunpack.c.h.b16 %v3858
        %v4187 = vunpack.c.l.b16 %v3859
        %v4188 = vunpack.c.l.b16 %v3860
        %v4189 = vunpack.c.h.b16 %v3860
        %v4190 = vunpack.c.l.b16 %v3861
        %v4191 = vunpack.c.h.b16 %v3861
        %v4192 = vunpack.c.l.b16 %v3862
        %v4193 = vunpack.c.l.b16 %v3863
        %v4194 = vunpack.c.h.b16 %v3863
        %v4195 = vunpack.c.l.b16 %v3864
        %v4196 = vunpack.c.h.b16 %v3864
        %v4197 = vunpack.c.l.b16 %v3865
        %v4198 = vunpack.c.l.b16 %v3866
        %v4199 = vunpack.c.h.b16 %v3866
        %v4200 = vunpack.c.l.b16 %v3867
        %v4201 = vunpack.c.h.b16 %v3867
        %v4202 = vunpack.c.l.b16 %v3868
        %v4203 = vunpack.c.l.b16 %v3869
        %v4204 = vunpack.c.h.b16 %v3869
        %v4205 = vunpack.c.l.b16 %v3870
        %v4206 = vunpack.c.h.b16 %v3870
        %v4207 = vunpack.c.l.b16 %v3871
        %v4208 = vpack.c.b16 %v4053, %v4048
        %v4209 = vpack.c.b16 %v4054, %v4049
        %v4210 = vpack.c.b16 %v4055, %v4050
        %v4211 = vpack.c.b16 %v4056, %v4051
        %v4212 = vpack.c.b16 %v4057, %v4052
        %v4213 = vpack.c.b16 %v4063, %v4058
        %v4214 = vpack.c.b16 %v4064, %v4059
        %v4215 = vpack.c.b16 %v4065, %v4060
        %v4216 = vpack.c.b16 %v4066, %v4061
        %v4217 = vpack.c.b16 %v4067, %v4062
        %v4218 = vpack.c.b16 %v4073, %v4068
        %v4219 = vpack.c.b16 %v4074, %v4069
        %v4220 = vpack.c.b16 %v4075, %v4070
        %v4221 = vpack.c.b16 %v4076, %v4071
        %v4222 = vpack.c.b16 %v4077, %v4072
        %v4223 = vpack.c.b16 %v4083, %v4078
        %v4224 = vpack.c.b16 %v4084, %v4079
        %v4225 = vpack.c.b16 %v4085, %v4080
        %v4226 = vpack.c.b16 %v4086, %v4081
        %v4227 = vpack.c.b16 %v4087, %v4082
        %v4228 = vpack.c.b16 %v4093, %v4088
        %v4229 = vpack.c.b16 %v4094, %v4089
        %v4230 = vpack.c.b16 %v4095, %v4090
        %v4231 = vpack.c.b16 %v4096, %v4091
        %v4232 = vpack.c.b16 %v4097, %v4092
        %v4233 = vpack.c.b16 %v4103, %v4098
        %v4234 = vpack.c.b16 %v4104, %v4099
        %v4235 = vpack.c.b16 %v4105, %v4100
        %v4236 = vpack.c.b16 %v4106, %v4101
        %v4237 = vpack.c.b16 %v4107, %v4102
        %v4238 = vpack.c.b16 %v4113, %v4108
        %v4239 = vpack.c.b16 %v4114, %v4109
        %v4240 = vpack.c.b16 %v4115, %v4110
        %v4241 = vpack.c.b16 %v4116, %v4111
        %v4242 = vpack.c.b16 %v4117, %v4112
        %v4243 = vpack.c.b16 %v4123, %v4118
        %v4244 = vpack.c.b16 %v4124, %v4119
        %v4245 = vpack.c.b16 %v4125, %v4120
        %v4246 = vpack.c.b16 %v4126, %v4121
        %v4247 = vpack.c.b16 %v4127, %v4122
        %v4248 = vpack.c.b16 %v4133, %v4128
        %v4249 = vpack.c.b16 %v4134, %v4129
        %v4250 = vpack.c.b16 %v4135, %v4130
        %v4251 = vpack.c.b16 %v4136, %v4131
        %v4252 = vpack.c.b16 %v4137, %v4132
        %v4253 = vpack.c.b16 %v4143, %v4138
        %v4254 = vpack.c.b16 %v4144, %v4139
        %v4255 = vpack.c.b16 %v4145, %v4140
        %v4256 = vpack.c.b16 %v4146, %v4141
        %v4257 = vpack.c.b16 %v4147, %v4142
        %v4258 = vpack.c.b16 %v4153, %v4148
        %v4259 = vpack.c.b16 %v4154, %v4149
        %v4260 = vpack.c.b16 %v4155, %v4150
        %v4261 = vpack.c.b16 %v4156, %v4151
        %v4262 = vpack.c.b16 %v4157, %v4152
        %v4263 = vpack.c.b16 %v4163, %v4158
        %v4264 = vpack.c.b16 %v4164, %v4159
        %v4265 = vpack.c.b16 %v4165, %v4160
        %v4266 = vpack.c.b16 %v4166, %v4161
        %v4267 = vpack.c.b16 %v4167, %v4162
        %v4268 = vpack.c.b16 %v4173, %v4168
        %v4269 = vpack.c.b16 %v4174, %v4169
        %v4270 = vpack.c.b16 %v4175, %v4170
        %v4271 = vpack.c.b16 %v4176, %v4171
        %v4272 = vpack.c.b16 %v4177, %v4172
        %v4273 = vpack.c.b16 %v4183, %v4178
        %v4274 = vpack.c.b16 %v4184, %v4179
        %v4275 = vpack.c.b16 %v4185, %v4180
        %v4276 = vpack.c.b16 %v4186, %v4181
        %v4277 = vpack.c.b16 %v4187, %v4182
        %v4278 = vpack.c.b16 %v4193, %v4188
        %v4279 = vpack.c.b16 %v4194, %v4189
        %v4280 = vpack.c.b16 %v4195, %v4190
        %v4281 = vpack.c.b16 %v4196, %v4191
        %v4282 = vpack.c.b16 %v4197, %v4192
        %v4283 = vpack.c.b16 %v4203, %v4198
        %v4284 = vpack.c.b16 %v4204, %v4199
        %v4285 = vpack.c.b16 %v4205, %v4200
        %v4286 = vpack.c.b16 %v4206, %v4201
        %v4287 = vpack.c.b16 %v4207, %v4202
        %v4448 = vunpack.c.l.b16 %v3872
        %v4449 = vunpack.c.l.b16 %v3873
        %v4450 = vunpack.c.l.b16 %v3874
        %v4451 = vunpack.c.l.b16 %v3875
        %v4452 = vunpack.c.l.b16 %v3876
        %v4453 = vunpack.c.l.b16 %v3877
        %v4454 = vunpack.c.l.b16 %v3878
        %v4455 = vunpack.c.l.b16 %v3879
        %v4456 = vunpack.c.l.b16 %v3880
        %v4457 = vunpack.c.l.b16 %v3881
        %v4458 = vunpack.c.l.b16 %v3882
        %v4459 = vunpack.c.l.b16 %v3883
        %v4460 = vunpack.c.l.b16 %v3884
        %v4461 = vunpack.c.l.b16 %v3885
        %v4462 = vunpack.c.l.b16 %v3886
        %v4463 = vunpack.c.l.b16 %v3887
        %v4464 = vunpack.c.l.b16 %v3888
        %v4465 = vunpack.c.l.b16 %v3889
        %v4466 = vunpack.c.l.b16 %v3890
        %v4467 = vunpack.c.l.b16 %v3891
        %v4468 = vunpack.c.l.b16 %v3892
        %v4469 = vunpack.c.l.b16 %v3893
        %v4470 = vunpack.c.l.b16 %v3894
        %v4471 = vunpack.c.l.b16 %v3895
        %v4472 = vunpack.c.l.b16 %v3896
        %v4473 = vunpack.c.l.b16 %v3897
        %v4474 = vunpack.c.l.b16 %v3898
        %v4475 = vunpack.c.l.b16 %v3899
        %v4476 = vunpack.c.l.b16 %v3900
        %v4477 = vunpack.c.l.b16 %v3901
        %v4478 = vunpack.c.l.b16 %v3902
        %v4479 = vunpack.c.l.b16 %v3903
        %v4480 = vunpack.c.l.b16 %v3904
        %v4481 = vunpack.c.l.b16 %v3905
        %v4482 = vunpack.c.l.b16 %v3906
        %v4483 = vunpack.c.l.b16 %v3907
        %v4484 = vunpack.c.l.b16 %v3908
        %v4485 = vunpack.c.l.b16 %v3909
        %v4486 = vunpack.c.l.b16 %v3910
        %v4487 = vunpack.c.l.b16 %v3911
        %v4488 = vunpack.c.l.b16 %v3912
        %v4489 = vunpack.c.l.b16 %v3913
        %v4490 = vunpack.c.l.b16 %v3914
        %v4491 = vunpack.c.l.b16 %v3915
        %v4492 = vunpack.c.l.b16 %v3916
        %v4493 = vunpack.c.l.b16 %v3917
        %v4494 = vunpack.c.l.b16 %v3918
        %v4495 = vunpack.c.l.b16 %v3919
        %v4496 = vunpack.c.l.b16 %v3920
        %v4497 = vunpack.c.l.b16 %v3921
        %v4498 = vunpack.c.l.b16 %v3922
        %v4499 = vunpack.c.l.b16 %v3923
        %v4500 = vunpack.c.l.b16 %v3924
        %v4501 = vunpack.c.l.b16 %v3925
        %v4502 = vunpack.c.l.b16 %v3926
        %v4503 = vunpack.c.l.b16 %v3927
        %v4504 = vunpack.c.l.b16 %v3928
        %v4505 = vunpack.c.l.b16 %v3929
        %v4506 = vunpack.c.l.b16 %v3930
        %v4507 = vunpack.c.l.b16 %v3931
        %v4508 = vunpack.c.l.b16 %v3932
        %v4509 = vunpack.c.l.b16 %v3933
        %v4510 = vunpack.c.l.b16 %v3934
        %v4511 = vunpack.c.l.b16 %v3935
        %v4512 = vunpack.c.l.b16 %v3936
        %v4513 = vunpack.c.l.b16 %v3937
        %v4514 = vunpack.c.l.b16 %v3938
        %v4515 = vunpack.c.l.b16 %v3939
        %v4516 = vunpack.c.l.b16 %v3940
        %v4517 = vunpack.c.l.b16 %v3941
        %v4518 = vunpack.c.l.b16 %v3942
        %v4519 = vunpack.c.l.b16 %v3943
        %v4520 = vunpack.c.l.b16 %v3944
        %v4521 = vunpack.c.l.b16 %v3945
        %v4522 = vunpack.c.l.b16 %v3946
        %v4523 = vunpack.c.l.b16 %v3947
        %v4524 = vunpack.c.l.b16 %v3948
        %v4525 = vunpack.c.l.b16 %v3949
        %v4526 = vunpack.c.l.b16 %v3950
        %v4527 = vunpack.c.l.b16 %v3951
        %v4528 = vpack.c.b16 %v4449, %v4448
        %v4529 = vpack.c.b16 %v4451, %v4450
        %v4530 = vpack.c.b16 %v4453, %v4452
        %v4531 = vpack.c.b16 %v4455, %v4454
        %v4532 = vpack.c.b16 %v4457, %v4456
        %v4533 = vpack.c.b16 %v4459, %v4458
        %v4534 = vpack.c.b16 %v4461, %v4460
        %v4535 = vpack.c.b16 %v4463, %v4462
        %v4536 = vpack.c.b16 %v4465, %v4464
        %v4537 = vpack.c.b16 %v4467, %v4466
        %v4538 = vpack.c.b16 %v4469, %v4468
        %v4539 = vpack.c.b16 %v4471, %v4470
        %v4540 = vpack.c.b16 %v4473, %v4472
        %v4541 = vpack.c.b16 %v4475, %v4474
        %v4542 = vpack.c.b16 %v4477, %v4476
        %v4543 = vpack.c.b16 %v4479, %v4478
        %v4544 = vpack.c.b16 %v4481, %v4480
        %v4545 = vpack.c.b16 %v4483, %v4482
        %v4546 = vpack.c.b16 %v4485, %v4484
        %v4547 = vpack.c.b16 %v4487, %v4486
        %v4548 = vpack.c.b16 %v4489, %v4488
        %v4549 = vpack.c.b16 %v4491, %v4490
        %v4550 = vpack.c.b16 %v4493, %v4492
        %v4551 = vpack.c.b16 %v4495, %v4494
        %v4552 = vpack.c.b16 %v4497, %v4496
        %v4553 = vpack.c.b16 %v4499, %v4498
        %v4554 = vpack.c.b16 %v4501, %v4500
        %v4555 = vpack.c.b16 %v4503, %v4502
        %v4556 = vpack.c.b16 %v4505, %v4504
        %v4557 = vpack.c.b16 %v4507, %v4506
        %v4558 = vpack.c.b16 %v4509, %v4508
        %v4559 = vpack.c.b16 %v4511, %v4510
        %v4560 = vpack.c.b16 %v4513, %v4512
        %v4561 = vpack.c.b16 %v4515, %v4514
        %v4562 = vpack.c.b16 %v4517, %v4516
        %v4563 = vpack.c.b16 %v4519, %v4518
        %v4564 = vpack.c.b16 %v4521, %v4520
        %v4565 = vpack.c.b16 %v4523, %v4522
        %v4566 = vpack.c.b16 %v4525, %v4524
        %v4567 = vpack.c.b16 %v4527, %v4526
        %4608 = vmatprep.subr.bf16.mxu0 0
        %4609 = vmatpush1.bf16.msra.mxu0 %v4535
        %4610 = vmatprep.subr.bf16.mxu0 0
        %4611 = vmatpush1.bf16.msra.mxu0 %v4534
        %4612 = vmatprep.subr.bf16.mxu0 0
        %4613 = vmatpush1.bf16.msra.mxu0 %v4533
        %4614 = vmatprep.subr.bf16.mxu0 0
        %4615 = vmatpush1.bf16.msra.mxu0 %v4532
        %4616 = vmatprep.subr.bf16.mxu0 0
        %4617 = vmatpush1.bf16.msra.mxu0 %v4531
        %4618 = vmatprep.subr.bf16.mxu0 0
        %4619 = vmatpush1.bf16.msra.mxu0 %v4530
        %4620 = vmatprep.subr.bf16.mxu0 0
        %4621 = vmatpush1.bf16.msra.mxu0 %v4529
        %4622 = vmatprep.subr.bf16.mxu0 0
        %4623 = vmatpush1.bf16.msra.mxu0 %v4528
        %4624 = vmatprep.subr.bf16.mxu0 0
        %4625 = vmatpush2.bf16.msra.mxu0 %v4543
        %4626 = vmatprep.subr.bf16.mxu0 0
        %4627 = vmatpush2.bf16.msra.mxu0 %v4542
        %4628 = vmatprep.subr.bf16.mxu0 0
        %4629 = vmatpush2.bf16.msra.mxu0 %v4541
        %4630 = vmatprep.subr.bf16.mxu0 0
        %4631 = vmatpush2.bf16.msra.mxu0 %v4540
        %4632 = vmatprep.subr.bf16.mxu0 0
        %4633 = vmatpush2.bf16.msra.mxu0 %v4539
        %4634 = vmatprep.subr.bf16.mxu0 0
        %4635 = vmatpush2.bf16.msra.mxu0 %v4538
        %4636 = vmatprep.subr.bf16.mxu0 0
        %4637 = vmatpush2.bf16.msra.mxu0 %v4537
        %4638 = vmatprep.subr.bf16.mxu0 0
        %4639 = vmatpush2.bf16.msra.mxu0 %v4536
        %4640 = vmatprep.mubr.bf16.mxu0 %v4209
        %4641 = vmatmul.mubr.bf16.gmra.mxu0 %v4208
        %v4642 = vpop.f32.mrf.mxu0
        %v4643 = vadd.f32 0.0, %v4642
        %v4644 = vpop.f32.mrf.mxu0
        %v4645 = vpop.f32.mrf.mxu0
        %v4646 = vadd.f32 0.0, %v4645
        %v4647 = vpop.f32.mrf.mxu0
        %4648 = vmatprep.mubr.bf16.mxu0 %v4214
        %4649 = vmatmul.mubr.bf16.gmra.mxu0 %v4213
        %v4650 = vpop.f32.mrf.mxu0
        %v4651 = vadd.f32 0.0, %v4650
        %v4652 = vpop.f32.mrf.mxu0
        %v4653 = vpop.f32.mrf.mxu0
        %v4654 = vadd.f32 0.0, %v4653
        %v4655 = vpop.f32.mrf.mxu0
        %4656 = vmatprep.mubr.bf16.mxu0 %v4219
        %4657 = vmatmul.mubr.bf16.gmra.mxu0 %v4218
        %v4658 = vpop.f32.mrf.mxu0
        %v4659 = vadd.f32 0.0, %v4658
        %v4660 = vpop.f32.mrf.mxu0
        %v4661 = vpop.f32.mrf.mxu0
        %v4662 = vadd.f32 0.0, %v4661
        %v4663 = vpop.f32.mrf.mxu0
        %4664 = vmatprep.mubr.bf16.mxu0 %v4224
        %4665 = vmatmul.mubr.bf16.gmra.mxu0 %v4223
        %v4666 = vpop.f32.mrf.mxu0
        %v4667 = vadd.f32 0.0, %v4666
        %v4668 = vpop.f32.mrf.mxu0
        %v4669 = vpop.f32.mrf.mxu0
        %v4670 = vadd.f32 0.0, %v4669
        %v4671 = vpop.f32.mrf.mxu0
        %4672 = vmatprep.mubr.bf16.mxu0 %v4229
        %4673 = vmatmul.mubr.bf16.gmra.mxu0 %v4228
        %v4674 = vpop.f32.mrf.mxu0
        %v4675 = vadd.f32 0.0, %v4674
        %v4676 = vpop.f32.mrf.mxu0
        %v4677 = vpop.f32.mrf.mxu0
        %v4678 = vadd.f32 0.0, %v4677
        %v4679 = vpop.f32.mrf.mxu0
        %4680 = vmatprep.mubr.bf16.mxu0 %v4234
        %4681 = vmatmul.mubr.bf16.gmra.mxu0 %v4233
        %v4682 = vpop.f32.mrf.mxu0
        %v4683 = vadd.f32 0.0, %v4682
        %v4684 = vpop.f32.mrf.mxu0
        %v4685 = vpop.f32.mrf.mxu0
        %v4686 = vadd.f32 0.0, %v4685
        %v4687 = vpop.f32.mrf.mxu0
        %4688 = vmatprep.mubr.bf16.mxu0 %v4239
        %4689 = vmatmul.mubr.bf16.gmra.mxu0 %v4238
        %v4690 = vpop.f32.mrf.mxu0
        %v4691 = vadd.f32 0.0, %v4690
        %v4692 = vpop.f32.mrf.mxu0
        %v4693 = vpop.f32.mrf.mxu0
        %v4694 = vadd.f32 0.0, %v4693
        %v4695 = vpop.f32.mrf.mxu0
        %4696 = vmatprep.mubr.bf16.mxu0 %v4244
        %4697 = vmatmul.mubr.bf16.gmra.mxu0 %v4243
        %v4698 = vpop.f32.mrf.mxu0
        %v4699 = vadd.f32 0.0, %v4698
        %v4700 = vpop.f32.mrf.mxu0
        %v4701 = vpop.f32.mrf.mxu0
        %v4702 = vadd.f32 0.0, %v4701
        %v4703 = vpop.f32.mrf.mxu0
        %4704 = vmatprep.mubr.bf16.mxu0 %v4249
        %4705 = vmatmul.mubr.bf16.gmra.mxu0 %v4248
        %v4706 = vpop.f32.mrf.mxu0
        %v4707 = vadd.f32 0.0, %v4706
        %v4708 = vpop.f32.mrf.mxu0
        %v4709 = vpop.f32.mrf.mxu0
        %v4710 = vadd.f32 0.0, %v4709
        %v4711 = vpop.f32.mrf.mxu0
        %4712 = vmatprep.mubr.bf16.mxu0 %v4254
        %4713 = vmatmul.mubr.bf16.gmra.mxu0 %v4253
        %v4714 = vpop.f32.mrf.mxu0
        %v4715 = vadd.f32 0.0, %v4714
        %v4716 = vpop.f32.mrf.mxu0
        %v4717 = vpop.f32.mrf.mxu0
        %v4718 = vadd.f32 0.0, %v4717
        %v4719 = vpop.f32.mrf.mxu0
        %4720 = vmatprep.mubr.bf16.mxu0 %v4259
        %4721 = vmatmul.mubr.bf16.gmra.mxu0 %v4258
        %v4722 = vpop.f32.mrf.mxu0
        %v4723 = vadd.f32 0.0, %v4722
        %v4724 = vpop.f32.mrf.mxu0
        %v4725 = vpop.f32.mrf.mxu0
        %v4726 = vadd.f32 0.0, %v4725
        %v4727 = vpop.f32.mrf.mxu0
        %4728 = vmatprep.mubr.bf16.mxu0 %v4264
        %4729 = vmatmul.mubr.bf16.gmra.mxu0 %v4263
        %v4730 = vpop.f32.mrf.mxu0
        %v4731 = vadd.f32 0.0, %v4730
        %v4732 = vpop.f32.mrf.mxu0
        %v4733 = vpop.f32.mrf.mxu0
        %v4734 = vadd.f32 0.0, %v4733
        %v4735 = vpop.f32.mrf.mxu0
        %4736 = vmatprep.mubr.bf16.mxu0 %v4269
        %4737 = vmatmul.mubr.bf16.gmra.mxu0 %v4268
        %v4738 = vpop.f32.mrf.mxu0
        %v4739 = vadd.f32 0.0, %v4738
        %v4740 = vpop.f32.mrf.mxu0
        %v4741 = vpop.f32.mrf.mxu0
        %v4742 = vadd.f32 0.0, %v4741
        %v4743 = vpop.f32.mrf.mxu0
        %4744 = vmatprep.mubr.bf16.mxu0 %v4274
        %4745 = vmatmul.mubr.bf16.gmra.mxu0 %v4273
        %v4746 = vpop.f32.mrf.mxu0
        %v4747 = vadd.f32 0.0, %v4746
        %v4748 = vpop.f32.mrf.mxu0
        %v4749 = vpop.f32.mrf.mxu0
        %v4750 = vadd.f32 0.0, %v4749
        %v4751 = vpop.f32.mrf.mxu0
        %4752 = vmatprep.mubr.bf16.mxu0 %v4279
        %4753 = vmatmul.mubr.bf16.gmra.mxu0 %v4278
        %v4754 = vpop.f32.mrf.mxu0
        %v4755 = vadd.f32 0.0, %v4754
        %v4756 = vpop.f32.mrf.mxu0
        %v4757 = vpop.f32.mrf.mxu0
        %v4758 = vadd.f32 0.0, %v4757
        %v4759 = vpop.f32.mrf.mxu0
        %4760 = vmatprep.mubr.bf16.mxu0 %v4284
        %4761 = vmatmul.mubr.bf16.gmra.mxu0 %v4283
        %v4762 = vpop.f32.mrf.mxu0
        %v4763 = vadd.f32 0.0, %v4762
        %v4764 = vpop.f32.mrf.mxu0
        %v4765 = vpop.f32.mrf.mxu0
        %v4766 = vadd.f32 0.0, %v4765
        %v4767 = vpop.f32.mrf.mxu0
        %4768 = vdwg.mxu0
        %4769 = vmatprep.subr.bf16.mxu0 0
        %4770 = vmatpush1.bf16.msra.mxu0 %v4551
        %4771 = vmatprep.subr.bf16.mxu0 0
        %4772 = vmatpush1.bf16.msra.mxu0 %v4550
        %4773 = vmatprep.subr.bf16.mxu0 0
        %4774 = vmatpush1.bf16.msra.mxu0 %v4549
        %4775 = vmatprep.subr.bf16.mxu0 0
        %4776 = vmatpush1.bf16.msra.mxu0 %v4548
        %4777 = vmatprep.subr.bf16.mxu0 0
        %4778 = vmatpush1.bf16.msra.mxu0 %v4547
        %4779 = vmatprep.subr.bf16.mxu0 0
        %4780 = vmatpush1.bf16.msra.mxu0 %v4546
        %4781 = vmatprep.subr.bf16.mxu0 0
        %4782 = vmatpush1.bf16.msra.mxu0 %v4545
        %4783 = vmatprep.subr.bf16.mxu0 0
        %4784 = vmatpush1.bf16.msra.mxu0 %v4544
        %4785 = vmatprep.subr.bf16.mxu0 0
        %4786 = vmatpush2.bf16.msra.mxu0 %v4559
        %4787 = vmatprep.subr.bf16.mxu0 0
        %4788 = vmatpush2.bf16.msra.mxu0 %v4558
        %4789 = vmatprep.subr.bf16.mxu0 0
        %4790 = vmatpush2.bf16.msra.mxu0 %v4557
        %4791 = vmatprep.subr.bf16.mxu0 0
        %4792 = vmatpush2.bf16.msra.mxu0 %v4556
        %4793 = vmatprep.subr.bf16.mxu0 0
        %4794 = vmatpush2.bf16.msra.mxu0 %v4555
        %4795 = vmatprep.subr.bf16.mxu0 0
        %4796 = vmatpush2.bf16.msra.mxu0 %v4554
        %4797 = vmatprep.subr.bf16.mxu0 0
        %4798 = vmatpush2.bf16.msra.mxu0 %v4553
        %4799 = vmatprep.subr.bf16.mxu0 0
        %4800 = vmatpush2.bf16.msra.mxu0 %v4552
        %4801 = vmatprep.mubr.bf16.mxu0 %v4211
        %4802 = vmatmul.mubr.bf16.gmra.mxu0 %v4210
        %v4803 = vpop.f32.mrf.mxu0
        %v4804 = vadd.f32 %v4643, %v4803
        %v4805 = vpop.f32.mrf.mxu0
        %v4806 = vpop.f32.mrf.mxu0
        %v4807 = vadd.f32 %v4646, %v4806
        %v4808 = vpop.f32.mrf.mxu0
        %4809 = vmatprep.mubr.bf16.mxu0 %v4216
        %4810 = vmatmul.mubr.bf16.gmra.mxu0 %v4215
        %v4811 = vpop.f32.mrf.mxu0
        %v4812 = vadd.f32 %v4651, %v4811
        %v4813 = vpop.f32.mrf.mxu0
        %v4814 = vpop.f32.mrf.mxu0
        %v4815 = vadd.f32 %v4654, %v4814
        %v4816 = vpop.f32.mrf.mxu0
        %4817 = vmatprep.mubr.bf16.mxu0 %v4221
        %4818 = vmatmul.mubr.bf16.gmra.mxu0 %v4220
        %v4819 = vpop.f32.mrf.mxu0
        %v4820 = vadd.f32 %v4659, %v4819
        %v4821 = vpop.f32.mrf.mxu0
        %v4822 = vpop.f32.mrf.mxu0
        %v4823 = vadd.f32 %v4662, %v4822
        %v4824 = vpop.f32.mrf.mxu0
        %4825 = vmatprep.mubr.bf16.mxu0 %v4226
        %4826 = vmatmul.mubr.bf16.gmra.mxu0 %v4225
        %v4827 = vpop.f32.mrf.mxu0
        %v4828 = vadd.f32 %v4667, %v4827
        %v4829 = vpop.f32.mrf.mxu0
        %v4830 = vpop.f32.mrf.mxu0
        %v4831 = vadd.f32 %v4670, %v4830
        %v4832 = vpop.f32.mrf.mxu0
        %4833 = vmatprep.mubr.bf16.mxu0 %v4231
        %4834 = vmatmul.mubr.bf16.gmra.mxu0 %v4230
        %v4835 = vpop.f32.mrf.mxu0
        %v4836 = vadd.f32 %v4675, %v4835
        %v4837 = vpop.f32.mrf.mxu0
        %v4838 = vpop.f32.mrf.mxu0
        %v4839 = vadd.f32 %v4678, %v4838
        %v4840 = vpop.f32.mrf.mxu0
        %4841 = vmatprep.mubr.bf16.mxu0 %v4236
        %4842 = vmatmul.mubr.bf16.gmra.mxu0 %v4235
        %v4843 = vpop.f32.mrf.mxu0
        %v4844 = vadd.f32 %v4683, %v4843
        %v4845 = vpop.f32.mrf.mxu0
        %v4846 = vpop.f32.mrf.mxu0
        %v4847 = vadd.f32 %v4686, %v4846
        %v4848 = vpop.f32.mrf.mxu0
        %4849 = vmatprep.mubr.bf16.mxu0 %v4241
        %4850 = vmatmul.mubr.bf16.gmra.mxu0 %v4240
        %v4851 = vpop.f32.mrf.mxu0
        %v4852 = vadd.f32 %v4691, %v4851
        %v4853 = vpop.f32.mrf.mxu0
        %v4854 = vpop.f32.mrf.mxu0
        %v4855 = vadd.f32 %v4694, %v4854
        %v4856 = vpop.f32.mrf.mxu0
        %4857 = vmatprep.mubr.bf16.mxu0 %v4246
        %4858 = vmatmul.mubr.bf16.gmra.mxu0 %v4245
        %v4859 = vpop.f32.mrf.mxu0
        %v4860 = vadd.f32 %v4699, %v4859
        %v4861 = vpop.f32.mrf.mxu0
        %v4862 = vpop.f32.mrf.mxu0
        %v4863 = vadd.f32 %v4702, %v4862
        %v4864 = vpop.f32.mrf.mxu0
        %4865 = vmatprep.mubr.bf16.mxu0 %v4251
        %4866 = vmatmul.mubr.bf16.gmra.mxu0 %v4250
        %v4867 = vpop.f32.mrf.mxu0
        %v4868 = vadd.f32 %v4707, %v4867
        %v4869 = vpop.f32.mrf.mxu0
        %v4870 = vpop.f32.mrf.mxu0
        %v4871 = vadd.f32 %v4710, %v4870
        %v4872 = vpop.f32.mrf.mxu0
        %4873 = vmatprep.mubr.bf16.mxu0 %v4256
        %4874 = vmatmul.mubr.bf16.gmra.mxu0 %v4255
        %v4875 = vpop.f32.mrf.mxu0
        %v4876 = vadd.f32 %v4715, %v4875
        %v4877 = vpop.f32.mrf.mxu0
        %v4878 = vpop.f32.mrf.mxu0
        %v4879 = vadd.f32 %v4718, %v4878
        %v4880 = vpop.f32.mrf.mxu0
        %4881 = vmatprep.mubr.bf16.mxu0 %v4261
        %4882 = vmatmul.mubr.bf16.gmra.mxu0 %v4260
        %v4883 = vpop.f32.mrf.mxu0
        %v4884 = vadd.f32 %v4723, %v4883
        %v4885 = vpop.f32.mrf.mxu0
        %v4886 = vpop.f32.mrf.mxu0
        %v4887 = vadd.f32 %v4726, %v4886
        %v4888 = vpop.f32.mrf.mxu0
        %4889 = vmatprep.mubr.bf16.mxu0 %v4266
        %4890 = vmatmul.mubr.bf16.gmra.mxu0 %v4265
        %v4891 = vpop.f32.mrf.mxu0
        %v4892 = vadd.f32 %v4731, %v4891
        %v4893 = vpop.f32.mrf.mxu0
        %v4894 = vpop.f32.mrf.mxu0
        %v4895 = vadd.f32 %v4734, %v4894
        %v4896 = vpop.f32.mrf.mxu0
        %4897 = vmatprep.mubr.bf16.mxu0 %v4271
        %4898 = vmatmul.mubr.bf16.gmra.mxu0 %v4270
        %v4899 = vpop.f32.mrf.mxu0
        %v4900 = vadd.f32 %v4739, %v4899
        %v4901 = vpop.f32.mrf.mxu0
        %v4902 = vpop.f32.mrf.mxu0
        %v4903 = vadd.f32 %v4742, %v4902
        %v4904 = vpop.f32.mrf.mxu0
        %4905 = vmatprep.mubr.bf16.mxu0 %v4276
        %4906 = vmatmul.mubr.bf16.gmra.mxu0 %v4275
        %v4907 = vpop.f32.mrf.mxu0
        %v4908 = vadd.f32 %v4747, %v4907
        %v4909 = vpop.f32.mrf.mxu0
        %v4910 = vpop.f32.mrf.mxu0
        %v4911 = vadd.f32 %v4750, %v4910
        %v4912 = vpop.f32.mrf.mxu0
        %4913 = vmatprep.mubr.bf16.mxu0 %v4281
        %4914 = vmatmul.mubr.bf16.gmra.mxu0 %v4280
        %v4915 = vpop.f32.mrf.mxu0
        %v4916 = vadd.f32 %v4755, %v4915
        %v4917 = vpop.f32.mrf.mxu0
        %v4918 = vpop.f32.mrf.mxu0
        %v4919 = vadd.f32 %v4758, %v4918
        %v4920 = vpop.f32.mrf.mxu0
        %4921 = vmatprep.mubr.bf16.mxu0 %v4286
        %4922 = vmatmul.mubr.bf16.gmra.mxu0 %v4285
        %v4923 = vpop.f32.mrf.mxu0
        %v4924 = vadd.f32 %v4763, %v4923
        %v4925 = vpop.f32.mrf.mxu0
        %v4926 = vpop.f32.mrf.mxu0
        %v4927 = vadd.f32 %v4766, %v4926
        %v4928 = vpop.f32.mrf.mxu0
        %4929 = vdwg.mxu0
        %4930 = vmatprep.subr.bf16.mxu0 0
        %4931 = vmatpush1.bf16.msra.mxu0 %v4567
        %4932 = vmatprep.subr.bf16.mxu0 0
        %4933 = vmatpush1.bf16.msra.mxu0 %v4566
        %4934 = vmatprep.subr.bf16.mxu0 0
        %4935 = vmatpush1.bf16.msra.mxu0 %v4565
        %4936 = vmatprep.subr.bf16.mxu0 0
        %4937 = vmatpush1.bf16.msra.mxu0 %v4564
        %4938 = vmatprep.subr.bf16.mxu0 0
        %4939 = vmatpush1.bf16.msra.mxu0 %v4563
        %4940 = vmatprep.subr.bf16.mxu0 0
        %4941 = vmatpush1.bf16.msra.mxu0 %v4562
        %4942 = vmatprep.subr.bf16.mxu0 0
        %4943 = vmatpush1.bf16.msra.mxu0 %v4561
        %4944 = vmatprep.subr.bf16.mxu0 0
        %4945 = vmatpush1.bf16.msra.mxu0 %v4560
        %4946 = vmatprep.subr.bf16.mxu0 0
        %4947 = vmatpush2.bf16.msra.mxu0 0
        %4948 = vmatprep.subr.bf16.mxu0 0
        %4949 = vmatpush2.bf16.msra.mxu0 0
        %4950 = vmatprep.subr.bf16.mxu0 0
        %4951 = vmatpush2.bf16.msra.mxu0 0
        %4952 = vmatprep.subr.bf16.mxu0 0
        %4953 = vmatpush2.bf16.msra.mxu0 0
        %4954 = vmatprep.subr.bf16.mxu0 0
        %4955 = vmatpush2.bf16.msra.mxu0 0
        %4956 = vmatprep.subr.bf16.mxu0 0
        %4957 = vmatpush2.bf16.msra.mxu0 0
        %4958 = vmatprep.subr.bf16.mxu0 0
        %4959 = vmatpush2.bf16.msra.mxu0 0
        %4960 = vmatprep.subr.bf16.mxu0 0
        %4961 = vmatpush2.bf16.msra.mxu0 0
        %4962 = vmatprep.mubr.bf16.mxu0 0
        %4963 = vmatmul.mubr.bf16.gmra.mxu0 %v4212
        %v4964 = vpop.f32.mrf.mxu0
        %v4965 = vadd.f32 %v4804, %v4964
        %v4966 = vpop.f32.mrf.mxu0
        %v4967 = vpop.f32.mrf.mxu0
        %v4968 = vadd.f32 %v4807, %v4967
        %v4969 = vpop.f32.mrf.mxu0
        %4970 = vmatprep.mubr.bf16.mxu0 0
        %4971 = vmatmul.mubr.bf16.gmra.mxu0 %v4217
        %v4972 = vpop.f32.mrf.mxu0
        %v4973 = vadd.f32 %v4812, %v4972
        %v4974 = vpop.f32.mrf.mxu0
        %v4975 = vpop.f32.mrf.mxu0
        %v4976 = vadd.f32 %v4815, %v4975
        %v4977 = vpop.f32.mrf.mxu0
        %4978 = vmatprep.mubr.bf16.mxu0 0
        %4979 = vmatmul.mubr.bf16.gmra.mxu0 %v4222
        %v4980 = vpop.f32.mrf.mxu0
        %v4981 = vadd.f32 %v4820, %v4980
        %v4982 = vpop.f32.mrf.mxu0
        %v4983 = vpop.f32.mrf.mxu0
        %v4984 = vadd.f32 %v4823, %v4983
        %v4985 = vpop.f32.mrf.mxu0
        %4986 = vmatprep.mubr.bf16.mxu0 0
        %4987 = vmatmul.mubr.bf16.gmra.mxu0 %v4227
        %v4988 = vpop.f32.mrf.mxu0
        %v4989 = vadd.f32 %v4828, %v4988
        %v4990 = vpop.f32.mrf.mxu0
        %v4991 = vpop.f32.mrf.mxu0
        %v4992 = vadd.f32 %v4831, %v4991
        %v4993 = vpop.f32.mrf.mxu0
        %4994 = vmatprep.mubr.bf16.mxu0 0
        %4995 = vmatmul.mubr.bf16.gmra.mxu0 %v4232
        %v4996 = vpop.f32.mrf.mxu0
        %v4997 = vadd.f32 %v4836, %v4996
        %v4998 = vpop.f32.mrf.mxu0
        %v4999 = vpop.f32.mrf.mxu0
        %v5000 = vadd.f32 %v4839, %v4999
        %v5001 = vpop.f32.mrf.mxu0
        %5002 = vmatprep.mubr.bf16.mxu0 0
        %5003 = vmatmul.mubr.bf16.gmra.mxu0 %v4237
        %v5004 = vpop.f32.mrf.mxu0
        %v5005 = vadd.f32 %v4844, %v5004
        %v5006 = vpop.f32.mrf.mxu0
        %v5007 = vpop.f32.mrf.mxu0
        %v5008 = vadd.f32 %v4847, %v5007
        %v5009 = vpop.f32.mrf.mxu0
        %5010 = vmatprep.mubr.bf16.mxu0 0
        %5011 = vmatmul.mubr.bf16.gmra.mxu0 %v4242
        %v5012 = vpop.f32.mrf.mxu0
        %v5013 = vadd.f32 %v4852, %v5012
        %v5014 = vpop.f32.mrf.mxu0
        %v5015 = vpop.f32.mrf.mxu0
        %v5016 = vadd.f32 %v4855, %v5015
        %v5017 = vpop.f32.mrf.mxu0
        %5018 = vmatprep.mubr.bf16.mxu0 0
        %5019 = vmatmul.mubr.bf16.gmra.mxu0 %v4247
        %v5020 = vpop.f32.mrf.mxu0
        %v5021 = vadd.f32 %v4860, %v5020
        %v5022 = vpop.f32.mrf.mxu0
        %v5023 = vpop.f32.mrf.mxu0
        %v5024 = vadd.f32 %v4863, %v5023
        %v5025 = vpop.f32.mrf.mxu0
        %5026 = vmatprep.mubr.bf16.mxu0 0
        %5027 = vmatmul.mubr.bf16.gmra.mxu0 %v4252
        %v5028 = vpop.f32.mrf.mxu0
        %v5029 = vadd.f32 %v4868, %v5028
        %v5030 = vpop.f32.mrf.mxu0
        %v5031 = vpop.f32.mrf.mxu0
        %v5032 = vadd.f32 %v4871, %v5031
        %v5033 = vpop.f32.mrf.mxu0
        %5034 = vmatprep.mubr.bf16.mxu0 0
        %5035 = vmatmul.mubr.bf16.gmra.mxu0 %v4257
        %v5036 = vpop.f32.mrf.mxu0
        %v5037 = vadd.f32 %v4876, %v5036
        %v5038 = vpop.f32.mrf.mxu0
        %v5039 = vpop.f32.mrf.mxu0
        %v5040 = vadd.f32 %v4879, %v5039
        %v5041 = vpop.f32.mrf.mxu0
        %5042 = vmatprep.mubr.bf16.mxu0 0
        %5043 = vmatmul.mubr.bf16.gmra.mxu0 %v4262
        %v5044 = vpop.f32.mrf.mxu0
        %v5045 = vadd.f32 %v4884, %v5044
        %v5046 = vpop.f32.mrf.mxu0
        %v5047 = vpop.f32.mrf.mxu0
        %v5048 = vadd.f32 %v4887, %v5047
        %v5049 = vpop.f32.mrf.mxu0
        %5050 = vmatprep.mubr.bf16.mxu0 0
        %5051 = vmatmul.mubr.bf16.gmra.mxu0 %v4267
        %v5052 = vpop.f32.mrf.mxu0
        %v5053 = vadd.f32 %v4892, %v5052
        %v5054 = vpop.f32.mrf.mxu0
        %v5055 = vpop.f32.mrf.mxu0
        %v5056 = vadd.f32 %v4895, %v5055
        %v5057 = vpop.f32.mrf.mxu0
        %5058 = vmatprep.mubr.bf16.mxu0 0
        %5059 = vmatmul.mubr.bf16.gmra.mxu0 %v4272
        %v5060 = vpop.f32.mrf.mxu0
        %v5061 = vadd.f32 %v4900, %v5060
        %v5062 = vpop.f32.mrf.mxu0
        %v5063 = vpop.f32.mrf.mxu0
        %v5064 = vadd.f32 %v4903, %v5063
        %v5065 = vpop.f32.mrf.mxu0
        %5066 = vmatprep.mubr.bf16.mxu0 0
        %5067 = vmatmul.mubr.bf16.gmra.mxu0 %v4277
        %v5068 = vpop.f32.mrf.mxu0
        %v5069 = vadd.f32 %v4908, %v5068
        %v5070 = vpop.f32.mrf.mxu0
        %v5071 = vpop.f32.mrf.mxu0
        %v5072 = vadd.f32 %v4911, %v5071
        %v5073 = vpop.f32.mrf.mxu0
        %5074 = vmatprep.mubr.bf16.mxu0 0
        %5075 = vmatmul.mubr.bf16.gmra.mxu0 %v4282
        %v5076 = vpop.f32.mrf.mxu0
        %v5077 = vadd.f32 %v4916, %v5076
        %v5078 = vpop.f32.mrf.mxu0
        %v5079 = vpop.f32.mrf.mxu0
        %v5080 = vadd.f32 %v4919, %v5079
        %v5081 = vpop.f32.mrf.mxu0
        %5082 = vmatprep.mubr.bf16.mxu0 0
        %5083 = vmatmul.mubr.bf16.gmra.mxu0 %v4287
        %v5084 = vpop.f32.mrf.mxu0
        %v5085 = vadd.f32 %v4924, %v5084
        %v5086 = vpop.f32.mrf.mxu0
        %v5087 = vpop.f32.mrf.mxu0
        %v5088 = vadd.f32 %v4927, %v5087
        %v5089 = vpop.f32.mrf.mxu0
        %5090 = vdwg.mxu0
        %v5091 = vadd.f32 %v3743, %v4965
        %v5092 = vadd.f32 %v3744, %v4968
        %v5093 = vadd.f32 %v3745, %v4973
        %v5094 = vadd.f32 %v3746, %v4976
        %v5095 = vadd.f32 %v3747, %v4981
        %v5096 = vadd.f32 %v3748, %v4984
        %v5097 = vadd.f32 %v3749, %v4989
        %v5098 = vadd.f32 %v3750, %v4992
        %v5099 = vadd.f32 %v3751, %v4997
        %v5100 = vadd.f32 %v3752, %v5000
        %v5101 = vadd.f32 %v3753, %v5005
        %v5102 = vadd.f32 %v3754, %v5008
        %v5103 = vadd.f32 %v3755, %v5013
        %v5104 = vadd.f32 %v3756, %v5016
        %v5105 = vadd.f32 %v3757, %v5021
        %v5106 = vadd.f32 %v3758, %v5024
        %v5107 = vadd.f32 %v3759, %v5029
        %v5108 = vadd.f32 %v3760, %v5032
        %v5109 = vadd.f32 %v3761, %v5037
        %v5110 = vadd.f32 %v3762, %v5040
        %v5111 = vadd.f32 %v3763, %v5045
        %v5112 = vadd.f32 %v3764, %v5048
        %v5113 = vadd.f32 %v3765, %v5053
        %v5114 = vadd.f32 %v3766, %v5056
        %v5115 = vadd.f32 %v3767, %v5061
        %v5116 = vadd.f32 %v3768, %v5064
        %v5117 = vadd.f32 %v3769, %v5069
        %v5118 = vadd.f32 %v3770, %v5072
        %v5119 = vadd.f32 %v3771, %v5077
        %v5120 = vadd.f32 %v3772, %v5080
        %v5121 = vadd.f32 %v3773, %v5085
        %v5122 = vadd.f32 %v3774, %v5088
        %5123 = vst [vmem:[%s3742] sm:$0xff] %v5091
        %5124 = vst [vmem:[%s3742 + $0x8] sm:$0xff] %v5092
        %5125 = vst [vmem:[%s3742 + $0x10] sm:$0xff] %v5093
        %5126 = vst [vmem:[%s3742 + $0x18] sm:$0xff] %v5094
        %5127 = vst [vmem:[%s3742 + $0x20] sm:$0xff] %v5095
        %5128 = vst [vmem:[%s3742 + $0x28] sm:$0xff] %v5096
        %5129 = vst [vmem:[%s3742 + $0x30] sm:$0xff] %v5097
        %5130 = vst [vmem:[%s3742 + $0x38] sm:$0xff] %v5098
        %5131 = vst [vmem:[%s3742 + $0x40] sm:$0xff] %v5099
        %5132 = vst [vmem:[%s3742 + $0x48] sm:$0xff] %v5100
        %5133 = vst [vmem:[%s3742 + $0x50] sm:$0xff] %v5101
        %5134 = vst [vmem:[%s3742 + $0x58] sm:$0xff] %v5102
        %5135 = vst [vmem:[%s3742 + $0x60] sm:$0xff] %v5103
        %5136 = vst [vmem:[%s3742 + $0x68] sm:$0xff] %v5104
        %5137 = vst [vmem:[%s3742 + $0x70] sm:$0xff] %v5105
        %5138 = vst [vmem:[%s3742 + $0x78] sm:$0xff] %v5106
        %5139 = vst [vmem:[%s3742 + $0x80] sm:$0xff] %v5107
        %5140 = vst [vmem:[%s3742 + $0x88] sm:$0xff] %v5108
        %5141 = vst [vmem:[%s3742 + $0x90] sm:$0xff] %v5109
        %5142 = vst [vmem:[%s3742 + $0x98] sm:$0xff] %v5110
        %5143 = vst [vmem:[%s3742 + $0xa0] sm:$0xff] %v5111
        %5144 = vst [vmem:[%s3742 + $0xa8] sm:$0xff] %v5112
        %5145 = vst [vmem:[%s3742 + $0xb0] sm:$0xff] %v5113
        %5146 = vst [vmem:[%s3742 + $0xb8] sm:$0xff] %v5114
        %5147 = vst [vmem:[%s3742 + $0xc0] sm:$0xff] %v5115
        %5148 = vst [vmem:[%s3742 + $0xc8] sm:$0xff] %v5116
        %5149 = vst [vmem:[%s3742 + $0xd0] sm:$0xff] %v5117
        %5150 = vst [vmem:[%s3742 + $0xd8] sm:$0xff] %v5118
        %5151 = vst [vmem:[%s3742 + $0xe0] sm:$0xff] %v5119
        %5152 = vst [vmem:[%s3742 + $0xe8] sm:$0xff] %v5120
        %5153 = vst [vmem:[%s3742 + $0xf0] sm:$0xff] %v5121
        %5154 = vst [vmem:[%s3742 + $0xf8] sm:$0xff] %v5122
        // Predicated region
        $region63: #{_lambda_.7} parent=53 // pred_check
          %p5155 = pneg %p818
        $region64: #{_lambda_.7} parent=53 // pred_check_branch
          %5157 = sbr.rel (%p5155) target = $region66
        $region65: #{_lambda_.7} parent=53 // pred_region
          %v5158 = vld [vmem:[#allocation2] sm:$0xff]
          %v5159 = vld [vmem:[#allocation2 + $0x8] sm:$0xff]
          %v5160 = vld [vmem:[#allocation2 + $0x10] sm:$0xff]
          %v5161 = vld [vmem:[#allocation2 + $0x18] sm:$0xff]
          %v5162 = vld [vmem:[#allocation2 + $0x20] sm:$0xff]
          %v5163 = vld [vmem:[#allocation2 + $0x28] sm:$0xff]
          %v5164 = vld [vmem:[#allocation2 + $0x30] sm:$0xff]
          %v5165 = vld [vmem:[#allocation2 + $0x38] sm:$0xff]
          %v5166 = vld [vmem:[#allocation2 + $0x40] sm:$0xff]
          %v5167 = vld [vmem:[#allocation2 + $0x48] sm:$0xff]
          %v5168 = vld [vmem:[#allocation2 + $0x50] sm:$0xff]
          %v5169 = vld [vmem:[#allocation2 + $0x58] sm:$0xff]
          %v5170 = vld [vmem:[#allocation2 + $0x60] sm:$0xff]
          %v5171 = vld [vmem:[#allocation2 + $0x68] sm:$0xff]
          %v5172 = vld [vmem:[#allocation2 + $0x70] sm:$0xff]
          %v5173 = vld [vmem:[#allocation2 + $0x78] sm:$0xff]
          %v5174 = vld [vmem:[#allocation2 + $0x80] sm:$0xff]
          %v5175 = vld [vmem:[#allocation2 + $0x88] sm:$0xff]
          %v5176 = vld [vmem:[#allocation2 + $0x90] sm:$0xff]
          %v5177 = vld [vmem:[#allocation2 + $0x98] sm:$0xff]
          %v5178 = vld [vmem:[#allocation2 + $0xa0] sm:$0xff]
          %v5179 = vld [vmem:[#allocation2 + $0xa8] sm:$0xff]
          %v5180 = vld [vmem:[#allocation2 + $0xb0] sm:$0xff]
          %v5181 = vld [vmem:[#allocation2 + $0xb8] sm:$0xff]
          %v5182 = vld [vmem:[#allocation2 + $0xc0] sm:$0xff]
          %v5183 = vld [vmem:[#allocation2 + $0xc8] sm:$0xff]
          %v5184 = vld [vmem:[#allocation2 + $0xd0] sm:$0xff]
          %v5185 = vld [vmem:[#allocation2 + $0xd8] sm:$0xff]
          %v5186 = vld [vmem:[#allocation2 + $0xe0] sm:$0xff]
          %v5187 = vld [vmem:[#allocation2 + $0xe8] sm:$0xff]
          %v5188 = vld [vmem:[#allocation2 + $0xf0] sm:$0xff]
          %v5189 = vld [vmem:[#allocation2 + $0xf8] sm:$0xff]
          %v5190 = vld [vmem:[%s2329] sm:$0xff]
          %v5191 = vld [vmem:[%s2329 + $0x8] sm:$0xff]
          %v5192 = vld [vmem:[%s2329 + $0x10] sm:$0xff]
          %v5193 = vld [vmem:[%s2329 + $0x18] sm:$0xff]
          %v5194 = vld [vmem:[%s2329 + $0x20] sm:$0xff]
          %v5195 = vld [vmem:[%s2329 + $0x28] sm:$0xff]
          %v5196 = vld [vmem:[%s2329 + $0x30] sm:$0xff]
          %v5197 = vld [vmem:[%s2329 + $0x38] sm:$0xff]
          %v5198 = vld [vmem:[%s2329 + $0x40] sm:$0xff]
          %v5199 = vld [vmem:[%s2329 + $0x48] sm:$0xff]
          %v5200 = vld [vmem:[%s2329 + $0x50] sm:$0xff]
          %v5201 = vld [vmem:[%s2329 + $0x58] sm:$0xff]
          %v5202 = vld [vmem:[%s2329 + $0x60] sm:$0xff]
          %v5203 = vld [vmem:[%s2329 + $0x68] sm:$0xff]
          %v5204 = vld [vmem:[%s2329 + $0x70] sm:$0xff]
          %v5205 = vld [vmem:[%s2329 + $0x78] sm:$0xff]
          %v5206 = vld [vmem:[%s2329 + $0x80] sm:$0xff]
          %v5207 = vld [vmem:[%s2329 + $0x88] sm:$0xff]
          %v5208 = vld [vmem:[%s2329 + $0x90] sm:$0xff]
          %v5209 = vld [vmem:[%s2329 + $0x98] sm:$0xff]
          %v5210 = vld [vmem:[%s2329 + $0xa0] sm:$0xff]
          %v5211 = vld [vmem:[%s2329 + $0xa8] sm:$0xff]
          %v5212 = vld [vmem:[%s2329 + $0xb0] sm:$0xff]
          %v5213 = vld [vmem:[%s2329 + $0xb8] sm:$0xff]
          %v5214 = vld [vmem:[%s2329 + $0xc0] sm:$0xff]
          %v5215 = vld [vmem:[%s2329 + $0xc8] sm:$0xff]
          %v5216 = vld [vmem:[%s2329 + $0xd0] sm:$0xff]
          %v5217 = vld [vmem:[%s2329 + $0xd8] sm:$0xff]
          %v5218 = vld [vmem:[%s2329 + $0xe0] sm:$0xff]
          %v5219 = vld [vmem:[%s2329 + $0xe8] sm:$0xff]
          %v5220 = vld [vmem:[%s2329 + $0xf0] sm:$0xff]
          %v5221 = vld [vmem:[%s2329 + $0xf8] sm:$0xff]
          %v5222 = vmax.f32 %v5158, %v5190
          %v5223 = vmax.f32 %v5159, %v5191
          %v5224 = vmax.f32 %v5160, %v5192
          %v5225 = vmax.f32 %v5161, %v5193
          %v5226 = vmax.f32 %v5162, %v5194
          %v5227 = vmax.f32 %v5163, %v5195
          %v5228 = vmax.f32 %v5164, %v5196
          %v5229 = vmax.f32 %v5165, %v5197
          %v5230 = vmax.f32 %v5166, %v5198
          %v5231 = vmax.f32 %v5167, %v5199
          %v5232 = vmax.f32 %v5168, %v5200
          %v5233 = vmax.f32 %v5169, %v5201
          %v5234 = vmax.f32 %v5170, %v5202
          %v5235 = vmax.f32 %v5171, %v5203
          %v5236 = vmax.f32 %v5172, %v5204
          %v5237 = vmax.f32 %v5173, %v5205
          %v5238 = vmax.f32 %v5174, %v5206
          %v5239 = vmax.f32 %v5175, %v5207
          %v5240 = vmax.f32 %v5176, %v5208
          %v5241 = vmax.f32 %v5177, %v5209
          %v5242 = vmax.f32 %v5178, %v5210
          %v5243 = vmax.f32 %v5179, %v5211
          %v5244 = vmax.f32 %v5180, %v5212
          %v5245 = vmax.f32 %v5181, %v5213
          %v5246 = vmax.f32 %v5182, %v5214
          %v5247 = vmax.f32 %v5183, %v5215
          %v5248 = vmax.f32 %v5184, %v5216
          %v5249 = vmax.f32 %v5185, %v5217
          %v5250 = vmax.f32 %v5186, %v5218
          %v5251 = vmax.f32 %v5187, %v5219
          %v5252 = vmax.f32 %v5188, %v5220
          %v5253 = vmax.f32 %v5189, %v5221
          %v5254 = vld [vmem:[%s3742] sm:$0xff]
          %v5255 = vld [vmem:[%s3742 + $0x8] sm:$0xff]
          %v5256 = vld [vmem:[%s3742 + $0x10] sm:$0xff]
          %v5257 = vld [vmem:[%s3742 + $0x18] sm:$0xff]
          %v5258 = vld [vmem:[%s3742 + $0x20] sm:$0xff]
          %v5259 = vld [vmem:[%s3742 + $0x28] sm:$0xff]
          %v5260 = vld [vmem:[%s3742 + $0x30] sm:$0xff]
          %v5261 = vld [vmem:[%s3742 + $0x38] sm:$0xff]
          %v5262 = vld [vmem:[%s3742 + $0x40] sm:$0xff]
          %v5263 = vld [vmem:[%s3742 + $0x48] sm:$0xff]
          %v5264 = vld [vmem:[%s3742 + $0x50] sm:$0xff]
          %v5265 = vld [vmem:[%s3742 + $0x58] sm:$0xff]
          %v5266 = vld [vmem:[%s3742 + $0x60] sm:$0xff]
          %v5267 = vld [vmem:[%s3742 + $0x68] sm:$0xff]
          %v5268 = vld [vmem:[%s3742 + $0x70] sm:$0xff]
          %v5269 = vld [vmem:[%s3742 + $0x78] sm:$0xff]
          %v5270 = vld [vmem:[%s3742 + $0x80] sm:$0xff]
          %v5271 = vld [vmem:[%s3742 + $0x88] sm:$0xff]
          %v5272 = vld [vmem:[%s3742 + $0x90] sm:$0xff]
          %v5273 = vld [vmem:[%s3742 + $0x98] sm:$0xff]
          %v5274 = vld [vmem:[%s3742 + $0xa0] sm:$0xff]
          %v5275 = vld [vmem:[%s3742 + $0xa8] sm:$0xff]
          %v5276 = vld [vmem:[%s3742 + $0xb0] sm:$0xff]
          %v5277 = vld [vmem:[%s3742 + $0xb8] sm:$0xff]
          %v5278 = vld [vmem:[%s3742 + $0xc0] sm:$0xff]
          %v5279 = vld [vmem:[%s3742 + $0xc8] sm:$0xff]
          %v5280 = vld [vmem:[%s3742 + $0xd0] sm:$0xff]
          %v5281 = vld [vmem:[%s3742 + $0xd8] sm:$0xff]
          %v5282 = vld [vmem:[%s3742 + $0xe0] sm:$0xff]
          %v5283 = vld [vmem:[%s3742 + $0xe8] sm:$0xff]
          %v5284 = vld [vmem:[%s3742 + $0xf0] sm:$0xff]
          %v5285 = vld [vmem:[%s3742 + $0xf8] sm:$0xff]
          %v5286 = vmax.f32 %v5222, %v5254
          %v5287 = vmax.f32 %v5223, %v5255
          %v5288 = vmax.f32 %v5224, %v5256
          %v5289 = vmax.f32 %v5225, %v5257
          %v5290 = vmax.f32 %v5226, %v5258
          %v5291 = vmax.f32 %v5227, %v5259
          %v5292 = vmax.f32 %v5228, %v5260
          %v5293 = vmax.f32 %v5229, %v5261
          %v5294 = vmax.f32 %v5230, %v5262
          %v5295 = vmax.f32 %v5231, %v5263
          %v5296 = vmax.f32 %v5232, %v5264
          %v5297 = vmax.f32 %v5233, %v5265
          %v5298 = vmax.f32 %v5234, %v5266
          %v5299 = vmax.f32 %v5235, %v5267
          %v5300 = vmax.f32 %v5236, %v5268
          %v5301 = vmax.f32 %v5237, %v5269
          %v5302 = vmax.f32 %v5238, %v5270
          %v5303 = vmax.f32 %v5239, %v5271
          %v5304 = vmax.f32 %v5240, %v5272
          %v5305 = vmax.f32 %v5241, %v5273
          %v5306 = vmax.f32 %v5242, %v5274
          %v5307 = vmax.f32 %v5243, %v5275
          %v5308 = vmax.f32 %v5244, %v5276
          %v5309 = vmax.f32 %v5245, %v5277
          %v5310 = vmax.f32 %v5246, %v5278
          %v5311 = vmax.f32 %v5247, %v5279
          %v5312 = vmax.f32 %v5248, %v5280
          %v5313 = vmax.f32 %v5249, %v5281
          %v5314 = vmax.f32 %v5250, %v5282
          %v5315 = vmax.f32 %v5251, %v5283
          %v5316 = vmax.f32 %v5252, %v5284
          %v5317 = vmax.f32 %v5253, %v5285
          %v5318 = vld [vmem:[%s2] sm:$0x1]
          %v5320 = vlaneseq
          %v5321 = vshrl.u32 %v5320, 7
          %v5322 = vsub.s32 0, %v5321
          %v5323 = vrot.slane %v5318, %v5322
          %v5325 = vadd.f32 %v5286, %v5323
          %v5326 = vadd.f32 %v5287, %v5323
          %v5327 = vadd.f32 %v5288, %v5323
          %v5328 = vadd.f32 %v5289, %v5323
          %v5329 = vadd.f32 %v5290, %v5323
          %v5330 = vadd.f32 %v5291, %v5323
          %v5331 = vadd.f32 %v5292, %v5323
          %v5332 = vadd.f32 %v5293, %v5323
          %v5333 = vadd.f32 %v5294, %v5323
          %v5334 = vadd.f32 %v5295, %v5323
          %v5335 = vadd.f32 %v5296, %v5323
          %v5336 = vadd.f32 %v5297, %v5323
          %v5337 = vadd.f32 %v5298, %v5323
          %v5338 = vadd.f32 %v5299, %v5323
          %v5339 = vadd.f32 %v5300, %v5323
          %v5340 = vadd.f32 %v5301, %v5323
          %v5341 = vadd.f32 %v5302, %v5323
          %v5342 = vadd.f32 %v5303, %v5323
          %v5343 = vadd.f32 %v5304, %v5323
          %v5344 = vadd.f32 %v5305, %v5323
          %v5345 = vadd.f32 %v5306, %v5323
          %v5346 = vadd.f32 %v5307, %v5323
          %v5347 = vadd.f32 %v5308, %v5323
          %v5348 = vadd.f32 %v5309, %v5323
          %v5349 = vadd.f32 %v5310, %v5323
          %v5350 = vadd.f32 %v5311, %v5323
          %v5351 = vadd.f32 %v5312, %v5323
          %v5352 = vadd.f32 %v5313, %v5323
          %v5353 = vadd.f32 %v5314, %v5323
          %v5354 = vadd.f32 %v5315, %v5323
          %v5355 = vadd.f32 %v5316, %v5323
          %v5356 = vadd.f32 %v5317, %v5323
          %v5357 = vmax.f32 %v5325, 0.0
          %v5358 = vmax.f32 %v5326, 0.0
          %v5359 = vmax.f32 %v5327, 0.0
          %v5360 = vmax.f32 %v5328, 0.0
          %v5361 = vmax.f32 %v5329, 0.0
          %v5362 = vmax.f32 %v5330, 0.0
          %v5363 = vmax.f32 %v5331, 0.0
          %v5364 = vmax.f32 %v5332, 0.0
          %v5365 = vmax.f32 %v5333, 0.0
          %v5366 = vmax.f32 %v5334, 0.0
          %v5367 = vmax.f32 %v5335, 0.0
          %v5368 = vmax.f32 %v5336, 0.0
          %v5369 = vmax.f32 %v5337, 0.0
          %v5370 = vmax.f32 %v5338, 0.0
          %v5371 = vmax.f32 %v5339, 0.0
          %v5372 = vmax.f32 %v5340, 0.0
          %v5373 = vmax.f32 %v5341, 0.0
          %v5374 = vmax.f32 %v5342, 0.0
          %v5375 = vmax.f32 %v5343, 0.0
          %v5376 = vmax.f32 %v5344, 0.0
          %v5377 = vmax.f32 %v5345, 0.0
          %v5378 = vmax.f32 %v5346, 0.0
          %v5379 = vmax.f32 %v5347, 0.0
          %v5380 = vmax.f32 %v5348, 0.0
          %v5381 = vmax.f32 %v5349, 0.0
          %v5382 = vmax.f32 %v5350, 0.0
          %v5383 = vmax.f32 %v5351, 0.0
          %v5384 = vmax.f32 %v5352, 0.0
          %v5385 = vmax.f32 %v5353, 0.0
          %v5386 = vmax.f32 %v5354, 0.0
          %v5387 = vmax.f32 %v5355, 0.0
          %v5388 = vmax.f32 %v5356, 0.0
          %5389 = vst [vmem:[%s815] sm:$0xff] %v5357
          %5390 = vst [vmem:[%s815 + $0x8] sm:$0xff] %v5358
          %5391 = vst [vmem:[%s815 + $0x10] sm:$0xff] %v5359
          %5392 = vst [vmem:[%s815 + $0x18] sm:$0xff] %v5360
          %5393 = vst [vmem:[%s815 + $0x20] sm:$0xff] %v5361
          %5394 = vst [vmem:[%s815 + $0x28] sm:$0xff] %v5362
          %5395 = vst [vmem:[%s815 + $0x30] sm:$0xff] %v5363
          %5396 = vst [vmem:[%s815 + $0x38] sm:$0xff] %v5364
          %5397 = vst [vmem:[%s815 + $0x40] sm:$0xff] %v5365
          %5398 = vst [vmem:[%s815 + $0x48] sm:$0xff] %v5366
          %5399 = vst [vmem:[%s815 + $0x50] sm:$0xff] %v5367
          %5400 = vst [vmem:[%s815 + $0x58] sm:$0xff] %v5368
          %5401 = vst [vmem:[%s815 + $0x60] sm:$0xff] %v5369
          %5402 = vst [vmem:[%s815 + $0x68] sm:$0xff] %v5370
          %5403 = vst [vmem:[%s815 + $0x70] sm:$0xff] %v5371
          %5404 = vst [vmem:[%s815 + $0x78] sm:$0xff] %v5372
          %5405 = vst [vmem:[%s815 + $0x80] sm:$0xff] %v5373
          %5406 = vst [vmem:[%s815 + $0x88] sm:$0xff] %v5374
          %5407 = vst [vmem:[%s815 + $0x90] sm:$0xff] %v5375
          %5408 = vst [vmem:[%s815 + $0x98] sm:$0xff] %v5376
          %5409 = vst [vmem:[%s815 + $0xa0] sm:$0xff] %v5377
          %5410 = vst [vmem:[%s815 + $0xa8] sm:$0xff] %v5378
          %5411 = vst [vmem:[%s815 + $0xb0] sm:$0xff] %v5379
          %5412 = vst [vmem:[%s815 + $0xb8] sm:$0xff] %v5380
          %5413 = vst [vmem:[%s815 + $0xc0] sm:$0xff] %v5381
          %5414 = vst [vmem:[%s815 + $0xc8] sm:$0xff] %v5382
          %5415 = vst [vmem:[%s815 + $0xd0] sm:$0xff] %v5383
          %5416 = vst [vmem:[%s815 + $0xd8] sm:$0xff] %v5384
          %5417 = vst [vmem:[%s815 + $0xe0] sm:$0xff] %v5385
          %5418 = vst [vmem:[%s815 + $0xe8] sm:$0xff] %v5386
          %5419 = vst [vmem:[%s815 + $0xf0] sm:$0xff] %v5387
          %5420 = vst [vmem:[%s815 + $0xf8] sm:$0xff] %v5388
        $region66: #{_lambda_.7} parent=53 // pred_fallthru
          _
        %s5421 = smul.u32 32, %s18
        %p5422 = scmp.lt.s32.totalorder %s5421, 63
        %s5423 = scalar_select %p5422, %s5421, 63
        %s5424 = smul.addr %s5423, 8
        %s5425 = scalar_lea.vmem %s3, %s5424
        // Predicated region
        $region67: #{_lambda_.7} parent=53 // pred_check
          %p5426 = pneg %p119
        $region68: #{_lambda_.7} parent=53 // pred_check_branch
          %5428 = sbr.rel (%p5426) target = $region70
        $region69: #{_lambda_.7} parent=53 // pred_region
          %s5429 = smul.u32 32, %s18
        $region70: #{_lambda_.7} parent=53 // pred_fallthru
          _
      $region54: #{_lambda_.7} parent=5 // pred_fallthru
        _
      %p5430 = scmp.le.s32.totalorder 2, %s9
      // Predicated region
      $region71: #{_lambda_.7} parent=5 // pred_check
        %p5431 = pneg %p5430
      $region72: #{_lambda_.7} parent=5 // pred_check_branch
        %5433 = sbr.rel (%p5431) target = $region74
      $region73: #{_lambda_.7} parent=5 // pred_region
        %s5434 = ssub.s32 %s9, 2
        // Predicated region
        $region75: #{_lambda_.7} parent=73 // pred_check
          %p5435 = pneg %p125
        $region76: #{_lambda_.7} parent=73 // pred_check_branch
          %5437 = sbr.rel (%p5435) target = $region78
        $region77: #{_lambda_.7} parent=73 // pred_region
          %s5438 = smul.u32 32, %s20
          %p5439 = scmp.lt.s32.totalorder %s5438, 63
          %s5440 = scalar_select %p5439, %s5438, 63
          %s5441 = smul.addr %s5440, 8
          %s5442 = scalar_lea.vmem %s3, %s5441
        $region78: #{_lambda_.7} parent=73 // pred_fallthru
          _
      $region74: #{_lambda_.7} parent=5 // pred_fallthru
        _
    $region6: #{_lambda_.7} parent=1 // loop_footer
      %s13 = sadd.s32 1, %s9
    $region7: #{_lambda_.7} parent=1 // loop_footer_branch
      %8 = sbr.rel target = $region3
    $region8: #{_lambda_.7} parent=1 // loop_exit
      _

// kernel: _lambda_.8
$region0: #{_lambda_.8}
  #allocation0 [shape = 'u32[]', space=smem, size = 0x4, offset = 0x4, fixed_abs, tag = 'smem constant byte address 0x4 - core index']
  #allocation1 [shape = 'u32[144,128]{1,0:T(1,128)}', space=vmem, size = 0x12000, scoped, tag = 'internal scratch']
  #allocation2 [shape = 'f32[1,256,128]{2,1,0:T(8,128)}', space=vmem, size = 0x20000, scoped, tag = 'scratch operand']
  %s0 = inlined_call_operand.vmem [shape: bf16[1,256,640], index: 0, kind: input, shape index: {}]
  %s1 = inlined_call_operand.vmem [shape: bf16[640,128], index: 1, kind: input, shape index: {}]
  %s2 = inlined_call_operand.vmem [shape: f32[1,128], index: 2, kind: input, shape index: {}]
  %s3 = inlined_call_operand.vmem [shape: f32[256,128], index: 3, kind: output, shape index: {}]
  %s4 = sld [smem:[#allocation0]]
  $region30: #{_lambda_.8} parent=0
    _
  %s6 = ssub.s32 1, %s4
  %s7 = scalar_select 0, %s6, %s4
  // Predicated region
  $region2: #{_lambda_.8} parent=0 // pred_check
    _
  $region3: #{_lambda_.8} parent=0 // pred_check_branch
    %9 = sbr.rel (0) target = $region5
  $region4: #{_lambda_.8} parent=0 // pred_region
    _
  $region5: #{_lambda_.8} parent=0 // pred_fallthru
    _
  // Predicated region
  $region6: #{_lambda_.8} parent=0 // pred_check
    _
  $region7: #{_lambda_.8} parent=0 // pred_check_branch
    %11 = sbr.rel (0) target = $region9
  $region8: #{_lambda_.8} parent=0 // pred_region
    _
  $region9: #{_lambda_.8} parent=0 // pred_fallthru
    _
  // Predicated region
  $region10: #{_lambda_.8} parent=0 // pred_check
    _
  $region11: #{_lambda_.8} parent=0 // pred_check_branch
    %13 = sbr.rel (0) target = $region13
  $region12: #{_lambda_.8} parent=0 // pred_region
    _
  $region13: #{_lambda_.8} parent=0 // pred_fallthru
    _
  %p15 = scmp.eq.s32.totalorder 0, 0
  // Predicated region
  $region14: #{_lambda_.8} parent=0 // pred_check
    %p16 = pneg %p15
  $region15: #{_lambda_.8} parent=0 // pred_check_branch
    %18 = sbr.rel (%p16) target = $region17
  $region16: #{_lambda_.8} parent=0 // pred_region
    %19 = vst [vmem:[#allocation2] sm:$0xff] 0.0
    %20 = vst [vmem:[#allocation2 + $0x8] sm:$0xff] 0.0
    %21 = vst [vmem:[#allocation2 + $0x10] sm:$0xff] 0.0
    %22 = vst [vmem:[#allocation2 + $0x18] sm:$0xff] 0.0
    %23 = vst [vmem:[#allocation2 + $0x20] sm:$0xff] 0.0
    %24 = vst [vmem:[#allocation2 + $0x28] sm:$0xff] 0.0
    %25 = vst [vmem:[#allocation2 + $0x30] sm:$0xff] 0.0
    %26 = vst [vmem:[#allocation2 + $0x38] sm:$0xff] 0.0
    %27 = vst [vmem:[#allocation2 + $0x40] sm:$0xff] 0.0
    %28 = vst [vmem:[#allocation2 + $0x48] sm:$0xff] 0.0
    %29 = vst [vmem:[#allocation2 + $0x50] sm:$0xff] 0.0
    %30 = vst [vmem:[#allocation2 + $0x58] sm:$0xff] 0.0
    %31 = vst [vmem:[#allocation2 + $0x60] sm:$0xff] 0.0
    %32 = vst [vmem:[#allocation2 + $0x68] sm:$0xff] 0.0
    %33 = vst [vmem:[#allocation2 + $0x70] sm:$0xff] 0.0
    %34 = vst [vmem:[#allocation2 + $0x78] sm:$0xff] 0.0
    %35 = vst [vmem:[#allocation2 + $0x80] sm:$0xff] 0.0
    %36 = vst [vmem:[#allocation2 + $0x88] sm:$0xff] 0.0
    %37 = vst [vmem:[#allocation2 + $0x90] sm:$0xff] 0.0
    %38 = vst [vmem:[#allocation2 + $0x98] sm:$0xff] 0.0
    %39 = vst [vmem:[#allocation2 + $0xa0] sm:$0xff] 0.0
    %40 = vst [vmem:[#allocation2 + $0xa8] sm:$0xff] 0.0
    %41 = vst [vmem:[#allocation2 + $0xb0] sm:$0xff] 0.0
    %42 = vst [vmem:[#allocation2 + $0xb8] sm:$0xff] 0.0
    %43 = vst [vmem:[#allocation2 + $0xc0] sm:$0xff] 0.0
    %44 = vst [vmem:[#allocation2 + $0xc8] sm:$0xff] 0.0
    %45 = vst [vmem:[#allocation2 + $0xd0] sm:$0xff] 0.0
    %46 = vst [vmem:[#allocation2 + $0xd8] sm:$0xff] 0.0
    %47 = vst [vmem:[#allocation2 + $0xe0] sm:$0xff] 0.0
    %48 = vst [vmem:[#allocation2 + $0xe8] sm:$0xff] 0.0
    %49 = vst [vmem:[#allocation2 + $0xf0] sm:$0xff] 0.0
    %50 = vst [vmem:[#allocation2 + $0xf8] sm:$0xff] 0.0
  $region17: #{_lambda_.8} parent=0 // pred_fallthru
    _
  %v51 = vld [vmem:[#allocation2] sm:$0xff]
  %v52 = vld [vmem:[#allocation2 + $0x8] sm:$0xff]
  %v53 = vld [vmem:[#allocation2 + $0x10] sm:$0xff]
  %v54 = vld [vmem:[#allocation2 + $0x18] sm:$0xff]
  %v55 = vld [vmem:[#allocation2 + $0x20] sm:$0xff]
  %v56 = vld [vmem:[#allocation2 + $0x28] sm:$0xff]
  %v57 = vld [vmem:[#allocation2 + $0x30] sm:$0xff]
  %v58 = vld [vmem:[#allocation2 + $0x38] sm:$0xff]
  %v59 = vld [vmem:[#allocation2 + $0x40] sm:$0xff]
  %v60 = vld [vmem:[#allocation2 + $0x48] sm:$0xff]
  %v61 = vld [vmem:[#allocation2 + $0x50] sm:$0xff]
  %v62 = vld [vmem:[#allocation2 + $0x58] sm:$0xff]
  %v63 = vld [vmem:[#allocation2 + $0x60] sm:$0xff]
  %v64 = vld [vmem:[#allocation2 + $0x68] sm:$0xff]
  %v65 = vld [vmem:[#allocation2 + $0x70] sm:$0xff]
  %v66 = vld [vmem:[#allocation2 + $0x78] sm:$0xff]
  %v67 = vld [vmem:[#allocation2 + $0x80] sm:$0xff]
  %v68 = vld [vmem:[#allocation2 + $0x88] sm:$0xff]
  %v69 = vld [vmem:[#allocation2 + $0x90] sm:$0xff]
  %v70 = vld [vmem:[#allocation2 + $0x98] sm:$0xff]
  %v71 = vld [vmem:[#allocation2 + $0xa0] sm:$0xff]
  %v72 = vld [vmem:[#allocation2 + $0xa8] sm:$0xff]
  %v73 = vld [vmem:[#allocation2 + $0xb0] sm:$0xff]
  %v74 = vld [vmem:[#allocation2 + $0xb8] sm:$0xff]
  %v75 = vld [vmem:[#allocation2 + $0xc0] sm:$0xff]
  %v76 = vld [vmem:[#allocation2 + $0xc8] sm:$0xff]
  %v77 = vld [vmem:[#allocation2 + $0xd0] sm:$0xff]
  %v78 = vld [vmem:[#allocation2 + $0xd8] sm:$0xff]
  %v79 = vld [vmem:[#allocation2 + $0xe0] sm:$0xff]
  %v80 = vld [vmem:[#allocation2 + $0xe8] sm:$0xff]
  %v81 = vld [vmem:[#allocation2 + $0xf0] sm:$0xff]
  %v82 = vld [vmem:[#allocation2 + $0xf8] sm:$0xff]
  %v83 = vld [vmem:[%s0] sm:$0xff]
  %v84 = vld [vmem:[%s0 + $0x8] sm:$0xff]
  %v85 = vld [vmem:[%s0 + $0x10] sm:$0xf]
  %v86 = vld [vmem:[%s0 + $0x14] sm:$0xff]
  %v87 = vld [vmem:[%s0 + $0x1c] sm:$0xff]
  %v88 = vld [vmem:[%s0 + $0x24] sm:$0xf]
  %v89 = vld [vmem:[%s0 + $0x28] sm:$0xff]
  %v90 = vld [vmem:[%s0 + $0x30] sm:$0xff]
  %v91 = vld [vmem:[%s0 + $0x38] sm:$0xf]
  %v92 = vld [vmem:[%s0 + $0x3c] sm:$0xff]
  %v93 = vld [vmem:[%s0 + $0x44] sm:$0xff]
  %v94 = vld [vmem:[%s0 + $0x4c] sm:$0xf]
  %v95 = vld [vmem:[%s0 + $0x50] sm:$0xff]
  %v96 = vld [vmem:[%s0 + $0x58] sm:$0xff]
  %v97 = vld [vmem:[%s0 + $0x60] sm:$0xf]
  %v98 = vld [vmem:[%s0 + $0x64] sm:$0xff]
  %v99 = vld [vmem:[%s0 + $0x6c] sm:$0xff]
  %v100 = vld [vmem:[%s0 + $0x74] sm:$0xf]
  %v101 = vld [vmem:[%s0 + $0x78] sm:$0xff]
  %v102 = vld [vmem:[%s0 + $0x80] sm:$0xff]
  %v103 = vld [vmem:[%s0 + $0x88] sm:$0xf]
  %v104 = vld [vmem:[%s0 + $0x8c] sm:$0xff]
  %v105 = vld [vmem:[%s0 + $0x94] sm:$0xff]
  %v106 = vld [vmem:[%s0 + $0x9c] sm:$0xf]
  %v107 = vld [vmem:[%s0 + $0xa0] sm:$0xff]
  %v108 = vld [vmem:[%s0 + $0xa8] sm:$0xff]
  %v109 = vld [vmem:[%s0 + $0xb0] sm:$0xf]
  %v110 = vld [vmem:[%s0 + $0xb4] sm:$0xff]
  %v111 = vld [vmem:[%s0 + $0xbc] sm:$0xff]
  %v112 = vld [vmem:[%s0 + $0xc4] sm:$0xf]
  %v113 = vld [vmem:[%s0 + $0xc8] sm:$0xff]
  %v114 = vld [vmem:[%s0 + $0xd0] sm:$0xff]
  %v115 = vld [vmem:[%s0 + $0xd8] sm:$0xf]
  %v116 = vld [vmem:[%s0 + $0xdc] sm:$0xff]
  %v117 = vld [vmem:[%s0 + $0xe4] sm:$0xff]
  %v118 = vld [vmem:[%s0 + $0xec] sm:$0xf]
  %v119 = vld [vmem:[%s0 + $0xf0] sm:$0xff]
  %v120 = vld [vmem:[%s0 + $0xf8] sm:$0xff]
  %v121 = vld [vmem:[%s0 + $0x100] sm:$0xf]
  %v122 = vld [vmem:[%s0 + $0x104] sm:$0xff]
  %v123 = vld [vmem:[%s0 + $0x10c] sm:$0xff]
  %v124 = vld [vmem:[%s0 + $0x114] sm:$0xf]
  %v125 = vld [vmem:[%s0 + $0x118] sm:$0xff]
  %v126 = vld [vmem:[%s0 + $0x120] sm:$0xff]
  %v127 = vld [vmem:[%s0 + $0x128] sm:$0xf]
  %v128 = vld [vmem:[%s0 + $0x12c] sm:$0xff]
  %v129 = vld [vmem:[%s0 + $0x134] sm:$0xff]
  %v130 = vld [vmem:[%s0 + $0x13c] sm:$0xf]
  %v131 = vld [vmem:[%s0 + $0x140] sm:$0xff]
  %v132 = vld [vmem:[%s0 + $0x148] sm:$0xff]
  %v133 = vld [vmem:[%s0 + $0x150] sm:$0xf]
  %v134 = vld [vmem:[%s0 + $0x154] sm:$0xff]
  %v135 = vld [vmem:[%s0 + $0x15c] sm:$0xff]
  %v136 = vld [vmem:[%s0 + $0x164] sm:$0xf]
  %v137 = vld [vmem:[%s0 + $0x168] sm:$0xff]
  %v138 = vld [vmem:[%s0 + $0x170] sm:$0xff]
  %v139 = vld [vmem:[%s0 + $0x178] sm:$0xf]
  %v140 = vld [vmem:[%s0 + $0x17c] sm:$0xff]
  %v141 = vld [vmem:[%s0 + $0x184] sm:$0xff]
  %v142 = vld [vmem:[%s0 + $0x18c] sm:$0xf]
  %v143 = vld [vmem:[%s0 + $0x190] sm:$0xff]
  %v144 = vld [vmem:[%s0 + $0x198] sm:$0xff]
  %v145 = vld [vmem:[%s0 + $0x1a0] sm:$0xf]
  %v146 = vld [vmem:[%s0 + $0x1a4] sm:$0xff]
  %v147 = vld [vmem:[%s0 + $0x1ac] sm:$0xff]
  %v148 = vld [vmem:[%s0 + $0x1b4] sm:$0xf]
  %v149 = vld [vmem:[%s0 + $0x1b8] sm:$0xff]
  %v150 = vld [vmem:[%s0 + $0x1c0] sm:$0xff]
  %v151 = vld [vmem:[%s0 + $0x1c8] sm:$0xf]
  %v152 = vld [vmem:[%s0 + $0x1cc] sm:$0xff]
  %v153 = vld [vmem:[%s0 + $0x1d4] sm:$0xff]
  %v154 = vld [vmem:[%s0 + $0x1dc] sm:$0xf]
  %v155 = vld [vmem:[%s0 + $0x1e0] sm:$0xff]
  %v156 = vld [vmem:[%s0 + $0x1e8] sm:$0xff]
  %v157 = vld [vmem:[%s0 + $0x1f0] sm:$0xf]
  %v158 = vld [vmem:[%s0 + $0x1f4] sm:$0xff]
  %v159 = vld [vmem:[%s0 + $0x1fc] sm:$0xff]
  %v160 = vld [vmem:[%s0 + $0x204] sm:$0xf]
  %v161 = vld [vmem:[%s0 + $0x208] sm:$0xff]
  %v162 = vld [vmem:[%s0 + $0x210] sm:$0xff]
  %v163 = vld [vmem:[%s0 + $0x218] sm:$0xf]
  %v164 = vld [vmem:[%s0 + $0x21c] sm:$0xff]
  %v165 = vld [vmem:[%s0 + $0x224] sm:$0xff]
  %v166 = vld [vmem:[%s0 + $0x22c] sm:$0xf]
  %v167 = vld [vmem:[%s0 + $0x230] sm:$0xff]
  %v168 = vld [vmem:[%s0 + $0x238] sm:$0xff]
  %v169 = vld [vmem:[%s0 + $0x240] sm:$0xf]
  %v170 = vld [vmem:[%s0 + $0x244] sm:$0xff]
  %v171 = vld [vmem:[%s0 + $0x24c] sm:$0xff]
  %v172 = vld [vmem:[%s0 + $0x254] sm:$0xf]
  %v173 = vld [vmem:[%s0 + $0x258] sm:$0xff]
  %v174 = vld [vmem:[%s0 + $0x260] sm:$0xff]
  %v175 = vld [vmem:[%s0 + $0x268] sm:$0xf]
  %v176 = vld [vmem:[%s0 + $0x26c] sm:$0xff]
  %v177 = vld [vmem:[%s0 + $0x274] sm:$0xff]
  %v178 = vld [vmem:[%s0 + $0x27c] sm:$0xf]
  %v179 = vld [vmem:[%s1] sm:$0xf]
  %v180 = vld [vmem:[%s1 + $0x4] sm:$0xf]
  %v181 = vld [vmem:[%s1 + $0x8] sm:$0xf]
  %v182 = vld [vmem:[%s1 + $0xc] sm:$0xf]
  %v183 = vld [vmem:[%s1 + $0x10] sm:$0xf]
  %v184 = vld [vmem:[%s1 + $0x14] sm:$0xf]
  %v185 = vld [vmem:[%s1 + $0x18] sm:$0xf]
  %v186 = vld [vmem:[%s1 + $0x1c] sm:$0xf]
  %v187 = vld [vmem:[%s1 + $0x20] sm:$0xf]
  %v188 = vld [vmem:[%s1 + $0x24] sm:$0xf]
  %v189 = vld [vmem:[%s1 + $0x28] sm:$0xf]
  %v190 = vld [vmem:[%s1 + $0x2c] sm:$0xf]
  %v191 = vld [vmem:[%s1 + $0x30] sm:$0xf]
  %v192 = vld [vmem:[%s1 + $0x34] sm:$0xf]
  %v193 = vld [vmem:[%s1 + $0x38] sm:$0xf]
  %v194 = vld [vmem:[%s1 + $0x3c] sm:$0xf]
  %v195 = vld [vmem:[%s1 + $0x40] sm:$0xf]
  %v196 = vld [vmem:[%s1 + $0x44] sm:$0xf]
  %v197 = vld [vmem:[%s1 + $0x48] sm:$0xf]
  %v198 = vld [vmem:[%s1 + $0x4c] sm:$0xf]
  %v199 = vld [vmem:[%s1 + $0x50] sm:$0xf]
  %v200 = vld [vmem:[%s1 + $0x54] sm:$0xf]
  %v201 = vld [vmem:[%s1 + $0x58] sm:$0xf]
  %v202 = vld [vmem:[%s1 + $0x5c] sm:$0xf]
  %v203 = vld [vmem:[%s1 + $0x60] sm:$0xf]
  %v204 = vld [vmem:[%s1 + $0x64] sm:$0xf]
  %v205 = vld [vmem:[%s1 + $0x68] sm:$0xf]
  %v206 = vld [vmem:[%s1 + $0x6c] sm:$0xf]
  %v207 = vld [vmem:[%s1 + $0x70] sm:$0xf]
  %v208 = vld [vmem:[%s1 + $0x74] sm:$0xf]
  %v209 = vld [vmem:[%s1 + $0x78] sm:$0xf]
  %v210 = vld [vmem:[%s1 + $0x7c] sm:$0xf]
  %v211 = vld [vmem:[%s1 + $0x80] sm:$0xf]
  %v212 = vld [vmem:[%s1 + $0x84] sm:$0xf]
  %v213 = vld [vmem:[%s1 + $0x88] sm:$0xf]
  %v214 = vld [vmem:[%s1 + $0x8c] sm:$0xf]
  %v215 = vld [vmem:[%s1 + $0x90] sm:$0xf]
  %v216 = vld [vmem:[%s1 + $0x94] sm:$0xf]
  %v217 = vld [vmem:[%s1 + $0x98] sm:$0xf]
  %v218 = vld [vmem:[%s1 + $0x9c] sm:$0xf]
  %v219 = vld [vmem:[%s1 + $0xa0] sm:$0xf]
  %v220 = vld [vmem:[%s1 + $0xa4] sm:$0xf]
  %v221 = vld [vmem:[%s1 + $0xa8] sm:$0xf]
  %v222 = vld [vmem:[%s1 + $0xac] sm:$0xf]
  %v223 = vld [vmem:[%s1 + $0xb0] sm:$0xf]
  %v224 = vld [vmem:[%s1 + $0xb4] sm:$0xf]
  %v225 = vld [vmem:[%s1 + $0xb8] sm:$0xf]
  %v226 = vld [vmem:[%s1 + $0xbc] sm:$0xf]
  %v227 = vld [vmem:[%s1 + $0xc0] sm:$0xf]
  %v228 = vld [vmem:[%s1 + $0xc4] sm:$0xf]
  %v229 = vld [vmem:[%s1 + $0xc8] sm:$0xf]
  %v230 = vld [vmem:[%s1 + $0xcc] sm:$0xf]
  %v231 = vld [vmem:[%s1 + $0xd0] sm:$0xf]
  %v232 = vld [vmem:[%s1 + $0xd4] sm:$0xf]
  %v233 = vld [vmem:[%s1 + $0xd8] sm:$0xf]
  %v234 = vld [vmem:[%s1 + $0xdc] sm:$0xf]
  %v235 = vld [vmem:[%s1 + $0xe0] sm:$0xf]
  %v236 = vld [vmem:[%s1 + $0xe4] sm:$0xf]
  %v237 = vld [vmem:[%s1 + $0xe8] sm:$0xf]
  %v238 = vld [vmem:[%s1 + $0xec] sm:$0xf]
  %v239 = vld [vmem:[%s1 + $0xf0] sm:$0xf]
  %v240 = vld [vmem:[%s1 + $0xf4] sm:$0xf]
  %v241 = vld [vmem:[%s1 + $0xf8] sm:$0xf]
  %v242 = vld [vmem:[%s1 + $0xfc] sm:$0xf]
  %v243 = vld [vmem:[%s1 + $0x100] sm:$0xf]
  %v244 = vld [vmem:[%s1 + $0x104] sm:$0xf]
  %v245 = vld [vmem:[%s1 + $0x108] sm:$0xf]
  %v246 = vld [vmem:[%s1 + $0x10c] sm:$0xf]
  %v247 = vld [vmem:[%s1 + $0x110] sm:$0xf]
  %v248 = vld [vmem:[%s1 + $0x114] sm:$0xf]
  %v249 = vld [vmem:[%s1 + $0x118] sm:$0xf]
  %v250 = vld [vmem:[%s1 + $0x11c] sm:$0xf]
  %v251 = vld [vmem:[%s1 + $0x120] sm:$0xf]
  %v252 = vld [vmem:[%s1 + $0x124] sm:$0xf]
  %v253 = vld [vmem:[%s1 + $0x128] sm:$0xf]
  %v254 = vld [vmem:[%s1 + $0x12c] sm:$0xf]
  %v255 = vld [vmem:[%s1 + $0x130] sm:$0xf]
  %v256 = vld [vmem:[%s1 + $0x134] sm:$0xf]
  %v257 = vld [vmem:[%s1 + $0x138] sm:$0xf]
  %v258 = vld [vmem:[%s1 + $0x13c] sm:$0xf]
  %v355 = vunpack.c.l.b16 %v83
  %v356 = vunpack.c.h.b16 %v83
  %v357 = vunpack.c.l.b16 %v84
  %v358 = vunpack.c.h.b16 %v84
  %v359 = vunpack.c.l.b16 %v85
  %v360 = vunpack.c.l.b16 %v86
  %v361 = vunpack.c.h.b16 %v86
  %v362 = vunpack.c.l.b16 %v87
  %v363 = vunpack.c.h.b16 %v87
  %v364 = vunpack.c.l.b16 %v88
  %v365 = vunpack.c.l.b16 %v89
  %v366 = vunpack.c.h.b16 %v89
  %v367 = vunpack.c.l.b16 %v90
  %v368 = vunpack.c.h.b16 %v90
  %v369 = vunpack.c.l.b16 %v91
  %v370 = vunpack.c.l.b16 %v92
  %v371 = vunpack.c.h.b16 %v92
  %v372 = vunpack.c.l.b16 %v93
  %v373 = vunpack.c.h.b16 %v93
  %v374 = vunpack.c.l.b16 %v94
  %v375 = vunpack.c.l.b16 %v95
  %v376 = vunpack.c.h.b16 %v95
  %v377 = vunpack.c.l.b16 %v96
  %v378 = vunpack.c.h.b16 %v96
  %v379 = vunpack.c.l.b16 %v97
  %v380 = vunpack.c.l.b16 %v98
  %v381 = vunpack.c.h.b16 %v98
  %v382 = vunpack.c.l.b16 %v99
  %v383 = vunpack.c.h.b16 %v99
  %v384 = vunpack.c.l.b16 %v100
  %v385 = vunpack.c.l.b16 %v101
  %v386 = vunpack.c.h.b16 %v101
  %v387 = vunpack.c.l.b16 %v102
  %v388 = vunpack.c.h.b16 %v102
  %v389 = vunpack.c.l.b16 %v103
  %v390 = vunpack.c.l.b16 %v104
  %v391 = vunpack.c.h.b16 %v104
  %v392 = vunpack.c.l.b16 %v105
  %v393 = vunpack.c.h.b16 %v105
  %v394 = vunpack.c.l.b16 %v106
  %v395 = vunpack.c.l.b16 %v107
  %v396 = vunpack.c.h.b16 %v107
  %v397 = vunpack.c.l.b16 %v108
  %v398 = vunpack.c.h.b16 %v108
  %v399 = vunpack.c.l.b16 %v109
  %v400 = vunpack.c.l.b16 %v110
  %v401 = vunpack.c.h.b16 %v110
  %v402 = vunpack.c.l.b16 %v111
  %v403 = vunpack.c.h.b16 %v111
  %v404 = vunpack.c.l.b16 %v112
  %v405 = vunpack.c.l.b16 %v113
  %v406 = vunpack.c.h.b16 %v113
  %v407 = vunpack.c.l.b16 %v114
  %v408 = vunpack.c.h.b16 %v114
  %v409 = vunpack.c.l.b16 %v115
  %v410 = vunpack.c.l.b16 %v116
  %v411 = vunpack.c.h.b16 %v116
  %v412 = vunpack.c.l.b16 %v117
  %v413 = vunpack.c.h.b16 %v117
  %v414 = vunpack.c.l.b16 %v118
  %v415 = vunpack.c.l.b16 %v119
  %v416 = vunpack.c.h.b16 %v119
  %v417 = vunpack.c.l.b16 %v120
  %v418 = vunpack.c.h.b16 %v120
  %v419 = vunpack.c.l.b16 %v121
  %v420 = vunpack.c.l.b16 %v122
  %v421 = vunpack.c.h.b16 %v122
  %v422 = vunpack.c.l.b16 %v123
  %v423 = vunpack.c.h.b16 %v123
  %v424 = vunpack.c.l.b16 %v124
  %v425 = vunpack.c.l.b16 %v125
  %v426 = vunpack.c.h.b16 %v125
  %v427 = vunpack.c.l.b16 %v126
  %v428 = vunpack.c.h.b16 %v126
  %v429 = vunpack.c.l.b16 %v127
  %v430 = vunpack.c.l.b16 %v128
  %v431 = vunpack.c.h.b16 %v128
  %v432 = vunpack.c.l.b16 %v129
  %v433 = vunpack.c.h.b16 %v129
  %v434 = vunpack.c.l.b16 %v130
  %v435 = vunpack.c.l.b16 %v131
  %v436 = vunpack.c.h.b16 %v131
  %v437 = vunpack.c.l.b16 %v132
  %v438 = vunpack.c.h.b16 %v132
  %v439 = vunpack.c.l.b16 %v133
  %v440 = vunpack.c.l.b16 %v134
  %v441 = vunpack.c.h.b16 %v134
  %v442 = vunpack.c.l.b16 %v135
  %v443 = vunpack.c.h.b16 %v135
  %v444 = vunpack.c.l.b16 %v136
  %v445 = vunpack.c.l.b16 %v137
  %v446 = vunpack.c.h.b16 %v137
  %v447 = vunpack.c.l.b16 %v138
  %v448 = vunpack.c.h.b16 %v138
  %v449 = vunpack.c.l.b16 %v139
  %v450 = vunpack.c.l.b16 %v140
  %v451 = vunpack.c.h.b16 %v140
  %v452 = vunpack.c.l.b16 %v141
  %v453 = vunpack.c.h.b16 %v141
  %v454 = vunpack.c.l.b16 %v142
  %v455 = vunpack.c.l.b16 %v143
  %v456 = vunpack.c.h.b16 %v143
  %v457 = vunpack.c.l.b16 %v144
  %v458 = vunpack.c.h.b16 %v144
  %v459 = vunpack.c.l.b16 %v145
  %v460 = vunpack.c.l.b16 %v146
  %v461 = vunpack.c.h.b16 %v146
  %v462 = vunpack.c.l.b16 %v147
  %v463 = vunpack.c.h.b16 %v147
  %v464 = vunpack.c.l.b16 %v148
  %v465 = vunpack.c.l.b16 %v149
  %v466 = vunpack.c.h.b16 %v149
  %v467 = vunpack.c.l.b16 %v150
  %v468 = vunpack.c.h.b16 %v150
  %v469 = vunpack.c.l.b16 %v151
  %v470 = vunpack.c.l.b16 %v152
  %v471 = vunpack.c.h.b16 %v152
  %v472 = vunpack.c.l.b16 %v153
  %v473 = vunpack.c.h.b16 %v153
  %v474 = vunpack.c.l.b16 %v154
  %v475 = vunpack.c.l.b16 %v155
  %v476 = vunpack.c.h.b16 %v155
  %v477 = vunpack.c.l.b16 %v156
  %v478 = vunpack.c.h.b16 %v156
  %v479 = vunpack.c.l.b16 %v157
  %v480 = vunpack.c.l.b16 %v158
  %v481 = vunpack.c.h.b16 %v158
  %v482 = vunpack.c.l.b16 %v159
  %v483 = vunpack.c.h.b16 %v159
  %v484 = vunpack.c.l.b16 %v160
  %v485 = vunpack.c.l.b16 %v161
  %v486 = vunpack.c.h.b16 %v161
  %v487 = vunpack.c.l.b16 %v162
  %v488 = vunpack.c.h.b16 %v162
  %v489 = vunpack.c.l.b16 %v163
  %v490 = vunpack.c.l.b16 %v164
  %v491 = vunpack.c.h.b16 %v164
  %v492 = vunpack.c.l.b16 %v165
  %v493 = vunpack.c.h.b16 %v165
  %v494 = vunpack.c.l.b16 %v166
  %v495 = vunpack.c.l.b16 %v167
  %v496 = vunpack.c.h.b16 %v167
  %v497 = vunpack.c.l.b16 %v168
  %v498 = vunpack.c.h.b16 %v168
  %v499 = vunpack.c.l.b16 %v169
  %v500 = vunpack.c.l.b16 %v170
  %v501 = vunpack.c.h.b16 %v170
  %v502 = vunpack.c.l.b16 %v171
  %v503 = vunpack.c.h.b16 %v171
  %v504 = vunpack.c.l.b16 %v172
  %v505 = vunpack.c.l.b16 %v173
  %v506 = vunpack.c.h.b16 %v173
  %v507 = vunpack.c.l.b16 %v174
  %v508 = vunpack.c.h.b16 %v174
  %v509 = vunpack.c.l.b16 %v175
  %v510 = vunpack.c.l.b16 %v176
  %v511 = vunpack.c.h.b16 %v176
  %v512 = vunpack.c.l.b16 %v177
  %v513 = vunpack.c.h.b16 %v177
  %v514 = vunpack.c.l.b16 %v178
  %v515 = vpack.c.b16 %v360, %v355
  %v516 = vpack.c.b16 %v361, %v356
  %v517 = vpack.c.b16 %v362, %v357
  %v518 = vpack.c.b16 %v363, %v358
  %v519 = vpack.c.b16 %v364, %v359
  %v520 = vpack.c.b16 %v370, %v365
  %v521 = vpack.c.b16 %v371, %v366
  %v522 = vpack.c.b16 %v372, %v367
  %v523 = vpack.c.b16 %v373, %v368
  %v524 = vpack.c.b16 %v374, %v369
  %v525 = vpack.c.b16 %v380, %v375
  %v526 = vpack.c.b16 %v381, %v376
  %v527 = vpack.c.b16 %v382, %v377
  %v528 = vpack.c.b16 %v383, %v378
  %v529 = vpack.c.b16 %v384, %v379
  %v530 = vpack.c.b16 %v390, %v385
  %v531 = vpack.c.b16 %v391, %v386
  %v532 = vpack.c.b16 %v392, %v387
  %v533 = vpack.c.b16 %v393, %v388
  %v534 = vpack.c.b16 %v394, %v389
  %v535 = vpack.c.b16 %v400, %v395
  %v536 = vpack.c.b16 %v401, %v396
  %v537 = vpack.c.b16 %v402, %v397
  %v538 = vpack.c.b16 %v403, %v398
  %v539 = vpack.c.b16 %v404, %v399
  %v540 = vpack.c.b16 %v410, %v405
  %v541 = vpack.c.b16 %v411, %v406
  %v542 = vpack.c.b16 %v412, %v407
  %v543 = vpack.c.b16 %v413, %v408
  %v544 = vpack.c.b16 %v414, %v409
  %v545 = vpack.c.b16 %v420, %v415
  %v546 = vpack.c.b16 %v421, %v416
  %v547 = vpack.c.b16 %v422, %v417
  %v548 = vpack.c.b16 %v423, %v418
  %v549 = vpack.c.b16 %v424, %v419
  %v550 = vpack.c.b16 %v430, %v425
  %v551 = vpack.c.b16 %v431, %v426
  %v552 = vpack.c.b16 %v432, %v427
  %v553 = vpack.c.b16 %v433, %v428
  %v554 = vpack.c.b16 %v434, %v429
  %v555 = vpack.c.b16 %v440, %v435
  %v556 = vpack.c.b16 %v441, %v436
  %v557 = vpack.c.b16 %v442, %v437
  %v558 = vpack.c.b16 %v443, %v438
  %v559 = vpack.c.b16 %v444, %v439
  %v560 = vpack.c.b16 %v450, %v445
  %v561 = vpack.c.b16 %v451, %v446
  %v562 = vpack.c.b16 %v452, %v447
  %v563 = vpack.c.b16 %v453, %v448
  %v564 = vpack.c.b16 %v454, %v449
  %v565 = vpack.c.b16 %v460, %v455
  %v566 = vpack.c.b16 %v461, %v456
  %v567 = vpack.c.b16 %v462, %v457
  %v568 = vpack.c.b16 %v463, %v458
  %v569 = vpack.c.b16 %v464, %v459
  %v570 = vpack.c.b16 %v470, %v465
  %v571 = vpack.c.b16 %v471, %v466
  %v572 = vpack.c.b16 %v472, %v467
  %v573 = vpack.c.b16 %v473, %v468
  %v574 = vpack.c.b16 %v474, %v469
  %v575 = vpack.c.b16 %v480, %v475
  %v576 = vpack.c.b16 %v481, %v476
  %v577 = vpack.c.b16 %v482, %v477
  %v578 = vpack.c.b16 %v483, %v478
  %v579 = vpack.c.b16 %v484, %v479
  %v580 = vpack.c.b16 %v490, %v485
  %v581 = vpack.c.b16 %v491, %v486
  %v582 = vpack.c.b16 %v492, %v487
  %v583 = vpack.c.b16 %v493, %v488
  %v584 = vpack.c.b16 %v494, %v489
  %v585 = vpack.c.b16 %v500, %v495
  %v586 = vpack.c.b16 %v501, %v496
  %v587 = vpack.c.b16 %v502, %v497
  %v588 = vpack.c.b16 %v503, %v498
  %v589 = vpack.c.b16 %v504, %v499
  %v590 = vpack.c.b16 %v510, %v505
  %v591 = vpack.c.b16 %v511, %v506
  %v592 = vpack.c.b16 %v512, %v507
  %v593 = vpack.c.b16 %v513, %v508
  %v594 = vpack.c.b16 %v514, %v509
  %v755 = vunpack.c.l.b16 %v179
  %v756 = vunpack.c.l.b16 %v180
  %v757 = vunpack.c.l.b16 %v181
  %v758 = vunpack.c.l.b16 %v182
  %v759 = vunpack.c.l.b16 %v183
  %v760 = vunpack.c.l.b16 %v184
  %v761 = vunpack.c.l.b16 %v185
  %v762 = vunpack.c.l.b16 %v186
  %v763 = vunpack.c.l.b16 %v187
  %v764 = vunpack.c.l.b16 %v188
  %v765 = vunpack.c.l.b16 %v189
  %v766 = vunpack.c.l.b16 %v190
  %v767 = vunpack.c.l.b16 %v191
  %v768 = vunpack.c.l.b16 %v192
  %v769 = vunpack.c.l.b16 %v193
  %v770 = vunpack.c.l.b16 %v194
  %v771 = vunpack.c.l.b16 %v195
  %v772 = vunpack.c.l.b16 %v196
  %v773 = vunpack.c.l.b16 %v197
  %v774 = vunpack.c.l.b16 %v198
  %v775 = vunpack.c.l.b16 %v199
  %v776 = vunpack.c.l.b16 %v200
  %v777 = vunpack.c.l.b16 %v201
  %v778 = vunpack.c.l.b16 %v202
  %v779 = vunpack.c.l.b16 %v203
  %v780 = vunpack.c.l.b16 %v204
  %v781 = vunpack.c.l.b16 %v205
  %v782 = vunpack.c.l.b16 %v206
  %v783 = vunpack.c.l.b16 %v207
  %v784 = vunpack.c.l.b16 %v208
  %v785 = vunpack.c.l.b16 %v209
  %v786 = vunpack.c.l.b16 %v210
  %v787 = vunpack.c.l.b16 %v211
  %v788 = vunpack.c.l.b16 %v212
  %v789 = vunpack.c.l.b16 %v213
  %v790 = vunpack.c.l.b16 %v214
  %v791 = vunpack.c.l.b16 %v215
  %v792 = vunpack.c.l.b16 %v216
  %v793 = vunpack.c.l.b16 %v217
  %v794 = vunpack.c.l.b16 %v218
  %v795 = vunpack.c.l.b16 %v219
  %v796 = vunpack.c.l.b16 %v220
  %v797 = vunpack.c.l.b16 %v221
  %v798 = vunpack.c.l.b16 %v222
  %v799 = vunpack.c.l.b16 %v223
  %v800 = vunpack.c.l.b16 %v224
  %v801 = vunpack.c.l.b16 %v225
  %v802 = vunpack.c.l.b16 %v226
  %v803 = vunpack.c.l.b16 %v227
  %v804 = vunpack.c.l.b16 %v228
  %v805 = vunpack.c.l.b16 %v229
  %v806 = vunpack.c.l.b16 %v230
  %v807 = vunpack.c.l.b16 %v231
  %v808 = vunpack.c.l.b16 %v232
  %v809 = vunpack.c.l.b16 %v233
  %v810 = vunpack.c.l.b16 %v234
  %v811 = vunpack.c.l.b16 %v235
  %v812 = vunpack.c.l.b16 %v236
  %v813 = vunpack.c.l.b16 %v237
  %v814 = vunpack.c.l.b16 %v238
  %v815 = vunpack.c.l.b16 %v239
  %v816 = vunpack.c.l.b16 %v240
  %v817 = vunpack.c.l.b16 %v241
  %v818 = vunpack.c.l.b16 %v242
  %v819 = vunpack.c.l.b16 %v243
  %v820 = vunpack.c.l.b16 %v244
  %v821 = vunpack.c.l.b16 %v245
  %v822 = vunpack.c.l.b16 %v246
  %v823 = vunpack.c.l.b16 %v247
  %v824 = vunpack.c.l.b16 %v248
  %v825 = vunpack.c.l.b16 %v249
  %v826 = vunpack.c.l.b16 %v250
  %v827 = vunpack.c.l.b16 %v251
  %v828 = vunpack.c.l.b16 %v252
  %v829 = vunpack.c.l.b16 %v253
  %v830 = vunpack.c.l.b16 %v254
  %v831 = vunpack.c.l.b16 %v255
  %v832 = vunpack.c.l.b16 %v256
  %v833 = vunpack.c.l.b16 %v257
  %v834 = vunpack.c.l.b16 %v258
  %v835 = vpack.c.b16 %v756, %v755
  %v836 = vpack.c.b16 %v758, %v757
  %v837 = vpack.c.b16 %v760, %v759
  %v838 = vpack.c.b16 %v762, %v761
  %v839 = vpack.c.b16 %v764, %v763
  %v840 = vpack.c.b16 %v766, %v765
  %v841 = vpack.c.b16 %v768, %v767
  %v842 = vpack.c.b16 %v770, %v769
  %v843 = vpack.c.b16 %v772, %v771
  %v844 = vpack.c.b16 %v774, %v773
  %v845 = vpack.c.b16 %v776, %v775
  %v846 = vpack.c.b16 %v778, %v777
  %v847 = vpack.c.b16 %v780, %v779
  %v848 = vpack.c.b16 %v782, %v781
  %v849 = vpack.c.b16 %v784, %v783
  %v850 = vpack.c.b16 %v786, %v785
  %v851 = vpack.c.b16 %v788, %v787
  %v852 = vpack.c.b16 %v790, %v789
  %v853 = vpack.c.b16 %v792, %v791
  %v854 = vpack.c.b16 %v794, %v793
  %v855 = vpack.c.b16 %v796, %v795
  %v856 = vpack.c.b16 %v798, %v797
  %v857 = vpack.c.b16 %v800, %v799
  %v858 = vpack.c.b16 %v802, %v801
  %v859 = vpack.c.b16 %v804, %v803
  %v860 = vpack.c.b16 %v806, %v805
  %v861 = vpack.c.b16 %v808, %v807
  %v862 = vpack.c.b16 %v810, %v809
  %v863 = vpack.c.b16 %v812, %v811
  %v864 = vpack.c.b16 %v814, %v813
  %v865 = vpack.c.b16 %v816, %v815
  %v866 = vpack.c.b16 %v818, %v817
  %v867 = vpack.c.b16 %v820, %v819
  %v868 = vpack.c.b16 %v822, %v821
  %v869 = vpack.c.b16 %v824, %v823
  %v870 = vpack.c.b16 %v826, %v825
  %v871 = vpack.c.b16 %v828, %v827
  %v872 = vpack.c.b16 %v830, %v829
  %v873 = vpack.c.b16 %v832, %v831
  %v874 = vpack.c.b16 %v834, %v833
  %915 = vmatprep.subr.bf16.mxu0 0
  %916 = vmatpush1.bf16.msra.mxu0 %v842
  %917 = vmatprep.subr.bf16.mxu0 0
  %918 = vmatpush1.bf16.msra.mxu0 %v841
  %919 = vmatprep.subr.bf16.mxu0 0
  %920 = vmatpush1.bf16.msra.mxu0 %v840
  %921 = vmatprep.subr.bf16.mxu0 0
  %922 = vmatpush1.bf16.msra.mxu0 %v839
  %923 = vmatprep.subr.bf16.mxu0 0
  %924 = vmatpush1.bf16.msra.mxu0 %v838
  %925 = vmatprep.subr.bf16.mxu0 0
  %926 = vmatpush1.bf16.msra.mxu0 %v837
  %927 = vmatprep.subr.bf16.mxu0 0
  %928 = vmatpush1.bf16.msra.mxu0 %v836
  %929 = vmatprep.subr.bf16.mxu0 0
  %930 = vmatpush1.bf16.msra.mxu0 %v835
  %931 = vmatprep.subr.bf16.mxu0 0
  %932 = vmatpush2.bf16.msra.mxu0 %v850
  %933 = vmatprep.subr.bf16.mxu0 0
  %934 = vmatpush2.bf16.msra.mxu0 %v849
  %935 = vmatprep.subr.bf16.mxu0 0
  %936 = vmatpush2.bf16.msra.mxu0 %v848
  %937 = vmatprep.subr.bf16.mxu0 0
  %938 = vmatpush2.bf16.msra.mxu0 %v847
  %939 = vmatprep.subr.bf16.mxu0 0
  %940 = vmatpush2.bf16.msra.mxu0 %v846
  %941 = vmatprep.subr.bf16.mxu0 0
  %942 = vmatpush2.bf16.msra.mxu0 %v845
  %943 = vmatprep.subr.bf16.mxu0 0
  %944 = vmatpush2.bf16.msra.mxu0 %v844
  %945 = vmatprep.subr.bf16.mxu0 0
  %946 = vmatpush2.bf16.msra.mxu0 %v843
  %947 = vmatprep.mubr.bf16.mxu0 %v516
  %948 = vmatmul.mubr.bf16.gmra.mxu0 %v515
  %v949 = vpop.f32.mrf.mxu0
  %v950 = vadd.f32 0.0, %v949
  %v951 = vpop.f32.mrf.mxu0
  %v952 = vpop.f32.mrf.mxu0
  %v953 = vadd.f32 0.0, %v952
  %v954 = vpop.f32.mrf.mxu0
  %955 = vmatprep.mubr.bf16.mxu0 %v521
  %956 = vmatmul.mubr.bf16.gmra.mxu0 %v520
  %v957 = vpop.f32.mrf.mxu0
  %v958 = vadd.f32 0.0, %v957
  %v959 = vpop.f32.mrf.mxu0
  %v960 = vpop.f32.mrf.mxu0
  %v961 = vadd.f32 0.0, %v960
  %v962 = vpop.f32.mrf.mxu0
  %963 = vmatprep.mubr.bf16.mxu0 %v526
  %964 = vmatmul.mubr.bf16.gmra.mxu0 %v525
  %v965 = vpop.f32.mrf.mxu0
  %v966 = vadd.f32 0.0, %v965
  %v967 = vpop.f32.mrf.mxu0
  %v968 = vpop.f32.mrf.mxu0
  %v969 = vadd.f32 0.0, %v968
  %v970 = vpop.f32.mrf.mxu0
  %971 = vmatprep.mubr.bf16.mxu0 %v531
  %972 = vmatmul.mubr.bf16.gmra.mxu0 %v530
  %v973 = vpop.f32.mrf.mxu0
  %v974 = vadd.f32 0.0, %v973
  %v975 = vpop.f32.mrf.mxu0
  %v976 = vpop.f32.mrf.mxu0
  %v977 = vadd.f32 0.0, %v976
  %v978 = vpop.f32.mrf.mxu0
  %979 = vmatprep.mubr.bf16.mxu0 %v536
  %980 = vmatmul.mubr.bf16.gmra.mxu0 %v535
  %v981 = vpop.f32.mrf.mxu0
  %v982 = vadd.f32 0.0, %v981
  %v983 = vpop.f32.mrf.mxu0
  %v984 = vpop.f32.mrf.mxu0
  %v985 = vadd.f32 0.0, %v984
  %v986 = vpop.f32.mrf.mxu0
  %987 = vmatprep.mubr.bf16.mxu0 %v541
  %988 = vmatmul.mubr.bf16.gmra.mxu0 %v540
  %v989 = vpop.f32.mrf.mxu0
  %v990 = vadd.f32 0.0, %v989
  %v991 = vpop.f32.mrf.mxu0
  %v992 = vpop.f32.mrf.mxu0
  %v993 = vadd.f32 0.0, %v992
  %v994 = vpop.f32.mrf.mxu0
  %995 = vmatprep.mubr.bf16.mxu0 %v546
  %996 = vmatmul.mubr.bf16.gmra.mxu0 %v545
  %v997 = vpop.f32.mrf.mxu0
  %v998 = vadd.f32 0.0, %v997
  %v999 = vpop.f32.mrf.mxu0
  %v1000 = vpop.f32.mrf.mxu0
  %v1001 = vadd.f32 0.0, %v1000
  %v1002 = vpop.f32.mrf.mxu0
  %1003 = vmatprep.mubr.bf16.mxu0 %v551
  %1004 = vmatmul.mubr.bf16.gmra.mxu0 %v550
  %v1005 = vpop.f32.mrf.mxu0
  %v1006 = vadd.f32 0.0, %v1005
  %v1007 = vpop.f32.mrf.mxu0
  %v1008 = vpop.f32.mrf.mxu0
  %v1009 = vadd.f32 0.0, %v1008
  %v1010 = vpop.f32.mrf.mxu0
  %1011 = vmatprep.mubr.bf16.mxu0 %v556
  %1012 = vmatmul.mubr.bf16.gmra.mxu0 %v555
  %v1013 = vpop.f32.mrf.mxu0
  %v1014 = vadd.f32 0.0, %v1013
  %v1015 = vpop.f32.mrf.mxu0
  %v1016 = vpop.f32.mrf.mxu0
  %v1017 = vadd.f32 0.0, %v1016
  %v1018 = vpop.f32.mrf.mxu0
  %1019 = vmatprep.mubr.bf16.mxu0 %v561
  %1020 = vmatmul.mubr.bf16.gmra.mxu0 %v560
  %v1021 = vpop.f32.mrf.mxu0
  %v1022 = vadd.f32 0.0, %v1021
  %v1023 = vpop.f32.mrf.mxu0
  %v1024 = vpop.f32.mrf.mxu0
  %v1025 = vadd.f32 0.0, %v1024
  %v1026 = vpop.f32.mrf.mxu0
  %1027 = vmatprep.mubr.bf16.mxu0 %v566
  %1028 = vmatmul.mubr.bf16.gmra.mxu0 %v565
  %v1029 = vpop.f32.mrf.mxu0
  %v1030 = vadd.f32 0.0, %v1029
  %v1031 = vpop.f32.mrf.mxu0
  %v1032 = vpop.f32.mrf.mxu0
  %v1033 = vadd.f32 0.0, %v1032
  %v1034 = vpop.f32.mrf.mxu0
  %1035 = vmatprep.mubr.bf16.mxu0 %v571
  %1036 = vmatmul.mubr.bf16.gmra.mxu0 %v570
  %v1037 = vpop.f32.mrf.mxu0
  %v1038 = vadd.f32 0.0, %v1037
  %v1039 = vpop.f32.mrf.mxu0
  %v1040 = vpop.f32.mrf.mxu0
  %v1041 = vadd.f32 0.0, %v1040
  %v1042 = vpop.f32.mrf.mxu0
  %1043 = vmatprep.mubr.bf16.mxu0 %v576
  %1044 = vmatmul.mubr.bf16.gmra.mxu0 %v575
  %v1045 = vpop.f32.mrf.mxu0
  %v1046 = vadd.f32 0.0, %v1045
  %v1047 = vpop.f32.mrf.mxu0
  %v1048 = vpop.f32.mrf.mxu0
  %v1049 = vadd.f32 0.0, %v1048
  %v1050 = vpop.f32.mrf.mxu0
  %1051 = vmatprep.mubr.bf16.mxu0 %v581
  %1052 = vmatmul.mubr.bf16.gmra.mxu0 %v580
  %v1053 = vpop.f32.mrf.mxu0
  %v1054 = vadd.f32 0.0, %v1053
  %v1055 = vpop.f32.mrf.mxu0
  %v1056 = vpop.f32.mrf.mxu0
  %v1057 = vadd.f32 0.0, %v1056
  %v1058 = vpop.f32.mrf.mxu0
  %1059 = vmatprep.mubr.bf16.mxu0 %v586
  %1060 = vmatmul.mubr.bf16.gmra.mxu0 %v585
  %v1061 = vpop.f32.mrf.mxu0
  %v1062 = vadd.f32 0.0, %v1061
  %v1063 = vpop.f32.mrf.mxu0
  %v1064 = vpop.f32.mrf.mxu0
  %v1065 = vadd.f32 0.0, %v1064
  %v1066 = vpop.f32.mrf.mxu0
  %1067 = vmatprep.mubr.bf16.mxu0 %v591
  %1068 = vmatmul.mubr.bf16.gmra.mxu0 %v590
  %v1069 = vpop.f32.mrf.mxu0
  %v1070 = vadd.f32 0.0, %v1069
  %v1071 = vpop.f32.mrf.mxu0
  %v1072 = vpop.f32.mrf.mxu0
  %v1073 = vadd.f32 0.0, %v1072
  %v1074 = vpop.f32.mrf.mxu0
  %1075 = vdwg.mxu0
  %1076 = vmatprep.subr.bf16.mxu0 0
  %1077 = vmatpush1.bf16.msra.mxu0 %v858
  %1078 = vmatprep.subr.bf16.mxu0 0
  %1079 = vmatpush1.bf16.msra.mxu0 %v857
  %1080 = vmatprep.subr.bf16.mxu0 0
  %1081 = vmatpush1.bf16.msra.mxu0 %v856
  %1082 = vmatprep.subr.bf16.mxu0 0
  %1083 = vmatpush1.bf16.msra.mxu0 %v855
  %1084 = vmatprep.subr.bf16.mxu0 0
  %1085 = vmatpush1.bf16.msra.mxu0 %v854
  %1086 = vmatprep.subr.bf16.mxu0 0
  %1087 = vmatpush1.bf16.msra.mxu0 %v853
  %1088 = vmatprep.subr.bf16.mxu0 0
  %1089 = vmatpush1.bf16.msra.mxu0 %v852
  %1090 = vmatprep.subr.bf16.mxu0 0
  %1091 = vmatpush1.bf16.msra.mxu0 %v851
  %1092 = vmatprep.subr.bf16.mxu0 0
  %1093 = vmatpush2.bf16.msra.mxu0 %v866
  %1094 = vmatprep.subr.bf16.mxu0 0
  %1095 = vmatpush2.bf16.msra.mxu0 %v865
  %1096 = vmatprep.subr.bf16.mxu0 0
  %1097 = vmatpush2.bf16.msra.mxu0 %v864
  %1098 = vmatprep.subr.bf16.mxu0 0
  %1099 = vmatpush2.bf16.msra.mxu0 %v863
  %1100 = vmatprep.subr.bf16.mxu0 0
  %1101 = vmatpush2.bf16.msra.mxu0 %v862
  %1102 = vmatprep.subr.bf16.mxu0 0
  %1103 = vmatpush2.bf16.msra.mxu0 %v861
  %1104 = vmatprep.subr.bf16.mxu0 0
  %1105 = vmatpush2.bf16.msra.mxu0 %v860
  %1106 = vmatprep.subr.bf16.mxu0 0
  %1107 = vmatpush2.bf16.msra.mxu0 %v859
  %1108 = vmatprep.mubr.bf16.mxu0 %v518
  %1109 = vmatmul.mubr.bf16.gmra.mxu0 %v517
  %v1110 = vpop.f32.mrf.mxu0
  %v1111 = vadd.f32 %v950, %v1110
  %v1112 = vpop.f32.mrf.mxu0
  %v1113 = vpop.f32.mrf.mxu0
  %v1114 = vadd.f32 %v953, %v1113
  %v1115 = vpop.f32.mrf.mxu0
  %1116 = vmatprep.mubr.bf16.mxu0 %v523
  %1117 = vmatmul.mubr.bf16.gmra.mxu0 %v522
  %v1118 = vpop.f32.mrf.mxu0
  %v1119 = vadd.f32 %v958, %v1118
  %v1120 = vpop.f32.mrf.mxu0
  %v1121 = vpop.f32.mrf.mxu0
  %v1122 = vadd.f32 %v961, %v1121
  %v1123 = vpop.f32.mrf.mxu0
  %1124 = vmatprep.mubr.bf16.mxu0 %v528
  %1125 = vmatmul.mubr.bf16.gmra.mxu0 %v527
  %v1126 = vpop.f32.mrf.mxu0
  %v1127 = vadd.f32 %v966, %v1126
  %v1128 = vpop.f32.mrf.mxu0
  %v1129 = vpop.f32.mrf.mxu0
  %v1130 = vadd.f32 %v969, %v1129
  %v1131 = vpop.f32.mrf.mxu0
  %1132 = vmatprep.mubr.bf16.mxu0 %v533
  %1133 = vmatmul.mubr.bf16.gmra.mxu0 %v532
  %v1134 = vpop.f32.mrf.mxu0
  %v1135 = vadd.f32 %v974, %v1134
  %v1136 = vpop.f32.mrf.mxu0
  %v1137 = vpop.f32.mrf.mxu0
  %v1138 = vadd.f32 %v977, %v1137
  %v1139 = vpop.f32.mrf.mxu0
  %1140 = vmatprep.mubr.bf16.mxu0 %v538
  %1141 = vmatmul.mubr.bf16.gmra.mxu0 %v537
  %v1142 = vpop.f32.mrf.mxu0
  %v1143 = vadd.f32 %v982, %v1142
  %v1144 = vpop.f32.mrf.mxu0
  %v1145 = vpop.f32.mrf.mxu0
  %v1146 = vadd.f32 %v985, %v1145
  %v1147 = vpop.f32.mrf.mxu0
  %1148 = vmatprep.mubr.bf16.mxu0 %v543
  %1149 = vmatmul.mubr.bf16.gmra.mxu0 %v542
  %v1150 = vpop.f32.mrf.mxu0
  %v1151 = vadd.f32 %v990, %v1150
  %v1152 = vpop.f32.mrf.mxu0
  %v1153 = vpop.f32.mrf.mxu0
  %v1154 = vadd.f32 %v993, %v1153
  %v1155 = vpop.f32.mrf.mxu0
  %1156 = vmatprep.mubr.bf16.mxu0 %v548
  %1157 = vmatmul.mubr.bf16.gmra.mxu0 %v547
  %v1158 = vpop.f32.mrf.mxu0
  %v1159 = vadd.f32 %v998, %v1158
  %v1160 = vpop.f32.mrf.mxu0
  %v1161 = vpop.f32.mrf.mxu0
  %v1162 = vadd.f32 %v1001, %v1161
  %v1163 = vpop.f32.mrf.mxu0
  %1164 = vmatprep.mubr.bf16.mxu0 %v553
  %1165 = vmatmul.mubr.bf16.gmra.mxu0 %v552
  %v1166 = vpop.f32.mrf.mxu0
  %v1167 = vadd.f32 %v1006, %v1166
  %v1168 = vpop.f32.mrf.mxu0
  %v1169 = vpop.f32.mrf.mxu0
  %v1170 = vadd.f32 %v1009, %v1169
  %v1171 = vpop.f32.mrf.mxu0
  %1172 = vmatprep.mubr.bf16.mxu0 %v558
  %1173 = vmatmul.mubr.bf16.gmra.mxu0 %v557
  %v1174 = vpop.f32.mrf.mxu0
  %v1175 = vadd.f32 %v1014, %v1174
  %v1176 = vpop.f32.mrf.mxu0
  %v1177 = vpop.f32.mrf.mxu0
  %v1178 = vadd.f32 %v1017, %v1177
  %v1179 = vpop.f32.mrf.mxu0
  %1180 = vmatprep.mubr.bf16.mxu0 %v563
  %1181 = vmatmul.mubr.bf16.gmra.mxu0 %v562
  %v1182 = vpop.f32.mrf.mxu0
  %v1183 = vadd.f32 %v1022, %v1182
  %v1184 = vpop.f32.mrf.mxu0
  %v1185 = vpop.f32.mrf.mxu0
  %v1186 = vadd.f32 %v1025, %v1185
  %v1187 = vpop.f32.mrf.mxu0
  %1188 = vmatprep.mubr.bf16.mxu0 %v568
  %1189 = vmatmul.mubr.bf16.gmra.mxu0 %v567
  %v1190 = vpop.f32.mrf.mxu0
  %v1191 = vadd.f32 %v1030, %v1190
  %v1192 = vpop.f32.mrf.mxu0
  %v1193 = vpop.f32.mrf.mxu0
  %v1194 = vadd.f32 %v1033, %v1193
  %v1195 = vpop.f32.mrf.mxu0
  %1196 = vmatprep.mubr.bf16.mxu0 %v573
  %1197 = vmatmul.mubr.bf16.gmra.mxu0 %v572
  %v1198 = vpop.f32.mrf.mxu0
  %v1199 = vadd.f32 %v1038, %v1198
  %v1200 = vpop.f32.mrf.mxu0
  %v1201 = vpop.f32.mrf.mxu0
  %v1202 = vadd.f32 %v1041, %v1201
  %v1203 = vpop.f32.mrf.mxu0
  %1204 = vmatprep.mubr.bf16.mxu0 %v578
  %1205 = vmatmul.mubr.bf16.gmra.mxu0 %v577
  %v1206 = vpop.f32.mrf.mxu0
  %v1207 = vadd.f32 %v1046, %v1206
  %v1208 = vpop.f32.mrf.mxu0
  %v1209 = vpop.f32.mrf.mxu0
  %v1210 = vadd.f32 %v1049, %v1209
  %v1211 = vpop.f32.mrf.mxu0
  %1212 = vmatprep.mubr.bf16.mxu0 %v583
  %1213 = vmatmul.mubr.bf16.gmra.mxu0 %v582
  %v1214 = vpop.f32.mrf.mxu0
  %v1215 = vadd.f32 %v1054, %v1214
  %v1216 = vpop.f32.mrf.mxu0
  %v1217 = vpop.f32.mrf.mxu0
  %v1218 = vadd.f32 %v1057, %v1217
  %v1219 = vpop.f32.mrf.mxu0
  %1220 = vmatprep.mubr.bf16.mxu0 %v588
  %1221 = vmatmul.mubr.bf16.gmra.mxu0 %v587
  %v1222 = vpop.f32.mrf.mxu0
  %v1223 = vadd.f32 %v1062, %v1222
  %v1224 = vpop.f32.mrf.mxu0
  %v1225 = vpop.f32.mrf.mxu0
  %v1226 = vadd.f32 %v1065, %v1225
  %v1227 = vpop.f32.mrf.mxu0
  %1228 = vmatprep.mubr.bf16.mxu0 %v593
  %1229 = vmatmul.mubr.bf16.gmra.mxu0 %v592
  %v1230 = vpop.f32.mrf.mxu0
  %v1231 = vadd.f32 %v1070, %v1230
  %v1232 = vpop.f32.mrf.mxu0
  %v1233 = vpop.f32.mrf.mxu0
  %v1234 = vadd.f32 %v1073, %v1233
  %v1235 = vpop.f32.mrf.mxu0
  %1236 = vdwg.mxu0
  %1237 = vmatprep.subr.bf16.mxu0 0
  %1238 = vmatpush1.bf16.msra.mxu0 %v874
  %1239 = vmatprep.subr.bf16.mxu0 0
  %1240 = vmatpush1.bf16.msra.mxu0 %v873
  %1241 = vmatprep.subr.bf16.mxu0 0
  %1242 = vmatpush1.bf16.msra.mxu0 %v872
  %1243 = vmatprep.subr.bf16.mxu0 0
  %1244 = vmatpush1.bf16.msra.mxu0 %v871
  %1245 = vmatprep.subr.bf16.mxu0 0
  %1246 = vmatpush1.bf16.msra.mxu0 %v870
  %1247 = vmatprep.subr.bf16.mxu0 0
  %1248 = vmatpush1.bf16.msra.mxu0 %v869
  %1249 = vmatprep.subr.bf16.mxu0 0
  %1250 = vmatpush1.bf16.msra.mxu0 %v868
  %1251 = vmatprep.subr.bf16.mxu0 0
  %1252 = vmatpush1.bf16.msra.mxu0 %v867
  %1253 = vmatprep.subr.bf16.mxu0 0
  %1254 = vmatpush2.bf16.msra.mxu0 0
  %1255 = vmatprep.subr.bf16.mxu0 0
  %1256 = vmatpush2.bf16.msra.mxu0 0
  %1257 = vmatprep.subr.bf16.mxu0 0
  %1258 = vmatpush2.bf16.msra.mxu0 0
  %1259 = vmatprep.subr.bf16.mxu0 0
  %1260 = vmatpush2.bf16.msra.mxu0 0
  %1261 = vmatprep.subr.bf16.mxu0 0
  %1262 = vmatpush2.bf16.msra.mxu0 0
  %1263 = vmatprep.subr.bf16.mxu0 0
  %1264 = vmatpush2.bf16.msra.mxu0 0
  %1265 = vmatprep.subr.bf16.mxu0 0
  %1266 = vmatpush2.bf16.msra.mxu0 0
  %1267 = vmatprep.subr.bf16.mxu0 0
  %1268 = vmatpush2.bf16.msra.mxu0 0
  %1269 = vmatprep.mubr.bf16.mxu0 0
  %1270 = vmatmul.mubr.bf16.gmra.mxu0 %v519
  %v1271 = vpop.f32.mrf.mxu0
  %v1272 = vadd.f32 %v1111, %v1271
  %v1273 = vpop.f32.mrf.mxu0
  %v1274 = vpop.f32.mrf.mxu0
  %v1275 = vadd.f32 %v1114, %v1274
  %v1276 = vpop.f32.mrf.mxu0
  %1277 = vmatprep.mubr.bf16.mxu0 0
  %1278 = vmatmul.mubr.bf16.gmra.mxu0 %v524
  %v1279 = vpop.f32.mrf.mxu0
  %v1280 = vadd.f32 %v1119, %v1279
  %v1281 = vpop.f32.mrf.mxu0
  %v1282 = vpop.f32.mrf.mxu0
  %v1283 = vadd.f32 %v1122, %v1282
  %v1284 = vpop.f32.mrf.mxu0
  %1285 = vmatprep.mubr.bf16.mxu0 0
  %1286 = vmatmul.mubr.bf16.gmra.mxu0 %v529
  %v1287 = vpop.f32.mrf.mxu0
  %v1288 = vadd.f32 %v1127, %v1287
  %v1289 = vpop.f32.mrf.mxu0
  %v1290 = vpop.f32.mrf.mxu0
  %v1291 = vadd.f32 %v1130, %v1290
  %v1292 = vpop.f32.mrf.mxu0
  %1293 = vmatprep.mubr.bf16.mxu0 0
  %1294 = vmatmul.mubr.bf16.gmra.mxu0 %v534
  %v1295 = vpop.f32.mrf.mxu0
  %v1296 = vadd.f32 %v1135, %v1295
  %v1297 = vpop.f32.mrf.mxu0
  %v1298 = vpop.f32.mrf.mxu0
  %v1299 = vadd.f32 %v1138, %v1298
  %v1300 = vpop.f32.mrf.mxu0
  %1301 = vmatprep.mubr.bf16.mxu0 0
  %1302 = vmatmul.mubr.bf16.gmra.mxu0 %v539
  %v1303 = vpop.f32.mrf.mxu0
  %v1304 = vadd.f32 %v1143, %v1303
  %v1305 = vpop.f32.mrf.mxu0
  %v1306 = vpop.f32.mrf.mxu0
  %v1307 = vadd.f32 %v1146, %v1306
  %v1308 = vpop.f32.mrf.mxu0
  %1309 = vmatprep.mubr.bf16.mxu0 0
  %1310 = vmatmul.mubr.bf16.gmra.mxu0 %v544
  %v1311 = vpop.f32.mrf.mxu0
  %v1312 = vadd.f32 %v1151, %v1311
  %v1313 = vpop.f32.mrf.mxu0
  %v1314 = vpop.f32.mrf.mxu0
  %v1315 = vadd.f32 %v1154, %v1314
  %v1316 = vpop.f32.mrf.mxu0
  %1317 = vmatprep.mubr.bf16.mxu0 0
  %1318 = vmatmul.mubr.bf16.gmra.mxu0 %v549
  %v1319 = vpop.f32.mrf.mxu0
  %v1320 = vadd.f32 %v1159, %v1319
  %v1321 = vpop.f32.mrf.mxu0
  %v1322 = vpop.f32.mrf.mxu0
  %v1323 = vadd.f32 %v1162, %v1322
  %v1324 = vpop.f32.mrf.mxu0
  %1325 = vmatprep.mubr.bf16.mxu0 0
  %1326 = vmatmul.mubr.bf16.gmra.mxu0 %v554
  %v1327 = vpop.f32.mrf.mxu0
  %v1328 = vadd.f32 %v1167, %v1327
  %v1329 = vpop.f32.mrf.mxu0
  %v1330 = vpop.f32.mrf.mxu0
  %v1331 = vadd.f32 %v1170, %v1330
  %v1332 = vpop.f32.mrf.mxu0
  %1333 = vmatprep.mubr.bf16.mxu0 0
  %1334 = vmatmul.mubr.bf16.gmra.mxu0 %v559
  %v1335 = vpop.f32.mrf.mxu0
  %v1336 = vadd.f32 %v1175, %v1335
  %v1337 = vpop.f32.mrf.mxu0
  %v1338 = vpop.f32.mrf.mxu0
  %v1339 = vadd.f32 %v1178, %v1338
  %v1340 = vpop.f32.mrf.mxu0
  %1341 = vmatprep.mubr.bf16.mxu0 0
  %1342 = vmatmul.mubr.bf16.gmra.mxu0 %v564
  %v1343 = vpop.f32.mrf.mxu0
  %v1344 = vadd.f32 %v1183, %v1343
  %v1345 = vpop.f32.mrf.mxu0
  %v1346 = vpop.f32.mrf.mxu0
  %v1347 = vadd.f32 %v1186, %v1346
  %v1348 = vpop.f32.mrf.mxu0
  %1349 = vmatprep.mubr.bf16.mxu0 0
  %1350 = vmatmul.mubr.bf16.gmra.mxu0 %v569
  %v1351 = vpop.f32.mrf.mxu0
  %v1352 = vadd.f32 %v1191, %v1351
  %v1353 = vpop.f32.mrf.mxu0
  %v1354 = vpop.f32.mrf.mxu0
  %v1355 = vadd.f32 %v1194, %v1354
  %v1356 = vpop.f32.mrf.mxu0
  %1357 = vmatprep.mubr.bf16.mxu0 0
  %1358 = vmatmul.mubr.bf16.gmra.mxu0 %v574
  %v1359 = vpop.f32.mrf.mxu0
  %v1360 = vadd.f32 %v1199, %v1359
  %v1361 = vpop.f32.mrf.mxu0
  %v1362 = vpop.f32.mrf.mxu0
  %v1363 = vadd.f32 %v1202, %v1362
  %v1364 = vpop.f32.mrf.mxu0
  %1365 = vmatprep.mubr.bf16.mxu0 0
  %1366 = vmatmul.mubr.bf16.gmra.mxu0 %v579
  %v1367 = vpop.f32.mrf.mxu0
  %v1368 = vadd.f32 %v1207, %v1367
  %v1369 = vpop.f32.mrf.mxu0
  %v1370 = vpop.f32.mrf.mxu0
  %v1371 = vadd.f32 %v1210, %v1370
  %v1372 = vpop.f32.mrf.mxu0
  %1373 = vmatprep.mubr.bf16.mxu0 0
  %1374 = vmatmul.mubr.bf16.gmra.mxu0 %v584
  %v1375 = vpop.f32.mrf.mxu0
  %v1376 = vadd.f32 %v1215, %v1375
  %v1377 = vpop.f32.mrf.mxu0
  %v1378 = vpop.f32.mrf.mxu0
  %v1379 = vadd.f32 %v1218, %v1378
  %v1380 = vpop.f32.mrf.mxu0
  %1381 = vmatprep.mubr.bf16.mxu0 0
  %1382 = vmatmul.mubr.bf16.gmra.mxu0 %v589
  %v1383 = vpop.f32.mrf.mxu0
  %v1384 = vadd.f32 %v1223, %v1383
  %v1385 = vpop.f32.mrf.mxu0
  %v1386 = vpop.f32.mrf.mxu0
  %v1387 = vadd.f32 %v1226, %v1386
  %v1388 = vpop.f32.mrf.mxu0
  %1389 = vmatprep.mubr.bf16.mxu0 0
  %1390 = vmatmul.mubr.bf16.gmra.mxu0 %v594
  %v1391 = vpop.f32.mrf.mxu0
  %v1392 = vadd.f32 %v1231, %v1391
  %v1393 = vpop.f32.mrf.mxu0
  %v1394 = vpop.f32.mrf.mxu0
  %v1395 = vadd.f32 %v1234, %v1394
  %v1396 = vpop.f32.mrf.mxu0
  %1397 = vdwg.mxu0
  %v1398 = vadd.f32 %v51, %v1272
  %v1399 = vadd.f32 %v52, %v1275
  %v1400 = vadd.f32 %v53, %v1280
  %v1401 = vadd.f32 %v54, %v1283
  %v1402 = vadd.f32 %v55, %v1288
  %v1403 = vadd.f32 %v56, %v1291
  %v1404 = vadd.f32 %v57, %v1296
  %v1405 = vadd.f32 %v58, %v1299
  %v1406 = vadd.f32 %v59, %v1304
  %v1407 = vadd.f32 %v60, %v1307
  %v1408 = vadd.f32 %v61, %v1312
  %v1409 = vadd.f32 %v62, %v1315
  %v1410 = vadd.f32 %v63, %v1320
  %v1411 = vadd.f32 %v64, %v1323
  %v1412 = vadd.f32 %v65, %v1328
  %v1413 = vadd.f32 %v66, %v1331
  %v1414 = vadd.f32 %v67, %v1336
  %v1415 = vadd.f32 %v68, %v1339
  %v1416 = vadd.f32 %v69, %v1344
  %v1417 = vadd.f32 %v70, %v1347
  %v1418 = vadd.f32 %v71, %v1352
  %v1419 = vadd.f32 %v72, %v1355
  %v1420 = vadd.f32 %v73, %v1360
  %v1421 = vadd.f32 %v74, %v1363
  %v1422 = vadd.f32 %v75, %v1368
  %v1423 = vadd.f32 %v76, %v1371
  %v1424 = vadd.f32 %v77, %v1376
  %v1425 = vadd.f32 %v78, %v1379
  %v1426 = vadd.f32 %v79, %v1384
  %v1427 = vadd.f32 %v80, %v1387
  %v1428 = vadd.f32 %v81, %v1392
  %v1429 = vadd.f32 %v82, %v1395
  %1430 = vst [vmem:[#allocation2] sm:$0xff] %v1398
  %1431 = vst [vmem:[#allocation2 + $0x8] sm:$0xff] %v1399
  %1432 = vst [vmem:[#allocation2 + $0x10] sm:$0xff] %v1400
  %1433 = vst [vmem:[#allocation2 + $0x18] sm:$0xff] %v1401
  %1434 = vst [vmem:[#allocation2 + $0x20] sm:$0xff] %v1402
  %1435 = vst [vmem:[#allocation2 + $0x28] sm:$0xff] %v1403
  %1436 = vst [vmem:[#allocation2 + $0x30] sm:$0xff] %v1404
  %1437 = vst [vmem:[#allocation2 + $0x38] sm:$0xff] %v1405
  %1438 = vst [vmem:[#allocation2 + $0x40] sm:$0xff] %v1406
  %1439 = vst [vmem:[#allocation2 + $0x48] sm:$0xff] %v1407
  %1440 = vst [vmem:[#allocation2 + $0x50] sm:$0xff] %v1408
  %1441 = vst [vmem:[#allocation2 + $0x58] sm:$0xff] %v1409
  %1442 = vst [vmem:[#allocation2 + $0x60] sm:$0xff] %v1410
  %1443 = vst [vmem:[#allocation2 + $0x68] sm:$0xff] %v1411
  %1444 = vst [vmem:[#allocation2 + $0x70] sm:$0xff] %v1412
  %1445 = vst [vmem:[#allocation2 + $0x78] sm:$0xff] %v1413
  %1446 = vst [vmem:[#allocation2 + $0x80] sm:$0xff] %v1414
  %1447 = vst [vmem:[#allocation2 + $0x88] sm:$0xff] %v1415
  %1448 = vst [vmem:[#allocation2 + $0x90] sm:$0xff] %v1416
  %1449 = vst [vmem:[#allocation2 + $0x98] sm:$0xff] %v1417
  %1450 = vst [vmem:[#allocation2 + $0xa0] sm:$0xff] %v1418
  %1451 = vst [vmem:[#allocation2 + $0xa8] sm:$0xff] %v1419
  %1452 = vst [vmem:[#allocation2 + $0xb0] sm:$0xff] %v1420
  %1453 = vst [vmem:[#allocation2 + $0xb8] sm:$0xff] %v1421
  %1454 = vst [vmem:[#allocation2 + $0xc0] sm:$0xff] %v1422
  %1455 = vst [vmem:[#allocation2 + $0xc8] sm:$0xff] %v1423
  %1456 = vst [vmem:[#allocation2 + $0xd0] sm:$0xff] %v1424
  %1457 = vst [vmem:[#allocation2 + $0xd8] sm:$0xff] %v1425
  %1458 = vst [vmem:[#allocation2 + $0xe0] sm:$0xff] %v1426
  %1459 = vst [vmem:[#allocation2 + $0xe8] sm:$0xff] %v1427
  %1460 = vst [vmem:[#allocation2 + $0xf0] sm:$0xff] %v1428
  %1461 = vst [vmem:[#allocation2 + $0xf8] sm:$0xff] %v1429
  // Predicated region
  $region18: #{_lambda_.8} parent=0 // pred_check
    %p1462 = pneg %p15
  $region19: #{_lambda_.8} parent=0 // pred_check_branch
    %1464 = sbr.rel (%p1462) target = $region21
  $region20: #{_lambda_.8} parent=0 // pred_region
    %v1465 = vld [vmem:[#allocation2] sm:$0xff]
    %v1466 = vld [vmem:[#allocation2 + $0x8] sm:$0xff]
    %v1467 = vld [vmem:[#allocation2 + $0x10] sm:$0xff]
    %v1468 = vld [vmem:[#allocation2 + $0x18] sm:$0xff]
    %v1469 = vld [vmem:[#allocation2 + $0x20] sm:$0xff]
    %v1470 = vld [vmem:[#allocation2 + $0x28] sm:$0xff]
    %v1471 = vld [vmem:[#allocation2 + $0x30] sm:$0xff]
    %v1472 = vld [vmem:[#allocation2 + $0x38] sm:$0xff]
    %v1473 = vld [vmem:[#allocation2 + $0x40] sm:$0xff]
    %v1474 = vld [vmem:[#allocation2 + $0x48] sm:$0xff]
    %v1475 = vld [vmem:[#allocation2 + $0x50] sm:$0xff]
    %v1476 = vld [vmem:[#allocation2 + $0x58] sm:$0xff]
    %v1477 = vld [vmem:[#allocation2 + $0x60] sm:$0xff]
    %v1478 = vld [vmem:[#allocation2 + $0x68] sm:$0xff]
    %v1479 = vld [vmem:[#allocation2 + $0x70] sm:$0xff]
    %v1480 = vld [vmem:[#allocation2 + $0x78] sm:$0xff]
    %v1481 = vld [vmem:[#allocation2 + $0x80] sm:$0xff]
    %v1482 = vld [vmem:[#allocation2 + $0x88] sm:$0xff]
    %v1483 = vld [vmem:[#allocation2 + $0x90] sm:$0xff]
    %v1484 = vld [vmem:[#allocation2 + $0x98] sm:$0xff]
    %v1485 = vld [vmem:[#allocation2 + $0xa0] sm:$0xff]
    %v1486 = vld [vmem:[#allocation2 + $0xa8] sm:$0xff]
    %v1487 = vld [vmem:[#allocation2 + $0xb0] sm:$0xff]
    %v1488 = vld [vmem:[#allocation2 + $0xb8] sm:$0xff]
    %v1489 = vld [vmem:[#allocation2 + $0xc0] sm:$0xff]
    %v1490 = vld [vmem:[#allocation2 + $0xc8] sm:$0xff]
    %v1491 = vld [vmem:[#allocation2 + $0xd0] sm:$0xff]
    %v1492 = vld [vmem:[#allocation2 + $0xd8] sm:$0xff]
    %v1493 = vld [vmem:[#allocation2 + $0xe0] sm:$0xff]
    %v1494 = vld [vmem:[#allocation2 + $0xe8] sm:$0xff]
    %v1495 = vld [vmem:[#allocation2 + $0xf0] sm:$0xff]
    %v1496 = vld [vmem:[#allocation2 + $0xf8] sm:$0xff]
    %v1497 = vld [vmem:[%s2] sm:$0x1]
    %v1499 = vlaneseq
    %v1500 = vshrl.u32 %v1499, 7
    %v1501 = vsub.s32 0, %v1500
    %v1502 = vrot.slane %v1497, %v1501
    %v1504 = vadd.f32 %v1465, %v1502
    %v1505 = vadd.f32 %v1466, %v1502
    %v1506 = vadd.f32 %v1467, %v1502
    %v1507 = vadd.f32 %v1468, %v1502
    %v1508 = vadd.f32 %v1469, %v1502
    %v1509 = vadd.f32 %v1470, %v1502
    %v1510 = vadd.f32 %v1471, %v1502
    %v1511 = vadd.f32 %v1472, %v1502
    %v1512 = vadd.f32 %v1473, %v1502
    %v1513 = vadd.f32 %v1474, %v1502
    %v1514 = vadd.f32 %v1475, %v1502
    %v1515 = vadd.f32 %v1476, %v1502
    %v1516 = vadd.f32 %v1477, %v1502
    %v1517 = vadd.f32 %v1478, %v1502
    %v1518 = vadd.f32 %v1479, %v1502
    %v1519 = vadd.f32 %v1480, %v1502
    %v1520 = vadd.f32 %v1481, %v1502
    %v1521 = vadd.f32 %v1482, %v1502
    %v1522 = vadd.f32 %v1483, %v1502
    %v1523 = vadd.f32 %v1484, %v1502
    %v1524 = vadd.f32 %v1485, %v1502
    %v1525 = vadd.f32 %v1486, %v1502
    %v1526 = vadd.f32 %v1487, %v1502
    %v1527 = vadd.f32 %v1488, %v1502
    %v1528 = vadd.f32 %v1489, %v1502
    %v1529 = vadd.f32 %v1490, %v1502
    %v1530 = vadd.f32 %v1491, %v1502
    %v1531 = vadd.f32 %v1492, %v1502
    %v1532 = vadd.f32 %v1493, %v1502
    %v1533 = vadd.f32 %v1494, %v1502
    %v1534 = vadd.f32 %v1495, %v1502
    %v1535 = vadd.f32 %v1496, %v1502
    %v1536 = vmax.f32 %v1504, 0.0
    %v1537 = vmax.f32 %v1505, 0.0
    %v1538 = vmax.f32 %v1506, 0.0
    %v1539 = vmax.f32 %v1507, 0.0
    %v1540 = vmax.f32 %v1508, 0.0
    %v1541 = vmax.f32 %v1509, 0.0
    %v1542 = vmax.f32 %v1510, 0.0
    %v1543 = vmax.f32 %v1511, 0.0
    %v1544 = vmax.f32 %v1512, 0.0
    %v1545 = vmax.f32 %v1513, 0.0
    %v1546 = vmax.f32 %v1514, 0.0
    %v1547 = vmax.f32 %v1515, 0.0
    %v1548 = vmax.f32 %v1516, 0.0
    %v1549 = vmax.f32 %v1517, 0.0
    %v1550 = vmax.f32 %v1518, 0.0
    %v1551 = vmax.f32 %v1519, 0.0
    %v1552 = vmax.f32 %v1520, 0.0
    %v1553 = vmax.f32 %v1521, 0.0
    %v1554 = vmax.f32 %v1522, 0.0
    %v1555 = vmax.f32 %v1523, 0.0
    %v1556 = vmax.f32 %v1524, 0.0
    %v1557 = vmax.f32 %v1525, 0.0
    %v1558 = vmax.f32 %v1526, 0.0
    %v1559 = vmax.f32 %v1527, 0.0
    %v1560 = vmax.f32 %v1528, 0.0
    %v1561 = vmax.f32 %v1529, 0.0
    %v1562 = vmax.f32 %v1530, 0.0
    %v1563 = vmax.f32 %v1531, 0.0
    %v1564 = vmax.f32 %v1532, 0.0
    %v1565 = vmax.f32 %v1533, 0.0
    %v1566 = vmax.f32 %v1534, 0.0
    %v1567 = vmax.f32 %v1535, 0.0
    %1568 = vst [vmem:[%s3] sm:$0xff] %v1536
    %1569 = vst [vmem:[%s3 + $0x8] sm:$0xff] %v1537
    %1570 = vst [vmem:[%s3 + $0x10] sm:$0xff] %v1538
    %1571 = vst [vmem:[%s3 + $0x18] sm:$0xff] %v1539
    %1572 = vst [vmem:[%s3 + $0x20] sm:$0xff] %v1540
    %1573 = vst [vmem:[%s3 + $0x28] sm:$0xff] %v1541
    %1574 = vst [vmem:[%s3 + $0x30] sm:$0xff] %v1542
    %1575 = vst [vmem:[%s3 + $0x38] sm:$0xff] %v1543
    %1576 = vst [vmem:[%s3 + $0x40] sm:$0xff] %v1544
    %1577 = vst [vmem:[%s3 + $0x48] sm:$0xff] %v1545
    %1578 = vst [vmem:[%s3 + $0x50] sm:$0xff] %v1546
    %1579 = vst [vmem:[%s3 + $0x58] sm:$0xff] %v1547
    %1580 = vst [vmem:[%s3 + $0x60] sm:$0xff] %v1548
    %1581 = vst [vmem:[%s3 + $0x68] sm:$0xff] %v1549
    %1582 = vst [vmem:[%s3 + $0x70] sm:$0xff] %v1550
    %1583 = vst [vmem:[%s3 + $0x78] sm:$0xff] %v1551
    %1584 = vst [vmem:[%s3 + $0x80] sm:$0xff] %v1552
    %1585 = vst [vmem:[%s3 + $0x88] sm:$0xff] %v1553
    %1586 = vst [vmem:[%s3 + $0x90] sm:$0xff] %v1554
    %1587 = vst [vmem:[%s3 + $0x98] sm:$0xff] %v1555
    %1588 = vst [vmem:[%s3 + $0xa0] sm:$0xff] %v1556
    %1589 = vst [vmem:[%s3 + $0xa8] sm:$0xff] %v1557
    %1590 = vst [vmem:[%s3 + $0xb0] sm:$0xff] %v1558
    %1591 = vst [vmem:[%s3 + $0xb8] sm:$0xff] %v1559
    %1592 = vst [vmem:[%s3 + $0xc0] sm:$0xff] %v1560
    %1593 = vst [vmem:[%s3 + $0xc8] sm:$0xff] %v1561
    %1594 = vst [vmem:[%s3 + $0xd0] sm:$0xff] %v1562
    %1595 = vst [vmem:[%s3 + $0xd8] sm:$0xff] %v1563
    %1596 = vst [vmem:[%s3 + $0xe0] sm:$0xff] %v1564
    %1597 = vst [vmem:[%s3 + $0xe8] sm:$0xff] %v1565
    %1598 = vst [vmem:[%s3 + $0xf0] sm:$0xff] %v1566
    %1599 = vst [vmem:[%s3 + $0xf8] sm:$0xff] %v1567
  $region21: #{_lambda_.8} parent=0 // pred_fallthru
    _
  // Predicated region
  $region22: #{_lambda_.8} parent=0 // pred_check
    _
  $region23: #{_lambda_.8} parent=0 // pred_check_branch
    %1601 = sbr.rel (0) target = $region25
  $region24: #{_lambda_.8} parent=0 // pred_region
    _
  $region25: #{_lambda_.8} parent=0 // pred_fallthru
    _
  // Predicated region
  $region26: #{_lambda_.8} parent=0 // pred_check
    _
  $region27: #{_lambda_.8} parent=0 // pred_check_branch
    %1603 = sbr.rel (0) target = $region29
  $region28: #{_lambda_.8} parent=0 // pred_region
    _
  $region29: #{_lambda_.8} parent=0 // pred_fallthru
    _

// kernel: _lambda_.9
$region0: #{_lambda_.9}
  #allocation0 [shape = 'u32[]', space=smem, size = 0x4, offset = 0x4, fixed_abs, tag = 'smem constant byte address 0x4 - core index']
  #allocation1 [shape = 'u32[144,128]{1,0:T(1,128)}', space=vmem, size = 0x12000, scoped, tag = 'internal scratch']
  #allocation2 [shape = 'f32[2,96,128]{2,1,0:T(8,128)}', space=vmem, size = 0x18000, scoped, tag = 'scratch operand']
  %s0 = inlined_call_operand.vmem [shape: bf16[2,96,1152], index: 0, kind: input, shape index: {}]
  %s1 = inlined_call_operand.vmem [shape: bf16[1152,128], index: 1, kind: input, shape index: {}]
  %s2 = inlined_call_operand.vmem [shape: f32[1,128], index: 2, kind: input, shape index: {}]
  %s3 = inlined_call_operand.vmem [shape: f32[96,128], index: 3, kind: output, shape index: {}]
  %s4 = sld [smem:[#allocation0]]
  $region30: #{_lambda_.9} parent=0
    _
  %s6 = ssub.s32 1, %s4
  %s7 = scalar_select 0, %s6, %s4
  // Predicated region
  $region2: #{_lambda_.9} parent=0 // pred_check
    _
  $region3: #{_lambda_.9} parent=0 // pred_check_branch
    %9 = sbr.rel (0) target = $region5
  $region4: #{_lambda_.9} parent=0 // pred_region
    _
  $region5: #{_lambda_.9} parent=0 // pred_fallthru
    _
  // Predicated region
  $region6: #{_lambda_.9} parent=0 // pred_check
    _
  $region7: #{_lambda_.9} parent=0 // pred_check_branch
    %11 = sbr.rel (0) target = $region9
  $region8: #{_lambda_.9} parent=0 // pred_region
    _
  $region9: #{_lambda_.9} parent=0 // pred_fallthru
    _
  // Predicated region
  $region10: #{_lambda_.9} parent=0 // pred_check
    _
  $region11: #{_lambda_.9} parent=0 // pred_check_branch
    %13 = sbr.rel (0) target = $region13
  $region12: #{_lambda_.9} parent=0 // pred_region
    _
  $region13: #{_lambda_.9} parent=0 // pred_fallthru
    _
  %p15 = scmp.eq.s32.totalorder 0, 0
  // Predicated region
  $region14: #{_lambda_.9} parent=0 // pred_check
    %p16 = pneg %p15
  $region15: #{_lambda_.9} parent=0 // pred_check_branch
    %18 = sbr.rel (%p16) target = $region17
  $region16: #{_lambda_.9} parent=0 // pred_region
    %19 = vst [vmem:[#allocation2] sm:$0xff] 0.0
    %20 = vst [vmem:[#allocation2 + $0x8] sm:$0xff] 0.0
    %21 = vst [vmem:[#allocation2 + $0x10] sm:$0xff] 0.0
    %22 = vst [vmem:[#allocation2 + $0x18] sm:$0xff] 0.0
    %23 = vst [vmem:[#allocation2 + $0x20] sm:$0xff] 0.0
    %24 = vst [vmem:[#allocation2 + $0x28] sm:$0xff] 0.0
    %25 = vst [vmem:[#allocation2 + $0x30] sm:$0xff] 0.0
    %26 = vst [vmem:[#allocation2 + $0x38] sm:$0xff] 0.0
    %27 = vst [vmem:[#allocation2 + $0x40] sm:$0xff] 0.0
    %28 = vst [vmem:[#allocation2 + $0x48] sm:$0xff] 0.0
    %29 = vst [vmem:[#allocation2 + $0x50] sm:$0xff] 0.0
    %30 = vst [vmem:[#allocation2 + $0x58] sm:$0xff] 0.0
    %31 = vst [vmem:[#allocation2 + $0x60] sm:$0xff] 0.0
    %32 = vst [vmem:[#allocation2 + $0x68] sm:$0xff] 0.0
    %33 = vst [vmem:[#allocation2 + $0x70] sm:$0xff] 0.0
    %34 = vst [vmem:[#allocation2 + $0x78] sm:$0xff] 0.0
    %35 = vst [vmem:[#allocation2 + $0x80] sm:$0xff] 0.0
    %36 = vst [vmem:[#allocation2 + $0x88] sm:$0xff] 0.0
    %37 = vst [vmem:[#allocation2 + $0x90] sm:$0xff] 0.0
    %38 = vst [vmem:[#allocation2 + $0x98] sm:$0xff] 0.0
    %39 = vst [vmem:[#allocation2 + $0xa0] sm:$0xff] 0.0
    %40 = vst [vmem:[#allocation2 + $0xa8] sm:$0xff] 0.0
    %41 = vst [vmem:[#allocation2 + $0xb0] sm:$0xff] 0.0
    %42 = vst [vmem:[#allocation2 + $0xb8] sm:$0xff] 0.0
  $region17: #{_lambda_.9} parent=0 // pred_fallthru
    _
  %v43 = vld [vmem:[#allocation2] sm:$0xff]
  %v44 = vld [vmem:[#allocation2 + $0x8] sm:$0xff]
  %v45 = vld [vmem:[#allocation2 + $0x10] sm:$0xff]
  %v46 = vld [vmem:[#allocation2 + $0x18] sm:$0xff]
  %v47 = vld [vmem:[#allocation2 + $0x20] sm:$0xff]
  %v48 = vld [vmem:[#allocation2 + $0x28] sm:$0xff]
  %v49 = vld [vmem:[#allocation2 + $0x30] sm:$0xff]
  %v50 = vld [vmem:[#allocation2 + $0x38] sm:$0xff]
  %v51 = vld [vmem:[#allocation2 + $0x40] sm:$0xff]
  %v52 = vld [vmem:[#allocation2 + $0x48] sm:$0xff]
  %v53 = vld [vmem:[#allocation2 + $0x50] sm:$0xff]
  %v54 = vld [vmem:[#allocation2 + $0x58] sm:$0xff]
  %v55 = vld [vmem:[%s0] sm:$0xff]
  %v56 = vld [vmem:[%s0 + $0x8] sm:$0xff]
  %v57 = vld [vmem:[%s0 + $0x10] sm:$0xff]
  %v58 = vld [vmem:[%s0 + $0x18] sm:$0xff]
  %v59 = vld [vmem:[%s0 + $0x20] sm:$0xf]
  %v60 = vld [vmem:[%s0 + $0x24] sm:$0xff]
  %v61 = vld [vmem:[%s0 + $0x2c] sm:$0xff]
  %v62 = vld [vmem:[%s0 + $0x34] sm:$0xff]
  %v63 = vld [vmem:[%s0 + $0x3c] sm:$0xff]
  %v64 = vld [vmem:[%s0 + $0x44] sm:$0xf]
  %v65 = vld [vmem:[%s0 + $0x48] sm:$0xff]
  %v66 = vld [vmem:[%s0 + $0x50] sm:$0xff]
  %v67 = vld [vmem:[%s0 + $0x58] sm:$0xff]
  %v68 = vld [vmem:[%s0 + $0x60] sm:$0xff]
  %v69 = vld [vmem:[%s0 + $0x68] sm:$0xf]
  %v70 = vld [vmem:[%s0 + $0x6c] sm:$0xff]
  %v71 = vld [vmem:[%s0 + $0x74] sm:$0xff]
  %v72 = vld [vmem:[%s0 + $0x7c] sm:$0xff]
  %v73 = vld [vmem:[%s0 + $0x84] sm:$0xff]
  %v74 = vld [vmem:[%s0 + $0x8c] sm:$0xf]
  %v75 = vld [vmem:[%s0 + $0x90] sm:$0xff]
  %v76 = vld [vmem:[%s0 + $0x98] sm:$0xff]
  %v77 = vld [vmem:[%s0 + $0xa0] sm:$0xff]
  %v78 = vld [vmem:[%s0 + $0xa8] sm:$0xff]
  %v79 = vld [vmem:[%s0 + $0xb0] sm:$0xf]
  %v80 = vld [vmem:[%s0 + $0xb4] sm:$0xff]
  %v81 = vld [vmem:[%s0 + $0xbc] sm:$0xff]
  %v82 = vld [vmem:[%s0 + $0xc4] sm:$0xff]
  %v83 = vld [vmem:[%s0 + $0xcc] sm:$0xff]
  %v84 = vld [vmem:[%s0 + $0xd4] sm:$0xf]
  %v85 = vld [vmem:[%s0 + $0xd8] sm:$0xff]
  %v86 = vld [vmem:[%s0 + $0xe0] sm:$0xff]
  %v87 = vld [vmem:[%s0 + $0xe8] sm:$0xff]
  %v88 = vld [vmem:[%s0 + $0xf0] sm:$0xff]
  %v89 = vld [vmem:[%s0 + $0xf8] sm:$0xf]
  %v90 = vld [vmem:[%s0 + $0xfc] sm:$0xff]
  %v91 = vld [vmem:[%s0 + $0x104] sm:$0xff]
  %v92 = vld [vmem:[%s0 + $0x10c] sm:$0xff]
  %v93 = vld [vmem:[%s0 + $0x114] sm:$0xff]
  %v94 = vld [vmem:[%s0 + $0x11c] sm:$0xf]
  %v95 = vld [vmem:[%s0 + $0x120] sm:$0xff]
  %v96 = vld [vmem:[%s0 + $0x128] sm:$0xff]
  %v97 = vld [vmem:[%s0 + $0x130] sm:$0xff]
  %v98 = vld [vmem:[%s0 + $0x138] sm:$0xff]
  %v99 = vld [vmem:[%s0 + $0x140] sm:$0xf]
  %v100 = vld [vmem:[%s0 + $0x144] sm:$0xff]
  %v101 = vld [vmem:[%s0 + $0x14c] sm:$0xff]
  %v102 = vld [vmem:[%s0 + $0x154] sm:$0xff]
  %v103 = vld [vmem:[%s0 + $0x15c] sm:$0xff]
  %v104 = vld [vmem:[%s0 + $0x164] sm:$0xf]
  %v105 = vld [vmem:[%s0 + $0x168] sm:$0xff]
  %v106 = vld [vmem:[%s0 + $0x170] sm:$0xff]
  %v107 = vld [vmem:[%s0 + $0x178] sm:$0xff]
  %v108 = vld [vmem:[%s0 + $0x180] sm:$0xff]
  %v109 = vld [vmem:[%s0 + $0x188] sm:$0xf]
  %v110 = vld [vmem:[%s0 + $0x18c] sm:$0xff]
  %v111 = vld [vmem:[%s0 + $0x194] sm:$0xff]
  %v112 = vld [vmem:[%s0 + $0x19c] sm:$0xff]
  %v113 = vld [vmem:[%s0 + $0x1a4] sm:$0xff]
  %v114 = vld [vmem:[%s0 + $0x1ac] sm:$0xf]
  %v115 = vld [vmem:[%s1] sm:$0xf]
  %v116 = vld [vmem:[%s1 + $0x4] sm:$0xf]
  %v117 = vld [vmem:[%s1 + $0x8] sm:$0xf]
  %v118 = vld [vmem:[%s1 + $0xc] sm:$0xf]
  %v119 = vld [vmem:[%s1 + $0x10] sm:$0xf]
  %v120 = vld [vmem:[%s1 + $0x14] sm:$0xf]
  %v121 = vld [vmem:[%s1 + $0x18] sm:$0xf]
  %v122 = vld [vmem:[%s1 + $0x1c] sm:$0xf]
  %v123 = vld [vmem:[%s1 + $0x20] sm:$0xf]
  %v124 = vld [vmem:[%s1 + $0x24] sm:$0xf]
  %v125 = vld [vmem:[%s1 + $0x28] sm:$0xf]
  %v126 = vld [vmem:[%s1 + $0x2c] sm:$0xf]
  %v127 = vld [vmem:[%s1 + $0x30] sm:$0xf]
  %v128 = vld [vmem:[%s1 + $0x34] sm:$0xf]
  %v129 = vld [vmem:[%s1 + $0x38] sm:$0xf]
  %v130 = vld [vmem:[%s1 + $0x3c] sm:$0xf]
  %v131 = vld [vmem:[%s1 + $0x40] sm:$0xf]
  %v132 = vld [vmem:[%s1 + $0x44] sm:$0xf]
  %v133 = vld [vmem:[%s1 + $0x48] sm:$0xf]
  %v134 = vld [vmem:[%s1 + $0x4c] sm:$0xf]
  %v135 = vld [vmem:[%s1 + $0x50] sm:$0xf]
  %v136 = vld [vmem:[%s1 + $0x54] sm:$0xf]
  %v137 = vld [vmem:[%s1 + $0x58] sm:$0xf]
  %v138 = vld [vmem:[%s1 + $0x5c] sm:$0xf]
  %v139 = vld [vmem:[%s1 + $0x60] sm:$0xf]
  %v140 = vld [vmem:[%s1 + $0x64] sm:$0xf]
  %v141 = vld [vmem:[%s1 + $0x68] sm:$0xf]
  %v142 = vld [vmem:[%s1 + $0x6c] sm:$0xf]
  %v143 = vld [vmem:[%s1 + $0x70] sm:$0xf]
  %v144 = vld [vmem:[%s1 + $0x74] sm:$0xf]
  %v145 = vld [vmem:[%s1 + $0x78] sm:$0xf]
  %v146 = vld [vmem:[%s1 + $0x7c] sm:$0xf]
  %v147 = vld [vmem:[%s1 + $0x80] sm:$0xf]
  %v148 = vld [vmem:[%s1 + $0x84] sm:$0xf]
  %v149 = vld [vmem:[%s1 + $0x88] sm:$0xf]
  %v150 = vld [vmem:[%s1 + $0x8c] sm:$0xf]
  %v151 = vld [vmem:[%s1 + $0x90] sm:$0xf]
  %v152 = vld [vmem:[%s1 + $0x94] sm:$0xf]
  %v153 = vld [vmem:[%s1 + $0x98] sm:$0xf]
  %v154 = vld [vmem:[%s1 + $0x9c] sm:$0xf]
  %v155 = vld [vmem:[%s1 + $0xa0] sm:$0xf]
  %v156 = vld [vmem:[%s1 + $0xa4] sm:$0xf]
  %v157 = vld [vmem:[%s1 + $0xa8] sm:$0xf]
  %v158 = vld [vmem:[%s1 + $0xac] sm:$0xf]
  %v159 = vld [vmem:[%s1 + $0xb0] sm:$0xf]
  %v160 = vld [vmem:[%s1 + $0xb4] sm:$0xf]
  %v161 = vld [vmem:[%s1 + $0xb8] sm:$0xf]
  %v162 = vld [vmem:[%s1 + $0xbc] sm:$0xf]
  %v163 = vld [vmem:[%s1 + $0xc0] sm:$0xf]
  %v164 = vld [vmem:[%s1 + $0xc4] sm:$0xf]
  %v165 = vld [vmem:[%s1 + $0xc8] sm:$0xf]
  %v166 = vld [vmem:[%s1 + $0xcc] sm:$0xf]
  %v167 = vld [vmem:[%s1 + $0xd0] sm:$0xf]
  %v168 = vld [vmem:[%s1 + $0xd4] sm:$0xf]
  %v169 = vld [vmem:[%s1 + $0xd8] sm:$0xf]
  %v170 = vld [vmem:[%s1 + $0xdc] sm:$0xf]
  %v171 = vld [vmem:[%s1 + $0xe0] sm:$0xf]
  %v172 = vld [vmem:[%s1 + $0xe4] sm:$0xf]
  %v173 = vld [vmem:[%s1 + $0xe8] sm:$0xf]
  %v174 = vld [vmem:[%s1 + $0xec] sm:$0xf]
  %v175 = vld [vmem:[%s1 + $0xf0] sm:$0xf]
  %v176 = vld [vmem:[%s1 + $0xf4] sm:$0xf]
  %v177 = vld [vmem:[%s1 + $0xf8] sm:$0xf]
  %v178 = vld [vmem:[%s1 + $0xfc] sm:$0xf]
  %v179 = vld [vmem:[%s1 + $0x100] sm:$0xf]
  %v180 = vld [vmem:[%s1 + $0x104] sm:$0xf]
  %v181 = vld [vmem:[%s1 + $0x108] sm:$0xf]
  %v182 = vld [vmem:[%s1 + $0x10c] sm:$0xf]
  %v183 = vld [vmem:[%s1 + $0x110] sm:$0xf]
  %v184 = vld [vmem:[%s1 + $0x114] sm:$0xf]
  %v185 = vld [vmem:[%s1 + $0x118] sm:$0xf]
  %v186 = vld [vmem:[%s1 + $0x11c] sm:$0xf]
  %v187 = vld [vmem:[%s1 + $0x120] sm:$0xf]
  %v188 = vld [vmem:[%s1 + $0x124] sm:$0xf]
  %v189 = vld [vmem:[%s1 + $0x128] sm:$0xf]
  %v190 = vld [vmem:[%s1 + $0x12c] sm:$0xf]
  %v191 = vld [vmem:[%s1 + $0x130] sm:$0xf]
  %v192 = vld [vmem:[%s1 + $0x134] sm:$0xf]
  %v193 = vld [vmem:[%s1 + $0x138] sm:$0xf]
  %v194 = vld [vmem:[%s1 + $0x13c] sm:$0xf]
  %v195 = vld [vmem:[%s1 + $0x140] sm:$0xf]
  %v196 = vld [vmem:[%s1 + $0x144] sm:$0xf]
  %v197 = vld [vmem:[%s1 + $0x148] sm:$0xf]
  %v198 = vld [vmem:[%s1 + $0x14c] sm:$0xf]
  %v199 = vld [vmem:[%s1 + $0x150] sm:$0xf]
  %v200 = vld [vmem:[%s1 + $0x154] sm:$0xf]
  %v201 = vld [vmem:[%s1 + $0x158] sm:$0xf]
  %v202 = vld [vmem:[%s1 + $0x15c] sm:$0xf]
  %v203 = vld [vmem:[%s1 + $0x160] sm:$0xf]
  %v204 = vld [vmem:[%s1 + $0x164] sm:$0xf]
  %v205 = vld [vmem:[%s1 + $0x168] sm:$0xf]
  %v206 = vld [vmem:[%s1 + $0x16c] sm:$0xf]
  %v207 = vld [vmem:[%s1 + $0x170] sm:$0xf]
  %v208 = vld [vmem:[%s1 + $0x174] sm:$0xf]
  %v209 = vld [vmem:[%s1 + $0x178] sm:$0xf]
  %v210 = vld [vmem:[%s1 + $0x17c] sm:$0xf]
  %v211 = vld [vmem:[%s1 + $0x180] sm:$0xf]
  %v212 = vld [vmem:[%s1 + $0x184] sm:$0xf]
  %v213 = vld [vmem:[%s1 + $0x188] sm:$0xf]
  %v214 = vld [vmem:[%s1 + $0x18c] sm:$0xf]
  %v215 = vld [vmem:[%s1 + $0x190] sm:$0xf]
  %v216 = vld [vmem:[%s1 + $0x194] sm:$0xf]
  %v217 = vld [vmem:[%s1 + $0x198] sm:$0xf]
  %v218 = vld [vmem:[%s1 + $0x19c] sm:$0xf]
  %v219 = vld [vmem:[%s1 + $0x1a0] sm:$0xf]
  %v220 = vld [vmem:[%s1 + $0x1a4] sm:$0xf]
  %v221 = vld [vmem:[%s1 + $0x1a8] sm:$0xf]
  %v222 = vld [vmem:[%s1 + $0x1ac] sm:$0xf]
  %v223 = vld [vmem:[%s1 + $0x1b0] sm:$0xf]
  %v224 = vld [vmem:[%s1 + $0x1b4] sm:$0xf]
  %v225 = vld [vmem:[%s1 + $0x1b8] sm:$0xf]
  %v226 = vld [vmem:[%s1 + $0x1bc] sm:$0xf]
  %v227 = vld [vmem:[%s1 + $0x1c0] sm:$0xf]
  %v228 = vld [vmem:[%s1 + $0x1c4] sm:$0xf]
  %v229 = vld [vmem:[%s1 + $0x1c8] sm:$0xf]
  %v230 = vld [vmem:[%s1 + $0x1cc] sm:$0xf]
  %v231 = vld [vmem:[%s1 + $0x1d0] sm:$0xf]
  %v232 = vld [vmem:[%s1 + $0x1d4] sm:$0xf]
  %v233 = vld [vmem:[%s1 + $0x1d8] sm:$0xf]
  %v234 = vld [vmem:[%s1 + $0x1dc] sm:$0xf]
  %v235 = vld [vmem:[%s1 + $0x1e0] sm:$0xf]
  %v236 = vld [vmem:[%s1 + $0x1e4] sm:$0xf]
  %v237 = vld [vmem:[%s1 + $0x1e8] sm:$0xf]
  %v238 = vld [vmem:[%s1 + $0x1ec] sm:$0xf]
  %v239 = vld [vmem:[%s1 + $0x1f0] sm:$0xf]
  %v240 = vld [vmem:[%s1 + $0x1f4] sm:$0xf]
  %v241 = vld [vmem:[%s1 + $0x1f8] sm:$0xf]
  %v242 = vld [vmem:[%s1 + $0x1fc] sm:$0xf]
  %v243 = vld [vmem:[%s1 + $0x200] sm:$0xf]
  %v244 = vld [vmem:[%s1 + $0x204] sm:$0xf]
  %v245 = vld [vmem:[%s1 + $0x208] sm:$0xf]
  %v246 = vld [vmem:[%s1 + $0x20c] sm:$0xf]
  %v247 = vld [vmem:[%s1 + $0x210] sm:$0xf]
  %v248 = vld [vmem:[%s1 + $0x214] sm:$0xf]
  %v249 = vld [vmem:[%s1 + $0x218] sm:$0xf]
  %v250 = vld [vmem:[%s1 + $0x21c] sm:$0xf]
  %v251 = vld [vmem:[%s1 + $0x220] sm:$0xf]
  %v252 = vld [vmem:[%s1 + $0x224] sm:$0xf]
  %v253 = vld [vmem:[%s1 + $0x228] sm:$0xf]
  %v254 = vld [vmem:[%s1 + $0x22c] sm:$0xf]
  %v255 = vld [vmem:[%s1 + $0x230] sm:$0xf]
  %v256 = vld [vmem:[%s1 + $0x234] sm:$0xf]
  %v257 = vld [vmem:[%s1 + $0x238] sm:$0xf]
  %v258 = vld [vmem:[%s1 + $0x23c] sm:$0xf]
  %v319 = vunpack.c.l.b16 %v55
  %v320 = vunpack.c.h.b16 %v55
  %v321 = vunpack.c.l.b16 %v56
  %v322 = vunpack.c.h.b16 %v56
  %v323 = vunpack.c.l.b16 %v57
  %v324 = vunpack.c.h.b16 %v57
  %v325 = vunpack.c.l.b16 %v58
  %v326 = vunpack.c.h.b16 %v58
  %v327 = vunpack.c.l.b16 %v59
  %v328 = vunpack.c.l.b16 %v60
  %v329 = vunpack.c.h.b16 %v60
  %v330 = vunpack.c.l.b16 %v61
  %v331 = vunpack.c.h.b16 %v61
  %v332 = vunpack.c.l.b16 %v62
  %v333 = vunpack.c.h.b16 %v62
  %v334 = vunpack.c.l.b16 %v63
  %v335 = vunpack.c.h.b16 %v63
  %v336 = vunpack.c.l.b16 %v64
  %v337 = vunpack.c.l.b16 %v65
  %v338 = vunpack.c.h.b16 %v65
  %v339 = vunpack.c.l.b16 %v66
  %v340 = vunpack.c.h.b16 %v66
  %v341 = vunpack.c.l.b16 %v67
  %v342 = vunpack.c.h.b16 %v67
  %v343 = vunpack.c.l.b16 %v68
  %v344 = vunpack.c.h.b16 %v68
  %v345 = vunpack.c.l.b16 %v69
  %v346 = vunpack.c.l.b16 %v70
  %v347 = vunpack.c.h.b16 %v70
  %v348 = vunpack.c.l.b16 %v71
  %v349 = vunpack.c.h.b16 %v71
  %v350 = vunpack.c.l.b16 %v72
  %v351 = vunpack.c.h.b16 %v72
  %v352 = vunpack.c.l.b16 %v73
  %v353 = vunpack.c.h.b16 %v73
  %v354 = vunpack.c.l.b16 %v74
  %v355 = vunpack.c.l.b16 %v75
  %v356 = vunpack.c.h.b16 %v75
  %v357 = vunpack.c.l.b16 %v76
  %v358 = vunpack.c.h.b16 %v76
  %v359 = vunpack.c.l.b16 %v77
  %v360 = vunpack.c.h.b16 %v77
  %v361 = vunpack.c.l.b16 %v78
  %v362 = vunpack.c.h.b16 %v78
  %v363 = vunpack.c.l.b16 %v79
  %v364 = vunpack.c.l.b16 %v80
  %v365 = vunpack.c.h.b16 %v80
  %v366 = vunpack.c.l.b16 %v81
  %v367 = vunpack.c.h.b16 %v81
  %v368 = vunpack.c.l.b16 %v82
  %v369 = vunpack.c.h.b16 %v82
  %v370 = vunpack.c.l.b16 %v83
  %v371 = vunpack.c.h.b16 %v83
  %v372 = vunpack.c.l.b16 %v84
  %v373 = vunpack.c.l.b16 %v85
  %v374 = vunpack.c.h.b16 %v85
  %v375 = vunpack.c.l.b16 %v86
  %v376 = vunpack.c.h.b16 %v86
  %v377 = vunpack.c.l.b16 %v87
  %v378 = vunpack.c.h.b16 %v87
  %v379 = vunpack.c.l.b16 %v88
  %v380 = vunpack.c.h.b16 %v88
  %v381 = vunpack.c.l.b16 %v89
  %v382 = vunpack.c.l.b16 %v90
  %v383 = vunpack.c.h.b16 %v90
  %v384 = vunpack.c.l.b16 %v91
  %v385 = vunpack.c.h.b16 %v91
  %v386 = vunpack.c.l.b16 %v92
  %v387 = vunpack.c.h.b16 %v92
  %v388 = vunpack.c.l.b16 %v93
  %v389 = vunpack.c.h.b16 %v93
  %v390 = vunpack.c.l.b16 %v94
  %v391 = vunpack.c.l.b16 %v95
  %v392 = vunpack.c.h.b16 %v95
  %v393 = vunpack.c.l.b16 %v96
  %v394 = vunpack.c.h.b16 %v96
  %v395 = vunpack.c.l.b16 %v97
  %v396 = vunpack.c.h.b16 %v97
  %v397 = vunpack.c.l.b16 %v98
  %v398 = vunpack.c.h.b16 %v98
  %v399 = vunpack.c.l.b16 %v99
  %v400 = vunpack.c.l.b16 %v100
  %v401 = vunpack.c.h.b16 %v100
  %v402 = vunpack.c.l.b16 %v101
  %v403 = vunpack.c.h.b16 %v101
  %v404 = vunpack.c.l.b16 %v102
  %v405 = vunpack.c.h.b16 %v102
  %v406 = vunpack.c.l.b16 %v103
  %v407 = vunpack.c.h.b16 %v103
  %v408 = vunpack.c.l.b16 %v104
  %v409 = vunpack.c.l.b16 %v105
  %v410 = vunpack.c.h.b16 %v105
  %v411 = vunpack.c.l.b16 %v106
  %v412 = vunpack.c.h.b16 %v106
  %v413 = vunpack.c.l.b16 %v107
  %v414 = vunpack.c.h.b16 %v107
  %v415 = vunpack.c.l.b16 %v108
  %v416 = vunpack.c.h.b16 %v108
  %v417 = vunpack.c.l.b16 %v109
  %v418 = vunpack.c.l.b16 %v110
  %v419 = vunpack.c.h.b16 %v110
  %v420 = vunpack.c.l.b16 %v111
  %v421 = vunpack.c.h.b16 %v111
  %v422 = vunpack.c.l.b16 %v112
  %v423 = vunpack.c.h.b16 %v112
  %v424 = vunpack.c.l.b16 %v113
  %v425 = vunpack.c.h.b16 %v113
  %v426 = vunpack.c.l.b16 %v114
  %v427 = vpack.c.b16 %v328, %v319
  %v428 = vpack.c.b16 %v329, %v320
  %v429 = vpack.c.b16 %v330, %v321
  %v430 = vpack.c.b16 %v331, %v322
  %v431 = vpack.c.b16 %v332, %v323
  %v432 = vpack.c.b16 %v333, %v324
  %v433 = vpack.c.b16 %v334, %v325
  %v434 = vpack.c.b16 %v335, %v326
  %v435 = vpack.c.b16 %v336, %v327
  %v436 = vpack.c.b16 %v346, %v337
  %v437 = vpack.c.b16 %v347, %v338
  %v438 = vpack.c.b16 %v348, %v339
  %v439 = vpack.c.b16 %v349, %v340
  %v440 = vpack.c.b16 %v350, %v341
  %v441 = vpack.c.b16 %v351, %v342
  %v442 = vpack.c.b16 %v352, %v343
  %v443 = vpack.c.b16 %v353, %v344
  %v444 = vpack.c.b16 %v354, %v345
  %v445 = vpack.c.b16 %v364, %v355
  %v446 = vpack.c.b16 %v365, %v356
  %v447 = vpack.c.b16 %v366, %v357
  %v448 = vpack.c.b16 %v367, %v358
  %v449 = vpack.c.b16 %v368, %v359
  %v450 = vpack.c.b16 %v369, %v360
  %v451 = vpack.c.b16 %v370, %v361
  %v452 = vpack.c.b16 %v371, %v362
  %v453 = vpack.c.b16 %v372, %v363
  %v454 = vpack.c.b16 %v382, %v373
  %v455 = vpack.c.b16 %v383, %v374
  %v456 = vpack.c.b16 %v384, %v375
  %v457 = vpack.c.b16 %v385, %v376
  %v458 = vpack.c.b16 %v386, %v377
  %v459 = vpack.c.b16 %v387, %v378
  %v460 = vpack.c.b16 %v388, %v379
  %v461 = vpack.c.b16 %v389, %v380
  %v462 = vpack.c.b16 %v390, %v381
  %v463 = vpack.c.b16 %v400, %v391
  %v464 = vpack.c.b16 %v401, %v392
  %v465 = vpack.c.b16 %v402, %v393
  %v466 = vpack.c.b16 %v403, %v394
  %v467 = vpack.c.b16 %v404, %v395
  %v468 = vpack.c.b16 %v405, %v396
  %v469 = vpack.c.b16 %v406, %v397
  %v470 = vpack.c.b16 %v407, %v398
  %v471 = vpack.c.b16 %v408, %v399
  %v472 = vpack.c.b16 %v418, %v409
  %v473 = vpack.c.b16 %v419, %v410
  %v474 = vpack.c.b16 %v420, %v411
  %v475 = vpack.c.b16 %v421, %v412
  %v476 = vpack.c.b16 %v422, %v413
  %v477 = vpack.c.b16 %v423, %v414
  %v478 = vpack.c.b16 %v424, %v415
  %v479 = vpack.c.b16 %v425, %v416
  %v480 = vpack.c.b16 %v426, %v417
  %v679 = vunpack.c.l.b16 %v115
  %v680 = vunpack.c.l.b16 %v116
  %v681 = vunpack.c.l.b16 %v117
  %v682 = vunpack.c.l.b16 %v118
  %v683 = vunpack.c.l.b16 %v119
  %v684 = vunpack.c.l.b16 %v120
  %v685 = vunpack.c.l.b16 %v121
  %v686 = vunpack.c.l.b16 %v122
  %v687 = vunpack.c.l.b16 %v123
  %v688 = vunpack.c.l.b16 %v124
  %v689 = vunpack.c.l.b16 %v125
  %v690 = vunpack.c.l.b16 %v126
  %v691 = vunpack.c.l.b16 %v127
  %v692 = vunpack.c.l.b16 %v128
  %v693 = vunpack.c.l.b16 %v129
  %v694 = vunpack.c.l.b16 %v130
  %v695 = vunpack.c.l.b16 %v131
  %v696 = vunpack.c.l.b16 %v132
  %v697 = vunpack.c.l.b16 %v133
  %v698 = vunpack.c.l.b16 %v134
  %v699 = vunpack.c.l.b16 %v135
  %v700 = vunpack.c.l.b16 %v136
  %v701 = vunpack.c.l.b16 %v137
  %v702 = vunpack.c.l.b16 %v138
  %v703 = vunpack.c.l.b16 %v139
  %v704 = vunpack.c.l.b16 %v140
  %v705 = vunpack.c.l.b16 %v141
  %v706 = vunpack.c.l.b16 %v142
  %v707 = vunpack.c.l.b16 %v143
  %v708 = vunpack.c.l.b16 %v144
  %v709 = vunpack.c.l.b16 %v145
  %v710 = vunpack.c.l.b16 %v146
  %v711 = vunpack.c.l.b16 %v147
  %v712 = vunpack.c.l.b16 %v148
  %v713 = vunpack.c.l.b16 %v149
  %v714 = vunpack.c.l.b16 %v150
  %v715 = vunpack.c.l.b16 %v151
  %v716 = vunpack.c.l.b16 %v152
  %v717 = vunpack.c.l.b16 %v153
  %v718 = vunpack.c.l.b16 %v154
  %v719 = vunpack.c.l.b16 %v155
  %v720 = vunpack.c.l.b16 %v156
  %v721 = vunpack.c.l.b16 %v157
  %v722 = vunpack.c.l.b16 %v158
  %v723 = vunpack.c.l.b16 %v159
  %v724 = vunpack.c.l.b16 %v160
  %v725 = vunpack.c.l.b16 %v161
  %v726 = vunpack.c.l.b16 %v162
  %v727 = vunpack.c.l.b16 %v163
  %v728 = vunpack.c.l.b16 %v164
  %v729 = vunpack.c.l.b16 %v165
  %v730 = vunpack.c.l.b16 %v166
  %v731 = vunpack.c.l.b16 %v167
  %v732 = vunpack.c.l.b16 %v168
  %v733 = vunpack.c.l.b16 %v169
  %v734 = vunpack.c.l.b16 %v170
  %v735 = vunpack.c.l.b16 %v171
  %v736 = vunpack.c.l.b16 %v172
  %v737 = vunpack.c.l.b16 %v173
  %v738 = vunpack.c.l.b16 %v174
  %v739 = vunpack.c.l.b16 %v175
  %v740 = vunpack.c.l.b16 %v176
  %v741 = vunpack.c.l.b16 %v177
  %v742 = vunpack.c.l.b16 %v178
  %v743 = vunpack.c.l.b16 %v179
  %v744 = vunpack.c.l.b16 %v180
  %v745 = vunpack.c.l.b16 %v181
  %v746 = vunpack.c.l.b16 %v182
  %v747 = vunpack.c.l.b16 %v183
  %v748 = vunpack.c.l.b16 %v184
  %v749 = vunpack.c.l.b16 %v185
  %v750 = vunpack.c.l.b16 %v186
  %v751 = vunpack.c.l.b16 %v187
  %v752 = vunpack.c.l.b16 %v188
  %v753 = vunpack.c.l.b16 %v189
  %v754 = vunpack.c.l.b16 %v190
  %v755 = vunpack.c.l.b16 %v191
  %v756 = vunpack.c.l.b16 %v192
  %v757 = vunpack.c.l.b16 %v193
  %v758 = vunpack.c.l.b16 %v194
  %v759 = vunpack.c.l.b16 %v195
  %v760 = vunpack.c.l.b16 %v196
  %v761 = vunpack.c.l.b16 %v197
  %v762 = vunpack.c.l.b16 %v198
  %v763 = vunpack.c.l.b16 %v199
  %v764 = vunpack.c.l.b16 %v200
  %v765 = vunpack.c.l.b16 %v201
  %v766 = vunpack.c.l.b16 %v202
  %v767 = vunpack.c.l.b16 %v203
  %v768 = vunpack.c.l.b16 %v204
  %v769 = vunpack.c.l.b16 %v205
  %v770 = vunpack.c.l.b16 %v206
  %v771 = vunpack.c.l.b16 %v207
  %v772 = vunpack.c.l.b16 %v208
  %v773 = vunpack.c.l.b16 %v209
  %v774 = vunpack.c.l.b16 %v210
  %v775 = vunpack.c.l.b16 %v211
  %v776 = vunpack.c.l.b16 %v212
  %v777 = vunpack.c.l.b16 %v213
  %v778 = vunpack.c.l.b16 %v214
  %v779 = vunpack.c.l.b16 %v215
  %v780 = vunpack.c.l.b16 %v216
  %v781 = vunpack.c.l.b16 %v217
  %v782 = vunpack.c.l.b16 %v218
  %v783 = vunpack.c.l.b16 %v219
  %v784 = vunpack.c.l.b16 %v220
  %v785 = vunpack.c.l.b16 %v221
  %v786 = vunpack.c.l.b16 %v222
  %v787 = vunpack.c.l.b16 %v223
  %v788 = vunpack.c.l.b16 %v224
  %v789 = vunpack.c.l.b16 %v225
  %v790 = vunpack.c.l.b16 %v226
  %v791 = vunpack.c.l.b16 %v227
  %v792 = vunpack.c.l.b16 %v228
  %v793 = vunpack.c.l.b16 %v229
  %v794 = vunpack.c.l.b16 %v230
  %v795 = vunpack.c.l.b16 %v231
  %v796 = vunpack.c.l.b16 %v232
  %v797 = vunpack.c.l.b16 %v233
  %v798 = vunpack.c.l.b16 %v234
  %v799 = vunpack.c.l.b16 %v235
  %v800 = vunpack.c.l.b16 %v236
  %v801 = vunpack.c.l.b16 %v237
  %v802 = vunpack.c.l.b16 %v238
  %v803 = vunpack.c.l.b16 %v239
  %v804 = vunpack.c.l.b16 %v240
  %v805 = vunpack.c.l.b16 %v241
  %v806 = vunpack.c.l.b16 %v242
  %v807 = vunpack.c.l.b16 %v243
  %v808 = vunpack.c.l.b16 %v244
  %v809 = vunpack.c.l.b16 %v245
  %v810 = vunpack.c.l.b16 %v246
  %v811 = vunpack.c.l.b16 %v247
  %v812 = vunpack.c.l.b16 %v248
  %v813 = vunpack.c.l.b16 %v249
  %v814 = vunpack.c.l.b16 %v250
  %v815 = vunpack.c.l.b16 %v251
  %v816 = vunpack.c.l.b16 %v252
  %v817 = vunpack.c.l.b16 %v253
  %v818 = vunpack.c.l.b16 %v254
  %v819 = vunpack.c.l.b16 %v255
  %v820 = vunpack.c.l.b16 %v256
  %v821 = vunpack.c.l.b16 %v257
  %v822 = vunpack.c.l.b16 %v258
  %v823 = vpack.c.b16 %v680, %v679
  %v824 = vpack.c.b16 %v682, %v681
  %v825 = vpack.c.b16 %v684, %v683
  %v826 = vpack.c.b16 %v686, %v685
  %v827 = vpack.c.b16 %v688, %v687
  %v828 = vpack.c.b16 %v690, %v689
  %v829 = vpack.c.b16 %v692, %v691
  %v830 = vpack.c.b16 %v694, %v693
  %v831 = vpack.c.b16 %v696, %v695
  %v832 = vpack.c.b16 %v698, %v697
  %v833 = vpack.c.b16 %v700, %v699
  %v834 = vpack.c.b16 %v702, %v701
  %v835 = vpack.c.b16 %v704, %v703
  %v836 = vpack.c.b16 %v706, %v705
  %v837 = vpack.c.b16 %v708, %v707
  %v838 = vpack.c.b16 %v710, %v709
  %v839 = vpack.c.b16 %v712, %v711
  %v840 = vpack.c.b16 %v714, %v713
  %v841 = vpack.c.b16 %v716, %v715
  %v842 = vpack.c.b16 %v718, %v717
  %v843 = vpack.c.b16 %v720, %v719
  %v844 = vpack.c.b16 %v722, %v721
  %v845 = vpack.c.b16 %v724, %v723
  %v846 = vpack.c.b16 %v726, %v725
  %v847 = vpack.c.b16 %v728, %v727
  %v848 = vpack.c.b16 %v730, %v729
  %v849 = vpack.c.b16 %v732, %v731
  %v850 = vpack.c.b16 %v734, %v733
  %v851 = vpack.c.b16 %v736, %v735
  %v852 = vpack.c.b16 %v738, %v737
  %v853 = vpack.c.b16 %v740, %v739
  %v854 = vpack.c.b16 %v742, %v741
  %v855 = vpack.c.b16 %v744, %v743
  %v856 = vpack.c.b16 %v746, %v745
  %v857 = vpack.c.b16 %v748, %v747
  %v858 = vpack.c.b16 %v750, %v749
  %v859 = vpack.c.b16 %v752, %v751
  %v860 = vpack.c.b16 %v754, %v753
  %v861 = vpack.c.b16 %v756, %v755
  %v862 = vpack.c.b16 %v758, %v757
  %v863 = vpack.c.b16 %v760, %v759
  %v864 = vpack.c.b16 %v762, %v761
  %v865 = vpack.c.b16 %v764, %v763
  %v866 = vpack.c.b16 %v766, %v765
  %v867 = vpack.c.b16 %v768, %v767
  %v868 = vpack.c.b16 %v770, %v769
  %v869 = vpack.c.b16 %v772, %v771
  %v870 = vpack.c.b16 %v774, %v773
  %v871 = vpack.c.b16 %v776, %v775
  %v872 = vpack.c.b16 %v778, %v777
  %v873 = vpack.c.b16 %v780, %v779
  %v874 = vpack.c.b16 %v782, %v781
  %v875 = vpack.c.b16 %v784, %v783
  %v876 = vpack.c.b16 %v786, %v785
  %v877 = vpack.c.b16 %v788, %v787
  %v878 = vpack.c.b16 %v790, %v789
  %v879 = vpack.c.b16 %v792, %v791
  %v880 = vpack.c.b16 %v794, %v793
  %v881 = vpack.c.b16 %v796, %v795
  %v882 = vpack.c.b16 %v798, %v797
  %v883 = vpack.c.b16 %v800, %v799
  %v884 = vpack.c.b16 %v802, %v801
  %v885 = vpack.c.b16 %v804, %v803
  %v886 = vpack.c.b16 %v806, %v805
  %v887 = vpack.c.b16 %v808, %v807
  %v888 = vpack.c.b16 %v810, %v809
  %v889 = vpack.c.b16 %v812, %v811
  %v890 = vpack.c.b16 %v814, %v813
  %v891 = vpack.c.b16 %v816, %v815
  %v892 = vpack.c.b16 %v818, %v817
  %v893 = vpack.c.b16 %v820, %v819
  %v894 = vpack.c.b16 %v822, %v821
  %967 = vmatprep.subr.bf16.mxu0 0
  %968 = vmatpush1.bf16.msra.mxu0 %v830
  %969 = vmatprep.subr.bf16.mxu0 0
  %970 = vmatpush1.bf16.msra.mxu0 %v829
  %971 = vmatprep.subr.bf16.mxu0 0
  %972 = vmatpush1.bf16.msra.mxu0 %v828
  %973 = vmatprep.subr.bf16.mxu0 0
  %974 = vmatpush1.bf16.msra.mxu0 %v827
  %975 = vmatprep.subr.bf16.mxu0 0
  %976 = vmatpush1.bf16.msra.mxu0 %v826
  %977 = vmatprep.subr.bf16.mxu0 0
  %978 = vmatpush1.bf16.msra.mxu0 %v825
  %979 = vmatprep.subr.bf16.mxu0 0
  %980 = vmatpush1.bf16.msra.mxu0 %v824
  %981 = vmatprep.subr.bf16.mxu0 0
  %982 = vmatpush1.bf16.msra.mxu0 %v823
  %983 = vmatprep.subr.bf16.mxu0 0
  %984 = vmatpush2.bf16.msra.mxu0 %v838
  %985 = vmatprep.subr.bf16.mxu0 0
  %986 = vmatpush2.bf16.msra.mxu0 %v837
  %987 = vmatprep.subr.bf16.mxu0 0
  %988 = vmatpush2.bf16.msra.mxu0 %v836
  %989 = vmatprep.subr.bf16.mxu0 0
  %990 = vmatpush2.bf16.msra.mxu0 %v835
  %991 = vmatprep.subr.bf16.mxu0 0
  %992 = vmatpush2.bf16.msra.mxu0 %v834
  %993 = vmatprep.subr.bf16.mxu0 0
  %994 = vmatpush2.bf16.msra.mxu0 %v833
  %995 = vmatprep.subr.bf16.mxu0 0
  %996 = vmatpush2.bf16.msra.mxu0 %v832
  %997 = vmatprep.subr.bf16.mxu0 0
  %998 = vmatpush2.bf16.msra.mxu0 %v831
  %999 = vmatprep.mubr.bf16.mxu0 %v428
  %1000 = vmatmul.mubr.bf16.gmra.mxu0 %v427
  %v1001 = vpop.f32.mrf.mxu0
  %v1002 = vadd.f32 0.0, %v1001
  %v1003 = vpop.f32.mrf.mxu0
  %v1004 = vpop.f32.mrf.mxu0
  %v1005 = vadd.f32 0.0, %v1004
  %v1006 = vpop.f32.mrf.mxu0
  %1007 = vmatprep.mubr.bf16.mxu0 %v437
  %1008 = vmatmul.mubr.bf16.gmra.mxu0 %v436
  %v1009 = vpop.f32.mrf.mxu0
  %v1010 = vadd.f32 0.0, %v1009
  %v1011 = vpop.f32.mrf.mxu0
  %v1012 = vpop.f32.mrf.mxu0
  %v1013 = vadd.f32 0.0, %v1012
  %v1014 = vpop.f32.mrf.mxu0
  %1015 = vmatprep.mubr.bf16.mxu0 %v446
  %1016 = vmatmul.mubr.bf16.gmra.mxu0 %v445
  %v1017 = vpop.f32.mrf.mxu0
  %v1018 = vadd.f32 0.0, %v1017
  %v1019 = vpop.f32.mrf.mxu0
  %v1020 = vpop.f32.mrf.mxu0
  %v1021 = vadd.f32 0.0, %v1020
  %v1022 = vpop.f32.mrf.mxu0
  %1023 = vmatprep.mubr.bf16.mxu0 %v455
  %1024 = vmatmul.mubr.bf16.gmra.mxu0 %v454
  %v1025 = vpop.f32.mrf.mxu0
  %v1026 = vadd.f32 0.0, %v1025
  %v1027 = vpop.f32.mrf.mxu0
  %v1028 = vpop.f32.mrf.mxu0
  %v1029 = vadd.f32 0.0, %v1028
  %v1030 = vpop.f32.mrf.mxu0
  %1031 = vmatprep.mubr.bf16.mxu0 %v464
  %1032 = vmatmul.mubr.bf16.gmra.mxu0 %v463
  %v1033 = vpop.f32.mrf.mxu0
  %v1034 = vadd.f32 0.0, %v1033
  %v1035 = vpop.f32.mrf.mxu0
  %v1036 = vpop.f32.mrf.mxu0
  %v1037 = vadd.f32 0.0, %v1036
  %v1038 = vpop.f32.mrf.mxu0
  %1039 = vmatprep.mubr.bf16.mxu0 %v473
  %1040 = vmatmul.mubr.bf16.gmra.mxu0 %v472
  %v1041 = vpop.f32.mrf.mxu0
  %v1042 = vadd.f32 0.0, %v1041
  %v1043 = vpop.f32.mrf.mxu0
  %v1044 = vpop.f32.mrf.mxu0
  %v1045 = vadd.f32 0.0, %v1044
  %v1046 = vpop.f32.mrf.mxu0
  %1047 = vdwg.mxu0
  %1048 = vmatprep.subr.bf16.mxu0 0
  %1049 = vmatpush1.bf16.msra.mxu0 %v846
  %1050 = vmatprep.subr.bf16.mxu0 0
  %1051 = vmatpush1.bf16.msra.mxu0 %v845
  %1052 = vmatprep.subr.bf16.mxu0 0
  %1053 = vmatpush1.bf16.msra.mxu0 %v844
  %1054 = vmatprep.subr.bf16.mxu0 0
  %1055 = vmatpush1.bf16.msra.mxu0 %v843
  %1056 = vmatprep.subr.bf16.mxu0 0
  %1057 = vmatpush1.bf16.msra.mxu0 %v842
  %1058 = vmatprep.subr.bf16.mxu0 0
  %1059 = vmatpush1.bf16.msra.mxu0 %v841
  %1060 = vmatprep.subr.bf16.mxu0 0
  %1061 = vmatpush1.bf16.msra.mxu0 %v840
  %1062 = vmatprep.subr.bf16.mxu0 0
  %1063 = vmatpush1.bf16.msra.mxu0 %v839
  %1064 = vmatprep.subr.bf16.mxu0 0
  %1065 = vmatpush2.bf16.msra.mxu0 %v854
  %1066 = vmatprep.subr.bf16.mxu0 0
  %1067 = vmatpush2.bf16.msra.mxu0 %v853
  %1068 = vmatprep.subr.bf16.mxu0 0
  %1069 = vmatpush2.bf16.msra.mxu0 %v852
  %1070 = vmatprep.subr.bf16.mxu0 0
  %1071 = vmatpush2.bf16.msra.mxu0 %v851
  %1072 = vmatprep.subr.bf16.mxu0 0
  %1073 = vmatpush2.bf16.msra.mxu0 %v850
  %1074 = vmatprep.subr.bf16.mxu0 0
  %1075 = vmatpush2.bf16.msra.mxu0 %v849
  %1076 = vmatprep.subr.bf16.mxu0 0
  %1077 = vmatpush2.bf16.msra.mxu0 %v848
  %1078 = vmatprep.subr.bf16.mxu0 0
  %1079 = vmatpush2.bf16.msra.mxu0 %v847
  %1080 = vmatprep.mubr.bf16.mxu0 %v430
  %1081 = vmatmul.mubr.bf16.gmra.mxu0 %v429
  %v1082 = vpop.f32.mrf.mxu0
  %v1083 = vadd.f32 %v1002, %v1082
  %v1084 = vpop.f32.mrf.mxu0
  %v1085 = vpop.f32.mrf.mxu0
  %v1086 = vadd.f32 %v1005, %v1085
  %v1087 = vpop.f32.mrf.mxu0
  %1088 = vmatprep.mubr.bf16.mxu0 %v439
  %1089 = vmatmul.mubr.bf16.gmra.mxu0 %v438
  %v1090 = vpop.f32.mrf.mxu0
  %v1091 = vadd.f32 %v1010, %v1090
  %v1092 = vpop.f32.mrf.mxu0
  %v1093 = vpop.f32.mrf.mxu0
  %v1094 = vadd.f32 %v1013, %v1093
  %v1095 = vpop.f32.mrf.mxu0
  %1096 = vmatprep.mubr.bf16.mxu0 %v448
  %1097 = vmatmul.mubr.bf16.gmra.mxu0 %v447
  %v1098 = vpop.f32.mrf.mxu0
  %v1099 = vadd.f32 %v1018, %v1098
  %v1100 = vpop.f32.mrf.mxu0
  %v1101 = vpop.f32.mrf.mxu0
  %v1102 = vadd.f32 %v1021, %v1101
  %v1103 = vpop.f32.mrf.mxu0
  %1104 = vmatprep.mubr.bf16.mxu0 %v457
  %1105 = vmatmul.mubr.bf16.gmra.mxu0 %v456
  %v1106 = vpop.f32.mrf.mxu0
  %v1107 = vadd.f32 %v1026, %v1106
  %v1108 = vpop.f32.mrf.mxu0
  %v1109 = vpop.f32.mrf.mxu0
  %v1110 = vadd.f32 %v1029, %v1109
  %v1111 = vpop.f32.mrf.mxu0
  %1112 = vmatprep.mubr.bf16.mxu0 %v466
  %1113 = vmatmul.mubr.bf16.gmra.mxu0 %v465
  %v1114 = vpop.f32.mrf.mxu0
  %v1115 = vadd.f32 %v1034, %v1114
  %v1116 = vpop.f32.mrf.mxu0
  %v1117 = vpop.f32.mrf.mxu0
  %v1118 = vadd.f32 %v1037, %v1117
  %v1119 = vpop.f32.mrf.mxu0
  %1120 = vmatprep.mubr.bf16.mxu0 %v475
  %1121 = vmatmul.mubr.bf16.gmra.mxu0 %v474
  %v1122 = vpop.f32.mrf.mxu0
  %v1123 = vadd.f32 %v1042, %v1122
  %v1124 = vpop.f32.mrf.mxu0
  %v1125 = vpop.f32.mrf.mxu0
  %v1126 = vadd.f32 %v1045, %v1125
  %v1127 = vpop.f32.mrf.mxu0
  %1128 = vdwg.mxu0
  %1129 = vmatprep.subr.bf16.mxu0 0
  %1130 = vmatpush1.bf16.msra.mxu0 %v862
  %1131 = vmatprep.subr.bf16.mxu0 0
  %1132 = vmatpush1.bf16.msra.mxu0 %v861
  %1133 = vmatprep.subr.bf16.mxu0 0
  %1134 = vmatpush1.bf16.msra.mxu0 %v860
  %1135 = vmatprep.subr.bf16.mxu0 0
  %1136 = vmatpush1.bf16.msra.mxu0 %v859
  %1137 = vmatprep.subr.bf16.mxu0 0
  %1138 = vmatpush1.bf16.msra.mxu0 %v858
  %1139 = vmatprep.subr.bf16.mxu0 0
  %1140 = vmatpush1.bf16.msra.mxu0 %v857
  %1141 = vmatprep.subr.bf16.mxu0 0
  %1142 = vmatpush1.bf16.msra.mxu0 %v856
  %1143 = vmatprep.subr.bf16.mxu0 0
  %1144 = vmatpush1.bf16.msra.mxu0 %v855
  %1145 = vmatprep.subr.bf16.mxu0 0
  %1146 = vmatpush2.bf16.msra.mxu0 %v870
  %1147 = vmatprep.subr.bf16.mxu0 0
  %1148 = vmatpush2.bf16.msra.mxu0 %v869
  %1149 = vmatprep.subr.bf16.mxu0 0
  %1150 = vmatpush2.bf16.msra.mxu0 %v868
  %1151 = vmatprep.subr.bf16.mxu0 0
  %1152 = vmatpush2.bf16.msra.mxu0 %v867
  %1153 = vmatprep.subr.bf16.mxu0 0
  %1154 = vmatpush2.bf16.msra.mxu0 %v866
  %1155 = vmatprep.subr.bf16.mxu0 0
  %1156 = vmatpush2.bf16.msra.mxu0 %v865
  %1157 = vmatprep.subr.bf16.mxu0 0
  %1158 = vmatpush2.bf16.msra.mxu0 %v864
  %1159 = vmatprep.subr.bf16.mxu0 0
  %1160 = vmatpush2.bf16.msra.mxu0 %v863
  %1161 = vmatprep.mubr.bf16.mxu0 %v432
  %1162 = vmatmul.mubr.bf16.gmra.mxu0 %v431
  %v1163 = vpop.f32.mrf.mxu0
  %v1164 = vadd.f32 %v1083, %v1163
  %v1165 = vpop.f32.mrf.mxu0
  %v1166 = vpop.f32.mrf.mxu0
  %v1167 = vadd.f32 %v1086, %v1166
  %v1168 = vpop.f32.mrf.mxu0
  %1169 = vmatprep.mubr.bf16.mxu0 %v441
  %1170 = vmatmul.mubr.bf16.gmra.mxu0 %v440
  %v1171 = vpop.f32.mrf.mxu0
  %v1172 = vadd.f32 %v1091, %v1171
  %v1173 = vpop.f32.mrf.mxu0
  %v1174 = vpop.f32.mrf.mxu0
  %v1175 = vadd.f32 %v1094, %v1174
  %v1176 = vpop.f32.mrf.mxu0
  %1177 = vmatprep.mubr.bf16.mxu0 %v450
  %1178 = vmatmul.mubr.bf16.gmra.mxu0 %v449
  %v1179 = vpop.f32.mrf.mxu0
  %v1180 = vadd.f32 %v1099, %v1179
  %v1181 = vpop.f32.mrf.mxu0
  %v1182 = vpop.f32.mrf.mxu0
  %v1183 = vadd.f32 %v1102, %v1182
  %v1184 = vpop.f32.mrf.mxu0
  %1185 = vmatprep.mubr.bf16.mxu0 %v459
  %1186 = vmatmul.mubr.bf16.gmra.mxu0 %v458
  %v1187 = vpop.f32.mrf.mxu0
  %v1188 = vadd.f32 %v1107, %v1187
  %v1189 = vpop.f32.mrf.mxu0
  %v1190 = vpop.f32.mrf.mxu0
  %v1191 = vadd.f32 %v1110, %v1190
  %v1192 = vpop.f32.mrf.mxu0
  %1193 = vmatprep.mubr.bf16.mxu0 %v468
  %1194 = vmatmul.mubr.bf16.gmra.mxu0 %v467
  %v1195 = vpop.f32.mrf.mxu0
  %v1196 = vadd.f32 %v1115, %v1195
  %v1197 = vpop.f32.mrf.mxu0
  %v1198 = vpop.f32.mrf.mxu0
  %v1199 = vadd.f32 %v1118, %v1198
  %v1200 = vpop.f32.mrf.mxu0
  %1201 = vmatprep.mubr.bf16.mxu0 %v477
  %1202 = vmatmul.mubr.bf16.gmra.mxu0 %v476
  %v1203 = vpop.f32.mrf.mxu0
  %v1204 = vadd.f32 %v1123, %v1203
  %v1205 = vpop.f32.mrf.mxu0
  %v1206 = vpop.f32.mrf.mxu0
  %v1207 = vadd.f32 %v1126, %v1206
  %v1208 = vpop.f32.mrf.mxu0
  %1209 = vdwg.mxu0
  %1210 = vmatprep.subr.bf16.mxu0 0
  %1211 = vmatpush1.bf16.msra.mxu0 %v878
  %1212 = vmatprep.subr.bf16.mxu0 0
  %1213 = vmatpush1.bf16.msra.mxu0 %v877
  %1214 = vmatprep.subr.bf16.mxu0 0
  %1215 = vmatpush1.bf16.msra.mxu0 %v876
  %1216 = vmatprep.subr.bf16.mxu0 0
  %1217 = vmatpush1.bf16.msra.mxu0 %v875
  %1218 = vmatprep.subr.bf16.mxu0 0
  %1219 = vmatpush1.bf16.msra.mxu0 %v874
  %1220 = vmatprep.subr.bf16.mxu0 0
  %1221 = vmatpush1.bf16.msra.mxu0 %v873
  %1222 = vmatprep.subr.bf16.mxu0 0
  %1223 = vmatpush1.bf16.msra.mxu0 %v872
  %1224 = vmatprep.subr.bf16.mxu0 0
  %1225 = vmatpush1.bf16.msra.mxu0 %v871
  %1226 = vmatprep.subr.bf16.mxu0 0
  %1227 = vmatpush2.bf16.msra.mxu0 %v886
  %1228 = vmatprep.subr.bf16.mxu0 0
  %1229 = vmatpush2.bf16.msra.mxu0 %v885
  %1230 = vmatprep.subr.bf16.mxu0 0
  %1231 = vmatpush2.bf16.msra.mxu0 %v884
  %1232 = vmatprep.subr.bf16.mxu0 0
  %1233 = vmatpush2.bf16.msra.mxu0 %v883
  %1234 = vmatprep.subr.bf16.mxu0 0
  %1235 = vmatpush2.bf16.msra.mxu0 %v882
  %1236 = vmatprep.subr.bf16.mxu0 0
  %1237 = vmatpush2.bf16.msra.mxu0 %v881
  %1238 = vmatprep.subr.bf16.mxu0 0
  %1239 = vmatpush2.bf16.msra.mxu0 %v880
  %1240 = vmatprep.subr.bf16.mxu0 0
  %1241 = vmatpush2.bf16.msra.mxu0 %v879
  %1242 = vmatprep.mubr.bf16.mxu0 %v434
  %1243 = vmatmul.mubr.bf16.gmra.mxu0 %v433
  %v1244 = vpop.f32.mrf.mxu0
  %v1245 = vadd.f32 %v1164, %v1244
  %v1246 = vpop.f32.mrf.mxu0
  %v1247 = vpop.f32.mrf.mxu0
  %v1248 = vadd.f32 %v1167, %v1247
  %v1249 = vpop.f32.mrf.mxu0
  %1250 = vmatprep.mubr.bf16.mxu0 %v443
  %1251 = vmatmul.mubr.bf16.gmra.mxu0 %v442
  %v1252 = vpop.f32.mrf.mxu0
  %v1253 = vadd.f32 %v1172, %v1252
  %v1254 = vpop.f32.mrf.mxu0
  %v1255 = vpop.f32.mrf.mxu0
  %v1256 = vadd.f32 %v1175, %v1255
  %v1257 = vpop.f32.mrf.mxu0
  %1258 = vmatprep.mubr.bf16.mxu0 %v452
  %1259 = vmatmul.mubr.bf16.gmra.mxu0 %v451
  %v1260 = vpop.f32.mrf.mxu0
  %v1261 = vadd.f32 %v1180, %v1260
  %v1262 = vpop.f32.mrf.mxu0
  %v1263 = vpop.f32.mrf.mxu0
  %v1264 = vadd.f32 %v1183, %v1263
  %v1265 = vpop.f32.mrf.mxu0
  %1266 = vmatprep.mubr.bf16.mxu0 %v461
  %1267 = vmatmul.mubr.bf16.gmra.mxu0 %v460
  %v1268 = vpop.f32.mrf.mxu0
  %v1269 = vadd.f32 %v1188, %v1268
  %v1270 = vpop.f32.mrf.mxu0
  %v1271 = vpop.f32.mrf.mxu0
  %v1272 = vadd.f32 %v1191, %v1271
  %v1273 = vpop.f32.mrf.mxu0
  %1274 = vmatprep.mubr.bf16.mxu0 %v470
  %1275 = vmatmul.mubr.bf16.gmra.mxu0 %v469
  %v1276 = vpop.f32.mrf.mxu0
  %v1277 = vadd.f32 %v1196, %v1276
  %v1278 = vpop.f32.mrf.mxu0
  %v1279 = vpop.f32.mrf.mxu0
  %v1280 = vadd.f32 %v1199, %v1279
  %v1281 = vpop.f32.mrf.mxu0
  %1282 = vmatprep.mubr.bf16.mxu0 %v479
  %1283 = vmatmul.mubr.bf16.gmra.mxu0 %v478
  %v1284 = vpop.f32.mrf.mxu0
  %v1285 = vadd.f32 %v1204, %v1284
  %v1286 = vpop.f32.mrf.mxu0
  %v1287 = vpop.f32.mrf.mxu0
  %v1288 = vadd.f32 %v1207, %v1287
  %v1289 = vpop.f32.mrf.mxu0
  %1290 = vdwg.mxu0
  %1291 = vmatprep.subr.bf16.mxu0 0
  %1292 = vmatpush1.bf16.msra.mxu0 %v894
  %1293 = vmatprep.subr.bf16.mxu0 0
  %1294 = vmatpush1.bf16.msra.mxu0 %v893
  %1295 = vmatprep.subr.bf16.mxu0 0
  %1296 = vmatpush1.bf16.msra.mxu0 %v892
  %1297 = vmatprep.subr.bf16.mxu0 0
  %1298 = vmatpush1.bf16.msra.mxu0 %v891
  %1299 = vmatprep.subr.bf16.mxu0 0
  %1300 = vmatpush1.bf16.msra.mxu0 %v890
  %1301 = vmatprep.subr.bf16.mxu0 0
  %1302 = vmatpush1.bf16.msra.mxu0 %v889
  %1303 = vmatprep.subr.bf16.mxu0 0
  %1304 = vmatpush1.bf16.msra.mxu0 %v888
  %1305 = vmatprep.subr.bf16.mxu0 0
  %1306 = vmatpush1.bf16.msra.mxu0 %v887
  %1307 = vmatprep.subr.bf16.mxu0 0
  %1308 = vmatpush2.bf16.msra.mxu0 0
  %1309 = vmatprep.subr.bf16.mxu0 0
  %1310 = vmatpush2.bf16.msra.mxu0 0
  %1311 = vmatprep.subr.bf16.mxu0 0
  %1312 = vmatpush2.bf16.msra.mxu0 0
  %1313 = vmatprep.subr.bf16.mxu0 0
  %1314 = vmatpush2.bf16.msra.mxu0 0
  %1315 = vmatprep.subr.bf16.mxu0 0
  %1316 = vmatpush2.bf16.msra.mxu0 0
  %1317 = vmatprep.subr.bf16.mxu0 0
  %1318 = vmatpush2.bf16.msra.mxu0 0
  %1319 = vmatprep.subr.bf16.mxu0 0
  %1320 = vmatpush2.bf16.msra.mxu0 0
  %1321 = vmatprep.subr.bf16.mxu0 0
  %1322 = vmatpush2.bf16.msra.mxu0 0
  %1323 = vmatprep.mubr.bf16.mxu0 0
  %1324 = vmatmul.mubr.bf16.gmra.mxu0 %v435
  %v1325 = vpop.f32.mrf.mxu0
  %v1326 = vadd.f32 %v1245, %v1325
  %v1327 = vpop.f32.mrf.mxu0
  %v1328 = vpop.f32.mrf.mxu0
  %v1329 = vadd.f32 %v1248, %v1328
  %v1330 = vpop.f32.mrf.mxu0
  %1331 = vmatprep.mubr.bf16.mxu0 0
  %1332 = vmatmul.mubr.bf16.gmra.mxu0 %v444
  %v1333 = vpop.f32.mrf.mxu0
  %v1334 = vadd.f32 %v1253, %v1333
  %v1335 = vpop.f32.mrf.mxu0
  %v1336 = vpop.f32.mrf.mxu0
  %v1337 = vadd.f32 %v1256, %v1336
  %v1338 = vpop.f32.mrf.mxu0
  %1339 = vmatprep.mubr.bf16.mxu0 0
  %1340 = vmatmul.mubr.bf16.gmra.mxu0 %v453
  %v1341 = vpop.f32.mrf.mxu0
  %v1342 = vadd.f32 %v1261, %v1341
  %v1343 = vpop.f32.mrf.mxu0
  %v1344 = vpop.f32.mrf.mxu0
  %v1345 = vadd.f32 %v1264, %v1344
  %v1346 = vpop.f32.mrf.mxu0
  %1347 = vmatprep.mubr.bf16.mxu0 0
  %1348 = vmatmul.mubr.bf16.gmra.mxu0 %v462
  %v1349 = vpop.f32.mrf.mxu0
  %v1350 = vadd.f32 %v1269, %v1349
  %v1351 = vpop.f32.mrf.mxu0
  %v1352 = vpop.f32.mrf.mxu0
  %v1353 = vadd.f32 %v1272, %v1352
  %v1354 = vpop.f32.mrf.mxu0
  %1355 = vmatprep.mubr.bf16.mxu0 0
  %1356 = vmatmul.mubr.bf16.gmra.mxu0 %v471
  %v1357 = vpop.f32.mrf.mxu0
  %v1358 = vadd.f32 %v1277, %v1357
  %v1359 = vpop.f32.mrf.mxu0
  %v1360 = vpop.f32.mrf.mxu0
  %v1361 = vadd.f32 %v1280, %v1360
  %v1362 = vpop.f32.mrf.mxu0
  %1363 = vmatprep.mubr.bf16.mxu0 0
  %1364 = vmatmul.mubr.bf16.gmra.mxu0 %v480
  %v1365 = vpop.f32.mrf.mxu0
  %v1366 = vadd.f32 %v1285, %v1365
  %v1367 = vpop.f32.mrf.mxu0
  %v1368 = vpop.f32.mrf.mxu0
  %v1369 = vadd.f32 %v1288, %v1368
  %v1370 = vpop.f32.mrf.mxu0
  %1371 = vdwg.mxu0
  %v1372 = vadd.f32 %v43, %v1326
  %v1373 = vadd.f32 %v44, %v1329
  %v1374 = vadd.f32 %v45, %v1334
  %v1375 = vadd.f32 %v46, %v1337
  %v1376 = vadd.f32 %v47, %v1342
  %v1377 = vadd.f32 %v48, %v1345
  %v1378 = vadd.f32 %v49, %v1350
  %v1379 = vadd.f32 %v50, %v1353
  %v1380 = vadd.f32 %v51, %v1358
  %v1381 = vadd.f32 %v52, %v1361
  %v1382 = vadd.f32 %v53, %v1366
  %v1383 = vadd.f32 %v54, %v1369
  %1384 = vst [vmem:[#allocation2] sm:$0xff] %v1372
  %1385 = vst [vmem:[#allocation2 + $0x8] sm:$0xff] %v1373
  %1386 = vst [vmem:[#allocation2 + $0x10] sm:$0xff] %v1374
  %1387 = vst [vmem:[#allocation2 + $0x18] sm:$0xff] %v1375
  %1388 = vst [vmem:[#allocation2 + $0x20] sm:$0xff] %v1376
  %1389 = vst [vmem:[#allocation2 + $0x28] sm:$0xff] %v1377
  %1390 = vst [vmem:[#allocation2 + $0x30] sm:$0xff] %v1378
  %1391 = vst [vmem:[#allocation2 + $0x38] sm:$0xff] %v1379
  %1392 = vst [vmem:[#allocation2 + $0x40] sm:$0xff] %v1380
  %1393 = vst [vmem:[#allocation2 + $0x48] sm:$0xff] %v1381
  %1394 = vst [vmem:[#allocation2 + $0x50] sm:$0xff] %v1382
  %1395 = vst [vmem:[#allocation2 + $0x58] sm:$0xff] %v1383
  %s1396 = scalar_lea.vmem [#allocation2], 96
  %v1397 = vld [vmem:[%s1396] sm:$0xff]
  %v1398 = vld [vmem:[%s1396 + $0x8] sm:$0xff]
  %v1399 = vld [vmem:[%s1396 + $0x10] sm:$0xff]
  %v1400 = vld [vmem:[%s1396 + $0x18] sm:$0xff]
  %v1401 = vld [vmem:[%s1396 + $0x20] sm:$0xff]
  %v1402 = vld [vmem:[%s1396 + $0x28] sm:$0xff]
  %v1403 = vld [vmem:[%s1396 + $0x30] sm:$0xff]
  %v1404 = vld [vmem:[%s1396 + $0x38] sm:$0xff]
  %v1405 = vld [vmem:[%s1396 + $0x40] sm:$0xff]
  %v1406 = vld [vmem:[%s1396 + $0x48] sm:$0xff]
  %v1407 = vld [vmem:[%s1396 + $0x50] sm:$0xff]
  %v1408 = vld [vmem:[%s1396 + $0x58] sm:$0xff]
  %s1409 = scalar_lea.vmem %s0, 432
  %v1410 = vld [vmem:[%s1409] sm:$0xff]
  %v1411 = vld [vmem:[%s1409 + $0x8] sm:$0xff]
  %v1412 = vld [vmem:[%s1409 + $0x10] sm:$0xff]
  %v1413 = vld [vmem:[%s1409 + $0x18] sm:$0xff]
  %v1414 = vld [vmem:[%s1409 + $0x20] sm:$0xf]
  %v1415 = vld [vmem:[%s1409 + $0x24] sm:$0xff]
  %v1416 = vld [vmem:[%s1409 + $0x2c] sm:$0xff]
  %v1417 = vld [vmem:[%s1409 + $0x34] sm:$0xff]
  %v1418 = vld [vmem:[%s1409 + $0x3c] sm:$0xff]
  %v1419 = vld [vmem:[%s1409 + $0x44] sm:$0xf]
  %v1420 = vld [vmem:[%s1409 + $0x48] sm:$0xff]
  %v1421 = vld [vmem:[%s1409 + $0x50] sm:$0xff]
  %v1422 = vld [vmem:[%s1409 + $0x58] sm:$0xff]
  %v1423 = vld [vmem:[%s1409 + $0x60] sm:$0xff]
  %v1424 = vld [vmem:[%s1409 + $0x68] sm:$0xf]
  %v1425 = vld [vmem:[%s1409 + $0x6c] sm:$0xff]
  %v1426 = vld [vmem:[%s1409 + $0x74] sm:$0xff]
  %v1427 = vld [vmem:[%s1409 + $0x7c] sm:$0xff]
  %v1428 = vld [vmem:[%s1409 + $0x84] sm:$0xff]
  %v1429 = vld [vmem:[%s1409 + $0x8c] sm:$0xf]
  %v1430 = vld [vmem:[%s1409 + $0x90] sm:$0xff]
  %v1431 = vld [vmem:[%s1409 + $0x98] sm:$0xff]
  %v1432 = vld [vmem:[%s1409 + $0xa0] sm:$0xff]
  %v1433 = vld [vmem:[%s1409 + $0xa8] sm:$0xff]
  %v1434 = vld [vmem:[%s1409 + $0xb0] sm:$0xf]
  %v1435 = vld [vmem:[%s1409 + $0xb4] sm:$0xff]
  %v1436 = vld [vmem:[%s1409 + $0xbc] sm:$0xff]
  %v1437 = vld [vmem:[%s1409 + $0xc4] sm:$0xff]
  %v1438 = vld [vmem:[%s1409 + $0xcc] sm:$0xff]
  %v1439 = vld [vmem:[%s1409 + $0xd4] sm:$0xf]
  %v1440 = vld [vmem:[%s1409 + $0xd8] sm:$0xff]
  %v1441 = vld [vmem:[%s1409 + $0xe0] sm:$0xff]
  %v1442 = vld [vmem:[%s1409 + $0xe8] sm:$0xff]
  %v1443 = vld [vmem:[%s1409 + $0xf0] sm:$0xff]
  %v1444 = vld [vmem:[%s1409 + $0xf8] sm:$0xf]
  %v1445 = vld [vmem:[%s1409 + $0xfc] sm:$0xff]
  %v1446 = vld [vmem:[%s1409 + $0x104] sm:$0xff]
  %v1447 = vld [vmem:[%s1409 + $0x10c] sm:$0xff]
  %v1448 = vld [vmem:[%s1409 + $0x114] sm:$0xff]
  %v1449 = vld [vmem:[%s1409 + $0x11c] sm:$0xf]
  %v1450 = vld [vmem:[%s1409 + $0x120] sm:$0xff]
  %v1451 = vld [vmem:[%s1409 + $0x128] sm:$0xff]
  %v1452 = vld [vmem:[%s1409 + $0x130] sm:$0xff]
  %v1453 = vld [vmem:[%s1409 + $0x138] sm:$0xff]
  %v1454 = vld [vmem:[%s1409 + $0x140] sm:$0xf]
  %v1455 = vld [vmem:[%s1409 + $0x144] sm:$0xff]
  %v1456 = vld [vmem:[%s1409 + $0x14c] sm:$0xff]
  %v1457 = vld [vmem:[%s1409 + $0x154] sm:$0xff]
  %v1458 = vld [vmem:[%s1409 + $0x15c] sm:$0xff]
  %v1459 = vld [vmem:[%s1409 + $0x164] sm:$0xf]
  %v1460 = vld [vmem:[%s1409 + $0x168] sm:$0xff]
  %v1461 = vld [vmem:[%s1409 + $0x170] sm:$0xff]
  %v1462 = vld [vmem:[%s1409 + $0x178] sm:$0xff]
  %v1463 = vld [vmem:[%s1409 + $0x180] sm:$0xff]
  %v1464 = vld [vmem:[%s1409 + $0x188] sm:$0xf]
  %v1465 = vld [vmem:[%s1409 + $0x18c] sm:$0xff]
  %v1466 = vld [vmem:[%s1409 + $0x194] sm:$0xff]
  %v1467 = vld [vmem:[%s1409 + $0x19c] sm:$0xff]
  %v1468 = vld [vmem:[%s1409 + $0x1a4] sm:$0xff]
  %v1469 = vld [vmem:[%s1409 + $0x1ac] sm:$0xf]
  %v1470 = vld [vmem:[%s1] sm:$0xf]
  %v1471 = vld [vmem:[%s1 + $0x4] sm:$0xf]
  %v1472 = vld [vmem:[%s1 + $0x8] sm:$0xf]
  %v1473 = vld [vmem:[%s1 + $0xc] sm:$0xf]
  %v1474 = vld [vmem:[%s1 + $0x10] sm:$0xf]
  %v1475 = vld [vmem:[%s1 + $0x14] sm:$0xf]
  %v1476 = vld [vmem:[%s1 + $0x18] sm:$0xf]
  %v1477 = vld [vmem:[%s1 + $0x1c] sm:$0xf]
  %v1478 = vld [vmem:[%s1 + $0x20] sm:$0xf]
  %v1479 = vld [vmem:[%s1 + $0x24] sm:$0xf]
  %v1480 = vld [vmem:[%s1 + $0x28] sm:$0xf]
  %v1481 = vld [vmem:[%s1 + $0x2c] sm:$0xf]
  %v1482 = vld [vmem:[%s1 + $0x30] sm:$0xf]
  %v1483 = vld [vmem:[%s1 + $0x34] sm:$0xf]
  %v1484 = vld [vmem:[%s1 + $0x38] sm:$0xf]
  %v1485 = vld [vmem:[%s1 + $0x3c] sm:$0xf]
  %v1486 = vld [vmem:[%s1 + $0x40] sm:$0xf]
  %v1487 = vld [vmem:[%s1 + $0x44] sm:$0xf]
  %v1488 = vld [vmem:[%s1 + $0x48] sm:$0xf]
  %v1489 = vld [vmem:[%s1 + $0x4c] sm:$0xf]
  %v1490 = vld [vmem:[%s1 + $0x50] sm:$0xf]
  %v1491 = vld [vmem:[%s1 + $0x54] sm:$0xf]
  %v1492 = vld [vmem:[%s1 + $0x58] sm:$0xf]
  %v1493 = vld [vmem:[%s1 + $0x5c] sm:$0xf]
  %v1494 = vld [vmem:[%s1 + $0x60] sm:$0xf]
  %v1495 = vld [vmem:[%s1 + $0x64] sm:$0xf]
  %v1496 = vld [vmem:[%s1 + $0x68] sm:$0xf]
  %v1497 = vld [vmem:[%s1 + $0x6c] sm:$0xf]
  %v1498 = vld [vmem:[%s1 + $0x70] sm:$0xf]
  %v1499 = vld [vmem:[%s1 + $0x74] sm:$0xf]
  %v1500 = vld [vmem:[%s1 + $0x78] sm:$0xf]
  %v1501 = vld [vmem:[%s1 + $0x7c] sm:$0xf]
  %v1502 = vld [vmem:[%s1 + $0x80] sm:$0xf]
  %v1503 = vld [vmem:[%s1 + $0x84] sm:$0xf]
  %v1504 = vld [vmem:[%s1 + $0x88] sm:$0xf]
  %v1505 = vld [vmem:[%s1 + $0x8c] sm:$0xf]
  %v1506 = vld [vmem:[%s1 + $0x90] sm:$0xf]
  %v1507 = vld [vmem:[%s1 + $0x94] sm:$0xf]
  %v1508 = vld [vmem:[%s1 + $0x98] sm:$0xf]
  %v1509 = vld [vmem:[%s1 + $0x9c] sm:$0xf]
  %v1510 = vld [vmem:[%s1 + $0xa0] sm:$0xf]
  %v1511 = vld [vmem:[%s1 + $0xa4] sm:$0xf]
  %v1512 = vld [vmem:[%s1 + $0xa8] sm:$0xf]
  %v1513 = vld [vmem:[%s1 + $0xac] sm:$0xf]
  %v1514 = vld [vmem:[%s1 + $0xb0] sm:$0xf]
  %v1515 = vld [vmem:[%s1 + $0xb4] sm:$0xf]
  %v1516 = vld [vmem:[%s1 + $0xb8] sm:$0xf]
  %v1517 = vld [vmem:[%s1 + $0xbc] sm:$0xf]
  %v1518 = vld [vmem:[%s1 + $0xc0] sm:$0xf]
  %v1519 = vld [vmem:[%s1 + $0xc4] sm:$0xf]
  %v1520 = vld [vmem:[%s1 + $0xc8] sm:$0xf]
  %v1521 = vld [vmem:[%s1 + $0xcc] sm:$0xf]
  %v1522 = vld [vmem:[%s1 + $0xd0] sm:$0xf]
  %v1523 = vld [vmem:[%s1 + $0xd4] sm:$0xf]
  %v1524 = vld [vmem:[%s1 + $0xd8] sm:$0xf]
  %v1525 = vld [vmem:[%s1 + $0xdc] sm:$0xf]
  %v1526 = vld [vmem:[%s1 + $0xe0] sm:$0xf]
  %v1527 = vld [vmem:[%s1 + $0xe4] sm:$0xf]
  %v1528 = vld [vmem:[%s1 + $0xe8] sm:$0xf]
  %v1529 = vld [vmem:[%s1 + $0xec] sm:$0xf]
  %v1530 = vld [vmem:[%s1 + $0xf0] sm:$0xf]
  %v1531 = vld [vmem:[%s1 + $0xf4] sm:$0xf]
  %v1532 = vld [vmem:[%s1 + $0xf8] sm:$0xf]
  %v1533 = vld [vmem:[%s1 + $0xfc] sm:$0xf]
  %v1534 = vld [vmem:[%s1 + $0x100] sm:$0xf]
  %v1535 = vld [vmem:[%s1 + $0x104] sm:$0xf]
  %v1536 = vld [vmem:[%s1 + $0x108] sm:$0xf]
  %v1537 = vld [vmem:[%s1 + $0x10c] sm:$0xf]
  %v1538 = vld [vmem:[%s1 + $0x110] sm:$0xf]
  %v1539 = vld [vmem:[%s1 + $0x114] sm:$0xf]
  %v1540 = vld [vmem:[%s1 + $0x118] sm:$0xf]
  %v1541 = vld [vmem:[%s1 + $0x11c] sm:$0xf]
  %v1542 = vld [vmem:[%s1 + $0x120] sm:$0xf]
  %v1543 = vld [vmem:[%s1 + $0x124] sm:$0xf]
  %v1544 = vld [vmem:[%s1 + $0x128] sm:$0xf]
  %v1545 = vld [vmem:[%s1 + $0x12c] sm:$0xf]
  %v1546 = vld [vmem:[%s1 + $0x130] sm:$0xf]
  %v1547 = vld [vmem:[%s1 + $0x134] sm:$0xf]
  %v1548 = vld [vmem:[%s1 + $0x138] sm:$0xf]
  %v1549 = vld [vmem:[%s1 + $0x13c] sm:$0xf]
  %v1550 = vld [vmem:[%s1 + $0x140] sm:$0xf]
  %v1551 = vld [vmem:[%s1 + $0x144] sm:$0xf]
  %v1552 = vld [vmem:[%s1 + $0x148] sm:$0xf]
  %v1553 = vld [vmem:[%s1 + $0x14c] sm:$0xf]
  %v1554 = vld [vmem:[%s1 + $0x150] sm:$0xf]
  %v1555 = vld [vmem:[%s1 + $0x154] sm:$0xf]
  %v1556 = vld [vmem:[%s1 + $0x158] sm:$0xf]
  %v1557 = vld [vmem:[%s1 + $0x15c] sm:$0xf]
  %v1558 = vld [vmem:[%s1 + $0x160] sm:$0xf]
  %v1559 = vld [vmem:[%s1 + $0x164] sm:$0xf]
  %v1560 = vld [vmem:[%s1 + $0x168] sm:$0xf]
  %v1561 = vld [vmem:[%s1 + $0x16c] sm:$0xf]
  %v1562 = vld [vmem:[%s1 + $0x170] sm:$0xf]
  %v1563 = vld [vmem:[%s1 + $0x174] sm:$0xf]
  %v1564 = vld [vmem:[%s1 + $0x178] sm:$0xf]
  %v1565 = vld [vmem:[%s1 + $0x17c] sm:$0xf]
  %v1566 = vld [vmem:[%s1 + $0x180] sm:$0xf]
  %v1567 = vld [vmem:[%s1 + $0x184] sm:$0xf]
  %v1568 = vld [vmem:[%s1 + $0x188] sm:$0xf]
  %v1569 = vld [vmem:[%s1 + $0x18c] sm:$0xf]
  %v1570 = vld [vmem:[%s1 + $0x190] sm:$0xf]
  %v1571 = vld [vmem:[%s1 + $0x194] sm:$0xf]
  %v1572 = vld [vmem:[%s1 + $0x198] sm:$0xf]
  %v1573 = vld [vmem:[%s1 + $0x19c] sm:$0xf]
  %v1574 = vld [vmem:[%s1 + $0x1a0] sm:$0xf]
  %v1575 = vld [vmem:[%s1 + $0x1a4] sm:$0xf]
  %v1576 = vld [vmem:[%s1 + $0x1a8] sm:$0xf]
  %v1577 = vld [vmem:[%s1 + $0x1ac] sm:$0xf]
  %v1578 = vld [vmem:[%s1 + $0x1b0] sm:$0xf]
  %v1579 = vld [vmem:[%s1 + $0x1b4] sm:$0xf]
  %v1580 = vld [vmem:[%s1 + $0x1b8] sm:$0xf]
  %v1581 = vld [vmem:[%s1 + $0x1bc] sm:$0xf]
  %v1582 = vld [vmem:[%s1 + $0x1c0] sm:$0xf]
  %v1583 = vld [vmem:[%s1 + $0x1c4] sm:$0xf]
  %v1584 = vld [vmem:[%s1 + $0x1c8] sm:$0xf]
  %v1585 = vld [vmem:[%s1 + $0x1cc] sm:$0xf]
  %v1586 = vld [vmem:[%s1 + $0x1d0] sm:$0xf]
  %v1587 = vld [vmem:[%s1 + $0x1d4] sm:$0xf]
  %v1588 = vld [vmem:[%s1 + $0x1d8] sm:$0xf]
  %v1589 = vld [vmem:[%s1 + $0x1dc] sm:$0xf]
  %v1590 = vld [vmem:[%s1 + $0x1e0] sm:$0xf]
  %v1591 = vld [vmem:[%s1 + $0x1e4] sm:$0xf]
  %v1592 = vld [vmem:[%s1 + $0x1e8] sm:$0xf]
  %v1593 = vld [vmem:[%s1 + $0x1ec] sm:$0xf]
  %v1594 = vld [vmem:[%s1 + $0x1f0] sm:$0xf]
  %v1595 = vld [vmem:[%s1 + $0x1f4] sm:$0xf]
  %v1596 = vld [vmem:[%s1 + $0x1f8] sm:$0xf]
  %v1597 = vld [vmem:[%s1 + $0x1fc] sm:$0xf]
  %v1598 = vld [vmem:[%s1 + $0x200] sm:$0xf]
  %v1599 = vld [vmem:[%s1 + $0x204] sm:$0xf]
  %v1600 = vld [vmem:[%s1 + $0x208] sm:$0xf]
  %v1601 = vld [vmem:[%s1 + $0x20c] sm:$0xf]
  %v1602 = vld [vmem:[%s1 + $0x210] sm:$0xf]
  %v1603 = vld [vmem:[%s1 + $0x214] sm:$0xf]
  %v1604 = vld [vmem:[%s1 + $0x218] sm:$0xf]
  %v1605 = vld [vmem:[%s1 + $0x21c] sm:$0xf]
  %v1606 = vld [vmem:[%s1 + $0x220] sm:$0xf]
  %v1607 = vld [vmem:[%s1 + $0x224] sm:$0xf]
  %v1608 = vld [vmem:[%s1 + $0x228] sm:$0xf]
  %v1609 = vld [vmem:[%s1 + $0x22c] sm:$0xf]
  %v1610 = vld [vmem:[%s1 + $0x230] sm:$0xf]
  %v1611 = vld [vmem:[%s1 + $0x234] sm:$0xf]
  %v1612 = vld [vmem:[%s1 + $0x238] sm:$0xf]
  %v1613 = vld [vmem:[%s1 + $0x23c] sm:$0xf]
  %v1674 = vunpack.c.l.b16 %v1410
  %v1675 = vunpack.c.h.b16 %v1410
  %v1676 = vunpack.c.l.b16 %v1411
  %v1677 = vunpack.c.h.b16 %v1411
  %v1678 = vunpack.c.l.b16 %v1412
  %v1679 = vunpack.c.h.b16 %v1412
  %v1680 = vunpack.c.l.b16 %v1413
  %v1681 = vunpack.c.h.b16 %v1413
  %v1682 = vunpack.c.l.b16 %v1414
  %v1683 = vunpack.c.l.b16 %v1415
  %v1684 = vunpack.c.h.b16 %v1415
  %v1685 = vunpack.c.l.b16 %v1416
  %v1686 = vunpack.c.h.b16 %v1416
  %v1687 = vunpack.c.l.b16 %v1417
  %v1688 = vunpack.c.h.b16 %v1417
  %v1689 = vunpack.c.l.b16 %v1418
  %v1690 = vunpack.c.h.b16 %v1418
  %v1691 = vunpack.c.l.b16 %v1419
  %v1692 = vunpack.c.l.b16 %v1420
  %v1693 = vunpack.c.h.b16 %v1420
  %v1694 = vunpack.c.l.b16 %v1421
  %v1695 = vunpack.c.h.b16 %v1421
  %v1696 = vunpack.c.l.b16 %v1422
  %v1697 = vunpack.c.h.b16 %v1422
  %v1698 = vunpack.c.l.b16 %v1423
  %v1699 = vunpack.c.h.b16 %v1423
  %v1700 = vunpack.c.l.b16 %v1424
  %v1701 = vunpack.c.l.b16 %v1425
  %v1702 = vunpack.c.h.b16 %v1425
  %v1703 = vunpack.c.l.b16 %v1426
  %v1704 = vunpack.c.h.b16 %v1426
  %v1705 = vunpack.c.l.b16 %v1427
  %v1706 = vunpack.c.h.b16 %v1427
  %v1707 = vunpack.c.l.b16 %v1428
  %v1708 = vunpack.c.h.b16 %v1428
  %v1709 = vunpack.c.l.b16 %v1429
  %v1710 = vunpack.c.l.b16 %v1430
  %v1711 = vunpack.c.h.b16 %v1430
  %v1712 = vunpack.c.l.b16 %v1431
  %v1713 = vunpack.c.h.b16 %v1431
  %v1714 = vunpack.c.l.b16 %v1432
  %v1715 = vunpack.c.h.b16 %v1432
  %v1716 = vunpack.c.l.b16 %v1433
  %v1717 = vunpack.c.h.b16 %v1433
  %v1718 = vunpack.c.l.b16 %v1434
  %v1719 = vunpack.c.l.b16 %v1435
  %v1720 = vunpack.c.h.b16 %v1435
  %v1721 = vunpack.c.l.b16 %v1436
  %v1722 = vunpack.c.h.b16 %v1436
  %v1723 = vunpack.c.l.b16 %v1437
  %v1724 = vunpack.c.h.b16 %v1437
  %v1725 = vunpack.c.l.b16 %v1438
  %v1726 = vunpack.c.h.b16 %v1438
  %v1727 = vunpack.c.l.b16 %v1439
  %v1728 = vunpack.c.l.b16 %v1440
  %v1729 = vunpack.c.h.b16 %v1440
  %v1730 = vunpack.c.l.b16 %v1441
  %v1731 = vunpack.c.h.b16 %v1441
  %v1732 = vunpack.c.l.b16 %v1442
  %v1733 = vunpack.c.h.b16 %v1442
  %v1734 = vunpack.c.l.b16 %v1443
  %v1735 = vunpack.c.h.b16 %v1443
  %v1736 = vunpack.c.l.b16 %v1444
  %v1737 = vunpack.c.l.b16 %v1445
  %v1738 = vunpack.c.h.b16 %v1445
  %v1739 = vunpack.c.l.b16 %v1446
  %v1740 = vunpack.c.h.b16 %v1446
  %v1741 = vunpack.c.l.b16 %v1447
  %v1742 = vunpack.c.h.b16 %v1447
  %v1743 = vunpack.c.l.b16 %v1448
  %v1744 = vunpack.c.h.b16 %v1448
  %v1745 = vunpack.c.l.b16 %v1449
  %v1746 = vunpack.c.l.b16 %v1450
  %v1747 = vunpack.c.h.b16 %v1450
  %v1748 = vunpack.c.l.b16 %v1451
  %v1749 = vunpack.c.h.b16 %v1451
  %v1750 = vunpack.c.l.b16 %v1452
  %v1751 = vunpack.c.h.b16 %v1452
  %v1752 = vunpack.c.l.b16 %v1453
  %v1753 = vunpack.c.h.b16 %v1453
  %v1754 = vunpack.c.l.b16 %v1454
  %v1755 = vunpack.c.l.b16 %v1455
  %v1756 = vunpack.c.h.b16 %v1455
  %v1757 = vunpack.c.l.b16 %v1456
  %v1758 = vunpack.c.h.b16 %v1456
  %v1759 = vunpack.c.l.b16 %v1457
  %v1760 = vunpack.c.h.b16 %v1457
  %v1761 = vunpack.c.l.b16 %v1458
  %v1762 = vunpack.c.h.b16 %v1458
  %v1763 = vunpack.c.l.b16 %v1459
  %v1764 = vunpack.c.l.b16 %v1460
  %v1765 = vunpack.c.h.b16 %v1460
  %v1766 = vunpack.c.l.b16 %v1461
  %v1767 = vunpack.c.h.b16 %v1461
  %v1768 = vunpack.c.l.b16 %v1462
  %v1769 = vunpack.c.h.b16 %v1462
  %v1770 = vunpack.c.l.b16 %v1463
  %v1771 = vunpack.c.h.b16 %v1463
  %v1772 = vunpack.c.l.b16 %v1464
  %v1773 = vunpack.c.l.b16 %v1465
  %v1774 = vunpack.c.h.b16 %v1465
  %v1775 = vunpack.c.l.b16 %v1466
  %v1776 = vunpack.c.h.b16 %v1466
  %v1777 = vunpack.c.l.b16 %v1467
  %v1778 = vunpack.c.h.b16 %v1467
  %v1779 = vunpack.c.l.b16 %v1468
  %v1780 = vunpack.c.h.b16 %v1468
  %v1781 = vunpack.c.l.b16 %v1469
  %v1782 = vpack.c.b16 %v1683, %v1674
  %v1783 = vpack.c.b16 %v1684, %v1675
  %v1784 = vpack.c.b16 %v1685, %v1676
  %v1785 = vpack.c.b16 %v1686, %v1677
  %v1786 = vpack.c.b16 %v1687, %v1678
  %v1787 = vpack.c.b16 %v1688, %v1679
  %v1788 = vpack.c.b16 %v1689, %v1680
  %v1789 = vpack.c.b16 %v1690, %v1681
  %v1790 = vpack.c.b16 %v1691, %v1682
  %v1791 = vpack.c.b16 %v1701, %v1692
  %v1792 = vpack.c.b16 %v1702, %v1693
  %v1793 = vpack.c.b16 %v1703, %v1694
  %v1794 = vpack.c.b16 %v1704, %v1695
  %v1795 = vpack.c.b16 %v1705, %v1696
  %v1796 = vpack.c.b16 %v1706, %v1697
  %v1797 = vpack.c.b16 %v1707, %v1698
  %v1798 = vpack.c.b16 %v1708, %v1699
  %v1799 = vpack.c.b16 %v1709, %v1700
  %v1800 = vpack.c.b16 %v1719, %v1710
  %v1801 = vpack.c.b16 %v1720, %v1711
  %v1802 = vpack.c.b16 %v1721, %v1712
  %v1803 = vpack.c.b16 %v1722, %v1713
  %v1804 = vpack.c.b16 %v1723, %v1714
  %v1805 = vpack.c.b16 %v1724, %v1715
  %v1806 = vpack.c.b16 %v1725, %v1716
  %v1807 = vpack.c.b16 %v1726, %v1717
  %v1808 = vpack.c.b16 %v1727, %v1718
  %v1809 = vpack.c.b16 %v1737, %v1728
  %v1810 = vpack.c.b16 %v1738, %v1729
  %v1811 = vpack.c.b16 %v1739, %v1730
  %v1812 = vpack.c.b16 %v1740, %v1731
  %v1813 = vpack.c.b16 %v1741, %v1732
  %v1814 = vpack.c.b16 %v1742, %v1733
  %v1815 = vpack.c.b16 %v1743, %v1734
  %v1816 = vpack.c.b16 %v1744, %v1735
  %v1817 = vpack.c.b16 %v1745, %v1736
  %v1818 = vpack.c.b16 %v1755, %v1746
  %v1819 = vpack.c.b16 %v1756, %v1747
  %v1820 = vpack.c.b16 %v1757, %v1748
  %v1821 = vpack.c.b16 %v1758, %v1749
  %v1822 = vpack.c.b16 %v1759, %v1750
  %v1823 = vpack.c.b16 %v1760, %v1751
  %v1824 = vpack.c.b16 %v1761, %v1752
  %v1825 = vpack.c.b16 %v1762, %v1753
  %v1826 = vpack.c.b16 %v1763, %v1754
  %v1827 = vpack.c.b16 %v1773, %v1764
  %v1828 = vpack.c.b16 %v1774, %v1765
  %v1829 = vpack.c.b16 %v1775, %v1766
  %v1830 = vpack.c.b16 %v1776, %v1767
  %v1831 = vpack.c.b16 %v1777, %v1768
  %v1832 = vpack.c.b16 %v1778, %v1769
  %v1833 = vpack.c.b16 %v1779, %v1770
  %v1834 = vpack.c.b16 %v1780, %v1771
  %v1835 = vpack.c.b16 %v1781, %v1772
  %v2034 = vunpack.c.l.b16 %v1470
  %v2035 = vunpack.c.l.b16 %v1471
  %v2036 = vunpack.c.l.b16 %v1472
  %v2037 = vunpack.c.l.b16 %v1473
  %v2038 = vunpack.c.l.b16 %v1474
  %v2039 = vunpack.c.l.b16 %v1475
  %v2040 = vunpack.c.l.b16 %v1476
  %v2041 = vunpack.c.l.b16 %v1477
  %v2042 = vunpack.c.l.b16 %v1478
  %v2043 = vunpack.c.l.b16 %v1479
  %v2044 = vunpack.c.l.b16 %v1480
  %v2045 = vunpack.c.l.b16 %v1481
  %v2046 = vunpack.c.l.b16 %v1482
  %v2047 = vunpack.c.l.b16 %v1483
  %v2048 = vunpack.c.l.b16 %v1484
  %v2049 = vunpack.c.l.b16 %v1485
  %v2050 = vunpack.c.l.b16 %v1486
  %v2051 = vunpack.c.l.b16 %v1487
  %v2052 = vunpack.c.l.b16 %v1488
  %v2053 = vunpack.c.l.b16 %v1489
  %v2054 = vunpack.c.l.b16 %v1490
  %v2055 = vunpack.c.l.b16 %v1491
  %v2056 = vunpack.c.l.b16 %v1492
  %v2057 = vunpack.c.l.b16 %v1493
  %v2058 = vunpack.c.l.b16 %v1494
  %v2059 = vunpack.c.l.b16 %v1495
  %v2060 = vunpack.c.l.b16 %v1496
  %v2061 = vunpack.c.l.b16 %v1497
  %v2062 = vunpack.c.l.b16 %v1498
  %v2063 = vunpack.c.l.b16 %v1499
  %v2064 = vunpack.c.l.b16 %v1500
  %v2065 = vunpack.c.l.b16 %v1501
  %v2066 = vunpack.c.l.b16 %v1502
  %v2067 = vunpack.c.l.b16 %v1503
  %v2068 = vunpack.c.l.b16 %v1504
  %v2069 = vunpack.c.l.b16 %v1505
  %v2070 = vunpack.c.l.b16 %v1506
  %v2071 = vunpack.c.l.b16 %v1507
  %v2072 = vunpack.c.l.b16 %v1508
  %v2073 = vunpack.c.l.b16 %v1509
  %v2074 = vunpack.c.l.b16 %v1510
  %v2075 = vunpack.c.l.b16 %v1511
  %v2076 = vunpack.c.l.b16 %v1512
  %v2077 = vunpack.c.l.b16 %v1513
  %v2078 = vunpack.c.l.b16 %v1514
  %v2079 = vunpack.c.l.b16 %v1515
  %v2080 = vunpack.c.l.b16 %v1516
  %v2081 = vunpack.c.l.b16 %v1517
  %v2082 = vunpack.c.l.b16 %v1518
  %v2083 = vunpack.c.l.b16 %v1519
  %v2084 = vunpack.c.l.b16 %v1520
  %v2085 = vunpack.c.l.b16 %v1521
  %v2086 = vunpack.c.l.b16 %v1522
  %v2087 = vunpack.c.l.b16 %v1523
  %v2088 = vunpack.c.l.b16 %v1524
  %v2089 = vunpack.c.l.b16 %v1525
  %v2090 = vunpack.c.l.b16 %v1526
  %v2091 = vunpack.c.l.b16 %v1527
  %v2092 = vunpack.c.l.b16 %v1528
  %v2093 = vunpack.c.l.b16 %v1529
  %v2094 = vunpack.c.l.b16 %v1530
  %v2095 = vunpack.c.l.b16 %v1531
  %v2096 = vunpack.c.l.b16 %v1532
  %v2097 = vunpack.c.l.b16 %v1533
  %v2098 = vunpack.c.l.b16 %v1534
  %v2099 = vunpack.c.l.b16 %v1535
  %v2100 = vunpack.c.l.b16 %v1536
  %v2101 = vunpack.c.l.b16 %v1537
  %v2102 = vunpack.c.l.b16 %v1538
  %v2103 = vunpack.c.l.b16 %v1539
  %v2104 = vunpack.c.l.b16 %v1540
  %v2105 = vunpack.c.l.b16 %v1541
  %v2106 = vunpack.c.l.b16 %v1542
  %v2107 = vunpack.c.l.b16 %v1543
  %v2108 = vunpack.c.l.b16 %v1544
  %v2109 = vunpack.c.l.b16 %v1545
  %v2110 = vunpack.c.l.b16 %v1546
  %v2111 = vunpack.c.l.b16 %v1547
  %v2112 = vunpack.c.l.b16 %v1548
  %v2113 = vunpack.c.l.b16 %v1549
  %v2114 = vunpack.c.l.b16 %v1550
  %v2115 = vunpack.c.l.b16 %v1551
  %v2116 = vunpack.c.l.b16 %v1552
  %v2117 = vunpack.c.l.b16 %v1553
  %v2118 = vunpack.c.l.b16 %v1554
  %v2119 = vunpack.c.l.b16 %v1555
  %v2120 = vunpack.c.l.b16 %v1556
  %v2121 = vunpack.c.l.b16 %v1557
  %v2122 = vunpack.c.l.b16 %v1558
  %v2123 = vunpack.c.l.b16 %v1559
  %v2124 = vunpack.c.l.b16 %v1560
  %v2125 = vunpack.c.l.b16 %v1561
  %v2126 = vunpack.c.l.b16 %v1562
  %v2127 = vunpack.c.l.b16 %v1563
  %v2128 = vunpack.c.l.b16 %v1564
  %v2129 = vunpack.c.l.b16 %v1565
  %v2130 = vunpack.c.l.b16 %v1566
  %v2131 = vunpack.c.l.b16 %v1567
  %v2132 = vunpack.c.l.b16 %v1568
  %v2133 = vunpack.c.l.b16 %v1569
  %v2134 = vunpack.c.l.b16 %v1570
  %v2135 = vunpack.c.l.b16 %v1571
  %v2136 = vunpack.c.l.b16 %v1572
  %v2137 = vunpack.c.l.b16 %v1573
  %v2138 = vunpack.c.l.b16 %v1574
  %v2139 = vunpack.c.l.b16 %v1575
  %v2140 = vunpack.c.l.b16 %v1576
  %v2141 = vunpack.c.l.b16 %v1577
  %v2142 = vunpack.c.l.b16 %v1578
  %v2143 = vunpack.c.l.b16 %v1579
  %v2144 = vunpack.c.l.b16 %v1580
  %v2145 = vunpack.c.l.b16 %v1581
  %v2146 = vunpack.c.l.b16 %v1582
  %v2147 = vunpack.c.l.b16 %v1583
  %v2148 = vunpack.c.l.b16 %v1584
  %v2149 = vunpack.c.l.b16 %v1585
  %v2150 = vunpack.c.l.b16 %v1586
  %v2151 = vunpack.c.l.b16 %v1587
  %v2152 = vunpack.c.l.b16 %v1588
  %v2153 = vunpack.c.l.b16 %v1589
  %v2154 = vunpack.c.l.b16 %v1590
  %v2155 = vunpack.c.l.b16 %v1591
  %v2156 = vunpack.c.l.b16 %v1592
  %v2157 = vunpack.c.l.b16 %v1593
  %v2158 = vunpack.c.l.b16 %v1594
  %v2159 = vunpack.c.l.b16 %v1595
  %v2160 = vunpack.c.l.b16 %v1596
  %v2161 = vunpack.c.l.b16 %v1597
  %v2162 = vunpack.c.l.b16 %v1598
  %v2163 = vunpack.c.l.b16 %v1599
  %v2164 = vunpack.c.l.b16 %v1600
  %v2165 = vunpack.c.l.b16 %v1601
  %v2166 = vunpack.c.l.b16 %v1602
  %v2167 = vunpack.c.l.b16 %v1603
  %v2168 = vunpack.c.l.b16 %v1604
  %v2169 = vunpack.c.l.b16 %v1605
  %v2170 = vunpack.c.l.b16 %v1606
  %v2171 = vunpack.c.l.b16 %v1607
  %v2172 = vunpack.c.l.b16 %v1608
  %v2173 = vunpack.c.l.b16 %v1609
  %v2174 = vunpack.c.l.b16 %v1610
  %v2175 = vunpack.c.l.b16 %v1611
  %v2176 = vunpack.c.l.b16 %v1612
  %v2177 = vunpack.c.l.b16 %v1613
  %v2178 = vpack.c.b16 %v2035, %v2034
  %v2179 = vpack.c.b16 %v2037, %v2036
  %v2180 = vpack.c.b16 %v2039, %v2038
  %v2181 = vpack.c.b16 %v2041, %v2040
  %v2182 = vpack.c.b16 %v2043, %v2042
  %v2183 = vpack.c.b16 %v2045, %v2044
  %v2184 = vpack.c.b16 %v2047, %v2046
  %v2185 = vpack.c.b16 %v2049, %v2048
  %v2186 = vpack.c.b16 %v2051, %v2050
  %v2187 = vpack.c.b16 %v2053, %v2052
  %v2188 = vpack.c.b16 %v2055, %v2054
  %v2189 = vpack.c.b16 %v2057, %v2056
  %v2190 = vpack.c.b16 %v2059, %v2058
  %v2191 = vpack.c.b16 %v2061, %v2060
  %v2192 = vpack.c.b16 %v2063, %v2062
  %v2193 = vpack.c.b16 %v2065, %v2064
  %v2194 = vpack.c.b16 %v2067, %v2066
  %v2195 = vpack.c.b16 %v2069, %v2068
  %v2196 = vpack.c.b16 %v2071, %v2070
  %v2197 = vpack.c.b16 %v2073, %v2072
  %v2198 = vpack.c.b16 %v2075, %v2074
  %v2199 = vpack.c.b16 %v2077, %v2076
  %v2200 = vpack.c.b16 %v2079, %v2078
  %v2201 = vpack.c.b16 %v2081, %v2080
  %v2202 = vpack.c.b16 %v2083, %v2082
  %v2203 = vpack.c.b16 %v2085, %v2084
  %v2204 = vpack.c.b16 %v2087, %v2086
  %v2205 = vpack.c.b16 %v2089, %v2088
  %v2206 = vpack.c.b16 %v2091, %v2090
  %v2207 = vpack.c.b16 %v2093, %v2092
  %v2208 = vpack.c.b16 %v2095, %v2094
  %v2209 = vpack.c.b16 %v2097, %v2096
  %v2210 = vpack.c.b16 %v2099, %v2098
  %v2211 = vpack.c.b16 %v2101, %v2100
  %v2212 = vpack.c.b16 %v2103, %v2102
  %v2213 = vpack.c.b16 %v2105, %v2104
  %v2214 = vpack.c.b16 %v2107, %v2106
  %v2215 = vpack.c.b16 %v2109, %v2108
  %v2216 = vpack.c.b16 %v2111, %v2110
  %v2217 = vpack.c.b16 %v2113, %v2112
  %v2218 = vpack.c.b16 %v2115, %v2114
  %v2219 = vpack.c.b16 %v2117, %v2116
  %v2220 = vpack.c.b16 %v2119, %v2118
  %v2221 = vpack.c.b16 %v2121, %v2120
  %v2222 = vpack.c.b16 %v2123, %v2122
  %v2223 = vpack.c.b16 %v2125, %v2124
  %v2224 = vpack.c.b16 %v2127, %v2126
  %v2225 = vpack.c.b16 %v2129, %v2128
  %v2226 = vpack.c.b16 %v2131, %v2130
  %v2227 = vpack.c.b16 %v2133, %v2132
  %v2228 = vpack.c.b16 %v2135, %v2134
  %v2229 = vpack.c.b16 %v2137, %v2136
  %v2230 = vpack.c.b16 %v2139, %v2138
  %v2231 = vpack.c.b16 %v2141, %v2140
  %v2232 = vpack.c.b16 %v2143, %v2142
  %v2233 = vpack.c.b16 %v2145, %v2144
  %v2234 = vpack.c.b16 %v2147, %v2146
  %v2235 = vpack.c.b16 %v2149, %v2148
  %v2236 = vpack.c.b16 %v2151, %v2150
  %v2237 = vpack.c.b16 %v2153, %v2152
  %v2238 = vpack.c.b16 %v2155, %v2154
  %v2239 = vpack.c.b16 %v2157, %v2156
  %v2240 = vpack.c.b16 %v2159, %v2158
  %v2241 = vpack.c.b16 %v2161, %v2160
  %v2242 = vpack.c.b16 %v2163, %v2162
  %v2243 = vpack.c.b16 %v2165, %v2164
  %v2244 = vpack.c.b16 %v2167, %v2166
  %v2245 = vpack.c.b16 %v2169, %v2168
  %v2246 = vpack.c.b16 %v2171, %v2170
  %v2247 = vpack.c.b16 %v2173, %v2172
  %v2248 = vpack.c.b16 %v2175, %v2174
  %v2249 = vpack.c.b16 %v2177, %v2176
  %2322 = vmatprep.subr.bf16.mxu0 0
  %2323 = vmatpush1.bf16.msra.mxu0 %v2185
  %2324 = vmatprep.subr.bf16.mxu0 0
  %2325 = vmatpush1.bf16.msra.mxu0 %v2184
  %2326 = vmatprep.subr.bf16.mxu0 0
  %2327 = vmatpush1.bf16.msra.mxu0 %v2183
  %2328 = vmatprep.subr.bf16.mxu0 0
  %2329 = vmatpush1.bf16.msra.mxu0 %v2182
  %2330 = vmatprep.subr.bf16.mxu0 0
  %2331 = vmatpush1.bf16.msra.mxu0 %v2181
  %2332 = vmatprep.subr.bf16.mxu0 0
  %2333 = vmatpush1.bf16.msra.mxu0 %v2180
  %2334 = vmatprep.subr.bf16.mxu0 0
  %2335 = vmatpush1.bf16.msra.mxu0 %v2179
  %2336 = vmatprep.subr.bf16.mxu0 0
  %2337 = vmatpush1.bf16.msra.mxu0 %v2178
  %2338 = vmatprep.subr.bf16.mxu0 0
  %2339 = vmatpush2.bf16.msra.mxu0 %v2193
  %2340 = vmatprep.subr.bf16.mxu0 0
  %2341 = vmatpush2.bf16.msra.mxu0 %v2192
  %2342 = vmatprep.subr.bf16.mxu0 0
  %2343 = vmatpush2.bf16.msra.mxu0 %v2191
  %2344 = vmatprep.subr.bf16.mxu0 0
  %2345 = vmatpush2.bf16.msra.mxu0 %v2190
  %2346 = vmatprep.subr.bf16.mxu0 0
  %2347 = vmatpush2.bf16.msra.mxu0 %v2189
  %2348 = vmatprep.subr.bf16.mxu0 0
  %2349 = vmatpush2.bf16.msra.mxu0 %v2188
  %2350 = vmatprep.subr.bf16.mxu0 0
  %2351 = vmatpush2.bf16.msra.mxu0 %v2187
  %2352 = vmatprep.subr.bf16.mxu0 0
  %2353 = vmatpush2.bf16.msra.mxu0 %v2186
  %2354 = vmatprep.mubr.bf16.mxu0 %v1783
  %2355 = vmatmul.mubr.bf16.gmra.mxu0 %v1782
  %v2356 = vpop.f32.mrf.mxu0
  %v2357 = vadd.f32 0.0, %v2356
  %v2358 = vpop.f32.mrf.mxu0
  %v2359 = vpop.f32.mrf.mxu0
  %v2360 = vadd.f32 0.0, %v2359
  %v2361 = vpop.f32.mrf.mxu0
  %2362 = vmatprep.mubr.bf16.mxu0 %v1792
  %2363 = vmatmul.mubr.bf16.gmra.mxu0 %v1791
  %v2364 = vpop.f32.mrf.mxu0
  %v2365 = vadd.f32 0.0, %v2364
  %v2366 = vpop.f32.mrf.mxu0
  %v2367 = vpop.f32.mrf.mxu0
  %v2368 = vadd.f32 0.0, %v2367
  %v2369 = vpop.f32.mrf.mxu0
  %2370 = vmatprep.mubr.bf16.mxu0 %v1801
  %2371 = vmatmul.mubr.bf16.gmra.mxu0 %v1800
  %v2372 = vpop.f32.mrf.mxu0
  %v2373 = vadd.f32 0.0, %v2372
  %v2374 = vpop.f32.mrf.mxu0
  %v2375 = vpop.f32.mrf.mxu0
  %v2376 = vadd.f32 0.0, %v2375
  %v2377 = vpop.f32.mrf.mxu0
  %2378 = vmatprep.mubr.bf16.mxu0 %v1810
  %2379 = vmatmul.mubr.bf16.gmra.mxu0 %v1809
  %v2380 = vpop.f32.mrf.mxu0
  %v2381 = vadd.f32 0.0, %v2380
  %v2382 = vpop.f32.mrf.mxu0
  %v2383 = vpop.f32.mrf.mxu0
  %v2384 = vadd.f32 0.0, %v2383
  %v2385 = vpop.f32.mrf.mxu0
  %2386 = vmatprep.mubr.bf16.mxu0 %v1819
  %2387 = vmatmul.mubr.bf16.gmra.mxu0 %v1818
  %v2388 = vpop.f32.mrf.mxu0
  %v2389 = vadd.f32 0.0, %v2388
  %v2390 = vpop.f32.mrf.mxu0
  %v2391 = vpop.f32.mrf.mxu0
  %v2392 = vadd.f32 0.0, %v2391
  %v2393 = vpop.f32.mrf.mxu0
  %2394 = vmatprep.mubr.bf16.mxu0 %v1828
  %2395 = vmatmul.mubr.bf16.gmra.mxu0 %v1827
  %v2396 = vpop.f32.mrf.mxu0
  %v2397 = vadd.f32 0.0, %v2396
  %v2398 = vpop.f32.mrf.mxu0
  %v2399 = vpop.f32.mrf.mxu0
  %v2400 = vadd.f32 0.0, %v2399
  %v2401 = vpop.f32.mrf.mxu0
  %2402 = vdwg.mxu0
  %2403 = vmatprep.subr.bf16.mxu0 0
  %2404 = vmatpush1.bf16.msra.mxu0 %v2201
  %2405 = vmatprep.subr.bf16.mxu0 0
  %2406 = vmatpush1.bf16.msra.mxu0 %v2200
  %2407 = vmatprep.subr.bf16.mxu0 0
  %2408 = vmatpush1.bf16.msra.mxu0 %v2199
  %2409 = vmatprep.subr.bf16.mxu0 0
  %2410 = vmatpush1.bf16.msra.mxu0 %v2198
  %2411 = vmatprep.subr.bf16.mxu0 0
  %2412 = vmatpush1.bf16.msra.mxu0 %v2197
  %2413 = vmatprep.subr.bf16.mxu0 0
  %2414 = vmatpush1.bf16.msra.mxu0 %v2196
  %2415 = vmatprep.subr.bf16.mxu0 0
  %2416 = vmatpush1.bf16.msra.mxu0 %v2195
  %2417 = vmatprep.subr.bf16.mxu0 0
  %2418 = vmatpush1.bf16.msra.mxu0 %v2194
  %2419 = vmatprep.subr.bf16.mxu0 0
  %2420 = vmatpush2.bf16.msra.mxu0 %v2209
  %2421 = vmatprep.subr.bf16.mxu0 0
  %2422 = vmatpush2.bf16.msra.mxu0 %v2208
  %2423 = vmatprep.subr.bf16.mxu0 0
  %2424 = vmatpush2.bf16.msra.mxu0 %v2207
  %2425 = vmatprep.subr.bf16.mxu0 0
  %2426 = vmatpush2.bf16.msra.mxu0 %v2206
  %2427 = vmatprep.subr.bf16.mxu0 0
  %2428 = vmatpush2.bf16.msra.mxu0 %v2205
  %2429 = vmatprep.subr.bf16.mxu0 0
  %2430 = vmatpush2.bf16.msra.mxu0 %v2204
  %2431 = vmatprep.subr.bf16.mxu0 0
  %2432 = vmatpush2.bf16.msra.mxu0 %v2203
  %2433 = vmatprep.subr.bf16.mxu0 0
  %2434 = vmatpush2.bf16.msra.mxu0 %v2202
  %2435 = vmatprep.mubr.bf16.mxu0 %v1785
  %2436 = vmatmul.mubr.bf16.gmra.mxu0 %v1784
  %v2437 = vpop.f32.mrf.mxu0
  %v2438 = vadd.f32 %v2357, %v2437
  %v2439 = vpop.f32.mrf.mxu0
  %v2440 = vpop.f32.mrf.mxu0
  %v2441 = vadd.f32 %v2360, %v2440
  %v2442 = vpop.f32.mrf.mxu0
  %2443 = vmatprep.mubr.bf16.mxu0 %v1794
  %2444 = vmatmul.mubr.bf16.gmra.mxu0 %v1793
  %v2445 = vpop.f32.mrf.mxu0
  %v2446 = vadd.f32 %v2365, %v2445
  %v2447 = vpop.f32.mrf.mxu0
  %v2448 = vpop.f32.mrf.mxu0
  %v2449 = vadd.f32 %v2368, %v2448
  %v2450 = vpop.f32.mrf.mxu0
  %2451 = vmatprep.mubr.bf16.mxu0 %v1803
  %2452 = vmatmul.mubr.bf16.gmra.mxu0 %v1802
  %v2453 = vpop.f32.mrf.mxu0
  %v2454 = vadd.f32 %v2373, %v2453
  %v2455 = vpop.f32.mrf.mxu0
  %v2456 = vpop.f32.mrf.mxu0
  %v2457 = vadd.f32 %v2376, %v2456
  %v2458 = vpop.f32.mrf.mxu0
  %2459 = vmatprep.mubr.bf16.mxu0 %v1812
  %2460 = vmatmul.mubr.bf16.gmra.mxu0 %v1811
  %v2461 = vpop.f32.mrf.mxu0
  %v2462 = vadd.f32 %v2381, %v2461
  %v2463 = vpop.f32.mrf.mxu0
  %v2464 = vpop.f32.mrf.mxu0
  %v2465 = vadd.f32 %v2384, %v2464
  %v2466 = vpop.f32.mrf.mxu0
  %2467 = vmatprep.mubr.bf16.mxu0 %v1821
  %2468 = vmatmul.mubr.bf16.gmra.mxu0 %v1820
  %v2469 = vpop.f32.mrf.mxu0
  %v2470 = vadd.f32 %v2389, %v2469
  %v2471 = vpop.f32.mrf.mxu0
  %v2472 = vpop.f32.mrf.mxu0
  %v2473 = vadd.f32 %v2392, %v2472
  %v2474 = vpop.f32.mrf.mxu0
  %2475 = vmatprep.mubr.bf16.mxu0 %v1830
  %2476 = vmatmul.mubr.bf16.gmra.mxu0 %v1829
  %v2477 = vpop.f32.mrf.mxu0
  %v2478 = vadd.f32 %v2397, %v2477
  %v2479 = vpop.f32.mrf.mxu0
  %v2480 = vpop.f32.mrf.mxu0
  %v2481 = vadd.f32 %v2400, %v2480
  %v2482 = vpop.f32.mrf.mxu0
  %2483 = vdwg.mxu0
  %2484 = vmatprep.subr.bf16.mxu0 0
  %2485 = vmatpush1.bf16.msra.mxu0 %v2217
  %2486 = vmatprep.subr.bf16.mxu0 0
  %2487 = vmatpush1.bf16.msra.mxu0 %v2216
  %2488 = vmatprep.subr.bf16.mxu0 0
  %2489 = vmatpush1.bf16.msra.mxu0 %v2215
  %2490 = vmatprep.subr.bf16.mxu0 0
  %2491 = vmatpush1.bf16.msra.mxu0 %v2214
  %2492 = vmatprep.subr.bf16.mxu0 0
  %2493 = vmatpush1.bf16.msra.mxu0 %v2213
  %2494 = vmatprep.subr.bf16.mxu0 0
  %2495 = vmatpush1.bf16.msra.mxu0 %v2212
  %2496 = vmatprep.subr.bf16.mxu0 0
  %2497 = vmatpush1.bf16.msra.mxu0 %v2211
  %2498 = vmatprep.subr.bf16.mxu0 0
  %2499 = vmatpush1.bf16.msra.mxu0 %v2210
  %2500 = vmatprep.subr.bf16.mxu0 0
  %2501 = vmatpush2.bf16.msra.mxu0 %v2225
  %2502 = vmatprep.subr.bf16.mxu0 0
  %2503 = vmatpush2.bf16.msra.mxu0 %v2224
  %2504 = vmatprep.subr.bf16.mxu0 0
  %2505 = vmatpush2.bf16.msra.mxu0 %v2223
  %2506 = vmatprep.subr.bf16.mxu0 0
  %2507 = vmatpush2.bf16.msra.mxu0 %v2222
  %2508 = vmatprep.subr.bf16.mxu0 0
  %2509 = vmatpush2.bf16.msra.mxu0 %v2221
  %2510 = vmatprep.subr.bf16.mxu0 0
  %2511 = vmatpush2.bf16.msra.mxu0 %v2220
  %2512 = vmatprep.subr.bf16.mxu0 0
  %2513 = vmatpush2.bf16.msra.mxu0 %v2219
  %2514 = vmatprep.subr.bf16.mxu0 0
  %2515 = vmatpush2.bf16.msra.mxu0 %v2218
  %2516 = vmatprep.mubr.bf16.mxu0 %v1787
  %2517 = vmatmul.mubr.bf16.gmra.mxu0 %v1786
  %v2518 = vpop.f32.mrf.mxu0
  %v2519 = vadd.f32 %v2438, %v2518
  %v2520 = vpop.f32.mrf.mxu0
  %v2521 = vpop.f32.mrf.mxu0
  %v2522 = vadd.f32 %v2441, %v2521
  %v2523 = vpop.f32.mrf.mxu0
  %2524 = vmatprep.mubr.bf16.mxu0 %v1796
  %2525 = vmatmul.mubr.bf16.gmra.mxu0 %v1795
  %v2526 = vpop.f32.mrf.mxu0
  %v2527 = vadd.f32 %v2446, %v2526
  %v2528 = vpop.f32.mrf.mxu0
  %v2529 = vpop.f32.mrf.mxu0
  %v2530 = vadd.f32 %v2449, %v2529
  %v2531 = vpop.f32.mrf.mxu0
  %2532 = vmatprep.mubr.bf16.mxu0 %v1805
  %2533 = vmatmul.mubr.bf16.gmra.mxu0 %v1804
  %v2534 = vpop.f32.mrf.mxu0
  %v2535 = vadd.f32 %v2454, %v2534
  %v2536 = vpop.f32.mrf.mxu0
  %v2537 = vpop.f32.mrf.mxu0
  %v2538 = vadd.f32 %v2457, %v2537
  %v2539 = vpop.f32.mrf.mxu0
  %2540 = vmatprep.mubr.bf16.mxu0 %v1814
  %2541 = vmatmul.mubr.bf16.gmra.mxu0 %v1813
  %v2542 = vpop.f32.mrf.mxu0
  %v2543 = vadd.f32 %v2462, %v2542
  %v2544 = vpop.f32.mrf.mxu0
  %v2545 = vpop.f32.mrf.mxu0
  %v2546 = vadd.f32 %v2465, %v2545
  %v2547 = vpop.f32.mrf.mxu0
  %2548 = vmatprep.mubr.bf16.mxu0 %v1823
  %2549 = vmatmul.mubr.bf16.gmra.mxu0 %v1822
  %v2550 = vpop.f32.mrf.mxu0
  %v2551 = vadd.f32 %v2470, %v2550
  %v2552 = vpop.f32.mrf.mxu0
  %v2553 = vpop.f32.mrf.mxu0
  %v2554 = vadd.f32 %v2473, %v2553
  %v2555 = vpop.f32.mrf.mxu0
  %2556 = vmatprep.mubr.bf16.mxu0 %v1832
  %2557 = vmatmul.mubr.bf16.gmra.mxu0 %v1831
  %v2558 = vpop.f32.mrf.mxu0
  %v2559 = vadd.f32 %v2478, %v2558
  %v2560 = vpop.f32.mrf.mxu0
  %v2561 = vpop.f32.mrf.mxu0
  %v2562 = vadd.f32 %v2481, %v2561
  %v2563 = vpop.f32.mrf.mxu0
  %2564 = vdwg.mxu0
  %2565 = vmatprep.subr.bf16.mxu0 0
  %2566 = vmatpush1.bf16.msra.mxu0 %v2233
  %2567 = vmatprep.subr.bf16.mxu0 0
  %2568 = vmatpush1.bf16.msra.mxu0 %v2232
  %2569 = vmatprep.subr.bf16.mxu0 0
  %2570 = vmatpush1.bf16.msra.mxu0 %v2231
  %2571 = vmatprep.subr.bf16.mxu0 0
  %2572 = vmatpush1.bf16.msra.mxu0 %v2230
  %2573 = vmatprep.subr.bf16.mxu0 0
  %2574 = vmatpush1.bf16.msra.mxu0 %v2229
  %2575 = vmatprep.subr.bf16.mxu0 0
  %2576 = vmatpush1.bf16.msra.mxu0 %v2228
  %2577 = vmatprep.subr.bf16.mxu0 0
  %2578 = vmatpush1.bf16.msra.mxu0 %v2227
  %2579 = vmatprep.subr.bf16.mxu0 0
  %2580 = vmatpush1.bf16.msra.mxu0 %v2226
  %2581 = vmatprep.subr.bf16.mxu0 0
  %2582 = vmatpush2.bf16.msra.mxu0 %v2241
  %2583 = vmatprep.subr.bf16.mxu0 0
  %2584 = vmatpush2.bf16.msra.mxu0 %v2240
  %2585 = vmatprep.subr.bf16.mxu0 0
  %2586 = vmatpush2.bf16.msra.mxu0 %v2239
  %2587 = vmatprep.subr.bf16.mxu0 0
  %2588 = vmatpush2.bf16.msra.mxu0 %v2238
  %2589 = vmatprep.subr.bf16.mxu0 0
  %2590 = vmatpush2.bf16.msra.mxu0 %v2237
  %2591 = vmatprep.subr.bf16.mxu0 0
  %2592 = vmatpush2.bf16.msra.mxu0 %v2236
  %2593 = vmatprep.subr.bf16.mxu0 0
  %2594 = vmatpush2.bf16.msra.mxu0 %v2235
  %2595 = vmatprep.subr.bf16.mxu0 0
  %2596 = vmatpush2.bf16.msra.mxu0 %v2234
  %2597 = vmatprep.mubr.bf16.mxu0 %v1789
  %2598 = vmatmul.mubr.bf16.gmra.mxu0 %v1788
  %v2599 = vpop.f32.mrf.mxu0
  %v2600 = vadd.f32 %v2519, %v2599
  %v2601 = vpop.f32.mrf.mxu0
  %v2602 = vpop.f32.mrf.mxu0
  %v2603 = vadd.f32 %v2522, %v2602
  %v2604 = vpop.f32.mrf.mxu0
  %2605 = vmatprep.mubr.bf16.mxu0 %v1798
  %2606 = vmatmul.mubr.bf16.gmra.mxu0 %v1797
  %v2607 = vpop.f32.mrf.mxu0
  %v2608 = vadd.f32 %v2527, %v2607
  %v2609 = vpop.f32.mrf.mxu0
  %v2610 = vpop.f32.mrf.mxu0
  %v2611 = vadd.f32 %v2530, %v2610
  %v2612 = vpop.f32.mrf.mxu0
  %2613 = vmatprep.mubr.bf16.mxu0 %v1807
  %2614 = vmatmul.mubr.bf16.gmra.mxu0 %v1806
  %v2615 = vpop.f32.mrf.mxu0
  %v2616 = vadd.f32 %v2535, %v2615
  %v2617 = vpop.f32.mrf.mxu0
  %v2618 = vpop.f32.mrf.mxu0
  %v2619 = vadd.f32 %v2538, %v2618
  %v2620 = vpop.f32.mrf.mxu0
  %2621 = vmatprep.mubr.bf16.mxu0 %v1816
  %2622 = vmatmul.mubr.bf16.gmra.mxu0 %v1815
  %v2623 = vpop.f32.mrf.mxu0
  %v2624 = vadd.f32 %v2543, %v2623
  %v2625 = vpop.f32.mrf.mxu0
  %v2626 = vpop.f32.mrf.mxu0
  %v2627 = vadd.f32 %v2546, %v2626
  %v2628 = vpop.f32.mrf.mxu0
  %2629 = vmatprep.mubr.bf16.mxu0 %v1825
  %2630 = vmatmul.mubr.bf16.gmra.mxu0 %v1824
  %v2631 = vpop.f32.mrf.mxu0
  %v2632 = vadd.f32 %v2551, %v2631
  %v2633 = vpop.f32.mrf.mxu0
  %v2634 = vpop.f32.mrf.mxu0
  %v2635 = vadd.f32 %v2554, %v2634
  %v2636 = vpop.f32.mrf.mxu0
  %2637 = vmatprep.mubr.bf16.mxu0 %v1834
  %2638 = vmatmul.mubr.bf16.gmra.mxu0 %v1833
  %v2639 = vpop.f32.mrf.mxu0
  %v2640 = vadd.f32 %v2559, %v2639
  %v2641 = vpop.f32.mrf.mxu0
  %v2642 = vpop.f32.mrf.mxu0
  %v2643 = vadd.f32 %v2562, %v2642
  %v2644 = vpop.f32.mrf.mxu0
  %2645 = vdwg.mxu0
  %2646 = vmatprep.subr.bf16.mxu0 0
  %2647 = vmatpush1.bf16.msra.mxu0 %v2249
  %2648 = vmatprep.subr.bf16.mxu0 0
  %2649 = vmatpush1.bf16.msra.mxu0 %v2248
  %2650 = vmatprep.subr.bf16.mxu0 0
  %2651 = vmatpush1.bf16.msra.mxu0 %v2247
  %2652 = vmatprep.subr.bf16.mxu0 0
  %2653 = vmatpush1.bf16.msra.mxu0 %v2246
  %2654 = vmatprep.subr.bf16.mxu0 0
  %2655 = vmatpush1.bf16.msra.mxu0 %v2245
  %2656 = vmatprep.subr.bf16.mxu0 0
  %2657 = vmatpush1.bf16.msra.mxu0 %v2244
  %2658 = vmatprep.subr.bf16.mxu0 0
  %2659 = vmatpush1.bf16.msra.mxu0 %v2243
  %2660 = vmatprep.subr.bf16.mxu0 0
  %2661 = vmatpush1.bf16.msra.mxu0 %v2242
  %2662 = vmatprep.subr.bf16.mxu0 0
  %2663 = vmatpush2.bf16.msra.mxu0 0
  %2664 = vmatprep.subr.bf16.mxu0 0
  %2665 = vmatpush2.bf16.msra.mxu0 0
  %2666 = vmatprep.subr.bf16.mxu0 0
  %2667 = vmatpush2.bf16.msra.mxu0 0
  %2668 = vmatprep.subr.bf16.mxu0 0
  %2669 = vmatpush2.bf16.msra.mxu0 0
  %2670 = vmatprep.subr.bf16.mxu0 0
  %2671 = vmatpush2.bf16.msra.mxu0 0
  %2672 = vmatprep.subr.bf16.mxu0 0
  %2673 = vmatpush2.bf16.msra.mxu0 0
  %2674 = vmatprep.subr.bf16.mxu0 0
  %2675 = vmatpush2.bf16.msra.mxu0 0
  %2676 = vmatprep.subr.bf16.mxu0 0
  %2677 = vmatpush2.bf16.msra.mxu0 0
  %2678 = vmatprep.mubr.bf16.mxu0 0
  %2679 = vmatmul.mubr.bf16.gmra.mxu0 %v1790
  %v2680 = vpop.f32.mrf.mxu0
  %v2681 = vadd.f32 %v2600, %v2680
  %v2682 = vpop.f32.mrf.mxu0
  %v2683 = vpop.f32.mrf.mxu0
  %v2684 = vadd.f32 %v2603, %v2683
  %v2685 = vpop.f32.mrf.mxu0
  %2686 = vmatprep.mubr.bf16.mxu0 0
  %2687 = vmatmul.mubr.bf16.gmra.mxu0 %v1799
  %v2688 = vpop.f32.mrf.mxu0
  %v2689 = vadd.f32 %v2608, %v2688
  %v2690 = vpop.f32.mrf.mxu0
  %v2691 = vpop.f32.mrf.mxu0
  %v2692 = vadd.f32 %v2611, %v2691
  %v2693 = vpop.f32.mrf.mxu0
  %2694 = vmatprep.mubr.bf16.mxu0 0
  %2695 = vmatmul.mubr.bf16.gmra.mxu0 %v1808
  %v2696 = vpop.f32.mrf.mxu0
  %v2697 = vadd.f32 %v2616, %v2696
  %v2698 = vpop.f32.mrf.mxu0
  %v2699 = vpop.f32.mrf.mxu0
  %v2700 = vadd.f32 %v2619, %v2699
  %v2701 = vpop.f32.mrf.mxu0
  %2702 = vmatprep.mubr.bf16.mxu0 0
  %2703 = vmatmul.mubr.bf16.gmra.mxu0 %v1817
  %v2704 = vpop.f32.mrf.mxu0
  %v2705 = vadd.f32 %v2624, %v2704
  %v2706 = vpop.f32.mrf.mxu0
  %v2707 = vpop.f32.mrf.mxu0
  %v2708 = vadd.f32 %v2627, %v2707
  %v2709 = vpop.f32.mrf.mxu0
  %2710 = vmatprep.mubr.bf16.mxu0 0
  %2711 = vmatmul.mubr.bf16.gmra.mxu0 %v1826
  %v2712 = vpop.f32.mrf.mxu0
  %v2713 = vadd.f32 %v2632, %v2712
  %v2714 = vpop.f32.mrf.mxu0
  %v2715 = vpop.f32.mrf.mxu0
  %v2716 = vadd.f32 %v2635, %v2715
  %v2717 = vpop.f32.mrf.mxu0
  %2718 = vmatprep.mubr.bf16.mxu0 0
  %2719 = vmatmul.mubr.bf16.gmra.mxu0 %v1835
  %v2720 = vpop.f32.mrf.mxu0
  %v2721 = vadd.f32 %v2640, %v2720
  %v2722 = vpop.f32.mrf.mxu0
  %v2723 = vpop.f32.mrf.mxu0
  %v2724 = vadd.f32 %v2643, %v2723
  %v2725 = vpop.f32.mrf.mxu0
  %2726 = vdwg.mxu0
  %v2727 = vadd.f32 %v1397, %v2681
  %v2728 = vadd.f32 %v1398, %v2684
  %v2729 = vadd.f32 %v1399, %v2689
  %v2730 = vadd.f32 %v1400, %v2692
  %v2731 = vadd.f32 %v1401, %v2697
  %v2732 = vadd.f32 %v1402, %v2700
  %v2733 = vadd.f32 %v1403, %v2705
  %v2734 = vadd.f32 %v1404, %v2708
  %v2735 = vadd.f32 %v1405, %v2713
  %v2736 = vadd.f32 %v1406, %v2716
  %v2737 = vadd.f32 %v1407, %v2721
  %v2738 = vadd.f32 %v1408, %v2724
  %2739 = vst [vmem:[%s1396] sm:$0xff] %v2727
  %2740 = vst [vmem:[%s1396 + $0x8] sm:$0xff] %v2728
  %2741 = vst [vmem:[%s1396 + $0x10] sm:$0xff] %v2729
  %2742 = vst [vmem:[%s1396 + $0x18] sm:$0xff] %v2730
  %2743 = vst [vmem:[%s1396 + $0x20] sm:$0xff] %v2731
  %2744 = vst [vmem:[%s1396 + $0x28] sm:$0xff] %v2732
  %2745 = vst [vmem:[%s1396 + $0x30] sm:$0xff] %v2733
  %2746 = vst [vmem:[%s1396 + $0x38] sm:$0xff] %v2734
  %2747 = vst [vmem:[%s1396 + $0x40] sm:$0xff] %v2735
  %2748 = vst [vmem:[%s1396 + $0x48] sm:$0xff] %v2736
  %2749 = vst [vmem:[%s1396 + $0x50] sm:$0xff] %v2737
  %2750 = vst [vmem:[%s1396 + $0x58] sm:$0xff] %v2738
  // Predicated region
  $region18: #{_lambda_.9} parent=0 // pred_check
    %p2751 = pneg %p15
  $region19: #{_lambda_.9} parent=0 // pred_check_branch
    %2753 = sbr.rel (%p2751) target = $region21
  $region20: #{_lambda_.9} parent=0 // pred_region
    %v2754 = vld [vmem:[#allocation2] sm:$0xff]
    %v2755 = vld [vmem:[#allocation2 + $0x8] sm:$0xff]
    %v2756 = vld [vmem:[#allocation2 + $0x10] sm:$0xff]
    %v2757 = vld [vmem:[#allocation2 + $0x18] sm:$0xff]
    %v2758 = vld [vmem:[#allocation2 + $0x20] sm:$0xff]
    %v2759 = vld [vmem:[#allocation2 + $0x28] sm:$0xff]
    %v2760 = vld [vmem:[#allocation2 + $0x30] sm:$0xff]
    %v2761 = vld [vmem:[#allocation2 + $0x38] sm:$0xff]
    %v2762 = vld [vmem:[#allocation2 + $0x40] sm:$0xff]
    %v2763 = vld [vmem:[#allocation2 + $0x48] sm:$0xff]
    %v2764 = vld [vmem:[#allocation2 + $0x50] sm:$0xff]
    %v2765 = vld [vmem:[#allocation2 + $0x58] sm:$0xff]
    %v2766 = vld [vmem:[%s1396] sm:$0xff]
    %v2767 = vld [vmem:[%s1396 + $0x8] sm:$0xff]
    %v2768 = vld [vmem:[%s1396 + $0x10] sm:$0xff]
    %v2769 = vld [vmem:[%s1396 + $0x18] sm:$0xff]
    %v2770 = vld [vmem:[%s1396 + $0x20] sm:$0xff]
    %v2771 = vld [vmem:[%s1396 + $0x28] sm:$0xff]
    %v2772 = vld [vmem:[%s1396 + $0x30] sm:$0xff]
    %v2773 = vld [vmem:[%s1396 + $0x38] sm:$0xff]
    %v2774 = vld [vmem:[%s1396 + $0x40] sm:$0xff]
    %v2775 = vld [vmem:[%s1396 + $0x48] sm:$0xff]
    %v2776 = vld [vmem:[%s1396 + $0x50] sm:$0xff]
    %v2777 = vld [vmem:[%s1396 + $0x58] sm:$0xff]
    %v2778 = vmax.f32 %v2754, %v2766
    %v2779 = vmax.f32 %v2755, %v2767
    %v2780 = vmax.f32 %v2756, %v2768
    %v2781 = vmax.f32 %v2757, %v2769
    %v2782 = vmax.f32 %v2758, %v2770
    %v2783 = vmax.f32 %v2759, %v2771
    %v2784 = vmax.f32 %v2760, %v2772
    %v2785 = vmax.f32 %v2761, %v2773
    %v2786 = vmax.f32 %v2762, %v2774
    %v2787 = vmax.f32 %v2763, %v2775
    %v2788 = vmax.f32 %v2764, %v2776
    %v2789 = vmax.f32 %v2765, %v2777
    %v2790 = vld [vmem:[%s2] sm:$0x1]
    %v2792 = vlaneseq
    %v2793 = vshrl.u32 %v2792, 7
    %v2794 = vsub.s32 0, %v2793
    %v2795 = vrot.slane %v2790, %v2794
    %v2797 = vadd.f32 %v2778, %v2795
    %v2798 = vadd.f32 %v2779, %v2795
    %v2799 = vadd.f32 %v2780, %v2795
    %v2800 = vadd.f32 %v2781, %v2795
    %v2801 = vadd.f32 %v2782, %v2795
    %v2802 = vadd.f32 %v2783, %v2795
    %v2803 = vadd.f32 %v2784, %v2795
    %v2804 = vadd.f32 %v2785, %v2795
    %v2805 = vadd.f32 %v2786, %v2795
    %v2806 = vadd.f32 %v2787, %v2795
    %v2807 = vadd.f32 %v2788, %v2795
    %v2808 = vadd.f32 %v2789, %v2795
    %v2809 = vmax.f32 %v2797, 0.0
    %v2810 = vmax.f32 %v2798, 0.0
    %v2811 = vmax.f32 %v2799, 0.0
    %v2812 = vmax.f32 %v2800, 0.0
    %v2813 = vmax.f32 %v2801, 0.0
    %v2814 = vmax.f32 %v2802, 0.0
    %v2815 = vmax.f32 %v2803, 0.0
    %v2816 = vmax.f32 %v2804, 0.0
    %v2817 = vmax.f32 %v2805, 0.0
    %v2818 = vmax.f32 %v2806, 0.0
    %v2819 = vmax.f32 %v2807, 0.0
    %v2820 = vmax.f32 %v2808, 0.0
    %2821 = vst [vmem:[%s3] sm:$0xff] %v2809
    %2822 = vst [vmem:[%s3 + $0x8] sm:$0xff] %v2810
    %2823 = vst [vmem:[%s3 + $0x10] sm:$0xff] %v2811
    %2824 = vst [vmem:[%s3 + $0x18] sm:$0xff] %v2812
    %2825 = vst [vmem:[%s3 + $0x20] sm:$0xff] %v2813
    %2826 = vst [vmem:[%s3 + $0x28] sm:$0xff] %v2814
    %2827 = vst [vmem:[%s3 + $0x30] sm:$0xff] %v2815
    %2828 = vst [vmem:[%s3 + $0x38] sm:$0xff] %v2816
    %2829 = vst [vmem:[%s3 + $0x40] sm:$0xff] %v2817
    %2830 = vst [vmem:[%s3 + $0x48] sm:$0xff] %v2818
    %2831 = vst [vmem:[%s3 + $0x50] sm:$0xff] %v2819
    %2832 = vst [vmem:[%s3 + $0x58] sm:$0xff] %v2820
  $region21: #{_lambda_.9} parent=0 // pred_fallthru
    _
  // Predicated region
  $region22: #{_lambda_.9} parent=0 // pred_check
    _
  $region23: #{_lambda_.9} parent=0 // pred_check_branch
    %2834 = sbr.rel (0) target = $region25
  $region24: #{_lambda_.9} parent=0 // pred_region
    _
  $region25: #{_lambda_.9} parent=0 // pred_fallthru
    _
  // Predicated region
  $region26: #{_lambda_.9} parent=0 // pred_check
    _
  $region27: #{_lambda_.9} parent=0 // pred_check_branch
    %2836 = sbr.rel (0) target = $region29
  $region28: #{_lambda_.9} parent=0 // pred_region
    _
  $region29: #{_lambda_.9} parent=0 // pred_fallthru
    _

// kernel: _lambda_.11
$region0: #{_lambda_.11}
  #allocation0 [shape = 'u32[]', space=smem, size = 0x4, offset = 0x4, fixed_abs, tag = 'smem constant byte address 0x4 - core index']
  #allocation1 [shape = 'u32[144,128]{1,0:T(1,128)}', space=vmem, size = 0x12000, scoped, tag = 'internal scratch']
  %s0 = inlined_call_operand.vmem [shape: f32[2,24,128], index: 0, kind: input, shape index: {}]
  %s1 = inlined_call_operand.vmem [shape: f32[128,128], index: 1, kind: input, shape index: {}]
  %s2 = inlined_call_operand.vmem [shape: f32[1,128], index: 2, kind: input, shape index: {}]
  %s3 = inlined_call_operand.hbm [shape: f32[2,128], index: 3, kind: output, shape index: {}]
  %s4 = sld [smem:[#allocation0]]
  $region22: #{_lambda_.11} parent=0
    _
  %s6 = ssub.s32 1, %s4
  %s7 = scalar_select 0, %s6, %s4
  $region1: #{_lambda_.11} parent=0
    #allocation2 [shape = 'u8[1024]{0}', space=vmem, size = 0x400, scoped, tag = 'output window, operand 0, single buffered']
    #allocation3 [shape = 's32[1]{0}', space=sflag, size = 0x4, scoped, tag = 'scoped memory for _lambda_.11']
    %8 = vsyncpa [#allocation3], 0
    // Predicated region
    $region2: #{_lambda_.11} parent=1 // pred_check
      _
    $region3: #{_lambda_.11} parent=1 // pred_check_branch
      %10 = sbr.rel (0) target = $region5
    $region4: #{_lambda_.11} parent=1 // pred_region
      _
    $region5: #{_lambda_.11} parent=1 // pred_fallthru
      _
    // Predicated region
    $region6: #{_lambda_.11} parent=1 // pred_check
      _
    $region7: #{_lambda_.11} parent=1 // pred_check_branch
      %12 = sbr.rel (0) target = $region9
    $region8: #{_lambda_.11} parent=1 // pred_region
      _
    $region9: #{_lambda_.11} parent=1 // pred_fallthru
      _
    // Predicated region
    $region10: #{_lambda_.11} parent=1 // pred_check
      _
    $region11: #{_lambda_.11} parent=1 // pred_check_branch
      %14 = sbr.rel (0) target = $region13
    $region12: #{_lambda_.11} parent=1 // pred_region
      _
    $region13: #{_lambda_.11} parent=1 // pred_fallthru
      _
    %v15 = vld [vmem:[%s0] sm:$0xff]
    %v16 = vld [vmem:[%s0 + $0x8] sm:$0xff]
    %v17 = vld [vmem:[%s0 + $0x10] sm:$0xff]
    %v18 = vld [vmem:[%s0 + $0x18] sm:$0xff]
    %v19 = vld [vmem:[%s0 + $0x20] sm:$0xff]
    %v20 = vld [vmem:[%s0 + $0x28] sm:$0xff]
    %v21 = vadd.f32 %v15, %v16
    %v22 = vadd.f32 %v21, %v17
    %v23 = vrot.slane %v22, 4
    %v24 = vadd.f32 %v22, %v23
    %v25 = vrot.slane %v24, 2
    %v26 = vadd.f32 %v24, %v25
    %v27 = vrot.slane %v26, 1
    %v28 = vadd.f32 %v26, %v27
    %v29 = vadd.f32 %v18, %v19
    %v30 = vadd.f32 %v29, %v20
    %v31 = vrot.slane %v30, 4
    %v32 = vadd.f32 %v30, %v31
    %v33 = vrot.slane %v32, 2
    %v34 = vadd.f32 %v32, %v33
    %v35 = vrot.slane %v34, 1
    %v36 = vadd.f32 %v34, %v35
    %v37 = vmul.f32 %v28, 0.041666668
    %v38 = vmul.f32 %v36, 0.041666668
    %v39 = vld [vmem:[%s1] sm:$0xff]
    %v40 = vld [vmem:[%s1 + $0x8] sm:$0xff]
    %v41 = vld [vmem:[%s1 + $0x10] sm:$0xff]
    %v42 = vld [vmem:[%s1 + $0x18] sm:$0xff]
    %v43 = vld [vmem:[%s1 + $0x20] sm:$0xff]
    %v44 = vld [vmem:[%s1 + $0x28] sm:$0xff]
    %v45 = vld [vmem:[%s1 + $0x30] sm:$0xff]
    %v46 = vld [vmem:[%s1 + $0x38] sm:$0xff]
    %v47 = vld [vmem:[%s1 + $0x40] sm:$0xff]
    %v48 = vld [vmem:[%s1 + $0x48] sm:$0xff]
    %v49 = vld [vmem:[%s1 + $0x50] sm:$0xff]
    %v50 = vld [vmem:[%s1 + $0x58] sm:$0xff]
    %v51 = vld [vmem:[%s1 + $0x60] sm:$0xff]
    %v52 = vld [vmem:[%s1 + $0x68] sm:$0xff]
    %v53 = vld [vmem:[%s1 + $0x70] sm:$0xff]
    %v54 = vld [vmem:[%s1 + $0x78] sm:$0xff]
    %v55 = vld [vmem:[%s2] sm:$0x1]
    %v57 = vlaneseq
    %v58 = vshrl.u32 %v57, 7
    %v59 = vsub.s32 0, %v58
    %v60 = vrot.slane %v55, %v59
    %vm64 = vcmask 1041409
    %v65 = vsel %vm64, %v38, %v37
    %67 = vmatprep.subr.mxu0 0.0
    %68 = vmatpush1.msra.mxu0 %v54
    %69 = vmatprep.subr.mxu0 0.0
    %70 = vmatpush1.msra.mxu0 %v53
    %71 = vmatprep.subr.mxu0 0.0
    %72 = vmatpush1.msra.mxu0 %v52
    %73 = vmatprep.subr.mxu0 0.0
    %74 = vmatpush1.msra.mxu0 %v51
    %75 = vmatprep.subr.mxu0 0.0
    %76 = vmatpush1.msra.mxu0 %v50
    %77 = vmatprep.subr.mxu0 0.0
    %78 = vmatpush1.msra.mxu0 %v49
    %79 = vmatprep.subr.mxu0 0.0
    %80 = vmatpush1.msra.mxu0 %v48
    %81 = vmatprep.subr.mxu0 0.0
    %82 = vmatpush1.msra.mxu0 %v47
    %83 = vmatprep.subr.mxu0 0.0
    %84 = vmatpush1.msra.mxu0 %v46
    %85 = vmatprep.subr.mxu0 0.0
    %86 = vmatpush1.msra.mxu0 %v45
    %87 = vmatprep.subr.mxu0 0.0
    %88 = vmatpush1.msra.mxu0 %v44
    %89 = vmatprep.subr.mxu0 0.0
    %90 = vmatpush1.msra.mxu0 %v43
    %91 = vmatprep.subr.mxu0 0.0
    %92 = vmatpush1.msra.mxu0 %v42
    %93 = vmatprep.subr.mxu0 0.0
    %94 = vmatpush1.msra.mxu0 %v41
    %95 = vmatprep.subr.mxu0 0.0
    %96 = vmatpush1.msra.mxu0 %v40
    %97 = vmatprep.subr.mxu0 0.0
    %98 = vmatpush1.msra.mxu0 %v39
    %99 = vmatprep.subr.mxu0 0.0
    %100 = vmatpush2.msra.mxu0 0.0
    %101 = vmatprep.subr.mxu0 0.0
    %102 = vmatpush2.msra.mxu0 0.0
    %103 = vmatprep.subr.mxu0 0.0
    %104 = vmatpush2.msra.mxu0 0.0
    %105 = vmatprep.subr.mxu0 0.0
    %106 = vmatpush2.msra.mxu0 0.0
    %107 = vmatprep.subr.mxu0 0.0
    %108 = vmatpush2.msra.mxu0 0.0
    %109 = vmatprep.subr.mxu0 0.0
    %110 = vmatpush2.msra.mxu0 0.0
    %111 = vmatprep.subr.mxu0 0.0
    %112 = vmatpush2.msra.mxu0 0.0
    %113 = vmatprep.subr.mxu0 0.0
    %114 = vmatpush2.msra.mxu0 0.0
    %115 = vmatprep.subr.mxu0 0.0
    %116 = vmatpush2.msra.mxu0 0.0
    %117 = vmatprep.subr.mxu0 0.0
    %118 = vmatpush2.msra.mxu0 0.0
    %119 = vmatprep.subr.mxu0 0.0
    %120 = vmatpush2.msra.mxu0 0.0
    %121 = vmatprep.subr.mxu0 0.0
    %122 = vmatpush2.msra.mxu0 0.0
    %123 = vmatprep.subr.mxu0 0.0
    %124 = vmatpush2.msra.mxu0 0.0
    %125 = vmatprep.subr.mxu0 0.0
    %126 = vmatpush2.msra.mxu0 0.0
    %127 = vmatprep.subr.mxu0 0.0
    %128 = vmatpush2.msra.mxu0 0.0
    %129 = vmatprep.subr.mxu0 0.0
    %130 = vmatpush2.msra.mxu0 0.0
    %131 = vmatprep.mubr.f32.mxu0 0.0
    %132 = vmatmul.mubr.f32.gmra.mxu0 %v65
    %v133 = vpop.f32.mrf.mxu0
    %v134 = vadd.f32 %v60, %v133
    %v135 = vpop.f32.mrf.mxu0
    %136 = vdwg.mxu0
    %137 = vst [vmem:[#allocation2] sm:$0x3] %v134
    // Predicated region
    $region14: #{_lambda_.11} parent=1 // pred_check
      _
    $region15: #{_lambda_.11} parent=1 // pred_check_branch
      %139 = sbr.rel (0) target = $region17
    $region16: #{_lambda_.11} parent=1 // pred_region
      %s141 = ssub.s32 32, 32
      %142 = vsyncadd [#allocation3], %s141
      %s144 = sshll.u32 [#allocation2], 4
      %s145 = int_to_ptr.vmem [resolvable:$true] %s144
      %147 = dma.vmem_to_hbm [thread:$0]  %s145, 32, %s3, [#allocation3]
    $region17: #{_lambda_.11} parent=1 // pred_fallthru
      _
    // Predicated region
    $region18: #{_lambda_.11} parent=1 // pred_check
      _
    $region19: #{_lambda_.11} parent=1 // pred_check_branch
      %149 = sbr.rel (0) target = $region21
    $region20: #{_lambda_.11} parent=1 // pred_region
      %150 = dma.done [#allocation3], 32
    $region21: #{_lambda_.11} parent=1 // pred_fallthru
      _
    %151 = vsyncpa [#allocation3], 1

// kernel: _lambda_.10
$region0: #{_lambda_.10}
  #allocation0 [shape = 'u32[]', space=smem, size = 0x4, offset = 0x4, fixed_abs, tag = 'smem constant byte address 0x4 - core index']
  #allocation1 [shape = 'u32[144,128]{1,0:T(1,128)}', space=vmem, size = 0x12000, scoped, tag = 'internal scratch']
  #allocation2 [shape = 'f32[1,48,128]{2,1,0:T(8,128)}', space=vmem, size = 0x6000, scoped, tag = 'scratch operand']
  %s0 = inlined_call_operand.vmem [shape: bf16[1,48,1152], index: 0, kind: input, shape index: {}]
  %s1 = inlined_call_operand.vmem [shape: bf16[1152,128], index: 1, kind: input, shape index: {}]
  %s2 = inlined_call_operand.vmem [shape: f32[1,128], index: 2, kind: input, shape index: {}]
  %s3 = inlined_call_operand.vmem [shape: f32[48,128], index: 3, kind: output, shape index: {}]
  %s4 = sld [smem:[#allocation0]]
  $region30: #{_lambda_.10} parent=0
    _
  %s6 = ssub.s32 1, %s4
  %s7 = scalar_select 0, %s6, %s4
  // Predicated region
  $region2: #{_lambda_.10} parent=0 // pred_check
    _
  $region3: #{_lambda_.10} parent=0 // pred_check_branch
    %9 = sbr.rel (0) target = $region5
  $region4: #{_lambda_.10} parent=0 // pred_region
    _
  $region5: #{_lambda_.10} parent=0 // pred_fallthru
    _
  // Predicated region
  $region6: #{_lambda_.10} parent=0 // pred_check
    _
  $region7: #{_lambda_.10} parent=0 // pred_check_branch
    %11 = sbr.rel (0) target = $region9
  $region8: #{_lambda_.10} parent=0 // pred_region
    _
  $region9: #{_lambda_.10} parent=0 // pred_fallthru
    _
  // Predicated region
  $region10: #{_lambda_.10} parent=0 // pred_check
    _
  $region11: #{_lambda_.10} parent=0 // pred_check_branch
    %13 = sbr.rel (0) target = $region13
  $region12: #{_lambda_.10} parent=0 // pred_region
    _
  $region13: #{_lambda_.10} parent=0 // pred_fallthru
    _
  %p15 = scmp.eq.s32.totalorder 0, 0
  // Predicated region
  $region14: #{_lambda_.10} parent=0 // pred_check
    %p16 = pneg %p15
  $region15: #{_lambda_.10} parent=0 // pred_check_branch
    %18 = sbr.rel (%p16) target = $region17
  $region16: #{_lambda_.10} parent=0 // pred_region
    %19 = vst [vmem:[#allocation2] sm:$0xff] 0.0
    %20 = vst [vmem:[#allocation2 + $0x8] sm:$0xff] 0.0
    %21 = vst [vmem:[#allocation2 + $0x10] sm:$0xff] 0.0
    %22 = vst [vmem:[#allocation2 + $0x18] sm:$0xff] 0.0
    %23 = vst [vmem:[#allocation2 + $0x20] sm:$0xff] 0.0
    %24 = vst [vmem:[#allocation2 + $0x28] sm:$0xff] 0.0
  $region17: #{_lambda_.10} parent=0 // pred_fallthru
    _
  %v25 = vld [vmem:[#allocation2] sm:$0xff]
  %v26 = vld [vmem:[#allocation2 + $0x8] sm:$0xff]
  %v27 = vld [vmem:[#allocation2 + $0x10] sm:$0xff]
  %v28 = vld [vmem:[#allocation2 + $0x18] sm:$0xff]
  %v29 = vld [vmem:[#allocation2 + $0x20] sm:$0xff]
  %v30 = vld [vmem:[#allocation2 + $0x28] sm:$0xff]
  %v31 = vld [vmem:[%s0] sm:$0xff]
  %v32 = vld [vmem:[%s0 + $0x8] sm:$0xff]
  %v33 = vld [vmem:[%s0 + $0x10] sm:$0xff]
  %v34 = vld [vmem:[%s0 + $0x18] sm:$0xff]
  %v35 = vld [vmem:[%s0 + $0x20] sm:$0xf]
  %v36 = vld [vmem:[%s0 + $0x24] sm:$0xff]
  %v37 = vld [vmem:[%s0 + $0x2c] sm:$0xff]
  %v38 = vld [vmem:[%s0 + $0x34] sm:$0xff]
  %v39 = vld [vmem:[%s0 + $0x3c] sm:$0xff]
  %v40 = vld [vmem:[%s0 + $0x44] sm:$0xf]
  %v41 = vld [vmem:[%s0 + $0x48] sm:$0xff]
  %v42 = vld [vmem:[%s0 + $0x50] sm:$0xff]
  %v43 = vld [vmem:[%s0 + $0x58] sm:$0xff]
  %v44 = vld [vmem:[%s0 + $0x60] sm:$0xff]
  %v45 = vld [vmem:[%s0 + $0x68] sm:$0xf]
  %v46 = vld [vmem:[%s0 + $0x6c] sm:$0xff]
  %v47 = vld [vmem:[%s0 + $0x74] sm:$0xff]
  %v48 = vld [vmem:[%s0 + $0x7c] sm:$0xff]
  %v49 = vld [vmem:[%s0 + $0x84] sm:$0xff]
  %v50 = vld [vmem:[%s0 + $0x8c] sm:$0xf]
  %v51 = vld [vmem:[%s0 + $0x90] sm:$0xff]
  %v52 = vld [vmem:[%s0 + $0x98] sm:$0xff]
  %v53 = vld [vmem:[%s0 + $0xa0] sm:$0xff]
  %v54 = vld [vmem:[%s0 + $0xa8] sm:$0xff]
  %v55 = vld [vmem:[%s0 + $0xb0] sm:$0xf]
  %v56 = vld [vmem:[%s0 + $0xb4] sm:$0xff]
  %v57 = vld [vmem:[%s0 + $0xbc] sm:$0xff]
  %v58 = vld [vmem:[%s0 + $0xc4] sm:$0xff]
  %v59 = vld [vmem:[%s0 + $0xcc] sm:$0xff]
  %v60 = vld [vmem:[%s0 + $0xd4] sm:$0xf]
  %v61 = vld [vmem:[%s1] sm:$0xf]
  %v62 = vld [vmem:[%s1 + $0x4] sm:$0xf]
  %v63 = vld [vmem:[%s1 + $0x8] sm:$0xf]
  %v64 = vld [vmem:[%s1 + $0xc] sm:$0xf]
  %v65 = vld [vmem:[%s1 + $0x10] sm:$0xf]
  %v66 = vld [vmem:[%s1 + $0x14] sm:$0xf]
  %v67 = vld [vmem:[%s1 + $0x18] sm:$0xf]
  %v68 = vld [vmem:[%s1 + $0x1c] sm:$0xf]
  %v69 = vld [vmem:[%s1 + $0x20] sm:$0xf]
  %v70 = vld [vmem:[%s1 + $0x24] sm:$0xf]
  %v71 = vld [vmem:[%s1 + $0x28] sm:$0xf]
  %v72 = vld [vmem:[%s1 + $0x2c] sm:$0xf]
  %v73 = vld [vmem:[%s1 + $0x30] sm:$0xf]
  %v74 = vld [vmem:[%s1 + $0x34] sm:$0xf]
  %v75 = vld [vmem:[%s1 + $0x38] sm:$0xf]
  %v76 = vld [vmem:[%s1 + $0x3c] sm:$0xf]
  %v77 = vld [vmem:[%s1 + $0x40] sm:$0xf]
  %v78 = vld [vmem:[%s1 + $0x44] sm:$0xf]
  %v79 = vld [vmem:[%s1 + $0x48] sm:$0xf]
  %v80 = vld [vmem:[%s1 + $0x4c] sm:$0xf]
  %v81 = vld [vmem:[%s1 + $0x50] sm:$0xf]
  %v82 = vld [vmem:[%s1 + $0x54] sm:$0xf]
  %v83 = vld [vmem:[%s1 + $0x58] sm:$0xf]
  %v84 = vld [vmem:[%s1 + $0x5c] sm:$0xf]
  %v85 = vld [vmem:[%s1 + $0x60] sm:$0xf]
  %v86 = vld [vmem:[%s1 + $0x64] sm:$0xf]
  %v87 = vld [vmem:[%s1 + $0x68] sm:$0xf]
  %v88 = vld [vmem:[%s1 + $0x6c] sm:$0xf]
  %v89 = vld [vmem:[%s1 + $0x70] sm:$0xf]
  %v90 = vld [vmem:[%s1 + $0x74] sm:$0xf]
  %v91 = vld [vmem:[%s1 + $0x78] sm:$0xf]
  %v92 = vld [vmem:[%s1 + $0x7c] sm:$0xf]
  %v93 = vld [vmem:[%s1 + $0x80] sm:$0xf]
  %v94 = vld [vmem:[%s1 + $0x84] sm:$0xf]
  %v95 = vld [vmem:[%s1 + $0x88] sm:$0xf]
  %v96 = vld [vmem:[%s1 + $0x8c] sm:$0xf]
  %v97 = vld [vmem:[%s1 + $0x90] sm:$0xf]
  %v98 = vld [vmem:[%s1 + $0x94] sm:$0xf]
  %v99 = vld [vmem:[%s1 + $0x98] sm:$0xf]
  %v100 = vld [vmem:[%s1 + $0x9c] sm:$0xf]
  %v101 = vld [vmem:[%s1 + $0xa0] sm:$0xf]
  %v102 = vld [vmem:[%s1 + $0xa4] sm:$0xf]
  %v103 = vld [vmem:[%s1 + $0xa8] sm:$0xf]
  %v104 = vld [vmem:[%s1 + $0xac] sm:$0xf]
  %v105 = vld [vmem:[%s1 + $0xb0] sm:$0xf]
  %v106 = vld [vmem:[%s1 + $0xb4] sm:$0xf]
  %v107 = vld [vmem:[%s1 + $0xb8] sm:$0xf]
  %v108 = vld [vmem:[%s1 + $0xbc] sm:$0xf]
  %v109 = vld [vmem:[%s1 + $0xc0] sm:$0xf]
  %v110 = vld [vmem:[%s1 + $0xc4] sm:$0xf]
  %v111 = vld [vmem:[%s1 + $0xc8] sm:$0xf]
  %v112 = vld [vmem:[%s1 + $0xcc] sm:$0xf]
  %v113 = vld [vmem:[%s1 + $0xd0] sm:$0xf]
  %v114 = vld [vmem:[%s1 + $0xd4] sm:$0xf]
  %v115 = vld [vmem:[%s1 + $0xd8] sm:$0xf]
  %v116 = vld [vmem:[%s1 + $0xdc] sm:$0xf]
  %v117 = vld [vmem:[%s1 + $0xe0] sm:$0xf]
  %v118 = vld [vmem:[%s1 + $0xe4] sm:$0xf]
  %v119 = vld [vmem:[%s1 + $0xe8] sm:$0xf]
  %v120 = vld [vmem:[%s1 + $0xec] sm:$0xf]
  %v121 = vld [vmem:[%s1 + $0xf0] sm:$0xf]
  %v122 = vld [vmem:[%s1 + $0xf4] sm:$0xf]
  %v123 = vld [vmem:[%s1 + $0xf8] sm:$0xf]
  %v124 = vld [vmem:[%s1 + $0xfc] sm:$0xf]
  %v125 = vld [vmem:[%s1 + $0x100] sm:$0xf]
  %v126 = vld [vmem:[%s1 + $0x104] sm:$0xf]
  %v127 = vld [vmem:[%s1 + $0x108] sm:$0xf]
  %v128 = vld [vmem:[%s1 + $0x10c] sm:$0xf]
  %v129 = vld [vmem:[%s1 + $0x110] sm:$0xf]
  %v130 = vld [vmem:[%s1 + $0x114] sm:$0xf]
  %v131 = vld [vmem:[%s1 + $0x118] sm:$0xf]
  %v132 = vld [vmem:[%s1 + $0x11c] sm:$0xf]
  %v133 = vld [vmem:[%s1 + $0x120] sm:$0xf]
  %v134 = vld [vmem:[%s1 + $0x124] sm:$0xf]
  %v135 = vld [vmem:[%s1 + $0x128] sm:$0xf]
  %v136 = vld [vmem:[%s1 + $0x12c] sm:$0xf]
  %v137 = vld [vmem:[%s1 + $0x130] sm:$0xf]
  %v138 = vld [vmem:[%s1 + $0x134] sm:$0xf]
  %v139 = vld [vmem:[%s1 + $0x138] sm:$0xf]
  %v140 = vld [vmem:[%s1 + $0x13c] sm:$0xf]
  %v141 = vld [vmem:[%s1 + $0x140] sm:$0xf]
  %v142 = vld [vmem:[%s1 + $0x144] sm:$0xf]
  %v143 = vld [vmem:[%s1 + $0x148] sm:$0xf]
  %v144 = vld [vmem:[%s1 + $0x14c] sm:$0xf]
  %v145 = vld [vmem:[%s1 + $0x150] sm:$0xf]
  %v146 = vld [vmem:[%s1 + $0x154] sm:$0xf]
  %v147 = vld [vmem:[%s1 + $0x158] sm:$0xf]
  %v148 = vld [vmem:[%s1 + $0x15c] sm:$0xf]
  %v149 = vld [vmem:[%s1 + $0x160] sm:$0xf]
  %v150 = vld [vmem:[%s1 + $0x164] sm:$0xf]
  %v151 = vld [vmem:[%s1 + $0x168] sm:$0xf]
  %v152 = vld [vmem:[%s1 + $0x16c] sm:$0xf]
  %v153 = vld [vmem:[%s1 + $0x170] sm:$0xf]
  %v154 = vld [vmem:[%s1 + $0x174] sm:$0xf]
  %v155 = vld [vmem:[%s1 + $0x178] sm:$0xf]
  %v156 = vld [vmem:[%s1 + $0x17c] sm:$0xf]
  %v157 = vld [vmem:[%s1 + $0x180] sm:$0xf]
  %v158 = vld [vmem:[%s1 + $0x184] sm:$0xf]
  %v159 = vld [vmem:[%s1 + $0x188] sm:$0xf]
  %v160 = vld [vmem:[%s1 + $0x18c] sm:$0xf]
  %v161 = vld [vmem:[%s1 + $0x190] sm:$0xf]
  %v162 = vld [vmem:[%s1 + $0x194] sm:$0xf]
  %v163 = vld [vmem:[%s1 + $0x198] sm:$0xf]
  %v164 = vld [vmem:[%s1 + $0x19c] sm:$0xf]
  %v165 = vld [vmem:[%s1 + $0x1a0] sm:$0xf]
  %v166 = vld [vmem:[%s1 + $0x1a4] sm:$0xf]
  %v167 = vld [vmem:[%s1 + $0x1a8] sm:$0xf]
  %v168 = vld [vmem:[%s1 + $0x1ac] sm:$0xf]
  %v169 = vld [vmem:[%s1 + $0x1b0] sm:$0xf]
  %v170 = vld [vmem:[%s1 + $0x1b4] sm:$0xf]
  %v171 = vld [vmem:[%s1 + $0x1b8] sm:$0xf]
  %v172 = vld [vmem:[%s1 + $0x1bc] sm:$0xf]
  %v173 = vld [vmem:[%s1 + $0x1c0] sm:$0xf]
  %v174 = vld [vmem:[%s1 + $0x1c4] sm:$0xf]
  %v175 = vld [vmem:[%s1 + $0x1c8] sm:$0xf]
  %v176 = vld [vmem:[%s1 + $0x1cc] sm:$0xf]
  %v177 = vld [vmem:[%s1 + $0x1d0] sm:$0xf]
  %v178 = vld [vmem:[%s1 + $0x1d4] sm:$0xf]
  %v179 = vld [vmem:[%s1 + $0x1d8] sm:$0xf]
  %v180 = vld [vmem:[%s1 + $0x1dc] sm:$0xf]
  %v181 = vld [vmem:[%s1 + $0x1e0] sm:$0xf]
  %v182 = vld [vmem:[%s1 + $0x1e4] sm:$0xf]
  %v183 = vld [vmem:[%s1 + $0x1e8] sm:$0xf]
  %v184 = vld [vmem:[%s1 + $0x1ec] sm:$0xf]
  %v185 = vld [vmem:[%s1 + $0x1f0] sm:$0xf]
  %v186 = vld [vmem:[%s1 + $0x1f4] sm:$0xf]
  %v187 = vld [vmem:[%s1 + $0x1f8] sm:$0xf]
  %v188 = vld [vmem:[%s1 + $0x1fc] sm:$0xf]
  %v189 = vld [vmem:[%s1 + $0x200] sm:$0xf]
  %v190 = vld [vmem:[%s1 + $0x204] sm:$0xf]
  %v191 = vld [vmem:[%s1 + $0x208] sm:$0xf]
  %v192 = vld [vmem:[%s1 + $0x20c] sm:$0xf]
  %v193 = vld [vmem:[%s1 + $0x210] sm:$0xf]
  %v194 = vld [vmem:[%s1 + $0x214] sm:$0xf]
  %v195 = vld [vmem:[%s1 + $0x218] sm:$0xf]
  %v196 = vld [vmem:[%s1 + $0x21c] sm:$0xf]
  %v197 = vld [vmem:[%s1 + $0x220] sm:$0xf]
  %v198 = vld [vmem:[%s1 + $0x224] sm:$0xf]
  %v199 = vld [vmem:[%s1 + $0x228] sm:$0xf]
  %v200 = vld [vmem:[%s1 + $0x22c] sm:$0xf]
  %v201 = vld [vmem:[%s1 + $0x230] sm:$0xf]
  %v202 = vld [vmem:[%s1 + $0x234] sm:$0xf]
  %v203 = vld [vmem:[%s1 + $0x238] sm:$0xf]
  %v204 = vld [vmem:[%s1 + $0x23c] sm:$0xf]
  %v235 = vunpack.c.l.b16 %v31
  %v236 = vunpack.c.h.b16 %v31
  %v237 = vunpack.c.l.b16 %v32
  %v238 = vunpack.c.h.b16 %v32
  %v239 = vunpack.c.l.b16 %v33
  %v240 = vunpack.c.h.b16 %v33
  %v241 = vunpack.c.l.b16 %v34
  %v242 = vunpack.c.h.b16 %v34
  %v243 = vunpack.c.l.b16 %v35
  %v244 = vunpack.c.l.b16 %v36
  %v245 = vunpack.c.h.b16 %v36
  %v246 = vunpack.c.l.b16 %v37
  %v247 = vunpack.c.h.b16 %v37
  %v248 = vunpack.c.l.b16 %v38
  %v249 = vunpack.c.h.b16 %v38
  %v250 = vunpack.c.l.b16 %v39
  %v251 = vunpack.c.h.b16 %v39
  %v252 = vunpack.c.l.b16 %v40
  %v253 = vunpack.c.l.b16 %v41
  %v254 = vunpack.c.h.b16 %v41
  %v255 = vunpack.c.l.b16 %v42
  %v256 = vunpack.c.h.b16 %v42
  %v257 = vunpack.c.l.b16 %v43
  %v258 = vunpack.c.h.b16 %v43
  %v259 = vunpack.c.l.b16 %v44
  %v260 = vunpack.c.h.b16 %v44
  %v261 = vunpack.c.l.b16 %v45
  %v262 = vunpack.c.l.b16 %v46
  %v263 = vunpack.c.h.b16 %v46
  %v264 = vunpack.c.l.b16 %v47
  %v265 = vunpack.c.h.b16 %v47
  %v266 = vunpack.c.l.b16 %v48
  %v267 = vunpack.c.h.b16 %v48
  %v268 = vunpack.c.l.b16 %v49
  %v269 = vunpack.c.h.b16 %v49
  %v270 = vunpack.c.l.b16 %v50
  %v271 = vunpack.c.l.b16 %v51
  %v272 = vunpack.c.h.b16 %v51
  %v273 = vunpack.c.l.b16 %v52
  %v274 = vunpack.c.h.b16 %v52
  %v275 = vunpack.c.l.b16 %v53
  %v276 = vunpack.c.h.b16 %v53
  %v277 = vunpack.c.l.b16 %v54
  %v278 = vunpack.c.h.b16 %v54
  %v279 = vunpack.c.l.b16 %v55
  %v280 = vunpack.c.l.b16 %v56
  %v281 = vunpack.c.h.b16 %v56
  %v282 = vunpack.c.l.b16 %v57
  %v283 = vunpack.c.h.b16 %v57
  %v284 = vunpack.c.l.b16 %v58
  %v285 = vunpack.c.h.b16 %v58
  %v286 = vunpack.c.l.b16 %v59
  %v287 = vunpack.c.h.b16 %v59
  %v288 = vunpack.c.l.b16 %v60
  %v289 = vpack.c.b16 %v244, %v235
  %v290 = vpack.c.b16 %v245, %v236
  %v291 = vpack.c.b16 %v246, %v237
  %v292 = vpack.c.b16 %v247, %v238
  %v293 = vpack.c.b16 %v248, %v239
  %v294 = vpack.c.b16 %v249, %v240
  %v295 = vpack.c.b16 %v250, %v241
  %v296 = vpack.c.b16 %v251, %v242
  %v297 = vpack.c.b16 %v252, %v243
  %v298 = vpack.c.b16 %v262, %v253
  %v299 = vpack.c.b16 %v263, %v254
  %v300 = vpack.c.b16 %v264, %v255
  %v301 = vpack.c.b16 %v265, %v256
  %v302 = vpack.c.b16 %v266, %v257
  %v303 = vpack.c.b16 %v267, %v258
  %v304 = vpack.c.b16 %v268, %v259
  %v305 = vpack.c.b16 %v269, %v260
  %v306 = vpack.c.b16 %v270, %v261
  %v307 = vpack.c.b16 %v280, %v271
  %v308 = vpack.c.b16 %v281, %v272
  %v309 = vpack.c.b16 %v282, %v273
  %v310 = vpack.c.b16 %v283, %v274
  %v311 = vpack.c.b16 %v284, %v275
  %v312 = vpack.c.b16 %v285, %v276
  %v313 = vpack.c.b16 %v286, %v277
  %v314 = vpack.c.b16 %v287, %v278
  %v315 = vpack.c.b16 %v288, %v279
  %v487 = vunpack.c.l.b16 %v61
  %v488 = vunpack.c.l.b16 %v62
  %v489 = vunpack.c.l.b16 %v63
  %v490 = vunpack.c.l.b16 %v64
  %v491 = vunpack.c.l.b16 %v65
  %v492 = vunpack.c.l.b16 %v66
  %v493 = vunpack.c.l.b16 %v67
  %v494 = vunpack.c.l.b16 %v68
  %v495 = vunpack.c.l.b16 %v69
  %v496 = vunpack.c.l.b16 %v70
  %v497 = vunpack.c.l.b16 %v71
  %v498 = vunpack.c.l.b16 %v72
  %v499 = vunpack.c.l.b16 %v73
  %v500 = vunpack.c.l.b16 %v74
  %v501 = vunpack.c.l.b16 %v75
  %v502 = vunpack.c.l.b16 %v76
  %v503 = vunpack.c.l.b16 %v77
  %v504 = vunpack.c.l.b16 %v78
  %v505 = vunpack.c.l.b16 %v79
  %v506 = vunpack.c.l.b16 %v80
  %v507 = vunpack.c.l.b16 %v81
  %v508 = vunpack.c.l.b16 %v82
  %v509 = vunpack.c.l.b16 %v83
  %v510 = vunpack.c.l.b16 %v84
  %v511 = vunpack.c.l.b16 %v85
  %v512 = vunpack.c.l.b16 %v86
  %v513 = vunpack.c.l.b16 %v87
  %v514 = vunpack.c.l.b16 %v88
  %v515 = vunpack.c.l.b16 %v89
  %v516 = vunpack.c.l.b16 %v90
  %v517 = vunpack.c.l.b16 %v91
  %v518 = vunpack.c.l.b16 %v92
  %v519 = vunpack.c.l.b16 %v93
  %v520 = vunpack.c.l.b16 %v94
  %v521 = vunpack.c.l.b16 %v95
  %v522 = vunpack.c.l.b16 %v96
  %v523 = vunpack.c.l.b16 %v97
  %v524 = vunpack.c.l.b16 %v98
  %v525 = vunpack.c.l.b16 %v99
  %v526 = vunpack.c.l.b16 %v100
  %v527 = vunpack.c.l.b16 %v101
  %v528 = vunpack.c.l.b16 %v102
  %v529 = vunpack.c.l.b16 %v103
  %v530 = vunpack.c.l.b16 %v104
  %v531 = vunpack.c.l.b16 %v105
  %v532 = vunpack.c.l.b16 %v106
  %v533 = vunpack.c.l.b16 %v107
  %v534 = vunpack.c.l.b16 %v108
  %v535 = vunpack.c.l.b16 %v109
  %v536 = vunpack.c.l.b16 %v110
  %v537 = vunpack.c.l.b16 %v111
  %v538 = vunpack.c.l.b16 %v112
  %v539 = vunpack.c.l.b16 %v113
  %v540 = vunpack.c.l.b16 %v114
  %v541 = vunpack.c.l.b16 %v115
  %v542 = vunpack.c.l.b16 %v116
  %v543 = vunpack.c.l.b16 %v117
  %v544 = vunpack.c.l.b16 %v118
  %v545 = vunpack.c.l.b16 %v119
  %v546 = vunpack.c.l.b16 %v120
  %v547 = vunpack.c.l.b16 %v121
  %v548 = vunpack.c.l.b16 %v122
  %v549 = vunpack.c.l.b16 %v123
  %v550 = vunpack.c.l.b16 %v124
  %v551 = vunpack.c.l.b16 %v125
  %v552 = vunpack.c.l.b16 %v126
  %v553 = vunpack.c.l.b16 %v127
  %v554 = vunpack.c.l.b16 %v128
  %v555 = vunpack.c.l.b16 %v129
  %v556 = vunpack.c.l.b16 %v130
  %v557 = vunpack.c.l.b16 %v131
  %v558 = vunpack.c.l.b16 %v132
  %v559 = vunpack.c.l.b16 %v133
  %v560 = vunpack.c.l.b16 %v134
  %v561 = vunpack.c.l.b16 %v135
  %v562 = vunpack.c.l.b16 %v136
  %v563 = vunpack.c.l.b16 %v137
  %v564 = vunpack.c.l.b16 %v138
  %v565 = vunpack.c.l.b16 %v139
  %v566 = vunpack.c.l.b16 %v140
  %v567 = vunpack.c.l.b16 %v141
  %v568 = vunpack.c.l.b16 %v142
  %v569 = vunpack.c.l.b16 %v143
  %v570 = vunpack.c.l.b16 %v144
  %v571 = vunpack.c.l.b16 %v145
  %v572 = vunpack.c.l.b16 %v146
  %v573 = vunpack.c.l.b16 %v147
  %v574 = vunpack.c.l.b16 %v148
  %v575 = vunpack.c.l.b16 %v149
  %v576 = vunpack.c.l.b16 %v150
  %v577 = vunpack.c.l.b16 %v151
  %v578 = vunpack.c.l.b16 %v152
  %v579 = vunpack.c.l.b16 %v153
  %v580 = vunpack.c.l.b16 %v154
  %v581 = vunpack.c.l.b16 %v155
  %v582 = vunpack.c.l.b16 %v156
  %v583 = vunpack.c.l.b16 %v157
  %v584 = vunpack.c.l.b16 %v158
  %v585 = vunpack.c.l.b16 %v159
  %v586 = vunpack.c.l.b16 %v160
  %v587 = vunpack.c.l.b16 %v161
  %v588 = vunpack.c.l.b16 %v162
  %v589 = vunpack.c.l.b16 %v163
  %v590 = vunpack.c.l.b16 %v164
  %v591 = vunpack.c.l.b16 %v165
  %v592 = vunpack.c.l.b16 %v166
  %v593 = vunpack.c.l.b16 %v167
  %v594 = vunpack.c.l.b16 %v168
  %v595 = vunpack.c.l.b16 %v169
  %v596 = vunpack.c.l.b16 %v170
  %v597 = vunpack.c.l.b16 %v171
  %v598 = vunpack.c.l.b16 %v172
  %v599 = vunpack.c.l.b16 %v173
  %v600 = vunpack.c.l.b16 %v174
  %v601 = vunpack.c.l.b16 %v175
  %v602 = vunpack.c.l.b16 %v176
  %v603 = vunpack.c.l.b16 %v177
  %v604 = vunpack.c.l.b16 %v178
  %v605 = vunpack.c.l.b16 %v179
  %v606 = vunpack.c.l.b16 %v180
  %v607 = vunpack.c.l.b16 %v181
  %v608 = vunpack.c.l.b16 %v182
  %v609 = vunpack.c.l.b16 %v183
  %v610 = vunpack.c.l.b16 %v184
  %v611 = vunpack.c.l.b16 %v185
  %v612 = vunpack.c.l.b16 %v186
  %v613 = vunpack.c.l.b16 %v187
  %v614 = vunpack.c.l.b16 %v188
  %v615 = vunpack.c.l.b16 %v189
  %v616 = vunpack.c.l.b16 %v190
  %v617 = vunpack.c.l.b16 %v191
  %v618 = vunpack.c.l.b16 %v192
  %v619 = vunpack.c.l.b16 %v193
  %v620 = vunpack.c.l.b16 %v194
  %v621 = vunpack.c.l.b16 %v195
  %v622 = vunpack.c.l.b16 %v196
  %v623 = vunpack.c.l.b16 %v197
  %v624 = vunpack.c.l.b16 %v198
  %v625 = vunpack.c.l.b16 %v199
  %v626 = vunpack.c.l.b16 %v200
  %v627 = vunpack.c.l.b16 %v201
  %v628 = vunpack.c.l.b16 %v202
  %v629 = vunpack.c.l.b16 %v203
  %v630 = vunpack.c.l.b16 %v204
  %v631 = vpack.c.b16 %v488, %v487
  %v632 = vpack.c.b16 %v490, %v489
  %v633 = vpack.c.b16 %v492, %v491
  %v634 = vpack.c.b16 %v494, %v493
  %v635 = vpack.c.b16 %v496, %v495
  %v636 = vpack.c.b16 %v498, %v497
  %v637 = vpack.c.b16 %v500, %v499
  %v638 = vpack.c.b16 %v502, %v501
  %v639 = vpack.c.b16 %v504, %v503
  %v640 = vpack.c.b16 %v506, %v505
  %v641 = vpack.c.b16 %v508, %v507
  %v642 = vpack.c.b16 %v510, %v509
  %v643 = vpack.c.b16 %v512, %v511
  %v644 = vpack.c.b16 %v514, %v513
  %v645 = vpack.c.b16 %v516, %v515
  %v646 = vpack.c.b16 %v518, %v517
  %v647 = vpack.c.b16 %v520, %v519
  %v648 = vpack.c.b16 %v522, %v521
  %v649 = vpack.c.b16 %v524, %v523
  %v650 = vpack.c.b16 %v526, %v525
  %v651 = vpack.c.b16 %v528, %v527
  %v652 = vpack.c.b16 %v530, %v529
  %v653 = vpack.c.b16 %v532, %v531
  %v654 = vpack.c.b16 %v534, %v533
  %v655 = vpack.c.b16 %v536, %v535
  %v656 = vpack.c.b16 %v538, %v537
  %v657 = vpack.c.b16 %v540, %v539
  %v658 = vpack.c.b16 %v542, %v541
  %v659 = vpack.c.b16 %v544, %v543
  %v660 = vpack.c.b16 %v546, %v545
  %v661 = vpack.c.b16 %v548, %v547
  %v662 = vpack.c.b16 %v550, %v549
  %v663 = vpack.c.b16 %v552, %v551
  %v664 = vpack.c.b16 %v554, %v553
  %v665 = vpack.c.b16 %v556, %v555
  %v666 = vpack.c.b16 %v558, %v557
  %v667 = vpack.c.b16 %v560, %v559
  %v668 = vpack.c.b16 %v562, %v561
  %v669 = vpack.c.b16 %v564, %v563
  %v670 = vpack.c.b16 %v566, %v565
  %v671 = vpack.c.b16 %v568, %v567
  %v672 = vpack.c.b16 %v570, %v569
  %v673 = vpack.c.b16 %v572, %v571
  %v674 = vpack.c.b16 %v574, %v573
  %v675 = vpack.c.b16 %v576, %v575
  %v676 = vpack.c.b16 %v578, %v577
  %v677 = vpack.c.b16 %v580, %v579
  %v678 = vpack.c.b16 %v582, %v581
  %v679 = vpack.c.b16 %v584, %v583
  %v680 = vpack.c.b16 %v586, %v585
  %v681 = vpack.c.b16 %v588, %v587
  %v682 = vpack.c.b16 %v590, %v589
  %v683 = vpack.c.b16 %v592, %v591
  %v684 = vpack.c.b16 %v594, %v593
  %v685 = vpack.c.b16 %v596, %v595
  %v686 = vpack.c.b16 %v598, %v597
  %v687 = vpack.c.b16 %v600, %v599
  %v688 = vpack.c.b16 %v602, %v601
  %v689 = vpack.c.b16 %v604, %v603
  %v690 = vpack.c.b16 %v606, %v605
  %v691 = vpack.c.b16 %v608, %v607
  %v692 = vpack.c.b16 %v610, %v609
  %v693 = vpack.c.b16 %v612, %v611
  %v694 = vpack.c.b16 %v614, %v613
  %v695 = vpack.c.b16 %v616, %v615
  %v696 = vpack.c.b16 %v618, %v617
  %v697 = vpack.c.b16 %v620, %v619
  %v698 = vpack.c.b16 %v622, %v621
  %v699 = vpack.c.b16 %v624, %v623
  %v700 = vpack.c.b16 %v626, %v625
  %v701 = vpack.c.b16 %v628, %v627
  %v702 = vpack.c.b16 %v630, %v629
  %775 = vmatprep.subr.bf16.mxu0 0
  %776 = vmatpush1.bf16.msra.mxu0 %v638
  %777 = vmatprep.subr.bf16.mxu0 0
  %778 = vmatpush1.bf16.msra.mxu0 %v637
  %779 = vmatprep.subr.bf16.mxu0 0
  %780 = vmatpush1.bf16.msra.mxu0 %v636
  %781 = vmatprep.subr.bf16.mxu0 0
  %782 = vmatpush1.bf16.msra.mxu0 %v635
  %783 = vmatprep.subr.bf16.mxu0 0
  %784 = vmatpush1.bf16.msra.mxu0 %v634
  %785 = vmatprep.subr.bf16.mxu0 0
  %786 = vmatpush1.bf16.msra.mxu0 %v633
  %787 = vmatprep.subr.bf16.mxu0 0
  %788 = vmatpush1.bf16.msra.mxu0 %v632
  %789 = vmatprep.subr.bf16.mxu0 0
  %790 = vmatpush1.bf16.msra.mxu0 %v631
  %791 = vmatprep.subr.bf16.mxu0 0
  %792 = vmatpush2.bf16.msra.mxu0 %v646
  %793 = vmatprep.subr.bf16.mxu0 0
  %794 = vmatpush2.bf16.msra.mxu0 %v645
  %795 = vmatprep.subr.bf16.mxu0 0
  %796 = vmatpush2.bf16.msra.mxu0 %v644
  %797 = vmatprep.subr.bf16.mxu0 0
  %798 = vmatpush2.bf16.msra.mxu0 %v643
  %799 = vmatprep.subr.bf16.mxu0 0
  %800 = vmatpush2.bf16.msra.mxu0 %v642
  %801 = vmatprep.subr.bf16.mxu0 0
  %802 = vmatpush2.bf16.msra.mxu0 %v641
  %803 = vmatprep.subr.bf16.mxu0 0
  %804 = vmatpush2.bf16.msra.mxu0 %v640
  %805 = vmatprep.subr.bf16.mxu0 0
  %806 = vmatpush2.bf16.msra.mxu0 %v639
  %807 = vmatprep.mubr.bf16.mxu0 %v290
  %808 = vmatmul.mubr.bf16.gmra.mxu0 %v289
  %v809 = vpop.f32.mrf.mxu0
  %v810 = vadd.f32 0.0, %v809
  %v811 = vpop.f32.mrf.mxu0
  %v812 = vpop.f32.mrf.mxu0
  %v813 = vadd.f32 0.0, %v812
  %v814 = vpop.f32.mrf.mxu0
  %815 = vmatprep.mubr.bf16.mxu0 %v299
  %816 = vmatmul.mubr.bf16.gmra.mxu0 %v298
  %v817 = vpop.f32.mrf.mxu0
  %v818 = vadd.f32 0.0, %v817
  %v819 = vpop.f32.mrf.mxu0
  %v820 = vpop.f32.mrf.mxu0
  %v821 = vadd.f32 0.0, %v820
  %v822 = vpop.f32.mrf.mxu0
  %823 = vmatprep.mubr.bf16.mxu0 %v308
  %824 = vmatmul.mubr.bf16.gmra.mxu0 %v307
  %v825 = vpop.f32.mrf.mxu0
  %v826 = vadd.f32 0.0, %v825
  %v827 = vpop.f32.mrf.mxu0
  %v828 = vpop.f32.mrf.mxu0
  %v829 = vadd.f32 0.0, %v828
  %v830 = vpop.f32.mrf.mxu0
  %831 = vdwg.mxu0
  %832 = vmatprep.subr.bf16.mxu0 0
  %833 = vmatpush1.bf16.msra.mxu0 %v654
  %834 = vmatprep.subr.bf16.mxu0 0
  %835 = vmatpush1.bf16.msra.mxu0 %v653
  %836 = vmatprep.subr.bf16.mxu0 0
  %837 = vmatpush1.bf16.msra.mxu0 %v652
  %838 = vmatprep.subr.bf16.mxu0 0
  %839 = vmatpush1.bf16.msra.mxu0 %v651
  %840 = vmatprep.subr.bf16.mxu0 0
  %841 = vmatpush1.bf16.msra.mxu0 %v650
  %842 = vmatprep.subr.bf16.mxu0 0
  %843 = vmatpush1.bf16.msra.mxu0 %v649
  %844 = vmatprep.subr.bf16.mxu0 0
  %845 = vmatpush1.bf16.msra.mxu0 %v648
  %846 = vmatprep.subr.bf16.mxu0 0
  %847 = vmatpush1.bf16.msra.mxu0 %v647
  %848 = vmatprep.subr.bf16.mxu0 0
  %849 = vmatpush2.bf16.msra.mxu0 %v662
  %850 = vmatprep.subr.bf16.mxu0 0
  %851 = vmatpush2.bf16.msra.mxu0 %v661
  %852 = vmatprep.subr.bf16.mxu0 0
  %853 = vmatpush2.bf16.msra.mxu0 %v660
  %854 = vmatprep.subr.bf16.mxu0 0
  %855 = vmatpush2.bf16.msra.mxu0 %v659
  %856 = vmatprep.subr.bf16.mxu0 0
  %857 = vmatpush2.bf16.msra.mxu0 %v658
  %858 = vmatprep.subr.bf16.mxu0 0
  %859 = vmatpush2.bf16.msra.mxu0 %v657
  %860 = vmatprep.subr.bf16.mxu0 0
  %861 = vmatpush2.bf16.msra.mxu0 %v656
  %862 = vmatprep.subr.bf16.mxu0 0
  %863 = vmatpush2.bf16.msra.mxu0 %v655
  %864 = vmatprep.mubr.bf16.mxu0 %v292
  %865 = vmatmul.mubr.bf16.gmra.mxu0 %v291
  %v866 = vpop.f32.mrf.mxu0
  %v867 = vadd.f32 %v810, %v866
  %v868 = vpop.f32.mrf.mxu0
  %v869 = vpop.f32.mrf.mxu0
  %v870 = vadd.f32 %v813, %v869
  %v871 = vpop.f32.mrf.mxu0
  %872 = vmatprep.mubr.bf16.mxu0 %v301
  %873 = vmatmul.mubr.bf16.gmra.mxu0 %v300
  %v874 = vpop.f32.mrf.mxu0
  %v875 = vadd.f32 %v818, %v874
  %v876 = vpop.f32.mrf.mxu0
  %v877 = vpop.f32.mrf.mxu0
  %v878 = vadd.f32 %v821, %v877
  %v879 = vpop.f32.mrf.mxu0
  %880 = vmatprep.mubr.bf16.mxu0 %v310
  %881 = vmatmul.mubr.bf16.gmra.mxu0 %v309
  %v882 = vpop.f32.mrf.mxu0
  %v883 = vadd.f32 %v826, %v882
  %v884 = vpop.f32.mrf.mxu0
  %v885 = vpop.f32.mrf.mxu0
  %v886 = vadd.f32 %v829, %v885
  %v887 = vpop.f32.mrf.mxu0
  %888 = vdwg.mxu0
  %889 = vmatprep.subr.bf16.mxu0 0
  %890 = vmatpush1.bf16.msra.mxu0 %v670
  %891 = vmatprep.subr.bf16.mxu0 0
  %892 = vmatpush1.bf16.msra.mxu0 %v669
  %893 = vmatprep.subr.bf16.mxu0 0
  %894 = vmatpush1.bf16.msra.mxu0 %v668
  %895 = vmatprep.subr.bf16.mxu0 0
  %896 = vmatpush1.bf16.msra.mxu0 %v667
  %897 = vmatprep.subr.bf16.mxu0 0
  %898 = vmatpush1.bf16.msra.mxu0 %v666
  %899 = vmatprep.subr.bf16.mxu0 0
  %900 = vmatpush1.bf16.msra.mxu0 %v665
  %901 = vmatprep.subr.bf16.mxu0 0
  %902 = vmatpush1.bf16.msra.mxu0 %v664
  %903 = vmatprep.subr.bf16.mxu0 0
  %904 = vmatpush1.bf16.msra.mxu0 %v663
  %905 = vmatprep.subr.bf16.mxu0 0
  %906 = vmatpush2.bf16.msra.mxu0 %v678
  %907 = vmatprep.subr.bf16.mxu0 0
  %908 = vmatpush2.bf16.msra.mxu0 %v677
  %909 = vmatprep.subr.bf16.mxu0 0
  %910 = vmatpush2.bf16.msra.mxu0 %v676
  %911 = vmatprep.subr.bf16.mxu0 0
  %912 = vmatpush2.bf16.msra.mxu0 %v675
  %913 = vmatprep.subr.bf16.mxu0 0
  %914 = vmatpush2.bf16.msra.mxu0 %v674
  %915 = vmatprep.subr.bf16.mxu0 0
  %916 = vmatpush2.bf16.msra.mxu0 %v673
  %917 = vmatprep.subr.bf16.mxu0 0
  %918 = vmatpush2.bf16.msra.mxu0 %v672
  %919 = vmatprep.subr.bf16.mxu0 0
  %920 = vmatpush2.bf16.msra.mxu0 %v671
  %921 = vmatprep.mubr.bf16.mxu0 %v294
  %922 = vmatmul.mubr.bf16.gmra.mxu0 %v293
  %v923 = vpop.f32.mrf.mxu0
  %v924 = vadd.f32 %v867, %v923
  %v925 = vpop.f32.mrf.mxu0
  %v926 = vpop.f32.mrf.mxu0
  %v927 = vadd.f32 %v870, %v926
  %v928 = vpop.f32.mrf.mxu0
  %929 = vmatprep.mubr.bf16.mxu0 %v303
  %930 = vmatmul.mubr.bf16.gmra.mxu0 %v302
  %v931 = vpop.f32.mrf.mxu0
  %v932 = vadd.f32 %v875, %v931
  %v933 = vpop.f32.mrf.mxu0
  %v934 = vpop.f32.mrf.mxu0
  %v935 = vadd.f32 %v878, %v934
  %v936 = vpop.f32.mrf.mxu0
  %937 = vmatprep.mubr.bf16.mxu0 %v312
  %938 = vmatmul.mubr.bf16.gmra.mxu0 %v311
  %v939 = vpop.f32.mrf.mxu0
  %v940 = vadd.f32 %v883, %v939
  %v941 = vpop.f32.mrf.mxu0
  %v942 = vpop.f32.mrf.mxu0
  %v943 = vadd.f32 %v886, %v942
  %v944 = vpop.f32.mrf.mxu0
  %945 = vdwg.mxu0
  %946 = vmatprep.subr.bf16.mxu0 0
  %947 = vmatpush1.bf16.msra.mxu0 %v686
  %948 = vmatprep.subr.bf16.mxu0 0
  %949 = vmatpush1.bf16.msra.mxu0 %v685
  %950 = vmatprep.subr.bf16.mxu0 0
  %951 = vmatpush1.bf16.msra.mxu0 %v684
  %952 = vmatprep.subr.bf16.mxu0 0
  %953 = vmatpush1.bf16.msra.mxu0 %v683
  %954 = vmatprep.subr.bf16.mxu0 0
  %955 = vmatpush1.bf16.msra.mxu0 %v682
  %956 = vmatprep.subr.bf16.mxu0 0
  %957 = vmatpush1.bf16.msra.mxu0 %v681
  %958 = vmatprep.subr.bf16.mxu0 0
  %959 = vmatpush1.bf16.msra.mxu0 %v680
  %960 = vmatprep.subr.bf16.mxu0 0
  %961 = vmatpush1.bf16.msra.mxu0 %v679
  %962 = vmatprep.subr.bf16.mxu0 0
  %963 = vmatpush2.bf16.msra.mxu0 %v694
  %964 = vmatprep.subr.bf16.mxu0 0
  %965 = vmatpush2.bf16.msra.mxu0 %v693
  %966 = vmatprep.subr.bf16.mxu0 0
  %967 = vmatpush2.bf16.msra.mxu0 %v692
  %968 = vmatprep.subr.bf16.mxu0 0
  %969 = vmatpush2.bf16.msra.mxu0 %v691
  %970 = vmatprep.subr.bf16.mxu0 0
  %971 = vmatpush2.bf16.msra.mxu0 %v690
  %972 = vmatprep.subr.bf16.mxu0 0
  %973 = vmatpush2.bf16.msra.mxu0 %v689
  %974 = vmatprep.subr.bf16.mxu0 0
  %975 = vmatpush2.bf16.msra.mxu0 %v688
  %976 = vmatprep.subr.bf16.mxu0 0
  %977 = vmatpush2.bf16.msra.mxu0 %v687
  %978 = vmatprep.mubr.bf16.mxu0 %v296
  %979 = vmatmul.mubr.bf16.gmra.mxu0 %v295
  %v980 = vpop.f32.mrf.mxu0
  %v981 = vadd.f32 %v924, %v980
  %v982 = vpop.f32.mrf.mxu0
  %v983 = vpop.f32.mrf.mxu0
  %v984 = vadd.f32 %v927, %v983
  %v985 = vpop.f32.mrf.mxu0
  %986 = vmatprep.mubr.bf16.mxu0 %v305
  %987 = vmatmul.mubr.bf16.gmra.mxu0 %v304
  %v988 = vpop.f32.mrf.mxu0
  %v989 = vadd.f32 %v932, %v988
  %v990 = vpop.f32.mrf.mxu0
  %v991 = vpop.f32.mrf.mxu0
  %v992 = vadd.f32 %v935, %v991
  %v993 = vpop.f32.mrf.mxu0
  %994 = vmatprep.mubr.bf16.mxu0 %v314
  %995 = vmatmul.mubr.bf16.gmra.mxu0 %v313
  %v996 = vpop.f32.mrf.mxu0
  %v997 = vadd.f32 %v940, %v996
  %v998 = vpop.f32.mrf.mxu0
  %v999 = vpop.f32.mrf.mxu0
  %v1000 = vadd.f32 %v943, %v999
  %v1001 = vpop.f32.mrf.mxu0
  %1002 = vdwg.mxu0
  %1003 = vmatprep.subr.bf16.mxu0 0
  %1004 = vmatpush1.bf16.msra.mxu0 %v702
  %1005 = vmatprep.subr.bf16.mxu0 0
  %1006 = vmatpush1.bf16.msra.mxu0 %v701
  %1007 = vmatprep.subr.bf16.mxu0 0
  %1008 = vmatpush1.bf16.msra.mxu0 %v700
  %1009 = vmatprep.subr.bf16.mxu0 0
  %1010 = vmatpush1.bf16.msra.mxu0 %v699
  %1011 = vmatprep.subr.bf16.mxu0 0
  %1012 = vmatpush1.bf16.msra.mxu0 %v698
  %1013 = vmatprep.subr.bf16.mxu0 0
  %1014 = vmatpush1.bf16.msra.mxu0 %v697
  %1015 = vmatprep.subr.bf16.mxu0 0
  %1016 = vmatpush1.bf16.msra.mxu0 %v696
  %1017 = vmatprep.subr.bf16.mxu0 0
  %1018 = vmatpush1.bf16.msra.mxu0 %v695
  %1019 = vmatprep.subr.bf16.mxu0 0
  %1020 = vmatpush2.bf16.msra.mxu0 0
  %1021 = vmatprep.subr.bf16.mxu0 0
  %1022 = vmatpush2.bf16.msra.mxu0 0
  %1023 = vmatprep.subr.bf16.mxu0 0
  %1024 = vmatpush2.bf16.msra.mxu0 0
  %1025 = vmatprep.subr.bf16.mxu0 0
  %1026 = vmatpush2.bf16.msra.mxu0 0
  %1027 = vmatprep.subr.bf16.mxu0 0
  %1028 = vmatpush2.bf16.msra.mxu0 0
  %1029 = vmatprep.subr.bf16.mxu0 0
  %1030 = vmatpush2.bf16.msra.mxu0 0
  %1031 = vmatprep.subr.bf16.mxu0 0
  %1032 = vmatpush2.bf16.msra.mxu0 0
  %1033 = vmatprep.subr.bf16.mxu0 0
  %1034 = vmatpush2.bf16.msra.mxu0 0
  %1035 = vmatprep.mubr.bf16.mxu0 0
  %1036 = vmatmul.mubr.bf16.gmra.mxu0 %v297
  %v1037 = vpop.f32.mrf.mxu0
  %v1038 = vadd.f32 %v981, %v1037
  %v1039 = vpop.f32.mrf.mxu0
  %v1040 = vpop.f32.mrf.mxu0
  %v1041 = vadd.f32 %v984, %v1040
  %v1042 = vpop.f32.mrf.mxu0
  %1043 = vmatprep.mubr.bf16.mxu0 0
  %1044 = vmatmul.mubr.bf16.gmra.mxu0 %v306
  %v1045 = vpop.f32.mrf.mxu0
  %v1046 = vadd.f32 %v989, %v1045
  %v1047 = vpop.f32.mrf.mxu0
  %v1048 = vpop.f32.mrf.mxu0
  %v1049 = vadd.f32 %v992, %v1048
  %v1050 = vpop.f32.mrf.mxu0
  %1051 = vmatprep.mubr.bf16.mxu0 0
  %1052 = vmatmul.mubr.bf16.gmra.mxu0 %v315
  %v1053 = vpop.f32.mrf.mxu0
  %v1054 = vadd.f32 %v997, %v1053
  %v1055 = vpop.f32.mrf.mxu0
  %v1056 = vpop.f32.mrf.mxu0
  %v1057 = vadd.f32 %v1000, %v1056
  %v1058 = vpop.f32.mrf.mxu0
  %1059 = vdwg.mxu0
  %v1060 = vadd.f32 %v25, %v1038
  %v1061 = vadd.f32 %v26, %v1041
  %v1062 = vadd.f32 %v27, %v1046
  %v1063 = vadd.f32 %v28, %v1049
  %v1064 = vadd.f32 %v29, %v1054
  %v1065 = vadd.f32 %v30, %v1057
  %1066 = vst [vmem:[#allocation2] sm:$0xff] %v1060
  %1067 = vst [vmem:[#allocation2 + $0x8] sm:$0xff] %v1061
  %1068 = vst [vmem:[#allocation2 + $0x10] sm:$0xff] %v1062
  %1069 = vst [vmem:[#allocation2 + $0x18] sm:$0xff] %v1063
  %1070 = vst [vmem:[#allocation2 + $0x20] sm:$0xff] %v1064
  %1071 = vst [vmem:[#allocation2 + $0x28] sm:$0xff] %v1065
  // Predicated region
  $region18: #{_lambda_.10} parent=0 // pred_check
    %p1072 = pneg %p15
  $region19: #{_lambda_.10} parent=0 // pred_check_branch
    %1074 = sbr.rel (%p1072) target = $region21
  $region20: #{_lambda_.10} parent=0 // pred_region
    %v1075 = vld [vmem:[#allocation2] sm:$0xff]
    %v1076 = vld [vmem:[#allocation2 + $0x8] sm:$0xff]
    %v1077 = vld [vmem:[#allocation2 + $0x10] sm:$0xff]
    %v1078 = vld [vmem:[#allocation2 + $0x18] sm:$0xff]
    %v1079 = vld [vmem:[#allocation2 + $0x20] sm:$0xff]
    %v1080 = vld [vmem:[#allocation2 + $0x28] sm:$0xff]
    %v1081 = vld [vmem:[%s2] sm:$0x1]
    %v1083 = vlaneseq
    %v1084 = vshrl.u32 %v1083, 7
    %v1085 = vsub.s32 0, %v1084
    %v1086 = vrot.slane %v1081, %v1085
    %v1088 = vadd.f32 %v1075, %v1086
    %v1089 = vadd.f32 %v1076, %v1086
    %v1090 = vadd.f32 %v1077, %v1086
    %v1091 = vadd.f32 %v1078, %v1086
    %v1092 = vadd.f32 %v1079, %v1086
    %v1093 = vadd.f32 %v1080, %v1086
    %v1094 = vmax.f32 %v1088, 0.0
    %v1095 = vmax.f32 %v1089, 0.0
    %v1096 = vmax.f32 %v1090, 0.0
    %v1097 = vmax.f32 %v1091, 0.0
    %v1098 = vmax.f32 %v1092, 0.0
    %v1099 = vmax.f32 %v1093, 0.0
    %1100 = vst [vmem:[%s3] sm:$0xff] %v1094
    %1101 = vst [vmem:[%s3 + $0x8] sm:$0xff] %v1095
    %1102 = vst [vmem:[%s3 + $0x10] sm:$0xff] %v1096
    %1103 = vst [vmem:[%s3 + $0x18] sm:$0xff] %v1097
    %1104 = vst [vmem:[%s3 + $0x20] sm:$0xff] %v1098
    %1105 = vst [vmem:[%s3 + $0x28] sm:$0xff] %v1099
  $region21: #{_lambda_.10} parent=0 // pred_fallthru
    _
  // Predicated region
  $region22: #{_lambda_.10} parent=0 // pred_check
    _
  $region23: #{_lambda_.10} parent=0 // pred_check_branch
    %1107 = sbr.rel (0) target = $region25
  $region24: #{_lambda_.10} parent=0 // pred_region
    _
  $region25: #{_lambda_.10} parent=0 // pred_fallthru
    _
  // Predicated region
  $region26: #{_lambda_.10} parent=0 // pred_check
    _
  $region27: #{_lambda_.10} parent=0 // pred_check_branch
    %1109 = sbr.rel (0) target = $region29
  $region28: #{_lambda_.10} parent=0 // pred_region
    _
  $region29: #{_lambda_.10} parent=0 // pred_fallthru
    _

</llo_original>
